<compile_context>
chip_gen: v6e
topology: v6e:2x2x1
jax: 0.10.0
libtpu: 0.0.40
codegen_flags: <defaults>
</compile_context>

<pallas_src>
import math
import functools

import numpy as np
import jax
import jax.numpy as jnp
from jax.experimental import pallas as pl
from jax.experimental.pallas import tpu as pltpu


def _r8(n):
    return ((n + 7) // 8) * 8


# ----------------------------- static slab layout ------------------------------

def make_layout(num_markers, dim_hidden, num_inds, hidden_layers, layer_norm):
    """Static row offsets of every weight inside the three packed slabs."""
    dv = dim_hidden
    w_off, c_off, v_off = 0, 0, 0
    enc = []
    din = num_markers
    for _ in range(hidden_layers):
        # ISAB mab0: Q = I (shared, pre-projected), K = X (dk = din)
        m0 = dict(shared_q=True, dk=din, ln=layer_norm, nq=num_inds,
                  c_row=c_off, w_kv=w_off, w_o=w_off + _r8(din), v_row=v_off)
        w_off += _r8(din) + _r8(dv)
        c_off += _r8(num_inds)
        v_off += 8
        # ISAB mab1: Q = X (dq = din), K = H_induced (dk = dv)
        m1 = dict(shared_q=False, dq=din, dk=dv, ln=layer_norm,
                  w_q=w_off, w_kv=w_off + _r8(din),
                  w_o=w_off + _r8(din) + _r8(dv), v_row=v_off)
        w_off += _r8(din) + 2 * _r8(dv)
        v_off += 8
        enc.append((m0, m1))
        din = dv
    # PMA: Q = S (shared, pre-projected, padded to 8 rows), K = H, ln = False
    pma = dict(shared_q=True, dk=dv, ln=False, nq=8,
               c_row=c_off, w_kv=w_off, w_o=w_off + _r8(dv), v_row=v_off)
    w_off += 2 * _r8(dv)
    c_off += 8
    v_off += 8
    # MLP head
    mlp = dict(w1=w_off, w2=w_off + _r8(dv), w3=w_off + 2 * _r8(dv), v_row=v_off)
    w_off += 2 * _r8(dv) + _r8(dv // 2)
    v_off += 8
    return dict(dv=dv, enc=enc, pma=pma, mlp=mlp,
                w_rows=w_off, v_rows=v_off, c_rows=c_off)


# ----------------------------- host-side packing -------------------------------

def pack_params(params, layout):
    """Pack all parameters into 3 slabs (runs once on host, outside jit)."""
    dv = layout['dv']
    scale = 1.0 / math.sqrt(dv)                       # Set Transformer: /sqrt(dim_V)
    W = np.zeros((layout['w_rows'], 2 * dv), np.float32)
    V = np.zeros((layout['v_rows'], 2 * dv), np.float32)
    C = np.zeros((layout['c_rows'], dv), np.float32)

    def put_mab(meta, p, q_const=None):
        wk = np.asarray(p['wk'], np.float32)
        wv = np.asarray(p['wv'], np.float32)
        dk = wk.shape[0]
        W[meta['w_kv']:meta['w_kv'] + dk, 0:dv] = wk * scale          # K pre-scaled
        W[meta['w_kv']:meta['w_kv'] + dk, dv:2 * dv] = wv
        W[meta['w_o']:meta['w_o'] + dv, 0:dv] = np.asarray(p['wo'], np.float32)
        vr = meta['v_row']
        V[vr + 1, 0:dv] = np.asarray(p['bk'], np.float32).reshape(-1) * scale
        V[vr + 1, dv:2 * dv] = np.asarray(p['bv'], np.float32).reshape(-1)
        V[vr + 2, 0:dv] = np.asarray(p['bo'], np.float32).reshape(-1)
        if meta['ln']:
            V[vr + 3, 0:dv] = np.asarray(p['g0'], np.float32).reshape(-1)
            V[vr + 4, 0:dv] = np.asarray(p['be0'], np.float32).reshape(-1)
            V[vr + 5, 0:dv] = np.asarray(p['g1'], np.float32).reshape(-1)
            V[vr + 6, 0:dv] = np.asarray(p['be1'], np.float32).reshape(-1)
        if meta['shared_q']:
            # I / S only ever pass through fc_q -> fold the projection here.
            qc = np.asarray(q_const, np.float32)                       # [nq_real, dq]
            qp = qc @ np.asarray(p['wq'], np.float32) \
                 + np.asarray(p['bq'], np.float32).reshape(1, -1)
            C[meta['c_row']:meta['c_row'] + qp.shape[0], 0:dv] = qp
        else:
            wq = np.asarray(p['wq'], np.float32)
            W[meta['w_q']:meta['w_q'] + wq.shape[0], 0:dv] = wq
            V[vr + 0, 0:dv] = np.asarray(p['bq'], np.float32).reshape(-1)

    for (m0, m1), lp in zip(layout['enc'], params['enc']):
        put_mab(m0, lp['mab0'], q_const=np.asarray(lp['I'])[0])
        put_mab(m1, lp['mab1'])
    put_mab(layout['pma'], params['pma']['mab'],
            q_const=np.asarray(params['pma']['S'])[0])

    mp, ml = params['mlp'], layout['mlp']
    W[ml['w1']:ml['w1'] + dv, 0:dv] = np.asarray(mp['w1'], np.float32)
    W[ml['w2']:ml['w2'] + dv, 0:dv // 2] = np.asarray(mp['w2'], np.float32)
    W[ml['w3']:ml['w3'] + dv // 2, 0:3] = np.asarray(mp['w3'], np.float32)
    vr = ml['v_row']
    V[vr + 0, 0:dv] = np.asarray(mp['b1'], np.float32).reshape(-1)
    V[vr + 1, 0:dv // 2] = np.asarray(mp['b2'], np.float32).reshape(-1)
    V[vr + 2, 0:3] = np.asarray(mp['b3'], np.float32).reshape(-1)
    return dict(W=jnp.asarray(W), V=jnp.asarray(V), C=jnp.asarray(C))


# ----------------------------- fused kernel ------------------------------------

def _layernorm(x, g, b, eps=1e-5):
    # PyTorch nn.LayerNorm semantics: biased variance, eps inside rsqrt.
    mean = jnp.mean(x, axis=-1, keepdims=True)
    var = jnp.mean((x - mean) ** 2, axis=-1, keepdims=True)
    return (x - mean) * jax.lax.rsqrt(var + eps) * g + b


def make_fused_kernel(layout, num_heads):
    dv = layout['dv']
    ds = dv // num_heads

    def mab(xq3, xk3, w_ref, v_ref, c_ref, meta):
        """Set-Transformer MAB; returns [B, nq, dv]. Weights loaded at point of use."""
        B, nk, dk = xk3.shape
        vr = meta['v_row']

        # ---- Q projection (pre-folded on host for the shared query sets I / S)
        if meta['shared_q']:
            nq = meta['nq']
            q_shared = c_ref[meta['c_row']:meta['c_row'] + nq, :]          # [nq, dv]
            q3 = jnp.broadcast_to(q_shared[None], (B, nq, dv))
        else:
            nq, dq = xq3.shape[1], xq3.shape[2]
            wq = w_ref[meta['w_q']:meta['w_q'] + dq, 0:dv]
            bq = v_ref[vr:vr + 1, 0:dv]
            q2 = jnp.dot(xq3.reshape(B * nq, dq), wq,
                         preferred_element_type=jnp.float32) + bq
            q3 = q2.reshape(B, nq, dv)

        # ---- fused K/V projection (K columns / bias pre-scaled by 1/sqrt(dv))
        wkv = w_ref[meta['w_kv']:meta['w_kv'] + dk, 0:2 * dv]
        bkv = v_ref[vr + 1:vr + 2, 0:2 * dv]
        kv2 = jnp.dot(xk3.reshape(B * nk, dk), wkv,
                      preferred_element_type=jnp.float32) + bkv
        kv3 = kv2.reshape(B, nk, 2 * dv)

        # ---- multi-head attention (static head loop)
        heads = []
        for h in range(num_heads):
            qk = slice(h * ds, (h + 1) * ds)
            vv = slice(dv + h * ds, dv + (h + 1) * ds)
            s = jnp.einsum('bqd,bkd->bqk', q3[..., qk], kv3[..., qk],
                           preferred_element_type=jnp.float32)
            s = s - jnp.max(s, axis=-1, keepdims=True)
            e = jnp.exp(s)
            a = e * pl.reciprocal(jnp.sum(e, axis=-1, keepdims=True), approx=True)
            heads.append(jnp.einsum('bqk,bkd->bqd', a, kv3[..., vv],
                                    preferred_element_type=jnp.float32))
        o2 = (q3 + jnp.concatenate(heads, axis=-1)).reshape(B * nq, dv)

        # ---- LayerNorm + residual rFF + LayerNorm (dropout = identity)
        if meta['ln']:
            o2 = _layernorm(o2, v_ref[vr + 3:vr + 4, 0:dv], v_ref[vr + 4:vr + 5, 0:dv])
        wo = w_ref[meta['w_o']:meta['w_o'] + dv, 0:dv]
        bo = v_ref[vr + 2:vr + 3, 0:dv]
        ff = jnp.dot(o2, wo, preferred_element_type=jnp.float32) + bo
        o2 = o2 + jnp.maximum(ff, 0.0)
        if meta['ln']:
            o2 = _layernorm(o2, v_ref[vr + 5:vr + 6, 0:dv], v_ref[vr + 6:vr + 7, 0:dv])
        return o2.reshape(B, nq, dv)

    def kernel(x_ref, w_ref, v_ref, c_ref, out_ref):
        x = x_ref[...]                                    # [B, N, num_markers]
        B = x.shape[0]

        # ---- ISAB encoder stack
        h = x
        for (m0, m1) in layout['enc']:
            hi = mab(None, h, w_ref, v_ref, c_ref, m0)    # [B, num_inds, dv]
            h = mab(h, hi, w_ref, v_ref, c_ref, m1)       # [B, N, dv]

        # ---- PMA (seed padded to 8 query rows; row 0 of each 8-block is real)
        z = mab(None, h, w_ref, v_ref, c_ref, layout['pma']).reshape(B * 8, dv)

        # ---- MLP head (Dropout = identity); weights sliced at point of use
        ml = layout['mlp']
        vr = ml['v_row']
        z = jnp.maximum(jnp.dot(z, w_ref[ml['w1']:ml['w1'] + dv, 0:dv],
                                preferred_element_type=jnp.float32)
                        + v_ref[vr:vr + 1, 0:dv], 0.0)
        z = jnp.maximum(jnp.dot(z, w_ref[ml['w2']:ml['w2'] + dv, 0:dv // 2],
                                preferred_element_type=jnp.float32)
                        + v_ref[vr + 1:vr + 2, 0:dv // 2], 0.0)
        z = jnp.dot(z, w_ref[ml['w3']:ml['w3'] + dv // 2, 0:3],
                    preferred_element_type=jnp.float32) + v_ref[vr + 2:vr + 3, 0:3]
        out_ref[...] = z.reshape(B, 8, 3)

    return kernel


def hai_titer_predictor(x, packed, *, layout, num_heads):
    """x: [B, num_cells, num_markers] -> [B, 3]; one fused, grid-less pallas_call."""
    B = x.shape[0]
    kernel = make_fused_kernel(layout, num_heads)
    out = pl.pallas_call(
        kernel,
        out_shape=jax.ShapeDtypeStruct((B, 8, 3), jnp.float32),
        compiler_params=pltpu.CompilerParams(vmem_limit_bytes=32 * 1024 * 1024),
    )(x, packed['W'], packed['V'], packed['C'])
    # TODO(synk): add a batch-parallel grid (dimension_semantics=("parallel",)) to use
    # the second TensorCore on v7x once B is large enough to matter.
    return out[:, 0, :]                                   # drop the 7 PMA pad rows


# ----------------------------- parameter init ----------------------------------

def init_linear(key, din, dout, scale=0.1):
    kw, kb = jax.random.split(key)
    w = jax.random.normal(kw, (din, dout), jnp.float32) * scale
    b = jax.random.normal(kb, (1, dout), jnp.float32) * scale
    return w, b


def init_mab(key, dq, dk, dv, ln):
    ks = jax.random.split(key, 4)
    p = {}
    p['wq'], p['bq'] = init_linear(ks[0], dq, dv)
    p['wk'], p['bk'] = init_linear(ks[1], dk, dv)
    p['wv'], p['bv'] = init_linear(ks[2], dk, dv)
    p['wo'], p['bo'] = init_linear(ks[3], dv, dv)
    if ln:
        p['g0'] = jnp.ones((1, dv), jnp.float32)
        p['be0'] = jnp.zeros((1, dv), jnp.float32)
        p['g1'] = jnp.ones((1, dv), jnp.float32)
        p['be1'] = jnp.zeros((1, dv), jnp.float32)
    return p


def init_params(key, num_markers, dim_hidden, num_heads, num_inds,
                hidden_layers, layer_norm):
    keys = jax.random.split(key, hidden_layers + 3)
    enc = []
    din = num_markers
    for li in range(hidden_layers):
        k_i, k0, k1 = jax.random.split(keys[li], 3)
        enc.append({
            'I': jax.random.normal(k_i, (1, num_inds, dim_hidden), jnp.float32) * 0.1,
            'mab0': init_mab(k0, dim_hidden, din, dim_hidden, layer_norm),
            'mab1': init_mab(k1, din, dim_hidden, dim_hidden, layer_norm),
        })
        din = dim_hidden
    k_s, k_m = jax.random.split(keys[hidden_layers], 2)
    pma = {
        'S': jax.random.normal(k_s, (1, 1, dim_hidden), jnp.float32) * 0.1,
        'mab': init_mab(k_m, dim_hidden, dim_hidden, dim_hidden, ln=False),
    }
    k1, k2, k3 = jax.random.split(keys[hidden_layers + 1], 3)
    mlp = {}
    mlp['w1'], mlp['b1'] = init_linear(k1, dim_hidden, dim_hidden)
    mlp['w2'], mlp['b2'] = init_linear(k2, dim_hidden, dim_hidden // 2)
    mlp['w3'], mlp['b3'] = init_linear(k3, dim_hidden // 2, 3)
    return {'enc': enc, 'pma': pma, 'mlp': mlp}


# ----------------------------- pure-JAX reference ------------------------------

def reference_forward(x, params, num_heads, layer_norm):
    def ln_f(t, g, b, eps=1e-5):
        m = jnp.mean(t, -1, keepdims=True)
        v = jnp.mean((t - m) ** 2, -1, keepdims=True)
        return (t - m) / jnp.sqrt(v + eps) * g + b

    def mab(xq, xk, p, ln):
        dvv = p['wq'].shape[1]
        dss = dvv // num_heads
        Q = xq @ p['wq'] + p['bq']
        K = xk @ p['wk'] + p['bk']
        V = xk @ p['wv'] + p['bv']
        outs = []
        for h in range(num_heads):
            sl = slice(h * dss, (h + 1) * dss)
            A = jax.nn.softmax(
                jnp.einsum('bqd,bkd->bqk', Q[..., sl], K[..., sl]) / math.sqrt(dvv),
                axis=-1)
            outs.append(jnp.einsum('bqk,bkd->bqd', A, V[..., sl]))
        O = Q + jnp.concatenate(outs, -1)
        if ln:
            O = ln_f(O, p['g0'], p['be0'])
        O = O + jax.nn.relu(O @ p['wo'] + p['bo'])
        if ln:
            O = ln_f(O, p['g1'], p['be1'])
        return O

    B = x.shape[0]
    h = x
    for lp in params['enc']:
        I = jnp.broadcast_to(lp['I'], (B,) + lp['I'].shape[1:])
        hi = mab(I, h, lp['mab0'], layer_norm)
        h = mab(h, hi, lp['mab1'], layer_norm)
    S = jnp.broadcast_to(params['pma']['S'], (B, 1, params['pma']['S'].shape[-1]))
    z = mab(S, h, params['pma']['mab'], False)[:, 0, :]
    mp = params['mlp']
    z = jax.nn.relu(z @ mp['w1'] + mp['b1'])
    z = jax.nn.relu(z @ mp['w2'] + mp['b2'])
    return z @ mp['w3'] + mp['b3']


# ----------------------------- main ---------------------------------------------

if __name__ == "__main__":
    batch = 2
    num_cells = 16
    num_markers = 8
    dim_hidden = 32
    num_heads = 4
    num_inds = 8
    hidden_layers = 2
    layer_norm = True

    key = jax.random.PRNGKey(0)
    k_x, k_p = jax.random.split(key)
    x = jax.random.normal(k_x, (batch, num_cells, num_markers), jnp.float32)
    params = init_params(k_p, num_markers, dim_hidden, num_heads, num_inds,
                         hidden_layers, layer_norm)

    layout = make_layout(num_markers, dim_hidden, num_inds, hidden_layers, layer_norm)
    packed = pack_params(params, layout)

    fwd = jax.jit(functools.partial(hai_titer_predictor, layout=layout,
                                    num_heads=num_heads))
    out = jax.block_until_ready(fwd(x, packed))
    assert out.shape == (batch, 3), out.shape
    assert bool(jnp.all(jnp.isfinite(out)))

    # sanity check vs a straightforward JAX port of the PyTorch module
    ref = reference_forward(x, params, num_heads, layer_norm)
    np.testing.assert_allclose(np.asarray(out), np.asarray(ref), rtol=5e-2, atol=5e-2)

    print("KERNEL_OK")
</pallas_src>

<mosaic_0001>
module attributes {stable_mosaic.version = 11 : i64} {
  func.func @kernel(%arg0: memref<2x16x8xf32, #tpu.memory_space<vmem>>, %arg1: memref<416x64xf32, #tpu.memory_space<vmem>>, %arg2: memref<48x64xf32, #tpu.memory_space<vmem>>, %arg3: memref<24x32xf32, #tpu.memory_space<vmem>>, %arg4: memref<2x8x3xf32, #tpu.memory_space<vmem>>) attributes {dimension_semantics = [], scalar_prefetch = 0 : i64, scratch_operands = 0 : i64, tpu.core_type = #tpu.core_type<tc>} {
    %c0 = arith.constant 0 : index
    %c0_0 = arith.constant 0 : index
    %c0_1 = arith.constant 0 : index
    %0 = vector.load %arg0[%c0, %c0_0, %c0_1] : memref<2x16x8xf32, #tpu.memory_space<vmem>>, vector<2x16x8xf32>
    %c0_2 = arith.constant 0 : index
    %c0_3 = arith.constant 0 : index
    %1 = vector.load %arg3[%c0_2, %c0_3] : memref<24x32xf32, #tpu.memory_space<vmem>>, vector<8x32xf32>
    %2 = vector.shape_cast %1 : vector<8x32xf32> to vector<1x8x32xf32>
    %3 = vector.shape_cast %2 : vector<1x8x32xf32> to vector<1x8x32xf32>
    %4 = vector.broadcast %3 : vector<1x8x32xf32> to vector<2x8x32xf32>
    %c0_4 = arith.constant 0 : index
    %c0_5 = arith.constant 0 : index
    %5 = vector.load %arg1[%c0_4, %c0_5] : memref<416x64xf32, #tpu.memory_space<vmem>>, vector<8x64xf32>
    %c1 = arith.constant 1 : index
    %c0_6 = arith.constant 0 : index
    %6 = vector.load %arg2[%c1, %c0_6] : memref<48x64xf32, #tpu.memory_space<vmem>>, vector<1x64xf32>
    %7 = vector.shape_cast %0 : vector<2x16x8xf32> to vector<32x8xf32>
    %cst = arith.constant dense<0.000000e+00> : vector<32x64xf32>
    %8 = tpu.matmul %7, %5, %cst {dimension_numbers = #tpu.dot_dimension_numbers<[1], [0], [0], [1], [0, 0, 1, 1], [], []>} : vector<32x8xf32>, vector<8x64xf32>, vector<32x64xf32> -> vector<32x64xf32>
    %9 = vector.broadcast %6 : vector<1x64xf32> to vector<32x64xf32>
    %10 = arith.addf %8, %9 : vector<32x64xf32>
    %11 = vector.shape_cast %10 : vector<32x64xf32> to vector<2x16x64xf32>
    %12 = vector.extract_strided_slice %4 {offsets = [0, 0, 0], sizes = [2, 8, 8], strides = [1, 1, 1]} : vector<2x8x32xf32> to vector<2x8x8xf32>
    %13 = vector.extract_strided_slice %11 {offsets = [0, 0, 0], sizes = [2, 16, 8], strides = [1, 1, 1]} : vector<2x16x64xf32> to vector<2x16x8xf32>
    "tpu.trace_start"() <{level = 10 : i32, message = "bqd,bkd->bqk"}> : () -> ()
    %cst_7 = arith.constant dense<0.000000e+00> : vector<2x8x16xf32>
    %14 = tpu.matmul %12, %13, %cst_7 {dimension_numbers = #tpu.dot_dimension_numbers<[2], [2], [1], [1], [0, 0, 0, 1, 1, 1], [0], [0]>} : vector<2x8x8xf32>, vector<2x16x8xf32>, vector<2x8x16xf32> -> vector<2x8x16xf32>
    "tpu.trace_stop"() : () -> ()
    %cst_8 = arith.constant dense<0xFF800000> : vector<2x8xf32>
    %15 = vector.multi_reduction <maximumf>, %14, %cst_8 [2] : vector<2x8x16xf32> to vector<2x8xf32>
    %16 = vector.shape_cast %15 : vector<2x8xf32> to vector<2x8x1xf32>
    %17 = vector.broadcast %16 : vector<2x8x1xf32> to vector<2x8x16xf32>
    %18 = arith.subf %14, %17 : vector<2x8x16xf32>
    %19 = math.exp %18 : vector<2x8x16xf32>
    %cst_9 = arith.constant dense<0.000000e+00> : vector<2x8xf32>
    %20 = vector.multi_reduction <add>, %19, %cst_9 [2] : vector<2x8x16xf32> to vector<2x8xf32>
    %21 = vector.shape_cast %20 : vector<2x8xf32> to vector<2x8x1xf32>
    %22 = tpu.reciprocal %21 {approx = true} : vector<2x8x1xf32> -> vector<2x8x1xf32>
    %23 = vector.broadcast %22 : vector<2x8x1xf32> to vector<2x8x16xf32>
    %24 = arith.mulf %19, %23 : vector<2x8x16xf32>
    %25 = vector.extract_strided_slice %11 {offsets = [0, 0, 32], sizes = [2, 16, 8], strides = [1, 1, 1]} : vector<2x16x64xf32> to vector<2x16x8xf32>
    "tpu.trace_start"() <{level = 10 : i32, message = "bqk,bkd->bqd"}> : () -> ()
    %cst_10 = arith.constant dense<0.000000e+00> : vector<2x8x8xf32>
    %26 = tpu.matmul %24, %25, %cst_10 {dimension_numbers = #tpu.dot_dimension_numbers<[2], [1], [1], [2], [0, 0, 0, 1, 1, 2], [0], [0]>} : vector<2x8x16xf32>, vector<2x16x8xf32>, vector<2x8x8xf32> -> vector<2x8x8xf32>
    "tpu.trace_stop"() : () -> ()
    %27 = vector.extract_strided_slice %4 {offsets = [0, 0, 8], sizes = [2, 8, 8], strides = [1, 1, 1]} : vector<2x8x32xf32> to vector<2x8x8xf32>
    %28 = vector.extract_strided_slice %11 {offsets = [0, 0, 8], sizes = [2, 16, 8], strides = [1, 1, 1]} : vector<2x16x64xf32> to vector<2x16x8xf32>
    "tpu.trace_start"() <{level = 10 : i32, message = "bqd,bkd->bqk"}> : () -> ()
    %cst_11 = arith.constant dense<0.000000e+00> : vector<2x8x16xf32>
    %29 = tpu.matmul %27, %28, %cst_11 {dimension_numbers = #tpu.dot_dimension_numbers<[2], [2], [1], [1], [0, 0, 0, 1, 1, 1], [0], [0]>} : vector<2x8x8xf32>, vector<2x16x8xf32>, vector<2x8x16xf32> -> vector<2x8x16xf32>
    "tpu.trace_stop"() : () -> ()
    %cst_12 = arith.constant dense<0xFF800000> : vector<2x8xf32>
    %30 = vector.multi_reduction <maximumf>, %29, %cst_12 [2] : vector<2x8x16xf32> to vector<2x8xf32>
    %31 = vector.shape_cast %30 : vector<2x8xf32> to vector<2x8x1xf32>
    %32 = vector.broadcast %31 : vector<2x8x1xf32> to vector<2x8x16xf32>
    %33 = arith.subf %29, %32 : vector<2x8x16xf32>
    %34 = math.exp %33 : vector<2x8x16xf32>
    %cst_13 = arith.constant dense<0.000000e+00> : vector<2x8xf32>
    %35 = vector.multi_reduction <add>, %34, %cst_13 [2] : vector<2x8x16xf32> to vector<2x8xf32>
    %36 = vector.shape_cast %35 : vector<2x8xf32> to vector<2x8x1xf32>
    %37 = tpu.reciprocal %36 {approx = true} : vector<2x8x1xf32> -> vector<2x8x1xf32>
    %38 = vector.broadcast %37 : vector<2x8x1xf32> to vector<2x8x16xf32>
    %39 = arith.mulf %34, %38 : vector<2x8x16xf32>
    %40 = vector.extract_strided_slice %11 {offsets = [0, 0, 40], sizes = [2, 16, 8], strides = [1, 1, 1]} : vector<2x16x64xf32> to vector<2x16x8xf32>
    "tpu.trace_start"() <{level = 10 : i32, message = "bqk,bkd->bqd"}> : () -> ()
    %cst_14 = arith.constant dense<0.000000e+00> : vector<2x8x8xf32>
    %41 = tpu.matmul %39, %40, %cst_14 {dimension_numbers = #tpu.dot_dimension_numbers<[2], [1], [1], [2], [0, 0, 0, 1, 1, 2], [0], [0]>} : vector<2x8x16xf32>, vector<2x16x8xf32>, vector<2x8x8xf32> -> vector<2x8x8xf32>
    "tpu.trace_stop"() : () -> ()
    %42 = vector.extract_strided_slice %4 {offsets = [0, 0, 16], sizes = [2, 8, 8], strides = [1, 1, 1]} : vector<2x8x32xf32> to vector<2x8x8xf32>
    %43 = vector.extract_strided_slice %11 {offsets = [0, 0, 16], sizes = [2, 16, 8], strides = [1, 1, 1]} : vector<2x16x64xf32> to vector<2x16x8xf32>
    "tpu.trace_start"() <{level = 10 : i32, message = "bqd,bkd->bqk"}> : () -> ()
    %cst_15 = arith.constant dense<0.000000e+00> : vector<2x8x16xf32>
    %44 = tpu.matmul %42, %43, %cst_15 {dimension_numbers = #tpu.dot_dimension_numbers<[2], [2], [1], [1], [0, 0, 0, 1, 1, 1], [0], [0]>} : vector<2x8x8xf32>, vector<2x16x8xf32>, vector<2x8x16xf32> -> vector<2x8x16xf32>
    "tpu.trace_stop"() : () -> ()
    %cst_16 = arith.constant dense<0xFF800000> : vector<2x8xf32>
    %45 = vector.multi_reduction <maximumf>, %44, %cst_16 [2] : vector<2x8x16xf32> to vector<2x8xf32>
    %46 = vector.shape_cast %45 : vector<2x8xf32> to vector<2x8x1xf32>
    %47 = vector.broadcast %46 : vector<2x8x1xf32> to vector<2x8x16xf32>
    %48 = arith.subf %44, %47 : vector<2x8x16xf32>
    %49 = math.exp %48 : vector<2x8x16xf32>
    %cst_17 = arith.constant dense<0.000000e+00> : vector<2x8xf32>
    %50 = vector.multi_reduction <add>, %49, %cst_17 [2] : vector<2x8x16xf32> to vector<2x8xf32>
    %51 = vector.shape_cast %50 : vector<2x8xf32> to vector<2x8x1xf32>
    %52 = tpu.reciprocal %51 {approx = true} : vector<2x8x1xf32> -> vector<2x8x1xf32>
    %53 = vector.broadcast %52 : vector<2x8x1xf32> to vector<2x8x16xf32>
    %54 = arith.mulf %49, %53 : vector<2x8x16xf32>
    %55 = vector.extract_strided_slice %11 {offsets = [0, 0, 48], sizes = [2, 16, 8], strides = [1, 1, 1]} : vector<2x16x64xf32> to vector<2x16x8xf32>
    "tpu.trace_start"() <{level = 10 : i32, message = "bqk,bkd->bqd"}> : () -> ()
    %cst_18 = arith.constant dense<0.000000e+00> : vector<2x8x8xf32>
    %56 = tpu.matmul %54, %55, %cst_18 {dimension_numbers = #tpu.dot_dimension_numbers<[2], [1], [1], [2], [0, 0, 0, 1, 1, 2], [0], [0]>} : vector<2x8x16xf32>, vector<2x16x8xf32>, vector<2x8x8xf32> -> vector<2x8x8xf32>
    "tpu.trace_stop"() : () -> ()
    %57 = vector.extract_strided_slice %4 {offsets = [0, 0, 24], sizes = [2, 8, 8], strides = [1, 1, 1]} : vector<2x8x32xf32> to vector<2x8x8xf32>
    %58 = vector.extract_strided_slice %11 {offsets = [0, 0, 24], sizes = [2, 16, 8], strides = [1, 1, 1]} : vector<2x16x64xf32> to vector<2x16x8xf32>
    "tpu.trace_start"() <{level = 10 : i32, message = "bqd,bkd->bqk"}> : () -> ()
    %cst_19 = arith.constant dense<0.000000e+00> : vector<2x8x16xf32>
    %59 = tpu.matmul %57, %58, %cst_19 {dimension_numbers = #tpu.dot_dimension_numbers<[2], [2], [1], [1], [0, 0, 0, 1, 1, 1], [0], [0]>} : vector<2x8x8xf32>, vector<2x16x8xf32>, vector<2x8x16xf32> -> vector<2x8x16xf32>
    "tpu.trace_stop"() : () -> ()
    %cst_20 = arith.constant dense<0xFF800000> : vector<2x8xf32>
    %60 = vector.multi_reduction <maximumf>, %59, %cst_20 [2] : vector<2x8x16xf32> to vector<2x8xf32>
    %61 = vector.shape_cast %60 : vector<2x8xf32> to vector<2x8x1xf32>
    %62 = vector.broadcast %61 : vector<2x8x1xf32> to vector<2x8x16xf32>
    %63 = arith.subf %59, %62 : vector<2x8x16xf32>
    %64 = math.exp %63 : vector<2x8x16xf32>
    %cst_21 = arith.constant dense<0.000000e+00> : vector<2x8xf32>
    %65 = vector.multi_reduction <add>, %64, %cst_21 [2] : vector<2x8x16xf32> to vector<2x8xf32>
    %66 = vector.shape_cast %65 : vector<2x8xf32> to vector<2x8x1xf32>
    %67 = tpu.reciprocal %66 {approx = true} : vector<2x8x1xf32> -> vector<2x8x1xf32>
    %68 = vector.broadcast %67 : vector<2x8x1xf32> to vector<2x8x16xf32>
    %69 = arith.mulf %64, %68 : vector<2x8x16xf32>
    %70 = vector.extract_strided_slice %11 {offsets = [0, 0, 56], sizes = [2, 16, 8], strides = [1, 1, 1]} : vector<2x16x64xf32> to vector<2x16x8xf32>
    "tpu.trace_start"() <{level = 10 : i32, message = "bqk,bkd->bqd"}> : () -> ()
    %cst_22 = arith.constant dense<0.000000e+00> : vector<2x8x8xf32>
    %71 = tpu.matmul %69, %70, %cst_22 {dimension_numbers = #tpu.dot_dimension_numbers<[2], [1], [1], [2], [0, 0, 0, 1, 1, 2], [0], [0]>} : vector<2x8x16xf32>, vector<2x16x8xf32>, vector<2x8x8xf32> -> vector<2x8x8xf32>
    "tpu.trace_stop"() : () -> ()
    %72 = tpu.concatenate %26, %41, %56, %71 in 2 : vector<2x8x8xf32>, vector<2x8x8xf32>, vector<2x8x8xf32>, vector<2x8x8xf32> -> vector<2x8x32xf32>
    %73 = arith.addf %4, %72 : vector<2x8x32xf32>
    %74 = vector.shape_cast %73 : vector<2x8x32xf32> to vector<16x32xf32>
    %c3 = arith.constant 3 : index
    %c0_23 = arith.constant 0 : index
    %75 = vector.load %arg2[%c3, %c0_23] : memref<48x64xf32, #tpu.memory_space<vmem>>, vector<1x32xf32>
    %c4 = arith.constant 4 : index
    %c0_24 = arith.constant 0 : index
    %76 = vector.load %arg2[%c4, %c0_24] : memref<48x64xf32, #tpu.memory_space<vmem>>, vector<1x32xf32>
    %cst_25 = arith.constant dense<0.000000e+00> : vector<16xf32>
    %77 = vector.multi_reduction <add>, %74, %cst_25 [1] : vector<16x32xf32> to vector<16xf32>
    %78 = vector.shape_cast %77 : vector<16xf32> to vector<16x1xf32>
    %cst_26 = arith.constant 3.200000e+01 : f32
    %79 = vector.broadcast %cst_26 : f32 to vector<16x1xf32>
    %80 = arith.divf %78, %79 : vector<16x1xf32>
    %81 = vector.broadcast %80 : vector<16x1xf32> to vector<16x32xf32>
    %82 = arith.subf %74, %81 : vector<16x32xf32>
    %83 = arith.mulf %82, %82 : vector<16x32xf32>
    %cst_27 = arith.constant dense<0.000000e+00> : vector<16xf32>
    %84 = vector.multi_reduction <add>, %83, %cst_27 [1] : vector<16x32xf32> to vector<16xf32>
    %85 = vector.shape_cast %84 : vector<16xf32> to vector<16x1xf32>
    %cst_28 = arith.constant 3.200000e+01 : f32
    %86 = vector.broadcast %cst_28 : f32 to vector<16x1xf32>
    %87 = arith.divf %85, %86 : vector<16x1xf32>
    %88 = vector.broadcast %80 : vector<16x1xf32> to vector<16x32xf32>
    %89 = arith.subf %74, %88 : vector<16x32xf32>
    %cst_29 = arith.constant 9.99999974E-6 : f32
    %90 = vector.broadcast %cst_29 : f32 to vector<16x1xf32>
    %91 = arith.addf %87, %90 : vector<16x1xf32>
    %92 = math.rsqrt %91 : vector<16x1xf32>
    %93 = vector.broadcast %92 : vector<16x1xf32> to vector<16x32xf32>
    %94 = arith.mulf %89, %93 : vector<16x32xf32>
    %95 = vector.broadcast %75 : vector<1x32xf32> to vector<16x32xf32>
    %96 = arith.mulf %94, %95 : vector<16x32xf32>
    %97 = vector.broadcast %76 : vector<1x32xf32> to vector<16x32xf32>
    %98 = arith.addf %96, %97 : vector<16x32xf32>
    %c8 = arith.constant 8 : index
    %c0_30 = arith.constant 0 : index
    %99 = vector.load %arg1[%c8, %c0_30] : memref<416x64xf32, #tpu.memory_space<vmem>>, vector<32x32xf32>
    %c2 = arith.constant 2 : index
    %c0_31 = arith.constant 0 : index
    %100 = vector.load %arg2[%c2, %c0_31] : memref<48x64xf32, #tpu.memory_space<vmem>>, vector<1x32xf32>
    %cst_32 = arith.constant dense<0.000000e+00> : vector<16x32xf32>
    %101 = tpu.matmul %98, %99, %cst_32 {dimension_numbers = #tpu.dot_dimension_numbers<[1], [0], [0], [1], [0, 0, 1, 1], [], []>} : vector<16x32xf32>, vector<32x32xf32>, vector<16x32xf32> -> vector<16x32xf32>
    %102 = vector.broadcast %100 : vector<1x32xf32> to vector<16x32xf32>
    %103 = arith.addf %101, %102 : vector<16x32xf32>
    %cst_33 = arith.constant 0.000000e+00 : f32
    %104 = vector.broadcast %cst_33 : f32 to vector<16x32xf32>
    %105 = arith.maximumf %103, %104 : vector<16x32xf32>
    %106 = arith.addf %98, %105 : vector<16x32xf32>
    %c5 = arith.constant 5 : index
    %c0_34 = arith.constant 0 : index
    %107 = vector.load %arg2[%c5, %c0_34] : memref<48x64xf32, #tpu.memory_space<vmem>>, vector<1x32xf32>
    %c6 = arith.constant 6 : index
    %c0_35 = arith.constant 0 : index
    %108 = vector.load %arg2[%c6, %c0_35] : memref<48x64xf32, #tpu.memory_space<vmem>>, vector<1x32xf32>
    %cst_36 = arith.constant dense<0.000000e+00> : vector<16xf32>
    %109 = vector.multi_reduction <add>, %106, %cst_36 [1] : vector<16x32xf32> to vector<16xf32>
    %110 = vector.shape_cast %109 : vector<16xf32> to vector<16x1xf32>
    %cst_37 = arith.constant 3.200000e+01 : f32
    %111 = vector.broadcast %cst_37 : f32 to vector<16x1xf32>
    %112 = arith.divf %110, %111 : vector<16x1xf32>
    %113 = vector.broadcast %112 : vector<16x1xf32> to vector<16x32xf32>
    %114 = arith.subf %106, %113 : vector<16x32xf32>
    %115 = arith.mulf %114, %114 : vector<16x32xf32>
    %cst_38 = arith.constant dense<0.000000e+00> : vector<16xf32>
    %116 = vector.multi_reduction <add>, %115, %cst_38 [1] : vector<16x32xf32> to vector<16xf32>
    %117 = vector.shape_cast %116 : vector<16xf32> to vector<16x1xf32>
    %cst_39 = arith.constant 3.200000e+01 : f32
    %118 = vector.broadcast %cst_39 : f32 to vector<16x1xf32>
    %119 = arith.divf %117, %118 : vector<16x1xf32>
    %120 = vector.broadcast %112 : vector<16x1xf32> to vector<16x32xf32>
    %121 = arith.subf %106, %120 : vector<16x32xf32>
    %cst_40 = arith.constant 9.99999974E-6 : f32
    %122 = vector.broadcast %cst_40 : f32 to vector<16x1xf32>
    %123 = arith.addf %119, %122 : vector<16x1xf32>
    %124 = math.rsqrt %123 : vector<16x1xf32>
    %125 = vector.broadcast %124 : vector<16x1xf32> to vector<16x32xf32>
    %126 = arith.mulf %121, %125 : vector<16x32xf32>
    %127 = vector.broadcast %107 : vector<1x32xf32> to vector<16x32xf32>
    %128 = arith.mulf %126, %127 : vector<16x32xf32>
    %129 = vector.broadcast %108 : vector<1x32xf32> to vector<16x32xf32>
    %130 = arith.addf %128, %129 : vector<16x32xf32>
    %131 = vector.shape_cast %130 : vector<16x32xf32> to vector<2x8x32xf32>
    %c40 = arith.constant 40 : index
    %c0_41 = arith.constant 0 : index
    %132 = vector.load %arg1[%c40, %c0_41] : memref<416x64xf32, #tpu.memory_space<vmem>>, vector<8x32xf32>
    %c8_42 = arith.constant 8 : index
    %c0_43 = arith.constant 0 : index
    %133 = vector.load %arg2[%c8_42, %c0_43] : memref<48x64xf32, #tpu.memory_space<vmem>>, vector<1x32xf32>
    %134 = vector.shape_cast %0 : vector<2x16x8xf32> to vector<32x8xf32>
    %cst_44 = arith.constant dense<0.000000e+00> : vector<32x32xf32>
    %135 = tpu.matmul %134, %132, %cst_44 {dimension_numbers = #tpu.dot_dimension_numbers<[1], [0], [0], [1], [0, 0, 1, 1], [], []>} : vector<32x8xf32>, vector<8x32xf32>, vector<32x32xf32> -> vector<32x32xf32>
    %136 = vector.broadcast %133 : vector<1x32xf32> to vector<32x32xf32>
    %137 = arith.addf %135, %136 : vector<32x32xf32>
    %138 = vector.shape_cast %137 : vector<32x32xf32> to vector<2x16x32xf32>
    %c48 = arith.constant 48 : index
    %c0_45 = arith.constant 0 : index
    %139 = vector.load %arg1[%c48, %c0_45] : memref<416x64xf32, #tpu.memory_space<vmem>>, vector<32x64xf32>
    %c9 = arith.constant 9 : index
    %c0_46 = arith.constant 0 : index
    %140 = vector.load %arg2[%c9, %c0_46] : memref<48x64xf32, #tpu.memory_space<vmem>>, vector<1x64xf32>
    %141 = vector.shape_cast %131 : vector<2x8x32xf32> to vector<16x32xf32>
    %cst_47 = arith.constant dense<0.000000e+00> : vector<16x64xf32>
    %142 = tpu.matmul %141, %139, %cst_47 {dimension_numbers = #tpu.dot_dimension_numbers<[1], [0], [0], [1], [0, 0, 1, 1], [], []>} : vector<16x32xf32>, vector<32x64xf32>, vector<16x64xf32> -> vector<16x64xf32>
    %143 = vector.broadcast %140 : vector<1x64xf32> to vector<16x64xf32>
    %144 = arith.addf %142, %143 : vector<16x64xf32>
    %145 = vector.shape_cast %144 : vector<16x64xf32> to vector<2x8x64xf32>
    %146 = vector.extract_strided_slice %138 {offsets = [0, 0, 0], sizes = [2, 16, 8], strides = [1, 1, 1]} : vector<2x16x32xf32> to vector<2x16x8xf32>
    %147 = vector.extract_strided_slice %145 {offsets = [0, 0, 0], sizes = [2, 8, 8], strides = [1, 1, 1]} : vector<2x8x64xf32> to vector<2x8x8xf32>
    "tpu.trace_start"() <{level = 10 : i32, message = "bqd,bkd->bqk"}> : () -> ()
    %cst_48 = arith.constant dense<0.000000e+00> : vector<2x16x8xf32>
    %148 = tpu.matmul %146, %147, %cst_48 {dimension_numbers = #tpu.dot_dimension_numbers<[2], [2], [1], [1], [0, 0, 0, 1, 1, 1], [0], [0]>} : vector<2x16x8xf32>, vector<2x8x8xf32>, vector<2x16x8xf32> -> vector<2x16x8xf32>
    "tpu.trace_stop"() : () -> ()
    %cst_49 = arith.constant dense<0xFF800000> : vector<2x16xf32>
    %149 = vector.multi_reduction <maximumf>, %148, %cst_49 [2] : vector<2x16x8xf32> to vector<2x16xf32>
    %150 = vector.shape_cast %149 : vector<2x16xf32> to vector<2x16x1xf32>
    %151 = vector.broadcast %150 : vector<2x16x1xf32> to vector<2x16x8xf32>
    %152 = arith.subf %148, %151 : vector<2x16x8xf32>
    %153 = math.exp %152 : vector<2x16x8xf32>
    %cst_50 = arith.constant dense<0.000000e+00> : vector<2x16xf32>
    %154 = vector.multi_reduction <add>, %153, %cst_50 [2] : vector<2x16x8xf32> to vector<2x16xf32>
    %155 = vector.shape_cast %154 : vector<2x16xf32> to vector<2x16x1xf32>
    %156 = tpu.reciprocal %155 {approx = true} : vector<2x16x1xf32> -> vector<2x16x1xf32>
    %157 = vector.broadcast %156 : vector<2x16x1xf32> to vector<2x16x8xf32>
    %158 = arith.mulf %153, %157 : vector<2x16x8xf32>
    %159 = vector.extract_strided_slice %145 {offsets = [0, 0, 32], sizes = [2, 8, 8], strides = [1, 1, 1]} : vector<2x8x64xf32> to vector<2x8x8xf32>
    "tpu.trace_start"() <{level = 10 : i32, message = "bqk,bkd->bqd"}> : () -> ()
    %cst_51 = arith.constant dense<0.000000e+00> : vector<2x16x8xf32>
    %160 = tpu.matmul %158, %159, %cst_51 {dimension_numbers = #tpu.dot_dimension_numbers<[2], [1], [1], [2], [0, 0, 0, 1, 1, 2], [0], [0]>} : vector<2x16x8xf32>, vector<2x8x8xf32>, vector<2x16x8xf32> -> vector<2x16x8xf32>
    "tpu.trace_stop"() : () -> ()
    %161 = vector.extract_strided_slice %138 {offsets = [0, 0, 8], sizes = [2, 16, 8], strides = [1, 1, 1]} : vector<2x16x32xf32> to vector<2x16x8xf32>
    %162 = vector.extract_strided_slice %145 {offsets = [0, 0, 8], sizes = [2, 8, 8], strides = [1, 1, 1]} : vector<2x8x64xf32> to vector<2x8x8xf32>
    "tpu.trace_start"() <{level = 10 : i32, message = "bqd,bkd->bqk"}> : () -> ()
    %cst_52 = arith.constant dense<0.000000e+00> : vector<2x16x8xf32>
    %163 = tpu.matmul %161, %162, %cst_52 {dimension_numbers = #tpu.dot_dimension_numbers<[2], [2], [1], [1], [0, 0, 0, 1, 1, 1], [0], [0]>} : vector<2x16x8xf32>, vector<2x8x8xf32>, vector<2x16x8xf32> -> vector<2x16x8xf32>
    "tpu.trace_stop"() : () -> ()
    %cst_53 = arith.constant dense<0xFF800000> : vector<2x16xf32>
    %164 = vector.multi_reduction <maximumf>, %163, %cst_53 [2] : vector<2x16x8xf32> to vector<2x16xf32>
    %165 = vector.shape_cast %164 : vector<2x16xf32> to vector<2x16x1xf32>
    %166 = vector.broadcast %165 : vector<2x16x1xf32> to vector<2x16x8xf32>
    %167 = arith.subf %163, %166 : vector<2x16x8xf32>
    %168 = math.exp %167 : vector<2x16x8xf32>
    %cst_54 = arith.constant dense<0.000000e+00> : vector<2x16xf32>
    %169 = vector.multi_reduction <add>, %168, %cst_54 [2] : vector<2x16x8xf32> to vector<2x16xf32>
    %170 = vector.shape_cast %169 : vector<2x16xf32> to vector<2x16x1xf32>
    %171 = tpu.reciprocal %170 {approx = true} : vector<2x16x1xf32> -> vector<2x16x1xf32>
    %172 = vector.broadcast %171 : vector<2x16x1xf32> to vector<2x16x8xf32>
    %173 = arith.mulf %168, %172 : vector<2x16x8xf32>
    %174 = vector.extract_strided_slice %145 {offsets = [0, 0, 40], sizes = [2, 8, 8], strides = [1, 1, 1]} : vector<2x8x64xf32> to vector<2x8x8xf32>
    "tpu.trace_start"() <{level = 10 : i32, message = "bqk,bkd->bqd"}> : () -> ()
    %cst_55 = arith.constant dense<0.000000e+00> : vector<2x16x8xf32>
    %175 = tpu.matmul %173, %174, %cst_55 {dimension_numbers = #tpu.dot_dimension_numbers<[2], [1], [1], [2], [0, 0, 0, 1, 1, 2], [0], [0]>} : vector<2x16x8xf32>, vector<2x8x8xf32>, vector<2x16x8xf32> -> vector<2x16x8xf32>
    "tpu.trace_stop"() : () -> ()
    %176 = vector.extract_strided_slice %138 {offsets = [0, 0, 16], sizes = [2, 16, 8], strides = [1, 1, 1]} : vector<2x16x32xf32> to vector<2x16x8xf32>
    %177 = vector.extract_strided_slice %145 {offsets = [0, 0, 16], sizes = [2, 8, 8], strides = [1, 1, 1]} : vector<2x8x64xf32> to vector<2x8x8xf32>
    "tpu.trace_start"() <{level = 10 : i32, message = "bqd,bkd->bqk"}> : () -> ()
    %cst_56 = arith.constant dense<0.000000e+00> : vector<2x16x8xf32>
    %178 = tpu.matmul %176, %177, %cst_56 {dimension_numbers = #tpu.dot_dimension_numbers<[2], [2], [1], [1], [0, 0, 0, 1, 1, 1], [0], [0]>} : vector<2x16x8xf32>, vector<2x8x8xf32>, vector<2x16x8xf32> -> vector<2x16x8xf32>
    "tpu.trace_stop"() : () -> ()
    %cst_57 = arith.constant dense<0xFF800000> : vector<2x16xf32>
    %179 = vector.multi_reduction <maximumf>, %178, %cst_57 [2] : vector<2x16x8xf32> to vector<2x16xf32>
    %180 = vector.shape_cast %179 : vector<2x16xf32> to vector<2x16x1xf32>
    %181 = vector.broadcast %180 : vector<2x16x1xf32> to vector<2x16x8xf32>
    %182 = arith.subf %178, %181 : vector<2x16x8xf32>
    %183 = math.exp %182 : vector<2x16x8xf32>
    %cst_58 = arith.constant dense<0.000000e+00> : vector<2x16xf32>
    %184 = vector.multi_reduction <add>, %183, %cst_58 [2] : vector<2x16x8xf32> to vector<2x16xf32>
    %185 = vector.shape_cast %184 : vector<2x16xf32> to vector<2x16x1xf32>
    %186 = tpu.reciprocal %185 {approx = true} : vector<2x16x1xf32> -> vector<2x16x1xf32>
    %187 = vector.broadcast %186 : vector<2x16x1xf32> to vector<2x16x8xf32>
    %188 = arith.mulf %183, %187 : vector<2x16x8xf32>
    %189 = vector.extract_strided_slice %145 {offsets = [0, 0, 48], sizes = [2, 8, 8], strides = [1, 1, 1]} : vector<2x8x64xf32> to vector<2x8x8xf32>
    "tpu.trace_start"() <{level = 10 : i32, message = "bqk,bkd->bqd"}> : () -> ()
    %cst_59 = arith.constant dense<0.000000e+00> : vector<2x16x8xf32>
    %190 = tpu.matmul %188, %189, %cst_59 {dimension_numbers = #tpu.dot_dimension_numbers<[2], [1], [1], [2], [0, 0, 0, 1, 1, 2], [0], [0]>} : vector<2x16x8xf32>, vector<2x8x8xf32>, vector<2x16x8xf32> -> vector<2x16x8xf32>
    "tpu.trace_stop"() : () -> ()
    %191 = vector.extract_strided_slice %138 {offsets = [0, 0, 24], sizes = [2, 16, 8], strides = [1, 1, 1]} : vector<2x16x32xf32> to vector<2x16x8xf32>
    %192 = vector.extract_strided_slice %145 {offsets = [0, 0, 24], sizes = [2, 8, 8], strides = [1, 1, 1]} : vector<2x8x64xf32> to vector<2x8x8xf32>
    "tpu.trace_start"() <{level = 10 : i32, message = "bqd,bkd->bqk"}> : () -> ()
    %cst_60 = arith.constant dense<0.000000e+00> : vector<2x16x8xf32>
    %193 = tpu.matmul %191, %192, %cst_60 {dimension_numbers = #tpu.dot_dimension_numbers<[2], [2], [1], [1], [0, 0, 0, 1, 1, 1], [0], [0]>} : vector<2x16x8xf32>, vector<2x8x8xf32>, vector<2x16x8xf32> -> vector<2x16x8xf32>
    "tpu.trace_stop"() : () -> ()
    %cst_61 = arith.constant dense<0xFF800000> : vector<2x16xf32>
    %194 = vector.multi_reduction <maximumf>, %193, %cst_61 [2] : vector<2x16x8xf32> to vector<2x16xf32>
    %195 = vector.shape_cast %194 : vector<2x16xf32> to vector<2x16x1xf32>
    %196 = vector.broadcast %195 : vector<2x16x1xf32> to vector<2x16x8xf32>
    %197 = arith.subf %193, %196 : vector<2x16x8xf32>
    %198 = math.exp %197 : vector<2x16x8xf32>
    %cst_62 = arith.constant dense<0.000000e+00> : vector<2x16xf32>
    %199 = vector.multi_reduction <add>, %198, %cst_62 [2] : vector<2x16x8xf32> to vector<2x16xf32>
    %200 = vector.shape_cast %199 : vector<2x16xf32> to vector<2x16x1xf32>
    %201 = tpu.reciprocal %200 {approx = true} : vector<2x16x1xf32> -> vector<2x16x1xf32>
    %202 = vector.broadcast %201 : vector<2x16x1xf32> to vector<2x16x8xf32>
    %203 = arith.mulf %198, %202 : vector<2x16x8xf32>
    %204 = vector.extract_strided_slice %145 {offsets = [0, 0, 56], sizes = [2, 8, 8], strides = [1, 1, 1]} : vector<2x8x64xf32> to vector<2x8x8xf32>
    "tpu.trace_start"() <{level = 10 : i32, message = "bqk,bkd->bqd"}> : () -> ()
    %cst_63 = arith.constant dense<0.000000e+00> : vector<2x16x8xf32>
    %205 = tpu.matmul %203, %204, %cst_63 {dimension_numbers = #tpu.dot_dimension_numbers<[2], [1], [1], [2], [0, 0, 0, 1, 1, 2], [0], [0]>} : vector<2x16x8xf32>, vector<2x8x8xf32>, vector<2x16x8xf32> -> vector<2x16x8xf32>
    "tpu.trace_stop"() : () -> ()
    %206 = tpu.concatenate %160, %175, %190, %205 in 2 : vector<2x16x8xf32>, vector<2x16x8xf32>, vector<2x16x8xf32>, vector<2x16x8xf32> -> vector<2x16x32xf32>
    %207 = arith.addf %138, %206 : vector<2x16x32xf32>
    %208 = vector.shape_cast %207 : vector<2x16x32xf32> to vector<32x32xf32>
    %c11 = arith.constant 11 : index
    %c0_64 = arith.constant 0 : index
    %209 = vector.load %arg2[%c11, %c0_64] : memref<48x64xf32, #tpu.memory_space<vmem>>, vector<1x32xf32>
    %c12 = arith.constant 12 : index
    %c0_65 = arith.constant 0 : index
    %210 = vector.load %arg2[%c12, %c0_65] : memref<48x64xf32, #tpu.memory_space<vmem>>, vector<1x32xf32>
    %cst_66 = arith.constant dense<0.000000e+00> : vector<32xf32>
    %211 = vector.multi_reduction <add>, %208, %cst_66 [1] : vector<32x32xf32> to vector<32xf32>
    %212 = vector.shape_cast %211 : vector<32xf32> to vector<32x1xf32>
    %cst_67 = arith.constant 3.200000e+01 : f32
    %213 = vector.broadcast %cst_67 : f32 to vector<32x1xf32>
    %214 = arith.divf %212, %213 : vector<32x1xf32>
    %215 = vector.broadcast %214 : vector<32x1xf32> to vector<32x32xf32>
    %216 = arith.subf %208, %215 : vector<32x32xf32>
    %217 = arith.mulf %216, %216 : vector<32x32xf32>
    %cst_68 = arith.constant dense<0.000000e+00> : vector<32xf32>
    %218 = vector.multi_reduction <add>, %217, %cst_68 [1] : vector<32x32xf32> to vector<32xf32>
    %219 = vector.shape_cast %218 : vector<32xf32> to vector<32x1xf32>
    %cst_69 = arith.constant 3.200000e+01 : f32
    %220 = vector.broadcast %cst_69 : f32 to vector<32x1xf32>
    %221 = arith.divf %219, %220 : vector<32x1xf32>
    %222 = vector.broadcast %214 : vector<32x1xf32> to vector<32x32xf32>
    %223 = arith.subf %208, %222 : vector<32x32xf32>
    %cst_70 = arith.constant 9.99999974E-6 : f32
    %224 = vector.broadcast %cst_70 : f32 to vector<32x1xf32>
    %225 = arith.addf %221, %224 : vector<32x1xf32>
    %226 = math.rsqrt %225 : vector<32x1xf32>
    %227 = vector.broadcast %226 : vector<32x1xf32> to vector<32x32xf32>
    %228 = arith.mulf %223, %227 : vector<32x32xf32>
    %229 = vector.broadcast %209 : vector<1x32xf32> to vector<32x32xf32>
    %230 = arith.mulf %228, %229 : vector<32x32xf32>
    %231 = vector.broadcast %210 : vector<1x32xf32> to vector<32x32xf32>
    %232 = arith.addf %230, %231 : vector<32x32xf32>
    %c80 = arith.constant 80 : index
    %c0_71 = arith.constant 0 : index
    %233 = vector.load %arg1[%c80, %c0_71] : memref<416x64xf32, #tpu.memory_space<vmem>>, vector<32x32xf32>
    %c10 = arith.constant 10 : index
    %c0_72 = arith.constant 0 : index
    %234 = vector.load %arg2[%c10, %c0_72] : memref<48x64xf32, #tpu.memory_space<vmem>>, vector<1x32xf32>
    %cst_73 = arith.constant dense<0.000000e+00> : vector<32x32xf32>
    %235 = tpu.matmul %232, %233, %cst_73 {dimension_numbers = #tpu.dot_dimension_numbers<[1], [0], [0], [1], [0, 0, 1, 1], [], []>} : vector<32x32xf32>, vector<32x32xf32>, vector<32x32xf32> -> vector<32x32xf32>
    %236 = vector.broadcast %234 : vector<1x32xf32> to vector<32x32xf32>
    %237 = arith.addf %235, %236 : vector<32x32xf32>
    %cst_74 = arith.constant 0.000000e+00 : f32
    %238 = vector.broadcast %cst_74 : f32 to vector<32x32xf32>
    %239 = arith.maximumf %237, %238 : vector<32x32xf32>
    %240 = arith.addf %232, %239 : vector<32x32xf32>
    %c13 = arith.constant 13 : index
    %c0_75 = arith.constant 0 : index
    %241 = vector.load %arg2[%c13, %c0_75] : memref<48x64xf32, #tpu.memory_space<vmem>>, vector<1x32xf32>
    %c14 = arith.constant 14 : index
    %c0_76 = arith.constant 0 : index
    %242 = vector.load %arg2[%c14, %c0_76] : memref<48x64xf32, #tpu.memory_space<vmem>>, vector<1x32xf32>
    %cst_77 = arith.constant dense<0.000000e+00> : vector<32xf32>
    %243 = vector.multi_reduction <add>, %240, %cst_77 [1] : vector<32x32xf32> to vector<32xf32>
    %244 = vector.shape_cast %243 : vector<32xf32> to vector<32x1xf32>
    %cst_78 = arith.constant 3.200000e+01 : f32
    %245 = vector.broadcast %cst_78 : f32 to vector<32x1xf32>
    %246 = arith.divf %244, %245 : vector<32x1xf32>
    %247 = vector.broadcast %246 : vector<32x1xf32> to vector<32x32xf32>
    %248 = arith.subf %240, %247 : vector<32x32xf32>
    %249 = arith.mulf %248, %248 : vector<32x32xf32>
    %cst_79 = arith.constant dense<0.000000e+00> : vector<32xf32>
    %250 = vector.multi_reduction <add>, %249, %cst_79 [1] : vector<32x32xf32> to vector<32xf32>
    %251 = vector.shape_cast %250 : vector<32xf32> to vector<32x1xf32>
    %cst_80 = arith.constant 3.200000e+01 : f32
    %252 = vector.broadcast %cst_80 : f32 to vector<32x1xf32>
    %253 = arith.divf %251, %252 : vector<32x1xf32>
    %254 = vector.broadcast %246 : vector<32x1xf32> to vector<32x32xf32>
    %255 = arith.subf %240, %254 : vector<32x32xf32>
    %cst_81 = arith.constant 9.99999974E-6 : f32
    %256 = vector.broadcast %cst_81 : f32 to vector<32x1xf32>
    %257 = arith.addf %253, %256 : vector<32x1xf32>
    %258 = math.rsqrt %257 : vector<32x1xf32>
    %259 = vector.broadcast %258 : vector<32x1xf32> to vector<32x32xf32>
    %260 = arith.mulf %255, %259 : vector<32x32xf32>
    %261 = vector.broadcast %241 : vector<1x32xf32> to vector<32x32xf32>
    %262 = arith.mulf %260, %261 : vector<32x32xf32>
    %263 = vector.broadcast %242 : vector<1x32xf32> to vector<32x32xf32>
    %264 = arith.addf %262, %263 : vector<32x32xf32>
    %265 = vector.shape_cast %264 : vector<32x32xf32> to vector<2x16x32xf32>
    %c8_82 = arith.constant 8 : index
    %c0_83 = arith.constant 0 : index
    %266 = vector.load %arg3[%c8_82, %c0_83] : memref<24x32xf32, #tpu.memory_space<vmem>>, vector<8x32xf32>
    %267 = vector.shape_cast %266 : vector<8x32xf32> to vector<1x8x32xf32>
    %268 = vector.shape_cast %267 : vector<1x8x32xf32> to vector<1x8x32xf32>
    %269 = vector.broadcast %268 : vector<1x8x32xf32> to vector<2x8x32xf32>
    %c112 = arith.constant 112 : index
    %c0_84 = arith.constant 0 : index
    %270 = vector.load %arg1[%c112, %c0_84] : memref<416x64xf32, #tpu.memory_space<vmem>>, vector<32x64xf32>
    %c17 = arith.constant 17 : index
    %c0_85 = arith.constant 0 : index
    %271 = vector.load %arg2[%c17, %c0_85] : memref<48x64xf32, #tpu.memory_space<vmem>>, vector<1x64xf32>
    %272 = vector.shape_cast %265 : vector<2x16x32xf32> to vector<32x32xf32>
    %cst_86 = arith.constant dense<0.000000e+00> : vector<32x64xf32>
    %273 = tpu.matmul %272, %270, %cst_86 {dimension_numbers = #tpu.dot_dimension_numbers<[1], [0], [0], [1], [0, 0, 1, 1], [], []>} : vector<32x32xf32>, vector<32x64xf32>, vector<32x64xf32> -> vector<32x64xf32>
    %274 = vector.broadcast %271 : vector<1x64xf32> to vector<32x64xf32>
    %275 = arith.addf %273, %274 : vector<32x64xf32>
    %276 = vector.shape_cast %275 : vector<32x64xf32> to vector<2x16x64xf32>
    %277 = vector.extract_strided_slice %269 {offsets = [0, 0, 0], sizes = [2, 8, 8], strides = [1, 1, 1]} : vector<2x8x32xf32> to vector<2x8x8xf32>
    %278 = vector.extract_strided_slice %276 {offsets = [0, 0, 0], sizes = [2, 16, 8], strides = [1, 1, 1]} : vector<2x16x64xf32> to vector<2x16x8xf32>
    "tpu.trace_start"() <{level = 10 : i32, message = "bqd,bkd->bqk"}> : () -> ()
    %cst_87 = arith.constant dense<0.000000e+00> : vector<2x8x16xf32>
    %279 = tpu.matmul %277, %278, %cst_87 {dimension_numbers = #tpu.dot_dimension_numbers<[2], [2], [1], [1], [0, 0, 0, 1, 1, 1], [0], [0]>} : vector<2x8x8xf32>, vector<2x16x8xf32>, vector<2x8x16xf32> -> vector<2x8x16xf32>
    "tpu.trace_stop"() : () -> ()
    %cst_88 = arith.constant dense<0xFF800000> : vector<2x8xf32>
    %280 = vector.multi_reduction <maximumf>, %279, %cst_88 [2] : vector<2x8x16xf32> to vector<2x8xf32>
    %281 = vector.shape_cast %280 : vector<2x8xf32> to vector<2x8x1xf32>
    %282 = vector.broadcast %281 : vector<2x8x1xf32> to vector<2x8x16xf32>
    %283 = arith.subf %279, %282 : vector<2x8x16xf32>
    %284 = math.exp %283 : vector<2x8x16xf32>
    %cst_89 = arith.constant dense<0.000000e+00> : vector<2x8xf32>
    %285 = vector.multi_reduction <add>, %284, %cst_89 [2] : vector<2x8x16xf32> to vector<2x8xf32>
    %286 = vector.shape_cast %285 : vector<2x8xf32> to vector<2x8x1xf32>
    %287 = tpu.reciprocal %286 {approx = true} : vector<2x8x1xf32> -> vector<2x8x1xf32>
    %288 = vector.broadcast %287 : vector<2x8x1xf32> to vector<2x8x16xf32>
    %289 = arith.mulf %284, %288 : vector<2x8x16xf32>
    %290 = vector.extract_strided_slice %276 {offsets = [0, 0, 32], sizes = [2, 16, 8], strides = [1, 1, 1]} : vector<2x16x64xf32> to vector<2x16x8xf32>
    "tpu.trace_start"() <{level = 10 : i32, message = "bqk,bkd->bqd"}> : () -> ()
    %cst_90 = arith.constant dense<0.000000e+00> : vector<2x8x8xf32>
    %291 = tpu.matmul %289, %290, %cst_90 {dimension_numbers = #tpu.dot_dimension_numbers<[2], [1], [1], [2], [0, 0, 0, 1, 1, 2], [0], [0]>} : vector<2x8x16xf32>, vector<2x16x8xf32>, vector<2x8x8xf32> -> vector<2x8x8xf32>
    "tpu.trace_stop"() : () -> ()
    %292 = vector.extract_strided_slice %269 {offsets = [0, 0, 8], sizes = [2, 8, 8], strides = [1, 1, 1]} : vector<2x8x32xf32> to vector<2x8x8xf32>
    %293 = vector.extract_strided_slice %276 {offsets = [0, 0, 8], sizes = [2, 16, 8], strides = [1, 1, 1]} : vector<2x16x64xf32> to vector<2x16x8xf32>
    "tpu.trace_start"() <{level = 10 : i32, message = "bqd,bkd->bqk"}> : () -> ()
    %cst_91 = arith.constant dense<0.000000e+00> : vector<2x8x16xf32>
    %294 = tpu.matmul %292, %293, %cst_91 {dimension_numbers = #tpu.dot_dimension_numbers<[2], [2], [1], [1], [0, 0, 0, 1, 1, 1], [0], [0]>} : vector<2x8x8xf32>, vector<2x16x8xf32>, vector<2x8x16xf32> -> vector<2x8x16xf32>
    "tpu.trace_stop"() : () -> ()
    %cst_92 = arith.constant dense<0xFF800000> : vector<2x8xf32>
    %295 = vector.multi_reduction <maximumf>, %294, %cst_92 [2] : vector<2x8x16xf32> to vector<2x8xf32>
    %296 = vector.shape_cast %295 : vector<2x8xf32> to vector<2x8x1xf32>
    %297 = vector.broadcast %296 : vector<2x8x1xf32> to vector<2x8x16xf32>
    %298 = arith.subf %294, %297 : vector<2x8x16xf32>
    %299 = math.exp %298 : vector<2x8x16xf32>
    %cst_93 = arith.constant dense<0.000000e+00> : vector<2x8xf32>
    %300 = vector.multi_reduction <add>, %299, %cst_93 [2] : vector<2x8x16xf32> to vector<2x8xf32>
    %301 = vector.shape_cast %300 : vector<2x8xf32> to vector<2x8x1xf32>
    %302 = tpu.reciprocal %301 {approx = true} : vector<2x8x1xf32> -> vector<2x8x1xf32>
    %303 = vector.broadcast %302 : vector<2x8x1xf32> to vector<2x8x16xf32>
    %304 = arith.mulf %299, %303 : vector<2x8x16xf32>
    %305 = vector.extract_strided_slice %276 {offsets = [0, 0, 40], sizes = [2, 16, 8], strides = [1, 1, 1]} : vector<2x16x64xf32> to vector<2x16x8xf32>
    "tpu.trace_start"() <{level = 10 : i32, message = "bqk,bkd->bqd"}> : () -> ()
    %cst_94 = arith.constant dense<0.000000e+00> : vector<2x8x8xf32>
    %306 = tpu.matmul %304, %305, %cst_94 {dimension_numbers = #tpu.dot_dimension_numbers<[2], [1], [1], [2], [0, 0, 0, 1, 1, 2], [0], [0]>} : vector<2x8x16xf32>, vector<2x16x8xf32>, vector<2x8x8xf32> -> vector<2x8x8xf32>
    "tpu.trace_stop"() : () -> ()
    %307 = vector.extract_strided_slice %269 {offsets = [0, 0, 16], sizes = [2, 8, 8], strides = [1, 1, 1]} : vector<2x8x32xf32> to vector<2x8x8xf32>
    %308 = vector.extract_strided_slice %276 {offsets = [0, 0, 16], sizes = [2, 16, 8], strides = [1, 1, 1]} : vector<2x16x64xf32> to vector<2x16x8xf32>
    "tpu.trace_start"() <{level = 10 : i32, message = "bqd,bkd->bqk"}> : () -> ()
    %cst_95 = arith.constant dense<0.000000e+00> : vector<2x8x16xf32>
    %309 = tpu.matmul %307, %308, %cst_95 {dimension_numbers = #tpu.dot_dimension_numbers<[2], [2], [1], [1], [0, 0, 0, 1, 1, 1], [0], [0]>} : vector<2x8x8xf32>, vector<2x16x8xf32>, vector<2x8x16xf32> -> vector<2x8x16xf32>
    "tpu.trace_stop"() : () -> ()
    %cst_96 = arith.constant dense<0xFF800000> : vector<2x8xf32>
    %310 = vector.multi_reduction <maximumf>, %309, %cst_96 [2] : vector<2x8x16xf32> to vector<2x8xf32>
    %311 = vector.shape_cast %310 : vector<2x8xf32> to vector<2x8x1xf32>
    %312 = vector.broadcast %311 : vector<2x8x1xf32> to vector<2x8x16xf32>
    %313 = arith.subf %309, %312 : vector<2x8x16xf32>
    %314 = math.exp %313 : vector<2x8x16xf32>
    %cst_97 = arith.constant dense<0.000000e+00> : vector<2x8xf32>
    %315 = vector.multi_reduction <add>, %314, %cst_97 [2] : vector<2x8x16xf32> to vector<2x8xf32>
    %316 = vector.shape_cast %315 : vector<2x8xf32> to vector<2x8x1xf32>
    %317 = tpu.reciprocal %316 {approx = true} : vector<2x8x1xf32> -> vector<2x8x1xf32>
    %318 = vector.broadcast %317 : vector<2x8x1xf32> to vector<2x8x16xf32>
    %319 = arith.mulf %314, %318 : vector<2x8x16xf32>
    %320 = vector.extract_strided_slice %276 {offsets = [0, 0, 48], sizes = [2, 16, 8], strides = [1, 1, 1]} : vector<2x16x64xf32> to vector<2x16x8xf32>
    "tpu.trace_start"() <{level = 10 : i32, message = "bqk,bkd->bqd"}> : () -> ()
    %cst_98 = arith.constant dense<0.000000e+00> : vector<2x8x8xf32>
    %321 = tpu.matmul %319, %320, %cst_98 {dimension_numbers = #tpu.dot_dimension_numbers<[2], [1], [1], [2], [0, 0, 0, 1, 1, 2], [0], [0]>} : vector<2x8x16xf32>, vector<2x16x8xf32>, vector<2x8x8xf32> -> vector<2x8x8xf32>
    "tpu.trace_stop"() : () -> ()
    %322 = vector.extract_strided_slice %269 {offsets = [0, 0, 24], sizes = [2, 8, 8], strides = [1, 1, 1]} : vector<2x8x32xf32> to vector<2x8x8xf32>
    %323 = vector.extract_strided_slice %276 {offsets = [0, 0, 24], sizes = [2, 16, 8], strides = [1, 1, 1]} : vector<2x16x64xf32> to vector<2x16x8xf32>
    "tpu.trace_start"() <{level = 10 : i32, message = "bqd,bkd->bqk"}> : () -> ()
    %cst_99 = arith.constant dense<0.000000e+00> : vector<2x8x16xf32>
    %324 = tpu.matmul %322, %323, %cst_99 {dimension_numbers = #tpu.dot_dimension_numbers<[2], [2], [1], [1], [0, 0, 0, 1, 1, 1], [0], [0]>} : vector<2x8x8xf32>, vector<2x16x8xf32>, vector<2x8x16xf32> -> vector<2x8x16xf32>
    "tpu.trace_stop"() : () -> ()
    %cst_100 = arith.constant dense<0xFF800000> : vector<2x8xf32>
    %325 = vector.multi_reduction <maximumf>, %324, %cst_100 [2] : vector<2x8x16xf32> to vector<2x8xf32>
    %326 = vector.shape_cast %325 : vector<2x8xf32> to vector<2x8x1xf32>
    %327 = vector.broadcast %326 : vector<2x8x1xf32> to vector<2x8x16xf32>
    %328 = arith.subf %324, %327 : vector<2x8x16xf32>
    %329 = math.exp %328 : vector<2x8x16xf32>
    %cst_101 = arith.constant dense<0.000000e+00> : vector<2x8xf32>
    %330 = vector.multi_reduction <add>, %329, %cst_101 [2] : vector<2x8x16xf32> to vector<2x8xf32>
    %331 = vector.shape_cast %330 : vector<2x8xf32> to vector<2x8x1xf32>
    %332 = tpu.reciprocal %331 {approx = true} : vector<2x8x1xf32> -> vector<2x8x1xf32>
    %333 = vector.broadcast %332 : vector<2x8x1xf32> to vector<2x8x16xf32>
    %334 = arith.mulf %329, %333 : vector<2x8x16xf32>
    %335 = vector.extract_strided_slice %276 {offsets = [0, 0, 56], sizes = [2, 16, 8], strides = [1, 1, 1]} : vector<2x16x64xf32> to vector<2x16x8xf32>
    "tpu.trace_start"() <{level = 10 : i32, message = "bqk,bkd->bqd"}> : () -> ()
    %cst_102 = arith.constant dense<0.000000e+00> : vector<2x8x8xf32>
    %336 = tpu.matmul %334, %335, %cst_102 {dimension_numbers = #tpu.dot_dimension_numbers<[2], [1], [1], [2], [0, 0, 0, 1, 1, 2], [0], [0]>} : vector<2x8x16xf32>, vector<2x16x8xf32>, vector<2x8x8xf32> -> vector<2x8x8xf32>
    "tpu.trace_stop"() : () -> ()
    %337 = tpu.concatenate %291, %306, %321, %336 in 2 : vector<2x8x8xf32>, vector<2x8x8xf32>, vector<2x8x8xf32>, vector<2x8x8xf32> -> vector<2x8x32xf32>
    %338 = arith.addf %269, %337 : vector<2x8x32xf32>
    %339 = vector.shape_cast %338 : vector<2x8x32xf32> to vector<16x32xf32>
    %c19 = arith.constant 19 : index
    %c0_103 = arith.constant 0 : index
    %340 = vector.load %arg2[%c19, %c0_103] : memref<48x64xf32, #tpu.memory_space<vmem>>, vector<1x32xf32>
    %c20 = arith.constant 20 : index
    %c0_104 = arith.constant 0 : index
    %341 = vector.load %arg2[%c20, %c0_104] : memref<48x64xf32, #tpu.memory_space<vmem>>, vector<1x32xf32>
    %cst_105 = arith.constant dense<0.000000e+00> : vector<16xf32>
    %342 = vector.multi_reduction <add>, %339, %cst_105 [1] : vector<16x32xf32> to vector<16xf32>
    %343 = vector.shape_cast %342 : vector<16xf32> to vector<16x1xf32>
    %cst_106 = arith.constant 3.200000e+01 : f32
    %344 = vector.broadcast %cst_106 : f32 to vector<16x1xf32>
    %345 = arith.divf %343, %344 : vector<16x1xf32>
    %346 = vector.broadcast %345 : vector<16x1xf32> to vector<16x32xf32>
    %347 = arith.subf %339, %346 : vector<16x32xf32>
    %348 = arith.mulf %347, %347 : vector<16x32xf32>
    %cst_107 = arith.constant dense<0.000000e+00> : vector<16xf32>
    %349 = vector.multi_reduction <add>, %348, %cst_107 [1] : vector<16x32xf32> to vector<16xf32>
    %350 = vector.shape_cast %349 : vector<16xf32> to vector<16x1xf32>
    %cst_108 = arith.constant 3.200000e+01 : f32
    %351 = vector.broadcast %cst_108 : f32 to vector<16x1xf32>
    %352 = arith.divf %350, %351 : vector<16x1xf32>
    %353 = vector.broadcast %345 : vector<16x1xf32> to vector<16x32xf32>
    %354 = arith.subf %339, %353 : vector<16x32xf32>
    %cst_109 = arith.constant 9.99999974E-6 : f32
    %355 = vector.broadcast %cst_109 : f32 to vector<16x1xf32>
    %356 = arith.addf %352, %355 : vector<16x1xf32>
    %357 = math.rsqrt %356 : vector<16x1xf32>
    %358 = vector.broadcast %357 : vector<16x1xf32> to vector<16x32xf32>
    %359 = arith.mulf %354, %358 : vector<16x32xf32>
    %360 = vector.broadcast %340 : vector<1x32xf32> to vector<16x32xf32>
    %361 = arith.mulf %359, %360 : vector<16x32xf32>
    %362 = vector.broadcast %341 : vector<1x32xf32> to vector<16x32xf32>
    %363 = arith.addf %361, %362 : vector<16x32xf32>
    %c144 = arith.constant 144 : index
    %c0_110 = arith.constant 0 : index
    %364 = vector.load %arg1[%c144, %c0_110] : memref<416x64xf32, #tpu.memory_space<vmem>>, vector<32x32xf32>
    %c18 = arith.constant 18 : index
    %c0_111 = arith.constant 0 : index
    %365 = vector.load %arg2[%c18, %c0_111] : memref<48x64xf32, #tpu.memory_space<vmem>>, vector<1x32xf32>
    %cst_112 = arith.constant dense<0.000000e+00> : vector<16x32xf32>
    %366 = tpu.matmul %363, %364, %cst_112 {dimension_numbers = #tpu.dot_dimension_numbers<[1], [0], [0], [1], [0, 0, 1, 1], [], []>} : vector<16x32xf32>, vector<32x32xf32>, vector<16x32xf32> -> vector<16x32xf32>
    %367 = vector.broadcast %365 : vector<1x32xf32> to vector<16x32xf32>
    %368 = arith.addf %366, %367 : vector<16x32xf32>
    %cst_113 = arith.constant 0.000000e+00 : f32
    %369 = vector.broadcast %cst_113 : f32 to vector<16x32xf32>
    %370 = arith.maximumf %368, %369 : vector<16x32xf32>
    %371 = arith.addf %363, %370 : vector<16x32xf32>
    %c21 = arith.constant 21 : index
    %c0_114 = arith.constant 0 : index
    %372 = vector.load %arg2[%c21, %c0_114] : memref<48x64xf32, #tpu.memory_space<vmem>>, vector<1x32xf32>
    %c22 = arith.constant 22 : index
    %c0_115 = arith.constant 0 : index
    %373 = vector.load %arg2[%c22, %c0_115] : memref<48x64xf32, #tpu.memory_space<vmem>>, vector<1x32xf32>
    %cst_116 = arith.constant dense<0.000000e+00> : vector<16xf32>
    %374 = vector.multi_reduction <add>, %371, %cst_116 [1] : vector<16x32xf32> to vector<16xf32>
    %375 = vector.shape_cast %374 : vector<16xf32> to vector<16x1xf32>
    %cst_117 = arith.constant 3.200000e+01 : f32
    %376 = vector.broadcast %cst_117 : f32 to vector<16x1xf32>
    %377 = arith.divf %375, %376 : vector<16x1xf32>
    %378 = vector.broadcast %377 : vector<16x1xf32> to vector<16x32xf32>
    %379 = arith.subf %371, %378 : vector<16x32xf32>
    %380 = arith.mulf %379, %379 : vector<16x32xf32>
    %cst_118 = arith.constant dense<0.000000e+00> : vector<16xf32>
    %381 = vector.multi_reduction <add>, %380, %cst_118 [1] : vector<16x32xf32> to vector<16xf32>
    %382 = vector.shape_cast %381 : vector<16xf32> to vector<16x1xf32>
    %cst_119 = arith.constant 3.200000e+01 : f32
    %383 = vector.broadcast %cst_119 : f32 to vector<16x1xf32>
    %384 = arith.divf %382, %383 : vector<16x1xf32>
    %385 = vector.broadcast %377 : vector<16x1xf32> to vector<16x32xf32>
    %386 = arith.subf %371, %385 : vector<16x32xf32>
    %cst_120 = arith.constant 9.99999974E-6 : f32
    %387 = vector.broadcast %cst_120 : f32 to vector<16x1xf32>
    %388 = arith.addf %384, %387 : vector<16x1xf32>
    %389 = math.rsqrt %388 : vector<16x1xf32>
    %390 = vector.broadcast %389 : vector<16x1xf32> to vector<16x32xf32>
    %391 = arith.mulf %386, %390 : vector<16x32xf32>
    %392 = vector.broadcast %372 : vector<1x32xf32> to vector<16x32xf32>
    %393 = arith.mulf %391, %392 : vector<16x32xf32>
    %394 = vector.broadcast %373 : vector<1x32xf32> to vector<16x32xf32>
    %395 = arith.addf %393, %394 : vector<16x32xf32>
    %396 = vector.shape_cast %395 : vector<16x32xf32> to vector<2x8x32xf32>
    %c176 = arith.constant 176 : index
    %c0_121 = arith.constant 0 : index
    %397 = vector.load %arg1[%c176, %c0_121] : memref<416x64xf32, #tpu.memory_space<vmem>>, vector<32x32xf32>
    %c24 = arith.constant 24 : index
    %c0_122 = arith.constant 0 : index
    %398 = vector.load %arg2[%c24, %c0_122] : memref<48x64xf32, #tpu.memory_space<vmem>>, vector<1x32xf32>
    %399 = vector.shape_cast %265 : vector<2x16x32xf32> to vector<32x32xf32>
    %cst_123 = arith.constant dense<0.000000e+00> : vector<32x32xf32>
    %400 = tpu.matmul %399, %397, %cst_123 {dimension_numbers = #tpu.dot_dimension_numbers<[1], [0], [0], [1], [0, 0, 1, 1], [], []>} : vector<32x32xf32>, vector<32x32xf32>, vector<32x32xf32> -> vector<32x32xf32>
    %401 = vector.broadcast %398 : vector<1x32xf32> to vector<32x32xf32>
    %402 = arith.addf %400, %401 : vector<32x32xf32>
    %403 = vector.shape_cast %402 : vector<32x32xf32> to vector<2x16x32xf32>
    %c208 = arith.constant 208 : index
    %c0_124 = arith.constant 0 : index
    %404 = vector.load %arg1[%c208, %c0_124] : memref<416x64xf32, #tpu.memory_space<vmem>>, vector<32x64xf32>
    %c25 = arith.constant 25 : index
    %c0_125 = arith.constant 0 : index
    %405 = vector.load %arg2[%c25, %c0_125] : memref<48x64xf32, #tpu.memory_space<vmem>>, vector<1x64xf32>
    %406 = vector.shape_cast %396 : vector<2x8x32xf32> to vector<16x32xf32>
    %cst_126 = arith.constant dense<0.000000e+00> : vector<16x64xf32>
    %407 = tpu.matmul %406, %404, %cst_126 {dimension_numbers = #tpu.dot_dimension_numbers<[1], [0], [0], [1], [0, 0, 1, 1], [], []>} : vector<16x32xf32>, vector<32x64xf32>, vector<16x64xf32> -> vector<16x64xf32>
    %408 = vector.broadcast %405 : vector<1x64xf32> to vector<16x64xf32>
    %409 = arith.addf %407, %408 : vector<16x64xf32>
    %410 = vector.shape_cast %409 : vector<16x64xf32> to vector<2x8x64xf32>
    %411 = vector.extract_strided_slice %403 {offsets = [0, 0, 0], sizes = [2, 16, 8], strides = [1, 1, 1]} : vector<2x16x32xf32> to vector<2x16x8xf32>
    %412 = vector.extract_strided_slice %410 {offsets = [0, 0, 0], sizes = [2, 8, 8], strides = [1, 1, 1]} : vector<2x8x64xf32> to vector<2x8x8xf32>
    "tpu.trace_start"() <{level = 10 : i32, message = "bqd,bkd->bqk"}> : () -> ()
    %cst_127 = arith.constant dense<0.000000e+00> : vector<2x16x8xf32>
    %413 = tpu.matmul %411, %412, %cst_127 {dimension_numbers = #tpu.dot_dimension_numbers<[2], [2], [1], [1], [0, 0, 0, 1, 1, 1], [0], [0]>} : vector<2x16x8xf32>, vector<2x8x8xf32>, vector<2x16x8xf32> -> vector<2x16x8xf32>
    "tpu.trace_stop"() : () -> ()
    %cst_128 = arith.constant dense<0xFF800000> : vector<2x16xf32>
    %414 = vector.multi_reduction <maximumf>, %413, %cst_128 [2] : vector<2x16x8xf32> to vector<2x16xf32>
    %415 = vector.shape_cast %414 : vector<2x16xf32> to vector<2x16x1xf32>
    %416 = vector.broadcast %415 : vector<2x16x1xf32> to vector<2x16x8xf32>
    %417 = arith.subf %413, %416 : vector<2x16x8xf32>
    %418 = math.exp %417 : vector<2x16x8xf32>
    %cst_129 = arith.constant dense<0.000000e+00> : vector<2x16xf32>
    %419 = vector.multi_reduction <add>, %418, %cst_129 [2] : vector<2x16x8xf32> to vector<2x16xf32>
    %420 = vector.shape_cast %419 : vector<2x16xf32> to vector<2x16x1xf32>
    %421 = tpu.reciprocal %420 {approx = true} : vector<2x16x1xf32> -> vector<2x16x1xf32>
    %422 = vector.broadcast %421 : vector<2x16x1xf32> to vector<2x16x8xf32>
    %423 = arith.mulf %418, %422 : vector<2x16x8xf32>
    %424 = vector.extract_strided_slice %410 {offsets = [0, 0, 32], sizes = [2, 8, 8], strides = [1, 1, 1]} : vector<2x8x64xf32> to vector<2x8x8xf32>
    "tpu.trace_start"() <{level = 10 : i32, message = "bqk,bkd->bqd"}> : () -> ()
    %cst_130 = arith.constant dense<0.000000e+00> : vector<2x16x8xf32>
    %425 = tpu.matmul %423, %424, %cst_130 {dimension_numbers = #tpu.dot_dimension_numbers<[2], [1], [1], [2], [0, 0, 0, 1, 1, 2], [0], [0]>} : vector<2x16x8xf32>, vector<2x8x8xf32>, vector<2x16x8xf32> -> vector<2x16x8xf32>
    "tpu.trace_stop"() : () -> ()
    %426 = vector.extract_strided_slice %403 {offsets = [0, 0, 8], sizes = [2, 16, 8], strides = [1, 1, 1]} : vector<2x16x32xf32> to vector<2x16x8xf32>
    %427 = vector.extract_strided_slice %410 {offsets = [0, 0, 8], sizes = [2, 8, 8], strides = [1, 1, 1]} : vector<2x8x64xf32> to vector<2x8x8xf32>
    "tpu.trace_start"() <{level = 10 : i32, message = "bqd,bkd->bqk"}> : () -> ()
    %cst_131 = arith.constant dense<0.000000e+00> : vector<2x16x8xf32>
    %428 = tpu.matmul %426, %427, %cst_131 {dimension_numbers = #tpu.dot_dimension_numbers<[2], [2], [1], [1], [0, 0, 0, 1, 1, 1], [0], [0]>} : vector<2x16x8xf32>, vector<2x8x8xf32>, vector<2x16x8xf32> -> vector<2x16x8xf32>
    "tpu.trace_stop"() : () -> ()
    %cst_132 = arith.constant dense<0xFF800000> : vector<2x16xf32>
    %429 = vector.multi_reduction <maximumf>, %428, %cst_132 [2] : vector<2x16x8xf32> to vector<2x16xf32>
    %430 = vector.shape_cast %429 : vector<2x16xf32> to vector<2x16x1xf32>
    %431 = vector.broadcast %430 : vector<2x16x1xf32> to vector<2x16x8xf32>
    %432 = arith.subf %428, %431 : vector<2x16x8xf32>
    %433 = math.exp %432 : vector<2x16x8xf32>
    %cst_133 = arith.constant dense<0.000000e+00> : vector<2x16xf32>
    %434 = vector.multi_reduction <add>, %433, %cst_133 [2] : vector<2x16x8xf32> to vector<2x16xf32>
    %435 = vector.shape_cast %434 : vector<2x16xf32> to vector<2x16x1xf32>
    %436 = tpu.reciprocal %435 {approx = true} : vector<2x16x1xf32> -> vector<2x16x1xf32>
    %437 = vector.broadcast %436 : vector<2x16x1xf32> to vector<2x16x8xf32>
    %438 = arith.mulf %433, %437 : vector<2x16x8xf32>
    %439 = vector.extract_strided_slice %410 {offsets = [0, 0, 40], sizes = [2, 8, 8], strides = [1, 1, 1]} : vector<2x8x64xf32> to vector<2x8x8xf32>
    "tpu.trace_start"() <{level = 10 : i32, message = "bqk,bkd->bqd"}> : () -> ()
    %cst_134 = arith.constant dense<0.000000e+00> : vector<2x16x8xf32>
    %440 = tpu.matmul %438, %439, %cst_134 {dimension_numbers = #tpu.dot_dimension_numbers<[2], [1], [1], [2], [0, 0, 0, 1, 1, 2], [0], [0]>} : vector<2x16x8xf32>, vector<2x8x8xf32>, vector<2x16x8xf32> -> vector<2x16x8xf32>
    "tpu.trace_stop"() : () -> ()
    %441 = vector.extract_strided_slice %403 {offsets = [0, 0, 16], sizes = [2, 16, 8], strides = [1, 1, 1]} : vector<2x16x32xf32> to vector<2x16x8xf32>
    %442 = vector.extract_strided_slice %410 {offsets = [0, 0, 16], sizes = [2, 8, 8], strides = [1, 1, 1]} : vector<2x8x64xf32> to vector<2x8x8xf32>
    "tpu.trace_start"() <{level = 10 : i32, message = "bqd,bkd->bqk"}> : () -> ()
    %cst_135 = arith.constant dense<0.000000e+00> : vector<2x16x8xf32>
    %443 = tpu.matmul %441, %442, %cst_135 {dimension_numbers = #tpu.dot_dimension_numbers<[2], [2], [1], [1], [0, 0, 0, 1, 1, 1], [0], [0]>} : vector<2x16x8xf32>, vector<2x8x8xf32>, vector<2x16x8xf32> -> vector<2x16x8xf32>
    "tpu.trace_stop"() : () -> ()
    %cst_136 = arith.constant dense<0xFF800000> : vector<2x16xf32>
    %444 = vector.multi_reduction <maximumf>, %443, %cst_136 [2] : vector<2x16x8xf32> to vector<2x16xf32>
    %445 = vector.shape_cast %444 : vector<2x16xf32> to vector<2x16x1xf32>
    %446 = vector.broadcast %445 : vector<2x16x1xf32> to vector<2x16x8xf32>
    %447 = arith.subf %443, %446 : vector<2x16x8xf32>
    %448 = math.exp %447 : vector<2x16x8xf32>
    %cst_137 = arith.constant dense<0.000000e+00> : vector<2x16xf32>
    %449 = vector.multi_reduction <add>, %448, %cst_137 [2] : vector<2x16x8xf32> to vector<2x16xf32>
    %450 = vector.shape_cast %449 : vector<2x16xf32> to vector<2x16x1xf32>
    %451 = tpu.reciprocal %450 {approx = true} : vector<2x16x1xf32> -> vector<2x16x1xf32>
    %452 = vector.broadcast %451 : vector<2x16x1xf32> to vector<2x16x8xf32>
    %453 = arith.mulf %448, %452 : vector<2x16x8xf32>
    %454 = vector.extract_strided_slice %410 {offsets = [0, 0, 48], sizes = [2, 8, 8], strides = [1, 1, 1]} : vector<2x8x64xf32> to vector<2x8x8xf32>
    "tpu.trace_start"() <{level = 10 : i32, message = "bqk,bkd->bqd"}> : () -> ()
    %cst_138 = arith.constant dense<0.000000e+00> : vector<2x16x8xf32>
    %455 = tpu.matmul %453, %454, %cst_138 {dimension_numbers = #tpu.dot_dimension_numbers<[2], [1], [1], [2], [0, 0, 0, 1, 1, 2], [0], [0]>} : vector<2x16x8xf32>, vector<2x8x8xf32>, vector<2x16x8xf32> -> vector<2x16x8xf32>
    "tpu.trace_stop"() : () -> ()
    %456 = vector.extract_strided_slice %403 {offsets = [0, 0, 24], sizes = [2, 16, 8], strides = [1, 1, 1]} : vector<2x16x32xf32> to vector<2x16x8xf32>
    %457 = vector.extract_strided_slice %410 {offsets = [0, 0, 24], sizes = [2, 8, 8], strides = [1, 1, 1]} : vector<2x8x64xf32> to vector<2x8x8xf32>
    "tpu.trace_start"() <{level = 10 : i32, message = "bqd,bkd->bqk"}> : () -> ()
    %cst_139 = arith.constant dense<0.000000e+00> : vector<2x16x8xf32>
    %458 = tpu.matmul %456, %457, %cst_139 {dimension_numbers = #tpu.dot_dimension_numbers<[2], [2], [1], [1], [0, 0, 0, 1, 1, 1], [0], [0]>} : vector<2x16x8xf32>, vector<2x8x8xf32>, vector<2x16x8xf32> -> vector<2x16x8xf32>
    "tpu.trace_stop"() : () -> ()
    %cst_140 = arith.constant dense<0xFF800000> : vector<2x16xf32>
    %459 = vector.multi_reduction <maximumf>, %458, %cst_140 [2] : vector<2x16x8xf32> to vector<2x16xf32>
    %460 = vector.shape_cast %459 : vector<2x16xf32> to vector<2x16x1xf32>
    %461 = vector.broadcast %460 : vector<2x16x1xf32> to vector<2x16x8xf32>
    %462 = arith.subf %458, %461 : vector<2x16x8xf32>
    %463 = math.exp %462 : vector<2x16x8xf32>
    %cst_141 = arith.constant dense<0.000000e+00> : vector<2x16xf32>
    %464 = vector.multi_reduction <add>, %463, %cst_141 [2] : vector<2x16x8xf32> to vector<2x16xf32>
    %465 = vector.shape_cast %464 : vector<2x16xf32> to vector<2x16x1xf32>
    %466 = tpu.reciprocal %465 {approx = true} : vector<2x16x1xf32> -> vector<2x16x1xf32>
    %467 = vector.broadcast %466 : vector<2x16x1xf32> to vector<2x16x8xf32>
    %468 = arith.mulf %463, %467 : vector<2x16x8xf32>
    %469 = vector.extract_strided_slice %410 {offsets = [0, 0, 56], sizes = [2, 8, 8], strides = [1, 1, 1]} : vector<2x8x64xf32> to vector<2x8x8xf32>
    "tpu.trace_start"() <{level = 10 : i32, message = "bqk,bkd->bqd"}> : () -> ()
    %cst_142 = arith.constant dense<0.000000e+00> : vector<2x16x8xf32>
    %470 = tpu.matmul %468, %469, %cst_142 {dimension_numbers = #tpu.dot_dimension_numbers<[2], [1], [1], [2], [0, 0, 0, 1, 1, 2], [0], [0]>} : vector<2x16x8xf32>, vector<2x8x8xf32>, vector<2x16x8xf32> -> vector<2x16x8xf32>
    "tpu.trace_stop"() : () -> ()
    %471 = tpu.concatenate %425, %440, %455, %470 in 2 : vector<2x16x8xf32>, vector<2x16x8xf32>, vector<2x16x8xf32>, vector<2x16x8xf32> -> vector<2x16x32xf32>
    %472 = arith.addf %403, %471 : vector<2x16x32xf32>
    %473 = vector.shape_cast %472 : vector<2x16x32xf32> to vector<32x32xf32>
    %c27 = arith.constant 27 : index
    %c0_143 = arith.constant 0 : index
    %474 = vector.load %arg2[%c27, %c0_143] : memref<48x64xf32, #tpu.memory_space<vmem>>, vector<1x32xf32>
    %c28 = arith.constant 28 : index
    %c0_144 = arith.constant 0 : index
    %475 = vector.load %arg2[%c28, %c0_144] : memref<48x64xf32, #tpu.memory_space<vmem>>, vector<1x32xf32>
    %cst_145 = arith.constant dense<0.000000e+00> : vector<32xf32>
    %476 = vector.multi_reduction <add>, %473, %cst_145 [1] : vector<32x32xf32> to vector<32xf32>
    %477 = vector.shape_cast %476 : vector<32xf32> to vector<32x1xf32>
    %cst_146 = arith.constant 3.200000e+01 : f32
    %478 = vector.broadcast %cst_146 : f32 to vector<32x1xf32>
    %479 = arith.divf %477, %478 : vector<32x1xf32>
    %480 = vector.broadcast %479 : vector<32x1xf32> to vector<32x32xf32>
    %481 = arith.subf %473, %480 : vector<32x32xf32>
    %482 = arith.mulf %481, %481 : vector<32x32xf32>
    %cst_147 = arith.constant dense<0.000000e+00> : vector<32xf32>
    %483 = vector.multi_reduction <add>, %482, %cst_147 [1] : vector<32x32xf32> to vector<32xf32>
    %484 = vector.shape_cast %483 : vector<32xf32> to vector<32x1xf32>
    %cst_148 = arith.constant 3.200000e+01 : f32
    %485 = vector.broadcast %cst_148 : f32 to vector<32x1xf32>
    %486 = arith.divf %484, %485 : vector<32x1xf32>
    %487 = vector.broadcast %479 : vector<32x1xf32> to vector<32x32xf32>
    %488 = arith.subf %473, %487 : vector<32x32xf32>
    %cst_149 = arith.constant 9.99999974E-6 : f32
    %489 = vector.broadcast %cst_149 : f32 to vector<32x1xf32>
    %490 = arith.addf %486, %489 : vector<32x1xf32>
    %491 = math.rsqrt %490 : vector<32x1xf32>
    %492 = vector.broadcast %491 : vector<32x1xf32> to vector<32x32xf32>
    %493 = arith.mulf %488, %492 : vector<32x32xf32>
    %494 = vector.broadcast %474 : vector<1x32xf32> to vector<32x32xf32>
    %495 = arith.mulf %493, %494 : vector<32x32xf32>
    %496 = vector.broadcast %475 : vector<1x32xf32> to vector<32x32xf32>
    %497 = arith.addf %495, %496 : vector<32x32xf32>
    %c240 = arith.constant 240 : index
    %c0_150 = arith.constant 0 : index
    %498 = vector.load %arg1[%c240, %c0_150] : memref<416x64xf32, #tpu.memory_space<vmem>>, vector<32x32xf32>
    %c26 = arith.constant 26 : index
    %c0_151 = arith.constant 0 : index
    %499 = vector.load %arg2[%c26, %c0_151] : memref<48x64xf32, #tpu.memory_space<vmem>>, vector<1x32xf32>
    %cst_152 = arith.constant dense<0.000000e+00> : vector<32x32xf32>
    %500 = tpu.matmul %497, %498, %cst_152 {dimension_numbers = #tpu.dot_dimension_numbers<[1], [0], [0], [1], [0, 0, 1, 1], [], []>} : vector<32x32xf32>, vector<32x32xf32>, vector<32x32xf32> -> vector<32x32xf32>
    %501 = vector.broadcast %499 : vector<1x32xf32> to vector<32x32xf32>
    %502 = arith.addf %500, %501 : vector<32x32xf32>
    %cst_153 = arith.constant 0.000000e+00 : f32
    %503 = vector.broadcast %cst_153 : f32 to vector<32x32xf32>
    %504 = arith.maximumf %502, %503 : vector<32x32xf32>
    %505 = arith.addf %497, %504 : vector<32x32xf32>
    %c29 = arith.constant 29 : index
    %c0_154 = arith.constant 0 : index
    %506 = vector.load %arg2[%c29, %c0_154] : memref<48x64xf32, #tpu.memory_space<vmem>>, vector<1x32xf32>
    %c30 = arith.constant 30 : index
    %c0_155 = arith.constant 0 : index
    %507 = vector.load %arg2[%c30, %c0_155] : memref<48x64xf32, #tpu.memory_space<vmem>>, vector<1x32xf32>
    %cst_156 = arith.constant dense<0.000000e+00> : vector<32xf32>
    %508 = vector.multi_reduction <add>, %505, %cst_156 [1] : vector<32x32xf32> to vector<32xf32>
    %509 = vector.shape_cast %508 : vector<32xf32> to vector<32x1xf32>
    %cst_157 = arith.constant 3.200000e+01 : f32
    %510 = vector.broadcast %cst_157 : f32 to vector<32x1xf32>
    %511 = arith.divf %509, %510 : vector<32x1xf32>
    %512 = vector.broadcast %511 : vector<32x1xf32> to vector<32x32xf32>
    %513 = arith.subf %505, %512 : vector<32x32xf32>
    %514 = arith.mulf %513, %513 : vector<32x32xf32>
    %cst_158 = arith.constant dense<0.000000e+00> : vector<32xf32>
    %515 = vector.multi_reduction <add>, %514, %cst_158 [1] : vector<32x32xf32> to vector<32xf32>
    %516 = vector.shape_cast %515 : vector<32xf32> to vector<32x1xf32>
    %cst_159 = arith.constant 3.200000e+01 : f32
    %517 = vector.broadcast %cst_159 : f32 to vector<32x1xf32>
    %518 = arith.divf %516, %517 : vector<32x1xf32>
    %519 = vector.broadcast %511 : vector<32x1xf32> to vector<32x32xf32>
    %520 = arith.subf %505, %519 : vector<32x32xf32>
    %cst_160 = arith.constant 9.99999974E-6 : f32
    %521 = vector.broadcast %cst_160 : f32 to vector<32x1xf32>
    %522 = arith.addf %518, %521 : vector<32x1xf32>
    %523 = math.rsqrt %522 : vector<32x1xf32>
    %524 = vector.broadcast %523 : vector<32x1xf32> to vector<32x32xf32>
    %525 = arith.mulf %520, %524 : vector<32x32xf32>
    %526 = vector.broadcast %506 : vector<1x32xf32> to vector<32x32xf32>
    %527 = arith.mulf %525, %526 : vector<32x32xf32>
    %528 = vector.broadcast %507 : vector<1x32xf32> to vector<32x32xf32>
    %529 = arith.addf %527, %528 : vector<32x32xf32>
    %530 = vector.shape_cast %529 : vector<32x32xf32> to vector<2x16x32xf32>
    %c16 = arith.constant 16 : index
    %c0_161 = arith.constant 0 : index
    %531 = vector.load %arg3[%c16, %c0_161] : memref<24x32xf32, #tpu.memory_space<vmem>>, vector<8x32xf32>
    %532 = vector.shape_cast %531 : vector<8x32xf32> to vector<1x8x32xf32>
    %533 = vector.shape_cast %532 : vector<1x8x32xf32> to vector<1x8x32xf32>
    %534 = vector.broadcast %533 : vector<1x8x32xf32> to vector<2x8x32xf32>
    %c272 = arith.constant 272 : index
    %c0_162 = arith.constant 0 : index
    %535 = vector.load %arg1[%c272, %c0_162] : memref<416x64xf32, #tpu.memory_space<vmem>>, vector<32x64xf32>
    %c33 = arith.constant 33 : index
    %c0_163 = arith.constant 0 : index
    %536 = vector.load %arg2[%c33, %c0_163] : memref<48x64xf32, #tpu.memory_space<vmem>>, vector<1x64xf32>
    %537 = vector.shape_cast %530 : vector<2x16x32xf32> to vector<32x32xf32>
    %cst_164 = arith.constant dense<0.000000e+00> : vector<32x64xf32>
    %538 = tpu.matmul %537, %535, %cst_164 {dimension_numbers = #tpu.dot_dimension_numbers<[1], [0], [0], [1], [0, 0, 1, 1], [], []>} : vector<32x32xf32>, vector<32x64xf32>, vector<32x64xf32> -> vector<32x64xf32>
    %539 = vector.broadcast %536 : vector<1x64xf32> to vector<32x64xf32>
    %540 = arith.addf %538, %539 : vector<32x64xf32>
    %541 = vector.shape_cast %540 : vector<32x64xf32> to vector<2x16x64xf32>
    %542 = vector.extract_strided_slice %534 {offsets = [0, 0, 0], sizes = [2, 8, 8], strides = [1, 1, 1]} : vector<2x8x32xf32> to vector<2x8x8xf32>
    %543 = vector.extract_strided_slice %541 {offsets = [0, 0, 0], sizes = [2, 16, 8], strides = [1, 1, 1]} : vector<2x16x64xf32> to vector<2x16x8xf32>
    "tpu.trace_start"() <{level = 10 : i32, message = "bqd,bkd->bqk"}> : () -> ()
    %cst_165 = arith.constant dense<0.000000e+00> : vector<2x8x16xf32>
    %544 = tpu.matmul %542, %543, %cst_165 {dimension_numbers = #tpu.dot_dimension_numbers<[2], [2], [1], [1], [0, 0, 0, 1, 1, 1], [0], [0]>} : vector<2x8x8xf32>, vector<2x16x8xf32>, vector<2x8x16xf32> -> vector<2x8x16xf32>
    "tpu.trace_stop"() : () -> ()
    %cst_166 = arith.constant dense<0xFF800000> : vector<2x8xf32>
    %545 = vector.multi_reduction <maximumf>, %544, %cst_166 [2] : vector<2x8x16xf32> to vector<2x8xf32>
    %546 = vector.shape_cast %545 : vector<2x8xf32> to vector<2x8x1xf32>
    %547 = vector.broadcast %546 : vector<2x8x1xf32> to vector<2x8x16xf32>
    %548 = arith.subf %544, %547 : vector<2x8x16xf32>
    %549 = math.exp %548 : vector<2x8x16xf32>
    %cst_167 = arith.constant dense<0.000000e+00> : vector<2x8xf32>
    %550 = vector.multi_reduction <add>, %549, %cst_167 [2] : vector<2x8x16xf32> to vector<2x8xf32>
    %551 = vector.shape_cast %550 : vector<2x8xf32> to vector<2x8x1xf32>
    %552 = tpu.reciprocal %551 {approx = true} : vector<2x8x1xf32> -> vector<2x8x1xf32>
    %553 = vector.broadcast %552 : vector<2x8x1xf32> to vector<2x8x16xf32>
    %554 = arith.mulf %549, %553 : vector<2x8x16xf32>
    %555 = vector.extract_strided_slice %541 {offsets = [0, 0, 32], sizes = [2, 16, 8], strides = [1, 1, 1]} : vector<2x16x64xf32> to vector<2x16x8xf32>
    "tpu.trace_start"() <{level = 10 : i32, message = "bqk,bkd->bqd"}> : () -> ()
    %cst_168 = arith.constant dense<0.000000e+00> : vector<2x8x8xf32>
    %556 = tpu.matmul %554, %555, %cst_168 {dimension_numbers = #tpu.dot_dimension_numbers<[2], [1], [1], [2], [0, 0, 0, 1, 1, 2], [0], [0]>} : vector<2x8x16xf32>, vector<2x16x8xf32>, vector<2x8x8xf32> -> vector<2x8x8xf32>
    "tpu.trace_stop"() : () -> ()
    %557 = vector.extract_strided_slice %534 {offsets = [0, 0, 8], sizes = [2, 8, 8], strides = [1, 1, 1]} : vector<2x8x32xf32> to vector<2x8x8xf32>
    %558 = vector.extract_strided_slice %541 {offsets = [0, 0, 8], sizes = [2, 16, 8], strides = [1, 1, 1]} : vector<2x16x64xf32> to vector<2x16x8xf32>
    "tpu.trace_start"() <{level = 10 : i32, message = "bqd,bkd->bqk"}> : () -> ()
    %cst_169 = arith.constant dense<0.000000e+00> : vector<2x8x16xf32>
    %559 = tpu.matmul %557, %558, %cst_169 {dimension_numbers = #tpu.dot_dimension_numbers<[2], [2], [1], [1], [0, 0, 0, 1, 1, 1], [0], [0]>} : vector<2x8x8xf32>, vector<2x16x8xf32>, vector<2x8x16xf32> -> vector<2x8x16xf32>
    "tpu.trace_stop"() : () -> ()
    %cst_170 = arith.constant dense<0xFF800000> : vector<2x8xf32>
    %560 = vector.multi_reduction <maximumf>, %559, %cst_170 [2] : vector<2x8x16xf32> to vector<2x8xf32>
    %561 = vector.shape_cast %560 : vector<2x8xf32> to vector<2x8x1xf32>
    %562 = vector.broadcast %561 : vector<2x8x1xf32> to vector<2x8x16xf32>
    %563 = arith.subf %559, %562 : vector<2x8x16xf32>
    %564 = math.exp %563 : vector<2x8x16xf32>
    %cst_171 = arith.constant dense<0.000000e+00> : vector<2x8xf32>
    %565 = vector.multi_reduction <add>, %564, %cst_171 [2] : vector<2x8x16xf32> to vector<2x8xf32>
    %566 = vector.shape_cast %565 : vector<2x8xf32> to vector<2x8x1xf32>
    %567 = tpu.reciprocal %566 {approx = true} : vector<2x8x1xf32> -> vector<2x8x1xf32>
    %568 = vector.broadcast %567 : vector<2x8x1xf32> to vector<2x8x16xf32>
    %569 = arith.mulf %564, %568 : vector<2x8x16xf32>
    %570 = vector.extract_strided_slice %541 {offsets = [0, 0, 40], sizes = [2, 16, 8], strides = [1, 1, 1]} : vector<2x16x64xf32> to vector<2x16x8xf32>
    "tpu.trace_start"() <{level = 10 : i32, message = "bqk,bkd->bqd"}> : () -> ()
    %cst_172 = arith.constant dense<0.000000e+00> : vector<2x8x8xf32>
    %571 = tpu.matmul %569, %570, %cst_172 {dimension_numbers = #tpu.dot_dimension_numbers<[2], [1], [1], [2], [0, 0, 0, 1, 1, 2], [0], [0]>} : vector<2x8x16xf32>, vector<2x16x8xf32>, vector<2x8x8xf32> -> vector<2x8x8xf32>
    "tpu.trace_stop"() : () -> ()
    %572 = vector.extract_strided_slice %534 {offsets = [0, 0, 16], sizes = [2, 8, 8], strides = [1, 1, 1]} : vector<2x8x32xf32> to vector<2x8x8xf32>
    %573 = vector.extract_strided_slice %541 {offsets = [0, 0, 16], sizes = [2, 16, 8], strides = [1, 1, 1]} : vector<2x16x64xf32> to vector<2x16x8xf32>
    "tpu.trace_start"() <{level = 10 : i32, message = "bqd,bkd->bqk"}> : () -> ()
    %cst_173 = arith.constant dense<0.000000e+00> : vector<2x8x16xf32>
    %574 = tpu.matmul %572, %573, %cst_173 {dimension_numbers = #tpu.dot_dimension_numbers<[2], [2], [1], [1], [0, 0, 0, 1, 1, 1], [0], [0]>} : vector<2x8x8xf32>, vector<2x16x8xf32>, vector<2x8x16xf32> -> vector<2x8x16xf32>
    "tpu.trace_stop"() : () -> ()
    %cst_174 = arith.constant dense<0xFF800000> : vector<2x8xf32>
    %575 = vector.multi_reduction <maximumf>, %574, %cst_174 [2] : vector<2x8x16xf32> to vector<2x8xf32>
    %576 = vector.shape_cast %575 : vector<2x8xf32> to vector<2x8x1xf32>
    %577 = vector.broadcast %576 : vector<2x8x1xf32> to vector<2x8x16xf32>
    %578 = arith.subf %574, %577 : vector<2x8x16xf32>
    %579 = math.exp %578 : vector<2x8x16xf32>
    %cst_175 = arith.constant dense<0.000000e+00> : vector<2x8xf32>
    %580 = vector.multi_reduction <add>, %579, %cst_175 [2] : vector<2x8x16xf32> to vector<2x8xf32>
    %581 = vector.shape_cast %580 : vector<2x8xf32> to vector<2x8x1xf32>
    %582 = tpu.reciprocal %581 {approx = true} : vector<2x8x1xf32> -> vector<2x8x1xf32>
    %583 = vector.broadcast %582 : vector<2x8x1xf32> to vector<2x8x16xf32>
    %584 = arith.mulf %579, %583 : vector<2x8x16xf32>
    %585 = vector.extract_strided_slice %541 {offsets = [0, 0, 48], sizes = [2, 16, 8], strides = [1, 1, 1]} : vector<2x16x64xf32> to vector<2x16x8xf32>
    "tpu.trace_start"() <{level = 10 : i32, message = "bqk,bkd->bqd"}> : () -> ()
    %cst_176 = arith.constant dense<0.000000e+00> : vector<2x8x8xf32>
    %586 = tpu.matmul %584, %585, %cst_176 {dimension_numbers = #tpu.dot_dimension_numbers<[2], [1], [1], [2], [0, 0, 0, 1, 1, 2], [0], [0]>} : vector<2x8x16xf32>, vector<2x16x8xf32>, vector<2x8x8xf32> -> vector<2x8x8xf32>
    "tpu.trace_stop"() : () -> ()
    %587 = vector.extract_strided_slice %534 {offsets = [0, 0, 24], sizes = [2, 8, 8], strides = [1, 1, 1]} : vector<2x8x32xf32> to vector<2x8x8xf32>
    %588 = vector.extract_strided_slice %541 {offsets = [0, 0, 24], sizes = [2, 16, 8], strides = [1, 1, 1]} : vector<2x16x64xf32> to vector<2x16x8xf32>
    "tpu.trace_start"() <{level = 10 : i32, message = "bqd,bkd->bqk"}> : () -> ()
    %cst_177 = arith.constant dense<0.000000e+00> : vector<2x8x16xf32>
    %589 = tpu.matmul %587, %588, %cst_177 {dimension_numbers = #tpu.dot_dimension_numbers<[2], [2], [1], [1], [0, 0, 0, 1, 1, 1], [0], [0]>} : vector<2x8x8xf32>, vector<2x16x8xf32>, vector<2x8x16xf32> -> vector<2x8x16xf32>
    "tpu.trace_stop"() : () -> ()
    %cst_178 = arith.constant dense<0xFF800000> : vector<2x8xf32>
    %590 = vector.multi_reduction <maximumf>, %589, %cst_178 [2] : vector<2x8x16xf32> to vector<2x8xf32>
    %591 = vector.shape_cast %590 : vector<2x8xf32> to vector<2x8x1xf32>
    %592 = vector.broadcast %591 : vector<2x8x1xf32> to vector<2x8x16xf32>
    %593 = arith.subf %589, %592 : vector<2x8x16xf32>
    %594 = math.exp %593 : vector<2x8x16xf32>
    %cst_179 = arith.constant dense<0.000000e+00> : vector<2x8xf32>
    %595 = vector.multi_reduction <add>, %594, %cst_179 [2] : vector<2x8x16xf32> to vector<2x8xf32>
    %596 = vector.shape_cast %595 : vector<2x8xf32> to vector<2x8x1xf32>
    %597 = tpu.reciprocal %596 {approx = true} : vector<2x8x1xf32> -> vector<2x8x1xf32>
    %598 = vector.broadcast %597 : vector<2x8x1xf32> to vector<2x8x16xf32>
    %599 = arith.mulf %594, %598 : vector<2x8x16xf32>
    %600 = vector.extract_strided_slice %541 {offsets = [0, 0, 56], sizes = [2, 16, 8], strides = [1, 1, 1]} : vector<2x16x64xf32> to vector<2x16x8xf32>
    "tpu.trace_start"() <{level = 10 : i32, message = "bqk,bkd->bqd"}> : () -> ()
    %cst_180 = arith.constant dense<0.000000e+00> : vector<2x8x8xf32>
    %601 = tpu.matmul %599, %600, %cst_180 {dimension_numbers = #tpu.dot_dimension_numbers<[2], [1], [1], [2], [0, 0, 0, 1, 1, 2], [0], [0]>} : vector<2x8x16xf32>, vector<2x16x8xf32>, vector<2x8x8xf32> -> vector<2x8x8xf32>
    "tpu.trace_stop"() : () -> ()
    %602 = tpu.concatenate %556, %571, %586, %601 in 2 : vector<2x8x8xf32>, vector<2x8x8xf32>, vector<2x8x8xf32>, vector<2x8x8xf32> -> vector<2x8x32xf32>
    %603 = arith.addf %534, %602 : vector<2x8x32xf32>
    %604 = vector.shape_cast %603 : vector<2x8x32xf32> to vector<16x32xf32>
    %c304 = arith.constant 304 : index
    %c0_181 = arith.constant 0 : index
    %605 = vector.load %arg1[%c304, %c0_181] : memref<416x64xf32, #tpu.memory_space<vmem>>, vector<32x32xf32>
    %c34 = arith.constant 34 : index
    %c0_182 = arith.constant 0 : index
    %606 = vector.load %arg2[%c34, %c0_182] : memref<48x64xf32, #tpu.memory_space<vmem>>, vector<1x32xf32>
    %cst_183 = arith.constant dense<0.000000e+00> : vector<16x32xf32>
    %607 = tpu.matmul %604, %605, %cst_183 {dimension_numbers = #tpu.dot_dimension_numbers<[1], [0], [0], [1], [0, 0, 1, 1], [], []>} : vector<16x32xf32>, vector<32x32xf32>, vector<16x32xf32> -> vector<16x32xf32>
    %608 = vector.broadcast %606 : vector<1x32xf32> to vector<16x32xf32>
    %609 = arith.addf %607, %608 : vector<16x32xf32>
    %cst_184 = arith.constant 0.000000e+00 : f32
    %610 = vector.broadcast %cst_184 : f32 to vector<16x32xf32>
    %611 = arith.maximumf %609, %610 : vector<16x32xf32>
    %612 = arith.addf %604, %611 : vector<16x32xf32>
    %613 = vector.shape_cast %612 : vector<16x32xf32> to vector<2x8x32xf32>
    %614 = vector.shape_cast %613 : vector<2x8x32xf32> to vector<16x32xf32>
    %c336 = arith.constant 336 : index
    %c0_185 = arith.constant 0 : index
    %615 = vector.load %arg1[%c336, %c0_185] : memref<416x64xf32, #tpu.memory_space<vmem>>, vector<32x32xf32>
    %cst_186 = arith.constant dense<0.000000e+00> : vector<16x32xf32>
    %616 = tpu.matmul %614, %615, %cst_186 {dimension_numbers = #tpu.dot_dimension_numbers<[1], [0], [0], [1], [0, 0, 1, 1], [], []>} : vector<16x32xf32>, vector<32x32xf32>, vector<16x32xf32> -> vector<16x32xf32>
    %c40_187 = arith.constant 40 : index
    %c0_188 = arith.constant 0 : index
    %617 = vector.load %arg2[%c40_187, %c0_188] : memref<48x64xf32, #tpu.memory_space<vmem>>, vector<1x32xf32>
    %618 = vector.broadcast %617 : vector<1x32xf32> to vector<16x32xf32>
    %619 = arith.addf %616, %618 : vector<16x32xf32>
    %cst_189 = arith.constant 0.000000e+00 : f32
    %620 = vector.broadcast %cst_189 : f32 to vector<16x32xf32>
    %621 = arith.maximumf %619, %620 : vector<16x32xf32>
    %c368 = arith.constant 368 : index
    %c0_190 = arith.constant 0 : index
    %622 = vector.load %arg1[%c368, %c0_190] : memref<416x64xf32, #tpu.memory_space<vmem>>, vector<32x16xf32>
    %cst_191 = arith.constant dense<0.000000e+00> : vector<16x16xf32>
    %623 = tpu.matmul %621, %622, %cst_191 {dimension_numbers = #tpu.dot_dimension_numbers<[1], [0], [0], [1], [0, 0, 1, 1], [], []>} : vector<16x32xf32>, vector<32x16xf32>, vector<16x16xf32> -> vector<16x16xf32>
    %c41 = arith.constant 41 : index
    %c0_192 = arith.constant 0 : index
    %624 = vector.load %arg2[%c41, %c0_192] : memref<48x64xf32, #tpu.memory_space<vmem>>, vector<1x16xf32>
    %625 = vector.broadcast %624 : vector<1x16xf32> to vector<16x16xf32>
    %626 = arith.addf %623, %625 : vector<16x16xf32>
    %cst_193 = arith.constant 0.000000e+00 : f32
    %627 = vector.broadcast %cst_193 : f32 to vector<16x16xf32>
    %628 = arith.maximumf %626, %627 : vector<16x16xf32>
    %c400 = arith.constant 400 : index
    %c0_194 = arith.constant 0 : index
    %629 = vector.load %arg1[%c400, %c0_194] : memref<416x64xf32, #tpu.memory_space<vmem>>, vector<16x3xf32>
    %cst_195 = arith.constant dense<0.000000e+00> : vector<16x3xf32>
    %630 = tpu.matmul %628, %629, %cst_195 {dimension_numbers = #tpu.dot_dimension_numbers<[1], [0], [0], [1], [0, 0, 1, 1], [], []>} : vector<16x16xf32>, vector<16x3xf32>, vector<16x3xf32> -> vector<16x3xf32>
    %c42 = arith.constant 42 : index
    %c0_196 = arith.constant 0 : index
    %631 = vector.load %arg2[%c42, %c0_196] : memref<48x64xf32, #tpu.memory_space<vmem>>, vector<1x3xf32>
    %632 = vector.broadcast %631 : vector<1x3xf32> to vector<16x3xf32>
    %633 = arith.addf %630, %632 : vector<16x3xf32>
    %634 = vector.shape_cast %633 : vector<16x3xf32> to vector<2x8x3xf32>
    %c0_197 = arith.constant 0 : index
    %c0_198 = arith.constant 0 : index
    %c0_199 = arith.constant 0 : index
    %635 = vector.load %arg4[%c0_197, %c0_198, %c0_199] : memref<2x8x3xf32, #tpu.memory_space<vmem>>, vector<2x8x3xf32>
    tpu.vector_store %arg4[%c0_197, %c0_198, %c0_199], %634 {strides = array<i32>} : memref<2x8x3xf32, #tpu.memory_space<vmem>>, vector<2x8x3xf32>,
    return
  }
}

</mosaic_0001>

<llo_original>
// kernel: hai_titer_predictor.1
$region0: #{hai_titer_predictor.1}
  #allocation0 [shape = 'u32[]', space=smem, size = 0x4, offset = 0x4, fixed_abs, tag = 'smem constant byte address 0x4 - core index']
  #allocation1 [shape = 'u32[144,128]{1,0:T(1,128)}', space=vmem, size = 0x12000, scoped, tag = 'internal scratch']
  %s0 = inlined_call_operand.vmem [shape: f32[2,16,8], index: 0, kind: input, shape index: {}]
  %s1 = inlined_call_operand.vmem [shape: f32[416,64], index: 1, kind: input, shape index: {}]
  %s2 = inlined_call_operand.vmem [shape: f32[48,64], index: 2, kind: input, shape index: {}]
  %s3 = inlined_call_operand.vmem [shape: f32[24,32], index: 3, kind: input, shape index: {}]
  %s4 = inlined_call_operand.vmem [shape: f32[2,8,3], index: 4, kind: output, shape index: {}]
  %s5 = sld [smem:[#allocation0]]
  $region26: #{hai_titer_predictor.1} parent=0
    _
  %s7 = ssub.s32 1, %s5
  %s8 = scalar_select 0, %s7, %s5
  // Predicated region
  $region2: #{hai_titer_predictor.1} parent=0 // pred_check
    _
  $region3: #{hai_titer_predictor.1} parent=0 // pred_check_branch
    %10 = sbr.rel (0) target = $region5
  $region4: #{hai_titer_predictor.1} parent=0 // pred_region
    _
  $region5: #{hai_titer_predictor.1} parent=0 // pred_fallthru
    _
  // Predicated region
  $region6: #{hai_titer_predictor.1} parent=0 // pred_check
    _
  $region7: #{hai_titer_predictor.1} parent=0 // pred_check_branch
    %12 = sbr.rel (0) target = $region9
  $region8: #{hai_titer_predictor.1} parent=0 // pred_region
    _
  $region9: #{hai_titer_predictor.1} parent=0 // pred_fallthru
    _
  // Predicated region
  $region10: #{hai_titer_predictor.1} parent=0 // pred_check
    _
  $region11: #{hai_titer_predictor.1} parent=0 // pred_check_branch
    %14 = sbr.rel (0) target = $region13
  $region12: #{hai_titer_predictor.1} parent=0 // pred_region
    _
  $region13: #{hai_titer_predictor.1} parent=0 // pred_fallthru
    _
  // Predicated region
  $region14: #{hai_titer_predictor.1} parent=0 // pred_check
    _
  $region15: #{hai_titer_predictor.1} parent=0 // pred_check_branch
    %16 = sbr.rel (0) target = $region17
  $region16: #{hai_titer_predictor.1} parent=0 // pred_region
    _
  $region17: #{hai_titer_predictor.1} parent=0 // pred_fallthru
    _
  %v17 = vld [vmem:[%s0] sm:$0xff]
  %v18 = vld [vmem:[%s0 + $0x8] sm:$0xff]
  %v19 = vld [vmem:[%s0 + $0x10] sm:$0xff]
  %v20 = vld [vmem:[%s0 + $0x18] sm:$0xff]
  %v21 = vld [vmem:[%s3] sm:$0xff]
  %v22 = vld [vmem:[%s1] sm:$0xff]
  %v23 = vld [vmem:[%s2 + $0x1] sm:$0x1]
  %v24 = vlaneseq
  %v25 = vshrl.u32 %v24, 7
  %v26 = vsub.s32 0, %v25
  %v27 = vrot.slane %v23, %v26
  %vm28 = vcmask 64512
  %v30 = vsel %vm28, %v17, 0
  %v33 = vsel %vm28, %v18, 0
  %v36 = vsel %vm28, %v19, 0
  %v39 = vsel %vm28, %v20, 0
  %41 = vmatprep.subr.mxu0 0.0
  %42 = vmatpush1.msra.mxu0 0.0
  %43 = vmatprep.subr.mxu0 0.0
  %44 = vmatpush1.msra.mxu0 0.0
  %45 = vmatprep.subr.mxu0 0.0
  %46 = vmatpush1.msra.mxu0 0.0
  %47 = vmatprep.subr.mxu0 0.0
  %48 = vmatpush1.msra.mxu0 0.0
  %49 = vmatprep.subr.mxu0 0.0
  %50 = vmatpush1.msra.mxu0 0.0
  %51 = vmatprep.subr.mxu0 0.0
  %52 = vmatpush1.msra.mxu0 0.0
  %53 = vmatprep.subr.mxu0 0.0
  %54 = vmatpush1.msra.mxu0 0.0
  %55 = vmatprep.subr.mxu0 0.0
  %56 = vmatpush1.msra.mxu0 0.0
  %57 = vmatprep.subr.mxu0 0.0
  %58 = vmatpush1.msra.mxu0 0.0
  %59 = vmatprep.subr.mxu0 0.0
  %60 = vmatpush1.msra.mxu0 0.0
  %61 = vmatprep.subr.mxu0 0.0
  %62 = vmatpush1.msra.mxu0 0.0
  %63 = vmatprep.subr.mxu0 0.0
  %64 = vmatpush1.msra.mxu0 0.0
  %65 = vmatprep.subr.mxu0 0.0
  %66 = vmatpush1.msra.mxu0 0.0
  %67 = vmatprep.subr.mxu0 0.0
  %68 = vmatpush1.msra.mxu0 0.0
  %69 = vmatprep.subr.mxu0 0.0
  %70 = vmatpush1.msra.mxu0 0.0
  %71 = vmatprep.subr.mxu0 0.0
  %72 = vmatpush1.msra.mxu0 %v22
  %73 = vmatprep.subr.mxu0 0.0
  %74 = vmatpush2.msra.mxu0 0.0
  %75 = vmatprep.subr.mxu0 0.0
  %76 = vmatpush2.msra.mxu0 0.0
  %77 = vmatprep.subr.mxu0 0.0
  %78 = vmatpush2.msra.mxu0 0.0
  %79 = vmatprep.subr.mxu0 0.0
  %80 = vmatpush2.msra.mxu0 0.0
  %81 = vmatprep.subr.mxu0 0.0
  %82 = vmatpush2.msra.mxu0 0.0
  %83 = vmatprep.subr.mxu0 0.0
  %84 = vmatpush2.msra.mxu0 0.0
  %85 = vmatprep.subr.mxu0 0.0
  %86 = vmatpush2.msra.mxu0 0.0
  %87 = vmatprep.subr.mxu0 0.0
  %88 = vmatpush2.msra.mxu0 0.0
  %89 = vmatprep.subr.mxu0 0.0
  %90 = vmatpush2.msra.mxu0 0.0
  %91 = vmatprep.subr.mxu0 0.0
  %92 = vmatpush2.msra.mxu0 0.0
  %93 = vmatprep.subr.mxu0 0.0
  %94 = vmatpush2.msra.mxu0 0.0
  %95 = vmatprep.subr.mxu0 0.0
  %96 = vmatpush2.msra.mxu0 0.0
  %97 = vmatprep.subr.mxu0 0.0
  %98 = vmatpush2.msra.mxu0 0.0
  %99 = vmatprep.subr.mxu0 0.0
  %100 = vmatpush2.msra.mxu0 0.0
  %101 = vmatprep.subr.mxu0 0.0
  %102 = vmatpush2.msra.mxu0 0.0
  %103 = vmatprep.subr.mxu0 0.0
  %104 = vmatpush2.msra.mxu0 0.0
  %105 = vmatprep.mubr.f32.mxu0 0.0
  %106 = vmatmul.mubr.f32.gmra.mxu0 %v30
  %v107 = vpop.f32.mrf.mxu0
  %v108 = vadd.f32 %v27, %v107
  %v109 = vpop.f32.mrf.mxu0
  %110 = vmatprep.mubr.f32.mxu0 0.0
  %111 = vmatmul.mubr.f32.gmra.mxu0 %v33
  %v112 = vpop.f32.mrf.mxu0
  %v113 = vadd.f32 %v27, %v112
  %v114 = vpop.f32.mrf.mxu0
  %115 = vmatprep.mubr.f32.mxu0 0.0
  %116 = vmatmul.mubr.f32.gmra.mxu0 %v36
  %v117 = vpop.f32.mrf.mxu0
  %v118 = vadd.f32 %v27, %v117
  %v119 = vpop.f32.mrf.mxu0
  %120 = vmatprep.mubr.f32.mxu0 0.0
  %121 = vmatmul.mubr.f32.gmra.mxu0 %v39
  %v122 = vpop.f32.mrf.mxu0
  %v123 = vadd.f32 %v27, %v122
  %v124 = vpop.f32.mrf.mxu0
  %125 = vdwg.mxu0
  %v127 = vsel %vm28, %v21, 0
  %v130 = vsel %vm28, %v108, 0
  %v133 = vsel %vm28, %v113, 0
  %135 = vmatprep.subr.mxu0 0.0
  %136 = vmatpush1.xpose.msra.mxu0 0.0
  %137 = vmatprep.subr.mxu0 0.0
  %138 = vmatpush1.xpose.msra.mxu0 0.0
  %139 = vmatprep.subr.mxu0 0.0
  %140 = vmatpush1.xpose.msra.mxu0 0.0
  %141 = vmatprep.subr.mxu0 0.0
  %142 = vmatpush1.xpose.msra.mxu0 0.0
  %143 = vmatprep.subr.mxu0 0.0
  %144 = vmatpush1.xpose.msra.mxu0 0.0
  %145 = vmatprep.subr.mxu0 0.0
  %146 = vmatpush1.xpose.msra.mxu0 0.0
  %147 = vmatprep.subr.mxu0 0.0
  %148 = vmatpush1.xpose.msra.mxu0 0.0
  %149 = vmatprep.subr.mxu0 0.0
  %150 = vmatpush1.xpose.msra.mxu0 0.0
  %151 = vmatprep.subr.mxu0 0.0
  %152 = vmatpush1.xpose.msra.mxu0 0.0
  %153 = vmatprep.subr.mxu0 0.0
  %154 = vmatpush1.xpose.msra.mxu0 0.0
  %155 = vmatprep.subr.mxu0 0.0
  %156 = vmatpush1.xpose.msra.mxu0 0.0
  %157 = vmatprep.subr.mxu0 0.0
  %158 = vmatpush1.xpose.msra.mxu0 0.0
  %159 = vmatprep.subr.mxu0 0.0
  %160 = vmatpush1.xpose.msra.mxu0 0.0
  %161 = vmatprep.subr.mxu0 0.0
  %162 = vmatpush1.xpose.msra.mxu0 0.0
  %163 = vmatprep.subr.mxu0 0.0
  %164 = vmatpush1.xpose.msra.mxu0 %v133
  %165 = vmatprep.subr.mxu0 0.0
  %166 = vmatpush1.xpose.msra.mxu0 %v130
  %167 = vmatprep.subr.mxu0 0.0
  %168 = vmatpush2.xpose.msra.mxu0 0.0
  %169 = vmatprep.subr.mxu0 0.0
  %170 = vmatpush2.xpose.msra.mxu0 0.0
  %171 = vmatprep.subr.mxu0 0.0
  %172 = vmatpush2.xpose.msra.mxu0 0.0
  %173 = vmatprep.subr.mxu0 0.0
  %174 = vmatpush2.xpose.msra.mxu0 0.0
  %175 = vmatprep.subr.mxu0 0.0
  %176 = vmatpush2.xpose.msra.mxu0 0.0
  %177 = vmatprep.subr.mxu0 0.0
  %178 = vmatpush2.xpose.msra.mxu0 0.0
  %179 = vmatprep.subr.mxu0 0.0
  %180 = vmatpush2.xpose.msra.mxu0 0.0
  %181 = vmatprep.subr.mxu0 0.0
  %182 = vmatpush2.xpose.msra.mxu0 0.0
  %183 = vmatprep.subr.mxu0 0.0
  %184 = vmatpush2.xpose.msra.mxu0 0.0
  %185 = vmatprep.subr.mxu0 0.0
  %186 = vmatpush2.xpose.msra.mxu0 0.0
  %187 = vmatprep.subr.mxu0 0.0
  %188 = vmatpush2.xpose.msra.mxu0 0.0
  %189 = vmatprep.subr.mxu0 0.0
  %190 = vmatpush2.xpose.msra.mxu0 0.0
  %191 = vmatprep.subr.mxu0 0.0
  %192 = vmatpush2.xpose.msra.mxu0 0.0
  %193 = vmatprep.subr.mxu0 0.0
  %194 = vmatpush2.xpose.msra.mxu0 0.0
  %195 = vmatprep.subr.mxu0 0.0
  %196 = vmatpush2.xpose.msra.mxu0 0.0
  %197 = vmatprep.subr.mxu0 0.0
  %198 = vmatpush2.xpose.msra.mxu0 0.0
  %199 = vmatprep.mubr.f32.mxu0 0.0
  %200 = vmatmul.mubr.f32.gmra.mxu0 %v127
  %v201 = vpop.f32.mrf.mxu0
  %v202 = vadd.f32 0.0, %v201
  %v203 = vpop.f32.mrf.mxu0
  %204 = vdwg.mxu0
  %v206 = vsel %vm28, %v118, 0
  %v209 = vsel %vm28, %v123, 0
  %211 = vmatprep.subr.mxu0 0.0
  %212 = vmatpush1.xpose.msra.mxu0 0.0
  %213 = vmatprep.subr.mxu0 0.0
  %214 = vmatpush1.xpose.msra.mxu0 0.0
  %215 = vmatprep.subr.mxu0 0.0
  %216 = vmatpush1.xpose.msra.mxu0 0.0
  %217 = vmatprep.subr.mxu0 0.0
  %218 = vmatpush1.xpose.msra.mxu0 0.0
  %219 = vmatprep.subr.mxu0 0.0
  %220 = vmatpush1.xpose.msra.mxu0 0.0
  %221 = vmatprep.subr.mxu0 0.0
  %222 = vmatpush1.xpose.msra.mxu0 0.0
  %223 = vmatprep.subr.mxu0 0.0
  %224 = vmatpush1.xpose.msra.mxu0 0.0
  %225 = vmatprep.subr.mxu0 0.0
  %226 = vmatpush1.xpose.msra.mxu0 0.0
  %227 = vmatprep.subr.mxu0 0.0
  %228 = vmatpush1.xpose.msra.mxu0 0.0
  %229 = vmatprep.subr.mxu0 0.0
  %230 = vmatpush1.xpose.msra.mxu0 0.0
  %231 = vmatprep.subr.mxu0 0.0
  %232 = vmatpush1.xpose.msra.mxu0 0.0
  %233 = vmatprep.subr.mxu0 0.0
  %234 = vmatpush1.xpose.msra.mxu0 0.0
  %235 = vmatprep.subr.mxu0 0.0
  %236 = vmatpush1.xpose.msra.mxu0 0.0
  %237 = vmatprep.subr.mxu0 0.0
  %238 = vmatpush1.xpose.msra.mxu0 0.0
  %239 = vmatprep.subr.mxu0 0.0
  %240 = vmatpush1.xpose.msra.mxu0 %v209
  %241 = vmatprep.subr.mxu0 0.0
  %242 = vmatpush1.xpose.msra.mxu0 %v206
  %243 = vmatprep.subr.mxu0 0.0
  %244 = vmatpush2.xpose.msra.mxu0 0.0
  %245 = vmatprep.subr.mxu0 0.0
  %246 = vmatpush2.xpose.msra.mxu0 0.0
  %247 = vmatprep.subr.mxu0 0.0
  %248 = vmatpush2.xpose.msra.mxu0 0.0
  %249 = vmatprep.subr.mxu0 0.0
  %250 = vmatpush2.xpose.msra.mxu0 0.0
  %251 = vmatprep.subr.mxu0 0.0
  %252 = vmatpush2.xpose.msra.mxu0 0.0
  %253 = vmatprep.subr.mxu0 0.0
  %254 = vmatpush2.xpose.msra.mxu0 0.0
  %255 = vmatprep.subr.mxu0 0.0
  %256 = vmatpush2.xpose.msra.mxu0 0.0
  %257 = vmatprep.subr.mxu0 0.0
  %258 = vmatpush2.xpose.msra.mxu0 0.0
  %259 = vmatprep.subr.mxu0 0.0
  %260 = vmatpush2.xpose.msra.mxu0 0.0
  %261 = vmatprep.subr.mxu0 0.0
  %262 = vmatpush2.xpose.msra.mxu0 0.0
  %263 = vmatprep.subr.mxu0 0.0
  %264 = vmatpush2.xpose.msra.mxu0 0.0
  %265 = vmatprep.subr.mxu0 0.0
  %266 = vmatpush2.xpose.msra.mxu0 0.0
  %267 = vmatprep.subr.mxu0 0.0
  %268 = vmatpush2.xpose.msra.mxu0 0.0
  %269 = vmatprep.subr.mxu0 0.0
  %270 = vmatpush2.xpose.msra.mxu0 0.0
  %271 = vmatprep.subr.mxu0 0.0
  %272 = vmatpush2.xpose.msra.mxu0 0.0
  %273 = vmatprep.subr.mxu0 0.0
  %274 = vmatpush2.xpose.msra.mxu0 0.0
  %275 = vmatprep.mubr.f32.mxu0 0.0
  %276 = vmatmul.mubr.f32.gmra.mxu0 %v127
  %v277 = vpop.f32.mrf.mxu0
  %v278 = vadd.f32 0.0, %v277
  %v279 = vpop.f32.mrf.mxu0
  %280 = vdwg.mxu0
  %vm281 = vcmask 130048
  %v282 = vsel %vm281, %v202, -inf
  %283 = vmax.xlane.f32.xlu0 %v282
  %v284 = vpop.xlane.xlu0 %283
  %v285 = vsel %vm281, %v278, -inf
  %286 = vmax.xlane.f32.xlu0 %v285
  %v287 = vpop.xlane.xlu0 %286
  %v288 = vsub.f32 %v202, %v284
  %v289 = vsub.f32 %v278, %v287
  %v290 = vmul.f32 %v288, 1.442695
  %v291 = vpow.pop %v290
  %v292 = vmul.f32 %v289, 1.442695
  %v293 = vpow.pop %v292
  %v294 = vsel %vm281, %v291, 0.0
  %295 = vadd.xlane.f32.xlu0 %v294
  %v296 = vpop.xlane.xlu0 %295
  %v297 = vsel %vm281, %v293, 0.0
  %298 = vadd.xlane.f32.xlu0 %v297
  %v299 = vpop.xlane.xlu0 %298
  %v300 = vrcp.pop %v296
  %v301 = vrcp.pop %v299
  %v302 = vmul.f32 %v291, %v300
  %v303 = vmul.f32 %v293, %v301
  %304 = vrot.lane.b32.xlu0 %v108, 96
  %v305 = vpop.permute.xlu0 %304
  %306 = vrot.lane.b32.xlu0 %v113, 96
  %v307 = vpop.permute.xlu0 %306
  %v311 = vsel %vm281, %v302, 0
  %313 = vmatprep.subr.mxu0 0.0
  %314 = vmatpush1.msra.mxu0 0.0
  %315 = vmatprep.subr.mxu0 0.0
  %316 = vmatpush1.msra.mxu0 0.0
  %317 = vmatprep.subr.mxu0 0.0
  %318 = vmatpush1.msra.mxu0 0.0
  %319 = vmatprep.subr.mxu0 0.0
  %320 = vmatpush1.msra.mxu0 0.0
  %321 = vmatprep.subr.mxu0 0.0
  %322 = vmatpush1.msra.mxu0 0.0
  %323 = vmatprep.subr.mxu0 0.0
  %324 = vmatpush1.msra.mxu0 0.0
  %325 = vmatprep.subr.mxu0 0.0
  %326 = vmatpush1.msra.mxu0 0.0
  %327 = vmatprep.subr.mxu0 0.0
  %328 = vmatpush1.msra.mxu0 0.0
  %329 = vmatprep.subr.mxu0 0.0
  %330 = vmatpush1.msra.mxu0 0.0
  %331 = vmatprep.subr.mxu0 0.0
  %332 = vmatpush1.msra.mxu0 0.0
  %333 = vmatprep.subr.mxu0 0.0
  %334 = vmatpush1.msra.mxu0 0.0
  %335 = vmatprep.subr.mxu0 0.0
  %336 = vmatpush1.msra.mxu0 0.0
  %337 = vmatprep.subr.mxu0 0.0
  %338 = vmatpush1.msra.mxu0 0.0
  %339 = vmatprep.subr.mxu0 0.0
  %340 = vmatpush1.msra.mxu0 0.0
  %341 = vmatprep.subr.mxu0 0.0
  %342 = vmatpush1.msra.mxu0 %v307
  %343 = vmatprep.subr.mxu0 0.0
  %344 = vmatpush1.msra.mxu0 %v305
  %345 = vmatprep.subr.mxu0 0.0
  %346 = vmatpush2.msra.mxu0 0.0
  %347 = vmatprep.subr.mxu0 0.0
  %348 = vmatpush2.msra.mxu0 0.0
  %349 = vmatprep.subr.mxu0 0.0
  %350 = vmatpush2.msra.mxu0 0.0
  %351 = vmatprep.subr.mxu0 0.0
  %352 = vmatpush2.msra.mxu0 0.0
  %353 = vmatprep.subr.mxu0 0.0
  %354 = vmatpush2.msra.mxu0 0.0
  %355 = vmatprep.subr.mxu0 0.0
  %356 = vmatpush2.msra.mxu0 0.0
  %357 = vmatprep.subr.mxu0 0.0
  %358 = vmatpush2.msra.mxu0 0.0
  %359 = vmatprep.subr.mxu0 0.0
  %360 = vmatpush2.msra.mxu0 0.0
  %361 = vmatprep.subr.mxu0 0.0
  %362 = vmatpush2.msra.mxu0 0.0
  %363 = vmatprep.subr.mxu0 0.0
  %364 = vmatpush2.msra.mxu0 0.0
  %365 = vmatprep.subr.mxu0 0.0
  %366 = vmatpush2.msra.mxu0 0.0
  %367 = vmatprep.subr.mxu0 0.0
  %368 = vmatpush2.msra.mxu0 0.0
  %369 = vmatprep.subr.mxu0 0.0
  %370 = vmatpush2.msra.mxu0 0.0
  %371 = vmatprep.subr.mxu0 0.0
  %372 = vmatpush2.msra.mxu0 0.0
  %373 = vmatprep.subr.mxu0 0.0
  %374 = vmatpush2.msra.mxu0 0.0
  %375 = vmatprep.subr.mxu0 0.0
  %376 = vmatpush2.msra.mxu0 0.0
  %377 = vmatprep.mubr.f32.mxu0 0.0
  %378 = vmatmul.mubr.f32.gmra.mxu0 %v311
  %v379 = vpop.f32.mrf.mxu0
  %v380 = vadd.f32 0.0, %v379
  %v381 = vpop.f32.mrf.mxu0
  %382 = vdwg.mxu0
  %383 = vrot.lane.b32.xlu0 %v118, 96
  %v384 = vpop.permute.xlu0 %383
  %385 = vrot.lane.b32.xlu0 %v123, 96
  %v386 = vpop.permute.xlu0 %385
  %v390 = vsel %vm281, %v303, 0
  %392 = vmatprep.subr.mxu0 0.0
  %393 = vmatpush1.msra.mxu0 0.0
  %394 = vmatprep.subr.mxu0 0.0
  %395 = vmatpush1.msra.mxu0 0.0
  %396 = vmatprep.subr.mxu0 0.0
  %397 = vmatpush1.msra.mxu0 0.0
  %398 = vmatprep.subr.mxu0 0.0
  %399 = vmatpush1.msra.mxu0 0.0
  %400 = vmatprep.subr.mxu0 0.0
  %401 = vmatpush1.msra.mxu0 0.0
  %402 = vmatprep.subr.mxu0 0.0
  %403 = vmatpush1.msra.mxu0 0.0
  %404 = vmatprep.subr.mxu0 0.0
  %405 = vmatpush1.msra.mxu0 0.0
  %406 = vmatprep.subr.mxu0 0.0
  %407 = vmatpush1.msra.mxu0 0.0
  %408 = vmatprep.subr.mxu0 0.0
  %409 = vmatpush1.msra.mxu0 0.0
  %410 = vmatprep.subr.mxu0 0.0
  %411 = vmatpush1.msra.mxu0 0.0
  %412 = vmatprep.subr.mxu0 0.0
  %413 = vmatpush1.msra.mxu0 0.0
  %414 = vmatprep.subr.mxu0 0.0
  %415 = vmatpush1.msra.mxu0 0.0
  %416 = vmatprep.subr.mxu0 0.0
  %417 = vmatpush1.msra.mxu0 0.0
  %418 = vmatprep.subr.mxu0 0.0
  %419 = vmatpush1.msra.mxu0 0.0
  %420 = vmatprep.subr.mxu0 0.0
  %421 = vmatpush1.msra.mxu0 %v386
  %422 = vmatprep.subr.mxu0 0.0
  %423 = vmatpush1.msra.mxu0 %v384
  %424 = vmatprep.subr.mxu0 0.0
  %425 = vmatpush2.msra.mxu0 0.0
  %426 = vmatprep.subr.mxu0 0.0
  %427 = vmatpush2.msra.mxu0 0.0
  %428 = vmatprep.subr.mxu0 0.0
  %429 = vmatpush2.msra.mxu0 0.0
  %430 = vmatprep.subr.mxu0 0.0
  %431 = vmatpush2.msra.mxu0 0.0
  %432 = vmatprep.subr.mxu0 0.0
  %433 = vmatpush2.msra.mxu0 0.0
  %434 = vmatprep.subr.mxu0 0.0
  %435 = vmatpush2.msra.mxu0 0.0
  %436 = vmatprep.subr.mxu0 0.0
  %437 = vmatpush2.msra.mxu0 0.0
  %438 = vmatprep.subr.mxu0 0.0
  %439 = vmatpush2.msra.mxu0 0.0
  %440 = vmatprep.subr.mxu0 0.0
  %441 = vmatpush2.msra.mxu0 0.0
  %442 = vmatprep.subr.mxu0 0.0
  %443 = vmatpush2.msra.mxu0 0.0
  %444 = vmatprep.subr.mxu0 0.0
  %445 = vmatpush2.msra.mxu0 0.0
  %446 = vmatprep.subr.mxu0 0.0
  %447 = vmatpush2.msra.mxu0 0.0
  %448 = vmatprep.subr.mxu0 0.0
  %449 = vmatpush2.msra.mxu0 0.0
  %450 = vmatprep.subr.mxu0 0.0
  %451 = vmatpush2.msra.mxu0 0.0
  %452 = vmatprep.subr.mxu0 0.0
  %453 = vmatpush2.msra.mxu0 0.0
  %454 = vmatprep.subr.mxu0 0.0
  %455 = vmatpush2.msra.mxu0 0.0
  %456 = vmatprep.mubr.f32.mxu0 0.0
  %457 = vmatmul.mubr.f32.gmra.mxu0 %v390
  %v458 = vpop.f32.mrf.mxu0
  %v459 = vadd.f32 0.0, %v458
  %v460 = vpop.f32.mrf.mxu0
  %461 = vdwg.mxu0
  %462 = vrot.lane.b32.xlu0 %v21, 120
  %v463 = vpop.permute.xlu0 %462
  %464 = vrot.lane.b32.xlu0 %v108, 120
  %v465 = vpop.permute.xlu0 %464
  %466 = vrot.lane.b32.xlu0 %v113, 120
  %v467 = vpop.permute.xlu0 %466
  %v468 = vsel %vm28, %v463, 0
  %v470 = vsel %vm28, %v465, 0
  %v472 = vsel %vm28, %v467, 0
  %474 = vmatprep.subr.mxu0 0.0
  %475 = vmatpush1.xpose.msra.mxu0 0.0
  %476 = vmatprep.subr.mxu0 0.0
  %477 = vmatpush1.xpose.msra.mxu0 0.0
  %478 = vmatprep.subr.mxu0 0.0
  %479 = vmatpush1.xpose.msra.mxu0 0.0
  %480 = vmatprep.subr.mxu0 0.0
  %481 = vmatpush1.xpose.msra.mxu0 0.0
  %482 = vmatprep.subr.mxu0 0.0
  %483 = vmatpush1.xpose.msra.mxu0 0.0
  %484 = vmatprep.subr.mxu0 0.0
  %485 = vmatpush1.xpose.msra.mxu0 0.0
  %486 = vmatprep.subr.mxu0 0.0
  %487 = vmatpush1.xpose.msra.mxu0 0.0
  %488 = vmatprep.subr.mxu0 0.0
  %489 = vmatpush1.xpose.msra.mxu0 0.0
  %490 = vmatprep.subr.mxu0 0.0
  %491 = vmatpush1.xpose.msra.mxu0 0.0
  %492 = vmatprep.subr.mxu0 0.0
  %493 = vmatpush1.xpose.msra.mxu0 0.0
  %494 = vmatprep.subr.mxu0 0.0
  %495 = vmatpush1.xpose.msra.mxu0 0.0
  %496 = vmatprep.subr.mxu0 0.0
  %497 = vmatpush1.xpose.msra.mxu0 0.0
  %498 = vmatprep.subr.mxu0 0.0
  %499 = vmatpush1.xpose.msra.mxu0 0.0
  %500 = vmatprep.subr.mxu0 0.0
  %501 = vmatpush1.xpose.msra.mxu0 0.0
  %502 = vmatprep.subr.mxu0 0.0
  %503 = vmatpush1.xpose.msra.mxu0 %v472
  %504 = vmatprep.subr.mxu0 0.0
  %505 = vmatpush1.xpose.msra.mxu0 %v470
  %506 = vmatprep.subr.mxu0 0.0
  %507 = vmatpush2.xpose.msra.mxu0 0.0
  %508 = vmatprep.subr.mxu0 0.0
  %509 = vmatpush2.xpose.msra.mxu0 0.0
  %510 = vmatprep.subr.mxu0 0.0
  %511 = vmatpush2.xpose.msra.mxu0 0.0
  %512 = vmatprep.subr.mxu0 0.0
  %513 = vmatpush2.xpose.msra.mxu0 0.0
  %514 = vmatprep.subr.mxu0 0.0
  %515 = vmatpush2.xpose.msra.mxu0 0.0
  %516 = vmatprep.subr.mxu0 0.0
  %517 = vmatpush2.xpose.msra.mxu0 0.0
  %518 = vmatprep.subr.mxu0 0.0
  %519 = vmatpush2.xpose.msra.mxu0 0.0
  %520 = vmatprep.subr.mxu0 0.0
  %521 = vmatpush2.xpose.msra.mxu0 0.0
  %522 = vmatprep.subr.mxu0 0.0
  %523 = vmatpush2.xpose.msra.mxu0 0.0
  %524 = vmatprep.subr.mxu0 0.0
  %525 = vmatpush2.xpose.msra.mxu0 0.0
  %526 = vmatprep.subr.mxu0 0.0
  %527 = vmatpush2.xpose.msra.mxu0 0.0
  %528 = vmatprep.subr.mxu0 0.0
  %529 = vmatpush2.xpose.msra.mxu0 0.0
  %530 = vmatprep.subr.mxu0 0.0
  %531 = vmatpush2.xpose.msra.mxu0 0.0
  %532 = vmatprep.subr.mxu0 0.0
  %533 = vmatpush2.xpose.msra.mxu0 0.0
  %534 = vmatprep.subr.mxu0 0.0
  %535 = vmatpush2.xpose.msra.mxu0 0.0
  %536 = vmatprep.subr.mxu0 0.0
  %537 = vmatpush2.xpose.msra.mxu0 0.0
  %538 = vmatprep.mubr.f32.mxu0 0.0
  %539 = vmatmul.mubr.f32.gmra.mxu0 %v468
  %v540 = vpop.f32.mrf.mxu0
  %v541 = vadd.f32 0.0, %v540
  %v542 = vpop.f32.mrf.mxu0
  %543 = vdwg.mxu0
  %544 = vrot.lane.b32.xlu0 %v118, 120
  %v545 = vpop.permute.xlu0 %544
  %546 = vrot.lane.b32.xlu0 %v123, 120
  %v547 = vpop.permute.xlu0 %546
  %v548 = vsel %vm28, %v545, 0
  %v550 = vsel %vm28, %v547, 0
  %552 = vmatprep.subr.mxu0 0.0
  %553 = vmatpush1.xpose.msra.mxu0 0.0
  %554 = vmatprep.subr.mxu0 0.0
  %555 = vmatpush1.xpose.msra.mxu0 0.0
  %556 = vmatprep.subr.mxu0 0.0
  %557 = vmatpush1.xpose.msra.mxu0 0.0
  %558 = vmatprep.subr.mxu0 0.0
  %559 = vmatpush1.xpose.msra.mxu0 0.0
  %560 = vmatprep.subr.mxu0 0.0
  %561 = vmatpush1.xpose.msra.mxu0 0.0
  %562 = vmatprep.subr.mxu0 0.0
  %563 = vmatpush1.xpose.msra.mxu0 0.0
  %564 = vmatprep.subr.mxu0 0.0
  %565 = vmatpush1.xpose.msra.mxu0 0.0
  %566 = vmatprep.subr.mxu0 0.0
  %567 = vmatpush1.xpose.msra.mxu0 0.0
  %568 = vmatprep.subr.mxu0 0.0
  %569 = vmatpush1.xpose.msra.mxu0 0.0
  %570 = vmatprep.subr.mxu0 0.0
  %571 = vmatpush1.xpose.msra.mxu0 0.0
  %572 = vmatprep.subr.mxu0 0.0
  %573 = vmatpush1.xpose.msra.mxu0 0.0
  %574 = vmatprep.subr.mxu0 0.0
  %575 = vmatpush1.xpose.msra.mxu0 0.0
  %576 = vmatprep.subr.mxu0 0.0
  %577 = vmatpush1.xpose.msra.mxu0 0.0
  %578 = vmatprep.subr.mxu0 0.0
  %579 = vmatpush1.xpose.msra.mxu0 0.0
  %580 = vmatprep.subr.mxu0 0.0
  %581 = vmatpush1.xpose.msra.mxu0 %v550
  %582 = vmatprep.subr.mxu0 0.0
  %583 = vmatpush1.xpose.msra.mxu0 %v548
  %584 = vmatprep.subr.mxu0 0.0
  %585 = vmatpush2.xpose.msra.mxu0 0.0
  %586 = vmatprep.subr.mxu0 0.0
  %587 = vmatpush2.xpose.msra.mxu0 0.0
  %588 = vmatprep.subr.mxu0 0.0
  %589 = vmatpush2.xpose.msra.mxu0 0.0
  %590 = vmatprep.subr.mxu0 0.0
  %591 = vmatpush2.xpose.msra.mxu0 0.0
  %592 = vmatprep.subr.mxu0 0.0
  %593 = vmatpush2.xpose.msra.mxu0 0.0
  %594 = vmatprep.subr.mxu0 0.0
  %595 = vmatpush2.xpose.msra.mxu0 0.0
  %596 = vmatprep.subr.mxu0 0.0
  %597 = vmatpush2.xpose.msra.mxu0 0.0
  %598 = vmatprep.subr.mxu0 0.0
  %599 = vmatpush2.xpose.msra.mxu0 0.0
  %600 = vmatprep.subr.mxu0 0.0
  %601 = vmatpush2.xpose.msra.mxu0 0.0
  %602 = vmatprep.subr.mxu0 0.0
  %603 = vmatpush2.xpose.msra.mxu0 0.0
  %604 = vmatprep.subr.mxu0 0.0
  %605 = vmatpush2.xpose.msra.mxu0 0.0
  %606 = vmatprep.subr.mxu0 0.0
  %607 = vmatpush2.xpose.msra.mxu0 0.0
  %608 = vmatprep.subr.mxu0 0.0
  %609 = vmatpush2.xpose.msra.mxu0 0.0
  %610 = vmatprep.subr.mxu0 0.0
  %611 = vmatpush2.xpose.msra.mxu0 0.0
  %612 = vmatprep.subr.mxu0 0.0
  %613 = vmatpush2.xpose.msra.mxu0 0.0
  %614 = vmatprep.subr.mxu0 0.0
  %615 = vmatpush2.xpose.msra.mxu0 0.0
  %616 = vmatprep.mubr.f32.mxu0 0.0
  %617 = vmatmul.mubr.f32.gmra.mxu0 %v468
  %v618 = vpop.f32.mrf.mxu0
  %v619 = vadd.f32 0.0, %v618
  %v620 = vpop.f32.mrf.mxu0
  %621 = vdwg.mxu0
  %v622 = vsel %vm281, %v541, -inf
  %623 = vmax.xlane.f32.xlu0 %v622
  %v624 = vpop.xlane.xlu0 %623
  %v625 = vsel %vm281, %v619, -inf
  %626 = vmax.xlane.f32.xlu0 %v625
  %v627 = vpop.xlane.xlu0 %626
  %v628 = vsub.f32 %v541, %v624
  %v629 = vsub.f32 %v619, %v627
  %v630 = vmul.f32 %v628, 1.442695
  %v631 = vpow.pop %v630
  %v632 = vmul.f32 %v629, 1.442695
  %v633 = vpow.pop %v632
  %v634 = vsel %vm281, %v631, 0.0
  %635 = vadd.xlane.f32.xlu0 %v634
  %v636 = vpop.xlane.xlu0 %635
  %v637 = vsel %vm281, %v633, 0.0
  %638 = vadd.xlane.f32.xlu0 %v637
  %v639 = vpop.xlane.xlu0 %638
  %v640 = vrcp.pop %v636
  %v641 = vrcp.pop %v639
  %v642 = vmul.f32 %v631, %v640
  %v643 = vmul.f32 %v633, %v641
  %644 = vrot.lane.b32.xlu0 %v108, 88
  %v645 = vpop.permute.xlu0 %644
  %646 = vrot.lane.b32.xlu0 %v113, 88
  %v647 = vpop.permute.xlu0 %646
  %v651 = vsel %vm281, %v642, 0
  %653 = vmatprep.subr.mxu0 0.0
  %654 = vmatpush1.msra.mxu0 0.0
  %655 = vmatprep.subr.mxu0 0.0
  %656 = vmatpush1.msra.mxu0 0.0
  %657 = vmatprep.subr.mxu0 0.0
  %658 = vmatpush1.msra.mxu0 0.0
  %659 = vmatprep.subr.mxu0 0.0
  %660 = vmatpush1.msra.mxu0 0.0
  %661 = vmatprep.subr.mxu0 0.0
  %662 = vmatpush1.msra.mxu0 0.0
  %663 = vmatprep.subr.mxu0 0.0
  %664 = vmatpush1.msra.mxu0 0.0
  %665 = vmatprep.subr.mxu0 0.0
  %666 = vmatpush1.msra.mxu0 0.0
  %667 = vmatprep.subr.mxu0 0.0
  %668 = vmatpush1.msra.mxu0 0.0
  %669 = vmatprep.subr.mxu0 0.0
  %670 = vmatpush1.msra.mxu0 0.0
  %671 = vmatprep.subr.mxu0 0.0
  %672 = vmatpush1.msra.mxu0 0.0
  %673 = vmatprep.subr.mxu0 0.0
  %674 = vmatpush1.msra.mxu0 0.0
  %675 = vmatprep.subr.mxu0 0.0
  %676 = vmatpush1.msra.mxu0 0.0
  %677 = vmatprep.subr.mxu0 0.0
  %678 = vmatpush1.msra.mxu0 0.0
  %679 = vmatprep.subr.mxu0 0.0
  %680 = vmatpush1.msra.mxu0 0.0
  %681 = vmatprep.subr.mxu0 0.0
  %682 = vmatpush1.msra.mxu0 %v647
  %683 = vmatprep.subr.mxu0 0.0
  %684 = vmatpush1.msra.mxu0 %v645
  %685 = vmatprep.subr.mxu0 0.0
  %686 = vmatpush2.msra.mxu0 0.0
  %687 = vmatprep.subr.mxu0 0.0
  %688 = vmatpush2.msra.mxu0 0.0
  %689 = vmatprep.subr.mxu0 0.0
  %690 = vmatpush2.msra.mxu0 0.0
  %691 = vmatprep.subr.mxu0 0.0
  %692 = vmatpush2.msra.mxu0 0.0
  %693 = vmatprep.subr.mxu0 0.0
  %694 = vmatpush2.msra.mxu0 0.0
  %695 = vmatprep.subr.mxu0 0.0
  %696 = vmatpush2.msra.mxu0 0.0
  %697 = vmatprep.subr.mxu0 0.0
  %698 = vmatpush2.msra.mxu0 0.0
  %699 = vmatprep.subr.mxu0 0.0
  %700 = vmatpush2.msra.mxu0 0.0
  %701 = vmatprep.subr.mxu0 0.0
  %702 = vmatpush2.msra.mxu0 0.0
  %703 = vmatprep.subr.mxu0 0.0
  %704 = vmatpush2.msra.mxu0 0.0
  %705 = vmatprep.subr.mxu0 0.0
  %706 = vmatpush2.msra.mxu0 0.0
  %707 = vmatprep.subr.mxu0 0.0
  %708 = vmatpush2.msra.mxu0 0.0
  %709 = vmatprep.subr.mxu0 0.0
  %710 = vmatpush2.msra.mxu0 0.0
  %711 = vmatprep.subr.mxu0 0.0
  %712 = vmatpush2.msra.mxu0 0.0
  %713 = vmatprep.subr.mxu0 0.0
  %714 = vmatpush2.msra.mxu0 0.0
  %715 = vmatprep.subr.mxu0 0.0
  %716 = vmatpush2.msra.mxu0 0.0
  %717 = vmatprep.mubr.f32.mxu0 0.0
  %718 = vmatmul.mubr.f32.gmra.mxu0 %v651
  %v719 = vpop.f32.mrf.mxu0
  %v720 = vadd.f32 0.0, %v719
  %v721 = vpop.f32.mrf.mxu0
  %722 = vdwg.mxu0
  %723 = vrot.lane.b32.xlu0 %v118, 88
  %v724 = vpop.permute.xlu0 %723
  %725 = vrot.lane.b32.xlu0 %v123, 88
  %v726 = vpop.permute.xlu0 %725
  %v730 = vsel %vm281, %v643, 0
  %732 = vmatprep.subr.mxu0 0.0
  %733 = vmatpush1.msra.mxu0 0.0
  %734 = vmatprep.subr.mxu0 0.0
  %735 = vmatpush1.msra.mxu0 0.0
  %736 = vmatprep.subr.mxu0 0.0
  %737 = vmatpush1.msra.mxu0 0.0
  %738 = vmatprep.subr.mxu0 0.0
  %739 = vmatpush1.msra.mxu0 0.0
  %740 = vmatprep.subr.mxu0 0.0
  %741 = vmatpush1.msra.mxu0 0.0
  %742 = vmatprep.subr.mxu0 0.0
  %743 = vmatpush1.msra.mxu0 0.0
  %744 = vmatprep.subr.mxu0 0.0
  %745 = vmatpush1.msra.mxu0 0.0
  %746 = vmatprep.subr.mxu0 0.0
  %747 = vmatpush1.msra.mxu0 0.0
  %748 = vmatprep.subr.mxu0 0.0
  %749 = vmatpush1.msra.mxu0 0.0
  %750 = vmatprep.subr.mxu0 0.0
  %751 = vmatpush1.msra.mxu0 0.0
  %752 = vmatprep.subr.mxu0 0.0
  %753 = vmatpush1.msra.mxu0 0.0
  %754 = vmatprep.subr.mxu0 0.0
  %755 = vmatpush1.msra.mxu0 0.0
  %756 = vmatprep.subr.mxu0 0.0
  %757 = vmatpush1.msra.mxu0 0.0
  %758 = vmatprep.subr.mxu0 0.0
  %759 = vmatpush1.msra.mxu0 0.0
  %760 = vmatprep.subr.mxu0 0.0
  %761 = vmatpush1.msra.mxu0 %v726
  %762 = vmatprep.subr.mxu0 0.0
  %763 = vmatpush1.msra.mxu0 %v724
  %764 = vmatprep.subr.mxu0 0.0
  %765 = vmatpush2.msra.mxu0 0.0
  %766 = vmatprep.subr.mxu0 0.0
  %767 = vmatpush2.msra.mxu0 0.0
  %768 = vmatprep.subr.mxu0 0.0
  %769 = vmatpush2.msra.mxu0 0.0
  %770 = vmatprep.subr.mxu0 0.0
  %771 = vmatpush2.msra.mxu0 0.0
  %772 = vmatprep.subr.mxu0 0.0
  %773 = vmatpush2.msra.mxu0 0.0
  %774 = vmatprep.subr.mxu0 0.0
  %775 = vmatpush2.msra.mxu0 0.0
  %776 = vmatprep.subr.mxu0 0.0
  %777 = vmatpush2.msra.mxu0 0.0
  %778 = vmatprep.subr.mxu0 0.0
  %779 = vmatpush2.msra.mxu0 0.0
  %780 = vmatprep.subr.mxu0 0.0
  %781 = vmatpush2.msra.mxu0 0.0
  %782 = vmatprep.subr.mxu0 0.0
  %783 = vmatpush2.msra.mxu0 0.0
  %784 = vmatprep.subr.mxu0 0.0
  %785 = vmatpush2.msra.mxu0 0.0
  %786 = vmatprep.subr.mxu0 0.0
  %787 = vmatpush2.msra.mxu0 0.0
  %788 = vmatprep.subr.mxu0 0.0
  %789 = vmatpush2.msra.mxu0 0.0
  %790 = vmatprep.subr.mxu0 0.0
  %791 = vmatpush2.msra.mxu0 0.0
  %792 = vmatprep.subr.mxu0 0.0
  %793 = vmatpush2.msra.mxu0 0.0
  %794 = vmatprep.subr.mxu0 0.0
  %795 = vmatpush2.msra.mxu0 0.0
  %796 = vmatprep.mubr.f32.mxu0 0.0
  %797 = vmatmul.mubr.f32.gmra.mxu0 %v730
  %v798 = vpop.f32.mrf.mxu0
  %v799 = vadd.f32 0.0, %v798
  %v800 = vpop.f32.mrf.mxu0
  %801 = vdwg.mxu0
  %802 = vrot.lane.b32.xlu0 %v21, 112
  %v803 = vpop.permute.xlu0 %802
  %804 = vrot.lane.b32.xlu0 %v108, 112
  %v805 = vpop.permute.xlu0 %804
  %806 = vrot.lane.b32.xlu0 %v113, 112
  %v807 = vpop.permute.xlu0 %806
  %v808 = vsel %vm28, %v803, 0
  %v810 = vsel %vm28, %v805, 0
  %v812 = vsel %vm28, %v807, 0
  %814 = vmatprep.subr.mxu0 0.0
  %815 = vmatpush1.xpose.msra.mxu0 0.0
  %816 = vmatprep.subr.mxu0 0.0
  %817 = vmatpush1.xpose.msra.mxu0 0.0
  %818 = vmatprep.subr.mxu0 0.0
  %819 = vmatpush1.xpose.msra.mxu0 0.0
  %820 = vmatprep.subr.mxu0 0.0
  %821 = vmatpush1.xpose.msra.mxu0 0.0
  %822 = vmatprep.subr.mxu0 0.0
  %823 = vmatpush1.xpose.msra.mxu0 0.0
  %824 = vmatprep.subr.mxu0 0.0
  %825 = vmatpush1.xpose.msra.mxu0 0.0
  %826 = vmatprep.subr.mxu0 0.0
  %827 = vmatpush1.xpose.msra.mxu0 0.0
  %828 = vmatprep.subr.mxu0 0.0
  %829 = vmatpush1.xpose.msra.mxu0 0.0
  %830 = vmatprep.subr.mxu0 0.0
  %831 = vmatpush1.xpose.msra.mxu0 0.0
  %832 = vmatprep.subr.mxu0 0.0
  %833 = vmatpush1.xpose.msra.mxu0 0.0
  %834 = vmatprep.subr.mxu0 0.0
  %835 = vmatpush1.xpose.msra.mxu0 0.0
  %836 = vmatprep.subr.mxu0 0.0
  %837 = vmatpush1.xpose.msra.mxu0 0.0
  %838 = vmatprep.subr.mxu0 0.0
  %839 = vmatpush1.xpose.msra.mxu0 0.0
  %840 = vmatprep.subr.mxu0 0.0
  %841 = vmatpush1.xpose.msra.mxu0 0.0
  %842 = vmatprep.subr.mxu0 0.0
  %843 = vmatpush1.xpose.msra.mxu0 %v812
  %844 = vmatprep.subr.mxu0 0.0
  %845 = vmatpush1.xpose.msra.mxu0 %v810
  %846 = vmatprep.subr.mxu0 0.0
  %847 = vmatpush2.xpose.msra.mxu0 0.0
  %848 = vmatprep.subr.mxu0 0.0
  %849 = vmatpush2.xpose.msra.mxu0 0.0
  %850 = vmatprep.subr.mxu0 0.0
  %851 = vmatpush2.xpose.msra.mxu0 0.0
  %852 = vmatprep.subr.mxu0 0.0
  %853 = vmatpush2.xpose.msra.mxu0 0.0
  %854 = vmatprep.subr.mxu0 0.0
  %855 = vmatpush2.xpose.msra.mxu0 0.0
  %856 = vmatprep.subr.mxu0 0.0
  %857 = vmatpush2.xpose.msra.mxu0 0.0
  %858 = vmatprep.subr.mxu0 0.0
  %859 = vmatpush2.xpose.msra.mxu0 0.0
  %860 = vmatprep.subr.mxu0 0.0
  %861 = vmatpush2.xpose.msra.mxu0 0.0
  %862 = vmatprep.subr.mxu0 0.0
  %863 = vmatpush2.xpose.msra.mxu0 0.0
  %864 = vmatprep.subr.mxu0 0.0
  %865 = vmatpush2.xpose.msra.mxu0 0.0
  %866 = vmatprep.subr.mxu0 0.0
  %867 = vmatpush2.xpose.msra.mxu0 0.0
  %868 = vmatprep.subr.mxu0 0.0
  %869 = vmatpush2.xpose.msra.mxu0 0.0
  %870 = vmatprep.subr.mxu0 0.0
  %871 = vmatpush2.xpose.msra.mxu0 0.0
  %872 = vmatprep.subr.mxu0 0.0
  %873 = vmatpush2.xpose.msra.mxu0 0.0
  %874 = vmatprep.subr.mxu0 0.0
  %875 = vmatpush2.xpose.msra.mxu0 0.0
  %876 = vmatprep.subr.mxu0 0.0
  %877 = vmatpush2.xpose.msra.mxu0 0.0
  %878 = vmatprep.mubr.f32.mxu0 0.0
  %879 = vmatmul.mubr.f32.gmra.mxu0 %v808
  %v880 = vpop.f32.mrf.mxu0
  %v881 = vadd.f32 0.0, %v880
  %v882 = vpop.f32.mrf.mxu0
  %883 = vdwg.mxu0
  %884 = vrot.lane.b32.xlu0 %v118, 112
  %v885 = vpop.permute.xlu0 %884
  %886 = vrot.lane.b32.xlu0 %v123, 112
  %v887 = vpop.permute.xlu0 %886
  %v888 = vsel %vm28, %v885, 0
  %v890 = vsel %vm28, %v887, 0
  %892 = vmatprep.subr.mxu0 0.0
  %893 = vmatpush1.xpose.msra.mxu0 0.0
  %894 = vmatprep.subr.mxu0 0.0
  %895 = vmatpush1.xpose.msra.mxu0 0.0
  %896 = vmatprep.subr.mxu0 0.0
  %897 = vmatpush1.xpose.msra.mxu0 0.0
  %898 = vmatprep.subr.mxu0 0.0
  %899 = vmatpush1.xpose.msra.mxu0 0.0
  %900 = vmatprep.subr.mxu0 0.0
  %901 = vmatpush1.xpose.msra.mxu0 0.0
  %902 = vmatprep.subr.mxu0 0.0
  %903 = vmatpush1.xpose.msra.mxu0 0.0
  %904 = vmatprep.subr.mxu0 0.0
  %905 = vmatpush1.xpose.msra.mxu0 0.0
  %906 = vmatprep.subr.mxu0 0.0
  %907 = vmatpush1.xpose.msra.mxu0 0.0
  %908 = vmatprep.subr.mxu0 0.0
  %909 = vmatpush1.xpose.msra.mxu0 0.0
  %910 = vmatprep.subr.mxu0 0.0
  %911 = vmatpush1.xpose.msra.mxu0 0.0
  %912 = vmatprep.subr.mxu0 0.0
  %913 = vmatpush1.xpose.msra.mxu0 0.0
  %914 = vmatprep.subr.mxu0 0.0
  %915 = vmatpush1.xpose.msra.mxu0 0.0
  %916 = vmatprep.subr.mxu0 0.0
  %917 = vmatpush1.xpose.msra.mxu0 0.0
  %918 = vmatprep.subr.mxu0 0.0
  %919 = vmatpush1.xpose.msra.mxu0 0.0
  %920 = vmatprep.subr.mxu0 0.0
  %921 = vmatpush1.xpose.msra.mxu0 %v890
  %922 = vmatprep.subr.mxu0 0.0
  %923 = vmatpush1.xpose.msra.mxu0 %v888
  %924 = vmatprep.subr.mxu0 0.0
  %925 = vmatpush2.xpose.msra.mxu0 0.0
  %926 = vmatprep.subr.mxu0 0.0
  %927 = vmatpush2.xpose.msra.mxu0 0.0
  %928 = vmatprep.subr.mxu0 0.0
  %929 = vmatpush2.xpose.msra.mxu0 0.0
  %930 = vmatprep.subr.mxu0 0.0
  %931 = vmatpush2.xpose.msra.mxu0 0.0
  %932 = vmatprep.subr.mxu0 0.0
  %933 = vmatpush2.xpose.msra.mxu0 0.0
  %934 = vmatprep.subr.mxu0 0.0
  %935 = vmatpush2.xpose.msra.mxu0 0.0
  %936 = vmatprep.subr.mxu0 0.0
  %937 = vmatpush2.xpose.msra.mxu0 0.0
  %938 = vmatprep.subr.mxu0 0.0
  %939 = vmatpush2.xpose.msra.mxu0 0.0
  %940 = vmatprep.subr.mxu0 0.0
  %941 = vmatpush2.xpose.msra.mxu0 0.0
  %942 = vmatprep.subr.mxu0 0.0
  %943 = vmatpush2.xpose.msra.mxu0 0.0
  %944 = vmatprep.subr.mxu0 0.0
  %945 = vmatpush2.xpose.msra.mxu0 0.0
  %946 = vmatprep.subr.mxu0 0.0
  %947 = vmatpush2.xpose.msra.mxu0 0.0
  %948 = vmatprep.subr.mxu0 0.0
  %949 = vmatpush2.xpose.msra.mxu0 0.0
  %950 = vmatprep.subr.mxu0 0.0
  %951 = vmatpush2.xpose.msra.mxu0 0.0
  %952 = vmatprep.subr.mxu0 0.0
  %953 = vmatpush2.xpose.msra.mxu0 0.0
  %954 = vmatprep.subr.mxu0 0.0
  %955 = vmatpush2.xpose.msra.mxu0 0.0
  %956 = vmatprep.mubr.f32.mxu0 0.0
  %957 = vmatmul.mubr.f32.gmra.mxu0 %v808
  %v958 = vpop.f32.mrf.mxu0
  %v959 = vadd.f32 0.0, %v958
  %v960 = vpop.f32.mrf.mxu0
  %961 = vdwg.mxu0
  %v962 = vsel %vm281, %v881, -inf
  %963 = vmax.xlane.f32.xlu0 %v962
  %v964 = vpop.xlane.xlu0 %963
  %v965 = vsel %vm281, %v959, -inf
  %966 = vmax.xlane.f32.xlu0 %v965
  %v967 = vpop.xlane.xlu0 %966
  %v968 = vsub.f32 %v881, %v964
  %v969 = vsub.f32 %v959, %v967
  %v970 = vmul.f32 %v968, 1.442695
  %v971 = vpow.pop %v970
  %v972 = vmul.f32 %v969, 1.442695
  %v973 = vpow.pop %v972
  %v974 = vsel %vm281, %v971, 0.0
  %975 = vadd.xlane.f32.xlu0 %v974
  %v976 = vpop.xlane.xlu0 %975
  %v977 = vsel %vm281, %v973, 0.0
  %978 = vadd.xlane.f32.xlu0 %v977
  %v979 = vpop.xlane.xlu0 %978
  %v980 = vrcp.pop %v976
  %v981 = vrcp.pop %v979
  %v982 = vmul.f32 %v971, %v980
  %v983 = vmul.f32 %v973, %v981
  %984 = vrot.lane.b32.xlu0 %v108, 80
  %v985 = vpop.permute.xlu0 %984
  %986 = vrot.lane.b32.xlu0 %v113, 80
  %v987 = vpop.permute.xlu0 %986
  %v991 = vsel %vm281, %v982, 0
  %993 = vmatprep.subr.mxu0 0.0
  %994 = vmatpush1.msra.mxu0 0.0
  %995 = vmatprep.subr.mxu0 0.0
  %996 = vmatpush1.msra.mxu0 0.0
  %997 = vmatprep.subr.mxu0 0.0
  %998 = vmatpush1.msra.mxu0 0.0
  %999 = vmatprep.subr.mxu0 0.0
  %1000 = vmatpush1.msra.mxu0 0.0
  %1001 = vmatprep.subr.mxu0 0.0
  %1002 = vmatpush1.msra.mxu0 0.0
  %1003 = vmatprep.subr.mxu0 0.0
  %1004 = vmatpush1.msra.mxu0 0.0
  %1005 = vmatprep.subr.mxu0 0.0
  %1006 = vmatpush1.msra.mxu0 0.0
  %1007 = vmatprep.subr.mxu0 0.0
  %1008 = vmatpush1.msra.mxu0 0.0
  %1009 = vmatprep.subr.mxu0 0.0
  %1010 = vmatpush1.msra.mxu0 0.0
  %1011 = vmatprep.subr.mxu0 0.0
  %1012 = vmatpush1.msra.mxu0 0.0
  %1013 = vmatprep.subr.mxu0 0.0
  %1014 = vmatpush1.msra.mxu0 0.0
  %1015 = vmatprep.subr.mxu0 0.0
  %1016 = vmatpush1.msra.mxu0 0.0
  %1017 = vmatprep.subr.mxu0 0.0
  %1018 = vmatpush1.msra.mxu0 0.0
  %1019 = vmatprep.subr.mxu0 0.0
  %1020 = vmatpush1.msra.mxu0 0.0
  %1021 = vmatprep.subr.mxu0 0.0
  %1022 = vmatpush1.msra.mxu0 %v987
  %1023 = vmatprep.subr.mxu0 0.0
  %1024 = vmatpush1.msra.mxu0 %v985
  %1025 = vmatprep.subr.mxu0 0.0
  %1026 = vmatpush2.msra.mxu0 0.0
  %1027 = vmatprep.subr.mxu0 0.0
  %1028 = vmatpush2.msra.mxu0 0.0
  %1029 = vmatprep.subr.mxu0 0.0
  %1030 = vmatpush2.msra.mxu0 0.0
  %1031 = vmatprep.subr.mxu0 0.0
  %1032 = vmatpush2.msra.mxu0 0.0
  %1033 = vmatprep.subr.mxu0 0.0
  %1034 = vmatpush2.msra.mxu0 0.0
  %1035 = vmatprep.subr.mxu0 0.0
  %1036 = vmatpush2.msra.mxu0 0.0
  %1037 = vmatprep.subr.mxu0 0.0
  %1038 = vmatpush2.msra.mxu0 0.0
  %1039 = vmatprep.subr.mxu0 0.0
  %1040 = vmatpush2.msra.mxu0 0.0
  %1041 = vmatprep.subr.mxu0 0.0
  %1042 = vmatpush2.msra.mxu0 0.0
  %1043 = vmatprep.subr.mxu0 0.0
  %1044 = vmatpush2.msra.mxu0 0.0
  %1045 = vmatprep.subr.mxu0 0.0
  %1046 = vmatpush2.msra.mxu0 0.0
  %1047 = vmatprep.subr.mxu0 0.0
  %1048 = vmatpush2.msra.mxu0 0.0
  %1049 = vmatprep.subr.mxu0 0.0
  %1050 = vmatpush2.msra.mxu0 0.0
  %1051 = vmatprep.subr.mxu0 0.0
  %1052 = vmatpush2.msra.mxu0 0.0
  %1053 = vmatprep.subr.mxu0 0.0
  %1054 = vmatpush2.msra.mxu0 0.0
  %1055 = vmatprep.subr.mxu0 0.0
  %1056 = vmatpush2.msra.mxu0 0.0
  %1057 = vmatprep.mubr.f32.mxu0 0.0
  %1058 = vmatmul.mubr.f32.gmra.mxu0 %v991
  %v1059 = vpop.f32.mrf.mxu0
  %v1060 = vadd.f32 0.0, %v1059
  %v1061 = vpop.f32.mrf.mxu0
  %1062 = vdwg.mxu0
  %1063 = vrot.lane.b32.xlu0 %v118, 80
  %v1064 = vpop.permute.xlu0 %1063
  %1065 = vrot.lane.b32.xlu0 %v123, 80
  %v1066 = vpop.permute.xlu0 %1065
  %v1070 = vsel %vm281, %v983, 0
  %1072 = vmatprep.subr.mxu0 0.0
  %1073 = vmatpush1.msra.mxu0 0.0
  %1074 = vmatprep.subr.mxu0 0.0
  %1075 = vmatpush1.msra.mxu0 0.0
  %1076 = vmatprep.subr.mxu0 0.0
  %1077 = vmatpush1.msra.mxu0 0.0
  %1078 = vmatprep.subr.mxu0 0.0
  %1079 = vmatpush1.msra.mxu0 0.0
  %1080 = vmatprep.subr.mxu0 0.0
  %1081 = vmatpush1.msra.mxu0 0.0
  %1082 = vmatprep.subr.mxu0 0.0
  %1083 = vmatpush1.msra.mxu0 0.0
  %1084 = vmatprep.subr.mxu0 0.0
  %1085 = vmatpush1.msra.mxu0 0.0
  %1086 = vmatprep.subr.mxu0 0.0
  %1087 = vmatpush1.msra.mxu0 0.0
  %1088 = vmatprep.subr.mxu0 0.0
  %1089 = vmatpush1.msra.mxu0 0.0
  %1090 = vmatprep.subr.mxu0 0.0
  %1091 = vmatpush1.msra.mxu0 0.0
  %1092 = vmatprep.subr.mxu0 0.0
  %1093 = vmatpush1.msra.mxu0 0.0
  %1094 = vmatprep.subr.mxu0 0.0
  %1095 = vmatpush1.msra.mxu0 0.0
  %1096 = vmatprep.subr.mxu0 0.0
  %1097 = vmatpush1.msra.mxu0 0.0
  %1098 = vmatprep.subr.mxu0 0.0
  %1099 = vmatpush1.msra.mxu0 0.0
  %1100 = vmatprep.subr.mxu0 0.0
  %1101 = vmatpush1.msra.mxu0 %v1066
  %1102 = vmatprep.subr.mxu0 0.0
  %1103 = vmatpush1.msra.mxu0 %v1064
  %1104 = vmatprep.subr.mxu0 0.0
  %1105 = vmatpush2.msra.mxu0 0.0
  %1106 = vmatprep.subr.mxu0 0.0
  %1107 = vmatpush2.msra.mxu0 0.0
  %1108 = vmatprep.subr.mxu0 0.0
  %1109 = vmatpush2.msra.mxu0 0.0
  %1110 = vmatprep.subr.mxu0 0.0
  %1111 = vmatpush2.msra.mxu0 0.0
  %1112 = vmatprep.subr.mxu0 0.0
  %1113 = vmatpush2.msra.mxu0 0.0
  %1114 = vmatprep.subr.mxu0 0.0
  %1115 = vmatpush2.msra.mxu0 0.0
  %1116 = vmatprep.subr.mxu0 0.0
  %1117 = vmatpush2.msra.mxu0 0.0
  %1118 = vmatprep.subr.mxu0 0.0
  %1119 = vmatpush2.msra.mxu0 0.0
  %1120 = vmatprep.subr.mxu0 0.0
  %1121 = vmatpush2.msra.mxu0 0.0
  %1122 = vmatprep.subr.mxu0 0.0
  %1123 = vmatpush2.msra.mxu0 0.0
  %1124 = vmatprep.subr.mxu0 0.0
  %1125 = vmatpush2.msra.mxu0 0.0
  %1126 = vmatprep.subr.mxu0 0.0
  %1127 = vmatpush2.msra.mxu0 0.0
  %1128 = vmatprep.subr.mxu0 0.0
  %1129 = vmatpush2.msra.mxu0 0.0
  %1130 = vmatprep.subr.mxu0 0.0
  %1131 = vmatpush2.msra.mxu0 0.0
  %1132 = vmatprep.subr.mxu0 0.0
  %1133 = vmatpush2.msra.mxu0 0.0
  %1134 = vmatprep.subr.mxu0 0.0
  %1135 = vmatpush2.msra.mxu0 0.0
  %1136 = vmatprep.mubr.f32.mxu0 0.0
  %1137 = vmatmul.mubr.f32.gmra.mxu0 %v1070
  %v1138 = vpop.f32.mrf.mxu0
  %v1139 = vadd.f32 0.0, %v1138
  %v1140 = vpop.f32.mrf.mxu0
  %1141 = vdwg.mxu0
  %1142 = vrot.lane.b32.xlu0 %v21, 104
  %v1143 = vpop.permute.xlu0 %1142
  %1144 = vrot.lane.b32.xlu0 %v108, 104
  %v1145 = vpop.permute.xlu0 %1144
  %1146 = vrot.lane.b32.xlu0 %v113, 104
  %v1147 = vpop.permute.xlu0 %1146
  %v1148 = vsel %vm28, %v1143, 0
  %v1150 = vsel %vm28, %v1145, 0
  %v1152 = vsel %vm28, %v1147, 0
  %1154 = vmatprep.subr.mxu0 0.0
  %1155 = vmatpush1.xpose.msra.mxu0 0.0
  %1156 = vmatprep.subr.mxu0 0.0
  %1157 = vmatpush1.xpose.msra.mxu0 0.0
  %1158 = vmatprep.subr.mxu0 0.0
  %1159 = vmatpush1.xpose.msra.mxu0 0.0
  %1160 = vmatprep.subr.mxu0 0.0
  %1161 = vmatpush1.xpose.msra.mxu0 0.0
  %1162 = vmatprep.subr.mxu0 0.0
  %1163 = vmatpush1.xpose.msra.mxu0 0.0
  %1164 = vmatprep.subr.mxu0 0.0
  %1165 = vmatpush1.xpose.msra.mxu0 0.0
  %1166 = vmatprep.subr.mxu0 0.0
  %1167 = vmatpush1.xpose.msra.mxu0 0.0
  %1168 = vmatprep.subr.mxu0 0.0
  %1169 = vmatpush1.xpose.msra.mxu0 0.0
  %1170 = vmatprep.subr.mxu0 0.0
  %1171 = vmatpush1.xpose.msra.mxu0 0.0
  %1172 = vmatprep.subr.mxu0 0.0
  %1173 = vmatpush1.xpose.msra.mxu0 0.0
  %1174 = vmatprep.subr.mxu0 0.0
  %1175 = vmatpush1.xpose.msra.mxu0 0.0
  %1176 = vmatprep.subr.mxu0 0.0
  %1177 = vmatpush1.xpose.msra.mxu0 0.0
  %1178 = vmatprep.subr.mxu0 0.0
  %1179 = vmatpush1.xpose.msra.mxu0 0.0
  %1180 = vmatprep.subr.mxu0 0.0
  %1181 = vmatpush1.xpose.msra.mxu0 0.0
  %1182 = vmatprep.subr.mxu0 0.0
  %1183 = vmatpush1.xpose.msra.mxu0 %v1152
  %1184 = vmatprep.subr.mxu0 0.0
  %1185 = vmatpush1.xpose.msra.mxu0 %v1150
  %1186 = vmatprep.subr.mxu0 0.0
  %1187 = vmatpush2.xpose.msra.mxu0 0.0
  %1188 = vmatprep.subr.mxu0 0.0
  %1189 = vmatpush2.xpose.msra.mxu0 0.0
  %1190 = vmatprep.subr.mxu0 0.0
  %1191 = vmatpush2.xpose.msra.mxu0 0.0
  %1192 = vmatprep.subr.mxu0 0.0
  %1193 = vmatpush2.xpose.msra.mxu0 0.0
  %1194 = vmatprep.subr.mxu0 0.0
  %1195 = vmatpush2.xpose.msra.mxu0 0.0
  %1196 = vmatprep.subr.mxu0 0.0
  %1197 = vmatpush2.xpose.msra.mxu0 0.0
  %1198 = vmatprep.subr.mxu0 0.0
  %1199 = vmatpush2.xpose.msra.mxu0 0.0
  %1200 = vmatprep.subr.mxu0 0.0
  %1201 = vmatpush2.xpose.msra.mxu0 0.0
  %1202 = vmatprep.subr.mxu0 0.0
  %1203 = vmatpush2.xpose.msra.mxu0 0.0
  %1204 = vmatprep.subr.mxu0 0.0
  %1205 = vmatpush2.xpose.msra.mxu0 0.0
  %1206 = vmatprep.subr.mxu0 0.0
  %1207 = vmatpush2.xpose.msra.mxu0 0.0
  %1208 = vmatprep.subr.mxu0 0.0
  %1209 = vmatpush2.xpose.msra.mxu0 0.0
  %1210 = vmatprep.subr.mxu0 0.0
  %1211 = vmatpush2.xpose.msra.mxu0 0.0
  %1212 = vmatprep.subr.mxu0 0.0
  %1213 = vmatpush2.xpose.msra.mxu0 0.0
  %1214 = vmatprep.subr.mxu0 0.0
  %1215 = vmatpush2.xpose.msra.mxu0 0.0
  %1216 = vmatprep.subr.mxu0 0.0
  %1217 = vmatpush2.xpose.msra.mxu0 0.0
  %1218 = vmatprep.mubr.f32.mxu0 0.0
  %1219 = vmatmul.mubr.f32.gmra.mxu0 %v1148
  %v1220 = vpop.f32.mrf.mxu0
  %v1221 = vadd.f32 0.0, %v1220
  %v1222 = vpop.f32.mrf.mxu0
  %1223 = vdwg.mxu0
  %1224 = vrot.lane.b32.xlu0 %v118, 104
  %v1225 = vpop.permute.xlu0 %1224
  %1226 = vrot.lane.b32.xlu0 %v123, 104
  %v1227 = vpop.permute.xlu0 %1226
  %v1228 = vsel %vm28, %v1225, 0
  %v1230 = vsel %vm28, %v1227, 0
  %1232 = vmatprep.subr.mxu0 0.0
  %1233 = vmatpush1.xpose.msra.mxu0 0.0
  %1234 = vmatprep.subr.mxu0 0.0
  %1235 = vmatpush1.xpose.msra.mxu0 0.0
  %1236 = vmatprep.subr.mxu0 0.0
  %1237 = vmatpush1.xpose.msra.mxu0 0.0
  %1238 = vmatprep.subr.mxu0 0.0
  %1239 = vmatpush1.xpose.msra.mxu0 0.0
  %1240 = vmatprep.subr.mxu0 0.0
  %1241 = vmatpush1.xpose.msra.mxu0 0.0
  %1242 = vmatprep.subr.mxu0 0.0
  %1243 = vmatpush1.xpose.msra.mxu0 0.0
  %1244 = vmatprep.subr.mxu0 0.0
  %1245 = vmatpush1.xpose.msra.mxu0 0.0
  %1246 = vmatprep.subr.mxu0 0.0
  %1247 = vmatpush1.xpose.msra.mxu0 0.0
  %1248 = vmatprep.subr.mxu0 0.0
  %1249 = vmatpush1.xpose.msra.mxu0 0.0
  %1250 = vmatprep.subr.mxu0 0.0
  %1251 = vmatpush1.xpose.msra.mxu0 0.0
  %1252 = vmatprep.subr.mxu0 0.0
  %1253 = vmatpush1.xpose.msra.mxu0 0.0
  %1254 = vmatprep.subr.mxu0 0.0
  %1255 = vmatpush1.xpose.msra.mxu0 0.0
  %1256 = vmatprep.subr.mxu0 0.0
  %1257 = vmatpush1.xpose.msra.mxu0 0.0
  %1258 = vmatprep.subr.mxu0 0.0
  %1259 = vmatpush1.xpose.msra.mxu0 0.0
  %1260 = vmatprep.subr.mxu0 0.0
  %1261 = vmatpush1.xpose.msra.mxu0 %v1230
  %1262 = vmatprep.subr.mxu0 0.0
  %1263 = vmatpush1.xpose.msra.mxu0 %v1228
  %1264 = vmatprep.subr.mxu0 0.0
  %1265 = vmatpush2.xpose.msra.mxu0 0.0
  %1266 = vmatprep.subr.mxu0 0.0
  %1267 = vmatpush2.xpose.msra.mxu0 0.0
  %1268 = vmatprep.subr.mxu0 0.0
  %1269 = vmatpush2.xpose.msra.mxu0 0.0
  %1270 = vmatprep.subr.mxu0 0.0
  %1271 = vmatpush2.xpose.msra.mxu0 0.0
  %1272 = vmatprep.subr.mxu0 0.0
  %1273 = vmatpush2.xpose.msra.mxu0 0.0
  %1274 = vmatprep.subr.mxu0 0.0
  %1275 = vmatpush2.xpose.msra.mxu0 0.0
  %1276 = vmatprep.subr.mxu0 0.0
  %1277 = vmatpush2.xpose.msra.mxu0 0.0
  %1278 = vmatprep.subr.mxu0 0.0
  %1279 = vmatpush2.xpose.msra.mxu0 0.0
  %1280 = vmatprep.subr.mxu0 0.0
  %1281 = vmatpush2.xpose.msra.mxu0 0.0
  %1282 = vmatprep.subr.mxu0 0.0
  %1283 = vmatpush2.xpose.msra.mxu0 0.0
  %1284 = vmatprep.subr.mxu0 0.0
  %1285 = vmatpush2.xpose.msra.mxu0 0.0
  %1286 = vmatprep.subr.mxu0 0.0
  %1287 = vmatpush2.xpose.msra.mxu0 0.0
  %1288 = vmatprep.subr.mxu0 0.0
  %1289 = vmatpush2.xpose.msra.mxu0 0.0
  %1290 = vmatprep.subr.mxu0 0.0
  %1291 = vmatpush2.xpose.msra.mxu0 0.0
  %1292 = vmatprep.subr.mxu0 0.0
  %1293 = vmatpush2.xpose.msra.mxu0 0.0
  %1294 = vmatprep.subr.mxu0 0.0
  %1295 = vmatpush2.xpose.msra.mxu0 0.0
  %1296 = vmatprep.mubr.f32.mxu0 0.0
  %1297 = vmatmul.mubr.f32.gmra.mxu0 %v1148
  %v1298 = vpop.f32.mrf.mxu0
  %v1299 = vadd.f32 0.0, %v1298
  %v1300 = vpop.f32.mrf.mxu0
  %1301 = vdwg.mxu0
  %v1302 = vsel %vm281, %v1221, -inf
  %1303 = vmax.xlane.f32.xlu0 %v1302
  %v1304 = vpop.xlane.xlu0 %1303
  %v1305 = vsel %vm281, %v1299, -inf
  %1306 = vmax.xlane.f32.xlu0 %v1305
  %v1307 = vpop.xlane.xlu0 %1306
  %v1308 = vsub.f32 %v1221, %v1304
  %v1309 = vsub.f32 %v1299, %v1307
  %v1310 = vmul.f32 %v1308, 1.442695
  %v1311 = vpow.pop %v1310
  %v1312 = vmul.f32 %v1309, 1.442695
  %v1313 = vpow.pop %v1312
  %v1314 = vsel %vm281, %v1311, 0.0
  %1315 = vadd.xlane.f32.xlu0 %v1314
  %v1316 = vpop.xlane.xlu0 %1315
  %v1317 = vsel %vm281, %v1313, 0.0
  %1318 = vadd.xlane.f32.xlu0 %v1317
  %v1319 = vpop.xlane.xlu0 %1318
  %v1320 = vrcp.pop %v1316
  %v1321 = vrcp.pop %v1319
  %v1322 = vmul.f32 %v1311, %v1320
  %v1323 = vmul.f32 %v1313, %v1321
  %1324 = vrot.lane.b32.xlu0 %v108, 72
  %v1325 = vpop.permute.xlu0 %1324
  %1326 = vrot.lane.b32.xlu0 %v113, 72
  %v1327 = vpop.permute.xlu0 %1326
  %v1331 = vsel %vm281, %v1322, 0
  %1333 = vmatprep.subr.mxu0 0.0
  %1334 = vmatpush1.msra.mxu0 0.0
  %1335 = vmatprep.subr.mxu0 0.0
  %1336 = vmatpush1.msra.mxu0 0.0
  %1337 = vmatprep.subr.mxu0 0.0
  %1338 = vmatpush1.msra.mxu0 0.0
  %1339 = vmatprep.subr.mxu0 0.0
  %1340 = vmatpush1.msra.mxu0 0.0
  %1341 = vmatprep.subr.mxu0 0.0
  %1342 = vmatpush1.msra.mxu0 0.0
  %1343 = vmatprep.subr.mxu0 0.0
  %1344 = vmatpush1.msra.mxu0 0.0
  %1345 = vmatprep.subr.mxu0 0.0
  %1346 = vmatpush1.msra.mxu0 0.0
  %1347 = vmatprep.subr.mxu0 0.0
  %1348 = vmatpush1.msra.mxu0 0.0
  %1349 = vmatprep.subr.mxu0 0.0
  %1350 = vmatpush1.msra.mxu0 0.0
  %1351 = vmatprep.subr.mxu0 0.0
  %1352 = vmatpush1.msra.mxu0 0.0
  %1353 = vmatprep.subr.mxu0 0.0
  %1354 = vmatpush1.msra.mxu0 0.0
  %1355 = vmatprep.subr.mxu0 0.0
  %1356 = vmatpush1.msra.mxu0 0.0
  %1357 = vmatprep.subr.mxu0 0.0
  %1358 = vmatpush1.msra.mxu0 0.0
  %1359 = vmatprep.subr.mxu0 0.0
  %1360 = vmatpush1.msra.mxu0 0.0
  %1361 = vmatprep.subr.mxu0 0.0
  %1362 = vmatpush1.msra.mxu0 %v1327
  %1363 = vmatprep.subr.mxu0 0.0
  %1364 = vmatpush1.msra.mxu0 %v1325
  %1365 = vmatprep.subr.mxu0 0.0
  %1366 = vmatpush2.msra.mxu0 0.0
  %1367 = vmatprep.subr.mxu0 0.0
  %1368 = vmatpush2.msra.mxu0 0.0
  %1369 = vmatprep.subr.mxu0 0.0
  %1370 = vmatpush2.msra.mxu0 0.0
  %1371 = vmatprep.subr.mxu0 0.0
  %1372 = vmatpush2.msra.mxu0 0.0
  %1373 = vmatprep.subr.mxu0 0.0
  %1374 = vmatpush2.msra.mxu0 0.0
  %1375 = vmatprep.subr.mxu0 0.0
  %1376 = vmatpush2.msra.mxu0 0.0
  %1377 = vmatprep.subr.mxu0 0.0
  %1378 = vmatpush2.msra.mxu0 0.0
  %1379 = vmatprep.subr.mxu0 0.0
  %1380 = vmatpush2.msra.mxu0 0.0
  %1381 = vmatprep.subr.mxu0 0.0
  %1382 = vmatpush2.msra.mxu0 0.0
  %1383 = vmatprep.subr.mxu0 0.0
  %1384 = vmatpush2.msra.mxu0 0.0
  %1385 = vmatprep.subr.mxu0 0.0
  %1386 = vmatpush2.msra.mxu0 0.0
  %1387 = vmatprep.subr.mxu0 0.0
  %1388 = vmatpush2.msra.mxu0 0.0
  %1389 = vmatprep.subr.mxu0 0.0
  %1390 = vmatpush2.msra.mxu0 0.0
  %1391 = vmatprep.subr.mxu0 0.0
  %1392 = vmatpush2.msra.mxu0 0.0
  %1393 = vmatprep.subr.mxu0 0.0
  %1394 = vmatpush2.msra.mxu0 0.0
  %1395 = vmatprep.subr.mxu0 0.0
  %1396 = vmatpush2.msra.mxu0 0.0
  %1397 = vmatprep.mubr.f32.mxu0 0.0
  %1398 = vmatmul.mubr.f32.gmra.mxu0 %v1331
  %v1399 = vpop.f32.mrf.mxu0
  %v1400 = vadd.f32 0.0, %v1399
  %v1401 = vpop.f32.mrf.mxu0
  %1402 = vdwg.mxu0
  %1403 = vrot.lane.b32.xlu0 %v118, 72
  %v1404 = vpop.permute.xlu0 %1403
  %1405 = vrot.lane.b32.xlu0 %v123, 72
  %v1406 = vpop.permute.xlu0 %1405
  %v1410 = vsel %vm281, %v1323, 0
  %1412 = vmatprep.subr.mxu0 0.0
  %1413 = vmatpush1.msra.mxu0 0.0
  %1414 = vmatprep.subr.mxu0 0.0
  %1415 = vmatpush1.msra.mxu0 0.0
  %1416 = vmatprep.subr.mxu0 0.0
  %1417 = vmatpush1.msra.mxu0 0.0
  %1418 = vmatprep.subr.mxu0 0.0
  %1419 = vmatpush1.msra.mxu0 0.0
  %1420 = vmatprep.subr.mxu0 0.0
  %1421 = vmatpush1.msra.mxu0 0.0
  %1422 = vmatprep.subr.mxu0 0.0
  %1423 = vmatpush1.msra.mxu0 0.0
  %1424 = vmatprep.subr.mxu0 0.0
  %1425 = vmatpush1.msra.mxu0 0.0
  %1426 = vmatprep.subr.mxu0 0.0
  %1427 = vmatpush1.msra.mxu0 0.0
  %1428 = vmatprep.subr.mxu0 0.0
  %1429 = vmatpush1.msra.mxu0 0.0
  %1430 = vmatprep.subr.mxu0 0.0
  %1431 = vmatpush1.msra.mxu0 0.0
  %1432 = vmatprep.subr.mxu0 0.0
  %1433 = vmatpush1.msra.mxu0 0.0
  %1434 = vmatprep.subr.mxu0 0.0
  %1435 = vmatpush1.msra.mxu0 0.0
  %1436 = vmatprep.subr.mxu0 0.0
  %1437 = vmatpush1.msra.mxu0 0.0
  %1438 = vmatprep.subr.mxu0 0.0
  %1439 = vmatpush1.msra.mxu0 0.0
  %1440 = vmatprep.subr.mxu0 0.0
  %1441 = vmatpush1.msra.mxu0 %v1406
  %1442 = vmatprep.subr.mxu0 0.0
  %1443 = vmatpush1.msra.mxu0 %v1404
  %1444 = vmatprep.subr.mxu0 0.0
  %1445 = vmatpush2.msra.mxu0 0.0
  %1446 = vmatprep.subr.mxu0 0.0
  %1447 = vmatpush2.msra.mxu0 0.0
  %1448 = vmatprep.subr.mxu0 0.0
  %1449 = vmatpush2.msra.mxu0 0.0
  %1450 = vmatprep.subr.mxu0 0.0
  %1451 = vmatpush2.msra.mxu0 0.0
  %1452 = vmatprep.subr.mxu0 0.0
  %1453 = vmatpush2.msra.mxu0 0.0
  %1454 = vmatprep.subr.mxu0 0.0
  %1455 = vmatpush2.msra.mxu0 0.0
  %1456 = vmatprep.subr.mxu0 0.0
  %1457 = vmatpush2.msra.mxu0 0.0
  %1458 = vmatprep.subr.mxu0 0.0
  %1459 = vmatpush2.msra.mxu0 0.0
  %1460 = vmatprep.subr.mxu0 0.0
  %1461 = vmatpush2.msra.mxu0 0.0
  %1462 = vmatprep.subr.mxu0 0.0
  %1463 = vmatpush2.msra.mxu0 0.0
  %1464 = vmatprep.subr.mxu0 0.0
  %1465 = vmatpush2.msra.mxu0 0.0
  %1466 = vmatprep.subr.mxu0 0.0
  %1467 = vmatpush2.msra.mxu0 0.0
  %1468 = vmatprep.subr.mxu0 0.0
  %1469 = vmatpush2.msra.mxu0 0.0
  %1470 = vmatprep.subr.mxu0 0.0
  %1471 = vmatpush2.msra.mxu0 0.0
  %1472 = vmatprep.subr.mxu0 0.0
  %1473 = vmatpush2.msra.mxu0 0.0
  %1474 = vmatprep.subr.mxu0 0.0
  %1475 = vmatpush2.msra.mxu0 0.0
  %1476 = vmatprep.mubr.f32.mxu0 0.0
  %1477 = vmatmul.mubr.f32.gmra.mxu0 %v1410
  %v1478 = vpop.f32.mrf.mxu0
  %v1479 = vadd.f32 0.0, %v1478
  %v1480 = vpop.f32.mrf.mxu0
  %1481 = vdwg.mxu0
  %1484 = vrot.lane.b32.xlu0 %v720, 8
  %v1485 = vpop.permute.xlu0 %1484
  %1486 = vrot.lane.b32.xlu0 %v799, 8
  %v1487 = vpop.permute.xlu0 %1486
  %1492 = vrot.lane.b32.xlu0 %v1060, 16
  %v1493 = vpop.permute.xlu0 %1492
  %1494 = vrot.lane.b32.xlu0 %v1139, 16
  %v1495 = vpop.permute.xlu0 %1494
  %1500 = vrot.lane.b32.xlu0 %v1400, 24
  %v1501 = vpop.permute.xlu0 %1500
  %1502 = vrot.lane.b32.xlu0 %v1479, 24
  %v1503 = vpop.permute.xlu0 %1502
  %v1506 = vsel %vm28, %v380, %v1485
  %v1507 = vsel %vm28, %v459, %v1487
  %v1508 = vsel %vm281, %v1506, %v1493
  %v1509 = vsel %vm281, %v1507, %v1495
  %vm1510 = vcmask 195584
  %v1511 = vsel %vm1510, %v1508, %v1501
  %v1512 = vsel %vm1510, %v1509, %v1503
  %v1513 = vadd.f32 %v21, %v1511
  %v1514 = vadd.f32 %v21, %v1512
  %v1515 = vld [vmem:[%s2 + $0x3] sm:$0x1]
  %v1516 = vld [vmem:[%s2 + $0x4] sm:$0x1]
  %vm1517 = vcmask 261120
  %v1518 = vsel %vm1517, %v1513, 0.0
  %1519 = vadd.xlane.f32.xlu0 %v1518
  %v1520 = vpop.xlane.xlu0 %1519
  %v1521 = vsel %vm1517, %v1514, 0.0
  %1522 = vadd.xlane.f32.xlu0 %v1521
  %v1523 = vpop.xlane.xlu0 %1522
  %v1524 = vrcp.pop 32.0
  %v1525 = vmul.f32 %v1520, %v1524
  %v1526 = vmul.f32 %v1523, %v1524
  %v1527 = vsub.f32 %v1513, %v1525
  %v1528 = vsub.f32 %v1514, %v1526
  %v1529 = vmul.f32 %v1527, %v1527
  %v1530 = vmul.f32 %v1528, %v1528
  %v1531 = vsel %vm1517, %v1529, 0.0
  %1532 = vadd.xlane.f32.xlu0 %v1531
  %v1533 = vpop.xlane.xlu0 %1532
  %v1534 = vsel %vm1517, %v1530, 0.0
  %1535 = vadd.xlane.f32.xlu0 %v1534
  %v1536 = vpop.xlane.xlu0 %1535
  %v1537 = vmul.f32 %v1533, %v1524
  %v1538 = vmul.f32 %v1536, %v1524
  %v1539 = vadd.f32 %v1537, 1e-05
  %v1540 = vadd.f32 %v1538, 1e-05
  %v1541 = vrsqrt.pop %v1539
  %v1542 = vrsqrt.pop %v1540
  %v1543 = vmul.f32 %v1527, %v1541
  %v1544 = vmul.f32 %v1528, %v1542
  %v1545 = vlaneseq
  %v1546 = vshrl.u32 %v1545, 7
  %v1547 = vsub.s32 0, %v1546
  %v1548 = vrot.slane %v1515, %v1547
  %v1549 = vmul.f32 %v1543, %v1548
  %v1550 = vmul.f32 %v1544, %v1548
  %v1551 = vlaneseq
  %v1552 = vshrl.u32 %v1551, 7
  %v1553 = vsub.s32 0, %v1552
  %v1554 = vrot.slane %v1516, %v1553
  %v1555 = vadd.f32 %v1549, %v1554
  %v1556 = vadd.f32 %v1550, %v1554
  %v1557 = vld [vmem:[%s1 + $0x8] sm:$0xff]
  %v1558 = vld [vmem:[%s1 + $0x10] sm:$0xff]
  %v1559 = vld [vmem:[%s1 + $0x18] sm:$0xff]
  %v1560 = vld [vmem:[%s1 + $0x20] sm:$0xff]
  %v1561 = vld [vmem:[%s2 + $0x2] sm:$0x1]
  %v1562 = vlaneseq
  %v1563 = vshrl.u32 %v1562, 7
  %v1564 = vsub.s32 0, %v1563
  %v1565 = vrot.slane %v1561, %v1564
  %v1567 = vsel %vm1517, %v1555, 0
  %v1570 = vsel %vm1517, %v1556, 0
  %1572 = vmatprep.subr.mxu0 0.0
  %1573 = vmatpush1.msra.mxu0 0.0
  %1574 = vmatprep.subr.mxu0 0.0
  %1575 = vmatpush1.msra.mxu0 0.0
  %1576 = vmatprep.subr.mxu0 0.0
  %1577 = vmatpush1.msra.mxu0 0.0
  %1578 = vmatprep.subr.mxu0 0.0
  %1579 = vmatpush1.msra.mxu0 0.0
  %1580 = vmatprep.subr.mxu0 0.0
  %1581 = vmatpush1.msra.mxu0 0.0
  %1582 = vmatprep.subr.mxu0 0.0
  %1583 = vmatpush1.msra.mxu0 0.0
  %1584 = vmatprep.subr.mxu0 0.0
  %1585 = vmatpush1.msra.mxu0 0.0
  %1586 = vmatprep.subr.mxu0 0.0
  %1587 = vmatpush1.msra.mxu0 0.0
  %1588 = vmatprep.subr.mxu0 0.0
  %1589 = vmatpush1.msra.mxu0 0.0
  %1590 = vmatprep.subr.mxu0 0.0
  %1591 = vmatpush1.msra.mxu0 0.0
  %1592 = vmatprep.subr.mxu0 0.0
  %1593 = vmatpush1.msra.mxu0 0.0
  %1594 = vmatprep.subr.mxu0 0.0
  %1595 = vmatpush1.msra.mxu0 0.0
  %1596 = vmatprep.subr.mxu0 0.0
  %1597 = vmatpush1.msra.mxu0 %v1560
  %1598 = vmatprep.subr.mxu0 0.0
  %1599 = vmatpush1.msra.mxu0 %v1559
  %1600 = vmatprep.subr.mxu0 0.0
  %1601 = vmatpush1.msra.mxu0 %v1558
  %1602 = vmatprep.subr.mxu0 0.0
  %1603 = vmatpush1.msra.mxu0 %v1557
  %1604 = vmatprep.subr.mxu0 0.0
  %1605 = vmatpush2.msra.mxu0 0.0
  %1606 = vmatprep.subr.mxu0 0.0
  %1607 = vmatpush2.msra.mxu0 0.0
  %1608 = vmatprep.subr.mxu0 0.0
  %1609 = vmatpush2.msra.mxu0 0.0
  %1610 = vmatprep.subr.mxu0 0.0
  %1611 = vmatpush2.msra.mxu0 0.0
  %1612 = vmatprep.subr.mxu0 0.0
  %1613 = vmatpush2.msra.mxu0 0.0
  %1614 = vmatprep.subr.mxu0 0.0
  %1615 = vmatpush2.msra.mxu0 0.0
  %1616 = vmatprep.subr.mxu0 0.0
  %1617 = vmatpush2.msra.mxu0 0.0
  %1618 = vmatprep.subr.mxu0 0.0
  %1619 = vmatpush2.msra.mxu0 0.0
  %1620 = vmatprep.subr.mxu0 0.0
  %1621 = vmatpush2.msra.mxu0 0.0
  %1622 = vmatprep.subr.mxu0 0.0
  %1623 = vmatpush2.msra.mxu0 0.0
  %1624 = vmatprep.subr.mxu0 0.0
  %1625 = vmatpush2.msra.mxu0 0.0
  %1626 = vmatprep.subr.mxu0 0.0
  %1627 = vmatpush2.msra.mxu0 0.0
  %1628 = vmatprep.subr.mxu0 0.0
  %1629 = vmatpush2.msra.mxu0 0.0
  %1630 = vmatprep.subr.mxu0 0.0
  %1631 = vmatpush2.msra.mxu0 0.0
  %1632 = vmatprep.subr.mxu0 0.0
  %1633 = vmatpush2.msra.mxu0 0.0
  %1634 = vmatprep.subr.mxu0 0.0
  %1635 = vmatpush2.msra.mxu0 0.0
  %1636 = vmatprep.mubr.f32.mxu0 0.0
  %1637 = vmatmul.mubr.f32.gmra.mxu0 %v1567
  %v1638 = vpop.f32.mrf.mxu0
  %v1639 = vadd.f32 %v1565, %v1638
  %v1640 = vpop.f32.mrf.mxu0
  %1641 = vmatprep.mubr.f32.mxu0 0.0
  %1642 = vmatmul.mubr.f32.gmra.mxu0 %v1570
  %v1643 = vpop.f32.mrf.mxu0
  %v1644 = vadd.f32 %v1565, %v1643
  %v1645 = vpop.f32.mrf.mxu0
  %1646 = vdwg.mxu0
  %v1647 = vmax.f32 %v1639, 0.0
  %v1648 = vmax.f32 %v1644, 0.0
  %v1649 = vadd.f32 %v1555, %v1647
  %v1650 = vadd.f32 %v1556, %v1648
  %v1651 = vld [vmem:[%s2 + $0x5] sm:$0x1]
  %v1652 = vld [vmem:[%s2 + $0x6] sm:$0x1]
  %v1653 = vsel %vm1517, %v1649, 0.0
  %1654 = vadd.xlane.f32.xlu0 %v1653
  %v1655 = vpop.xlane.xlu0 %1654
  %v1656 = vsel %vm1517, %v1650, 0.0
  %1657 = vadd.xlane.f32.xlu0 %v1656
  %v1658 = vpop.xlane.xlu0 %1657
  %v1659 = vmul.f32 %v1655, %v1524
  %v1660 = vmul.f32 %v1658, %v1524
  %v1661 = vsub.f32 %v1649, %v1659
  %v1662 = vsub.f32 %v1650, %v1660
  %v1663 = vmul.f32 %v1661, %v1661
  %v1664 = vmul.f32 %v1662, %v1662
  %v1665 = vsel %vm1517, %v1663, 0.0
  %1666 = vadd.xlane.f32.xlu0 %v1665
  %v1667 = vpop.xlane.xlu0 %1666
  %v1668 = vsel %vm1517, %v1664, 0.0
  %1669 = vadd.xlane.f32.xlu0 %v1668
  %v1670 = vpop.xlane.xlu0 %1669
  %v1671 = vmul.f32 %v1667, %v1524
  %v1672 = vmul.f32 %v1670, %v1524
  %v1673 = vadd.f32 %v1671, 1e-05
  %v1674 = vadd.f32 %v1672, 1e-05
  %v1675 = vrsqrt.pop %v1673
  %v1676 = vrsqrt.pop %v1674
  %v1677 = vmul.f32 %v1661, %v1675
  %v1678 = vmul.f32 %v1662, %v1676
  %v1679 = vlaneseq
  %v1680 = vshrl.u32 %v1679, 7
  %v1681 = vsub.s32 0, %v1680
  %v1682 = vrot.slane %v1651, %v1681
  %v1683 = vmul.f32 %v1677, %v1682
  %v1684 = vmul.f32 %v1678, %v1682
  %v1685 = vlaneseq
  %v1686 = vshrl.u32 %v1685, 7
  %v1687 = vsub.s32 0, %v1686
  %v1688 = vrot.slane %v1652, %v1687
  %v1689 = vadd.f32 %v1683, %v1688
  %v1690 = vadd.f32 %v1684, %v1688
  %v1691 = vld [vmem:[%s1 + $0x28] sm:$0xff]
  %v1692 = vld [vmem:[%s2 + $0x8] sm:$0x1]
  %v1693 = vlaneseq
  %v1694 = vshrl.u32 %v1693, 7
  %v1695 = vsub.s32 0, %v1694
  %v1696 = vrot.slane %v1692, %v1695
  %1697 = vmatprep.subr.mxu0 0.0
  %1698 = vmatpush1.msra.mxu0 0.0
  %1699 = vmatprep.subr.mxu0 0.0
  %1700 = vmatpush1.msra.mxu0 0.0
  %1701 = vmatprep.subr.mxu0 0.0
  %1702 = vmatpush1.msra.mxu0 0.0
  %1703 = vmatprep.subr.mxu0 0.0
  %1704 = vmatpush1.msra.mxu0 0.0
  %1705 = vmatprep.subr.mxu0 0.0
  %1706 = vmatpush1.msra.mxu0 0.0
  %1707 = vmatprep.subr.mxu0 0.0
  %1708 = vmatpush1.msra.mxu0 0.0
  %1709 = vmatprep.subr.mxu0 0.0
  %1710 = vmatpush1.msra.mxu0 0.0
  %1711 = vmatprep.subr.mxu0 0.0
  %1712 = vmatpush1.msra.mxu0 0.0
  %1713 = vmatprep.subr.mxu0 0.0
  %1714 = vmatpush1.msra.mxu0 0.0
  %1715 = vmatprep.subr.mxu0 0.0
  %1716 = vmatpush1.msra.mxu0 0.0
  %1717 = vmatprep.subr.mxu0 0.0
  %1718 = vmatpush1.msra.mxu0 0.0
  %1719 = vmatprep.subr.mxu0 0.0
  %1720 = vmatpush1.msra.mxu0 0.0
  %1721 = vmatprep.subr.mxu0 0.0
  %1722 = vmatpush1.msra.mxu0 0.0
  %1723 = vmatprep.subr.mxu0 0.0
  %1724 = vmatpush1.msra.mxu0 0.0
  %1725 = vmatprep.subr.mxu0 0.0
  %1726 = vmatpush1.msra.mxu0 0.0
  %1727 = vmatprep.subr.mxu0 0.0
  %1728 = vmatpush1.msra.mxu0 %v1691
  %1729 = vmatprep.subr.mxu0 0.0
  %1730 = vmatpush2.msra.mxu0 0.0
  %1731 = vmatprep.subr.mxu0 0.0
  %1732 = vmatpush2.msra.mxu0 0.0
  %1733 = vmatprep.subr.mxu0 0.0
  %1734 = vmatpush2.msra.mxu0 0.0
  %1735 = vmatprep.subr.mxu0 0.0
  %1736 = vmatpush2.msra.mxu0 0.0
  %1737 = vmatprep.subr.mxu0 0.0
  %1738 = vmatpush2.msra.mxu0 0.0
  %1739 = vmatprep.subr.mxu0 0.0
  %1740 = vmatpush2.msra.mxu0 0.0
  %1741 = vmatprep.subr.mxu0 0.0
  %1742 = vmatpush2.msra.mxu0 0.0
  %1743 = vmatprep.subr.mxu0 0.0
  %1744 = vmatpush2.msra.mxu0 0.0
  %1745 = vmatprep.subr.mxu0 0.0
  %1746 = vmatpush2.msra.mxu0 0.0
  %1747 = vmatprep.subr.mxu0 0.0
  %1748 = vmatpush2.msra.mxu0 0.0
  %1749 = vmatprep.subr.mxu0 0.0
  %1750 = vmatpush2.msra.mxu0 0.0
  %1751 = vmatprep.subr.mxu0 0.0
  %1752 = vmatpush2.msra.mxu0 0.0
  %1753 = vmatprep.subr.mxu0 0.0
  %1754 = vmatpush2.msra.mxu0 0.0
  %1755 = vmatprep.subr.mxu0 0.0
  %1756 = vmatpush2.msra.mxu0 0.0
  %1757 = vmatprep.subr.mxu0 0.0
  %1758 = vmatpush2.msra.mxu0 0.0
  %1759 = vmatprep.subr.mxu0 0.0
  %1760 = vmatpush2.msra.mxu0 0.0
  %1761 = vmatprep.mubr.f32.mxu0 0.0
  %1762 = vmatmul.mubr.f32.gmra.mxu0 %v30
  %v1763 = vpop.f32.mrf.mxu0
  %v1764 = vadd.f32 %v1696, %v1763
  %v1765 = vpop.f32.mrf.mxu0
  %1766 = vmatprep.mubr.f32.mxu0 0.0
  %1767 = vmatmul.mubr.f32.gmra.mxu0 %v33
  %v1768 = vpop.f32.mrf.mxu0
  %v1769 = vadd.f32 %v1696, %v1768
  %v1770 = vpop.f32.mrf.mxu0
  %1771 = vmatprep.mubr.f32.mxu0 0.0
  %1772 = vmatmul.mubr.f32.gmra.mxu0 %v36
  %v1773 = vpop.f32.mrf.mxu0
  %v1774 = vadd.f32 %v1696, %v1773
  %v1775 = vpop.f32.mrf.mxu0
  %1776 = vmatprep.mubr.f32.mxu0 0.0
  %1777 = vmatmul.mubr.f32.gmra.mxu0 %v39
  %v1778 = vpop.f32.mrf.mxu0
  %v1779 = vadd.f32 %v1696, %v1778
  %v1780 = vpop.f32.mrf.mxu0
  %1781 = vdwg.mxu0
  %v1782 = vld [vmem:[%s1 + $0x30] sm:$0xff]
  %v1783 = vld [vmem:[%s1 + $0x38] sm:$0xff]
  %v1784 = vld [vmem:[%s1 + $0x40] sm:$0xff]
  %v1785 = vld [vmem:[%s1 + $0x48] sm:$0xff]
  %v1786 = vld [vmem:[%s2 + $0x9] sm:$0x1]
  %v1787 = vlaneseq
  %v1788 = vshrl.u32 %v1787, 7
  %v1789 = vsub.s32 0, %v1788
  %v1790 = vrot.slane %v1786, %v1789
  %v1792 = vsel %vm1517, %v1689, 0
  %v1795 = vsel %vm1517, %v1690, 0
  %1797 = vmatprep.subr.mxu0 0.0
  %1798 = vmatpush1.msra.mxu0 0.0
  %1799 = vmatprep.subr.mxu0 0.0
  %1800 = vmatpush1.msra.mxu0 0.0
  %1801 = vmatprep.subr.mxu0 0.0
  %1802 = vmatpush1.msra.mxu0 0.0
  %1803 = vmatprep.subr.mxu0 0.0
  %1804 = vmatpush1.msra.mxu0 0.0
  %1805 = vmatprep.subr.mxu0 0.0
  %1806 = vmatpush1.msra.mxu0 0.0
  %1807 = vmatprep.subr.mxu0 0.0
  %1808 = vmatpush1.msra.mxu0 0.0
  %1809 = vmatprep.subr.mxu0 0.0
  %1810 = vmatpush1.msra.mxu0 0.0
  %1811 = vmatprep.subr.mxu0 0.0
  %1812 = vmatpush1.msra.mxu0 0.0
  %1813 = vmatprep.subr.mxu0 0.0
  %1814 = vmatpush1.msra.mxu0 0.0
  %1815 = vmatprep.subr.mxu0 0.0
  %1816 = vmatpush1.msra.mxu0 0.0
  %1817 = vmatprep.subr.mxu0 0.0
  %1818 = vmatpush1.msra.mxu0 0.0
  %1819 = vmatprep.subr.mxu0 0.0
  %1820 = vmatpush1.msra.mxu0 0.0
  %1821 = vmatprep.subr.mxu0 0.0
  %1822 = vmatpush1.msra.mxu0 %v1785
  %1823 = vmatprep.subr.mxu0 0.0
  %1824 = vmatpush1.msra.mxu0 %v1784
  %1825 = vmatprep.subr.mxu0 0.0
  %1826 = vmatpush1.msra.mxu0 %v1783
  %1827 = vmatprep.subr.mxu0 0.0
  %1828 = vmatpush1.msra.mxu0 %v1782
  %1829 = vmatprep.subr.mxu0 0.0
  %1830 = vmatpush2.msra.mxu0 0.0
  %1831 = vmatprep.subr.mxu0 0.0
  %1832 = vmatpush2.msra.mxu0 0.0
  %1833 = vmatprep.subr.mxu0 0.0
  %1834 = vmatpush2.msra.mxu0 0.0
  %1835 = vmatprep.subr.mxu0 0.0
  %1836 = vmatpush2.msra.mxu0 0.0
  %1837 = vmatprep.subr.mxu0 0.0
  %1838 = vmatpush2.msra.mxu0 0.0
  %1839 = vmatprep.subr.mxu0 0.0
  %1840 = vmatpush2.msra.mxu0 0.0
  %1841 = vmatprep.subr.mxu0 0.0
  %1842 = vmatpush2.msra.mxu0 0.0
  %1843 = vmatprep.subr.mxu0 0.0
  %1844 = vmatpush2.msra.mxu0 0.0
  %1845 = vmatprep.subr.mxu0 0.0
  %1846 = vmatpush2.msra.mxu0 0.0
  %1847 = vmatprep.subr.mxu0 0.0
  %1848 = vmatpush2.msra.mxu0 0.0
  %1849 = vmatprep.subr.mxu0 0.0
  %1850 = vmatpush2.msra.mxu0 0.0
  %1851 = vmatprep.subr.mxu0 0.0
  %1852 = vmatpush2.msra.mxu0 0.0
  %1853 = vmatprep.subr.mxu0 0.0
  %1854 = vmatpush2.msra.mxu0 0.0
  %1855 = vmatprep.subr.mxu0 0.0
  %1856 = vmatpush2.msra.mxu0 0.0
  %1857 = vmatprep.subr.mxu0 0.0
  %1858 = vmatpush2.msra.mxu0 0.0
  %1859 = vmatprep.subr.mxu0 0.0
  %1860 = vmatpush2.msra.mxu0 0.0
  %1861 = vmatprep.mubr.f32.mxu0 0.0
  %1862 = vmatmul.mubr.f32.gmra.mxu0 %v1792
  %v1863 = vpop.f32.mrf.mxu0
  %v1864 = vadd.f32 %v1790, %v1863
  %v1865 = vpop.f32.mrf.mxu0
  %1866 = vmatprep.mubr.f32.mxu0 0.0
  %1867 = vmatmul.mubr.f32.gmra.mxu0 %v1795
  %v1868 = vpop.f32.mrf.mxu0
  %v1869 = vadd.f32 %v1790, %v1868
  %v1870 = vpop.f32.mrf.mxu0
  %1871 = vdwg.mxu0
  %v1873 = vsel %vm28, %v1764, 0
  %v1876 = vsel %vm28, %v1769, 0
  %v1879 = vsel %vm28, %v1864, 0
  %1881 = vmatprep.subr.mxu0 0.0
  %1882 = vmatpush1.xpose.msra.mxu0 0.0
  %1883 = vmatprep.subr.mxu0 0.0
  %1884 = vmatpush1.xpose.msra.mxu0 0.0
  %1885 = vmatprep.subr.mxu0 0.0
  %1886 = vmatpush1.xpose.msra.mxu0 0.0
  %1887 = vmatprep.subr.mxu0 0.0
  %1888 = vmatpush1.xpose.msra.mxu0 0.0
  %1889 = vmatprep.subr.mxu0 0.0
  %1890 = vmatpush1.xpose.msra.mxu0 0.0
  %1891 = vmatprep.subr.mxu0 0.0
  %1892 = vmatpush1.xpose.msra.mxu0 0.0
  %1893 = vmatprep.subr.mxu0 0.0
  %1894 = vmatpush1.xpose.msra.mxu0 0.0
  %1895 = vmatprep.subr.mxu0 0.0
  %1896 = vmatpush1.xpose.msra.mxu0 0.0
  %1897 = vmatprep.subr.mxu0 0.0
  %1898 = vmatpush1.xpose.msra.mxu0 0.0
  %1899 = vmatprep.subr.mxu0 0.0
  %1900 = vmatpush1.xpose.msra.mxu0 0.0
  %1901 = vmatprep.subr.mxu0 0.0
  %1902 = vmatpush1.xpose.msra.mxu0 0.0
  %1903 = vmatprep.subr.mxu0 0.0
  %1904 = vmatpush1.xpose.msra.mxu0 0.0
  %1905 = vmatprep.subr.mxu0 0.0
  %1906 = vmatpush1.xpose.msra.mxu0 0.0
  %1907 = vmatprep.subr.mxu0 0.0
  %1908 = vmatpush1.xpose.msra.mxu0 0.0
  %1909 = vmatprep.subr.mxu0 0.0
  %1910 = vmatpush1.xpose.msra.mxu0 0.0
  %1911 = vmatprep.subr.mxu0 0.0
  %1912 = vmatpush1.xpose.msra.mxu0 %v1879
  %1913 = vmatprep.subr.mxu0 0.0
  %1914 = vmatpush2.xpose.msra.mxu0 0.0
  %1915 = vmatprep.subr.mxu0 0.0
  %1916 = vmatpush2.xpose.msra.mxu0 0.0
  %1917 = vmatprep.subr.mxu0 0.0
  %1918 = vmatpush2.xpose.msra.mxu0 0.0
  %1919 = vmatprep.subr.mxu0 0.0
  %1920 = vmatpush2.xpose.msra.mxu0 0.0
  %1921 = vmatprep.subr.mxu0 0.0
  %1922 = vmatpush2.xpose.msra.mxu0 0.0
  %1923 = vmatprep.subr.mxu0 0.0
  %1924 = vmatpush2.xpose.msra.mxu0 0.0
  %1925 = vmatprep.subr.mxu0 0.0
  %1926 = vmatpush2.xpose.msra.mxu0 0.0
  %1927 = vmatprep.subr.mxu0 0.0
  %1928 = vmatpush2.xpose.msra.mxu0 0.0
  %1929 = vmatprep.subr.mxu0 0.0
  %1930 = vmatpush2.xpose.msra.mxu0 0.0
  %1931 = vmatprep.subr.mxu0 0.0
  %1932 = vmatpush2.xpose.msra.mxu0 0.0
  %1933 = vmatprep.subr.mxu0 0.0
  %1934 = vmatpush2.xpose.msra.mxu0 0.0
  %1935 = vmatprep.subr.mxu0 0.0
  %1936 = vmatpush2.xpose.msra.mxu0 0.0
  %1937 = vmatprep.subr.mxu0 0.0
  %1938 = vmatpush2.xpose.msra.mxu0 0.0
  %1939 = vmatprep.subr.mxu0 0.0
  %1940 = vmatpush2.xpose.msra.mxu0 0.0
  %1941 = vmatprep.subr.mxu0 0.0
  %1942 = vmatpush2.xpose.msra.mxu0 0.0
  %1943 = vmatprep.subr.mxu0 0.0
  %1944 = vmatpush2.xpose.msra.mxu0 0.0
  %1945 = vmatprep.mubr.f32.mxu0 0.0
  %1946 = vmatmul.mubr.f32.gmra.mxu0 %v1873
  %v1947 = vpop.f32.mrf.mxu0
  %v1948 = vadd.f32 0.0, %v1947
  %v1949 = vpop.f32.mrf.mxu0
  %1950 = vmatprep.mubr.f32.mxu0 0.0
  %1951 = vmatmul.mubr.f32.gmra.mxu0 %v1876
  %v1952 = vpop.f32.mrf.mxu0
  %v1953 = vadd.f32 0.0, %v1952
  %v1954 = vpop.f32.mrf.mxu0
  %1955 = vdwg.mxu0
  %v1957 = vsel %vm28, %v1774, 0
  %v1960 = vsel %vm28, %v1779, 0
  %v1963 = vsel %vm28, %v1869, 0
  %1965 = vmatprep.subr.mxu0 0.0
  %1966 = vmatpush1.xpose.msra.mxu0 0.0
  %1967 = vmatprep.subr.mxu0 0.0
  %1968 = vmatpush1.xpose.msra.mxu0 0.0
  %1969 = vmatprep.subr.mxu0 0.0
  %1970 = vmatpush1.xpose.msra.mxu0 0.0
  %1971 = vmatprep.subr.mxu0 0.0
  %1972 = vmatpush1.xpose.msra.mxu0 0.0
  %1973 = vmatprep.subr.mxu0 0.0
  %1974 = vmatpush1.xpose.msra.mxu0 0.0
  %1975 = vmatprep.subr.mxu0 0.0
  %1976 = vmatpush1.xpose.msra.mxu0 0.0
  %1977 = vmatprep.subr.mxu0 0.0
  %1978 = vmatpush1.xpose.msra.mxu0 0.0
  %1979 = vmatprep.subr.mxu0 0.0
  %1980 = vmatpush1.xpose.msra.mxu0 0.0
  %1981 = vmatprep.subr.mxu0 0.0
  %1982 = vmatpush1.xpose.msra.mxu0 0.0
  %1983 = vmatprep.subr.mxu0 0.0
  %1984 = vmatpush1.xpose.msra.mxu0 0.0
  %1985 = vmatprep.subr.mxu0 0.0
  %1986 = vmatpush1.xpose.msra.mxu0 0.0
  %1987 = vmatprep.subr.mxu0 0.0
  %1988 = vmatpush1.xpose.msra.mxu0 0.0
  %1989 = vmatprep.subr.mxu0 0.0
  %1990 = vmatpush1.xpose.msra.mxu0 0.0
  %1991 = vmatprep.subr.mxu0 0.0
  %1992 = vmatpush1.xpose.msra.mxu0 0.0
  %1993 = vmatprep.subr.mxu0 0.0
  %1994 = vmatpush1.xpose.msra.mxu0 0.0
  %1995 = vmatprep.subr.mxu0 0.0
  %1996 = vmatpush1.xpose.msra.mxu0 %v1963
  %1997 = vmatprep.subr.mxu0 0.0
  %1998 = vmatpush2.xpose.msra.mxu0 0.0
  %1999 = vmatprep.subr.mxu0 0.0
  %2000 = vmatpush2.xpose.msra.mxu0 0.0
  %2001 = vmatprep.subr.mxu0 0.0
  %2002 = vmatpush2.xpose.msra.mxu0 0.0
  %2003 = vmatprep.subr.mxu0 0.0
  %2004 = vmatpush2.xpose.msra.mxu0 0.0
  %2005 = vmatprep.subr.mxu0 0.0
  %2006 = vmatpush2.xpose.msra.mxu0 0.0
  %2007 = vmatprep.subr.mxu0 0.0
  %2008 = vmatpush2.xpose.msra.mxu0 0.0
  %2009 = vmatprep.subr.mxu0 0.0
  %2010 = vmatpush2.xpose.msra.mxu0 0.0
  %2011 = vmatprep.subr.mxu0 0.0
  %2012 = vmatpush2.xpose.msra.mxu0 0.0
  %2013 = vmatprep.subr.mxu0 0.0
  %2014 = vmatpush2.xpose.msra.mxu0 0.0
  %2015 = vmatprep.subr.mxu0 0.0
  %2016 = vmatpush2.xpose.msra.mxu0 0.0
  %2017 = vmatprep.subr.mxu0 0.0
  %2018 = vmatpush2.xpose.msra.mxu0 0.0
  %2019 = vmatprep.subr.mxu0 0.0
  %2020 = vmatpush2.xpose.msra.mxu0 0.0
  %2021 = vmatprep.subr.mxu0 0.0
  %2022 = vmatpush2.xpose.msra.mxu0 0.0
  %2023 = vmatprep.subr.mxu0 0.0
  %2024 = vmatpush2.xpose.msra.mxu0 0.0
  %2025 = vmatprep.subr.mxu0 0.0
  %2026 = vmatpush2.xpose.msra.mxu0 0.0
  %2027 = vmatprep.subr.mxu0 0.0
  %2028 = vmatpush2.xpose.msra.mxu0 0.0
  %2029 = vmatprep.mubr.f32.mxu0 0.0
  %2030 = vmatmul.mubr.f32.gmra.mxu0 %v1957
  %v2031 = vpop.f32.mrf.mxu0
  %v2032 = vadd.f32 0.0, %v2031
  %v2033 = vpop.f32.mrf.mxu0
  %2034 = vmatprep.mubr.f32.mxu0 0.0
  %2035 = vmatmul.mubr.f32.gmra.mxu0 %v1960
  %v2036 = vpop.f32.mrf.mxu0
  %v2037 = vadd.f32 0.0, %v2036
  %v2038 = vpop.f32.mrf.mxu0
  %2039 = vdwg.mxu0
  %v2040 = vsel %vm28, %v1948, -inf
  %2041 = vmax.xlane.f32.xlu0 %v2040
  %v2042 = vpop.xlane.xlu0 %2041
  %v2043 = vsel %vm28, %v1953, -inf
  %2044 = vmax.xlane.f32.xlu0 %v2043
  %v2045 = vpop.xlane.xlu0 %2044
  %v2046 = vsel %vm28, %v2032, -inf
  %2047 = vmax.xlane.f32.xlu0 %v2046
  %v2048 = vpop.xlane.xlu0 %2047
  %v2049 = vsel %vm28, %v2037, -inf
  %2050 = vmax.xlane.f32.xlu0 %v2049
  %v2051 = vpop.xlane.xlu0 %2050
  %v2052 = vsub.f32 %v1948, %v2042
  %v2053 = vsub.f32 %v1953, %v2045
  %v2054 = vsub.f32 %v2032, %v2048
  %v2055 = vsub.f32 %v2037, %v2051
  %v2056 = vmul.f32 %v2052, 1.442695
  %v2057 = vpow.pop %v2056
  %v2058 = vmul.f32 %v2053, 1.442695
  %v2059 = vpow.pop %v2058
  %v2060 = vmul.f32 %v2054, 1.442695
  %v2061 = vpow.pop %v2060
  %v2062 = vmul.f32 %v2055, 1.442695
  %v2063 = vpow.pop %v2062
  %v2064 = vsel %vm28, %v2057, 0.0
  %2065 = vadd.xlane.f32.xlu0 %v2064
  %v2066 = vpop.xlane.xlu0 %2065
  %v2067 = vsel %vm28, %v2059, 0.0
  %2068 = vadd.xlane.f32.xlu0 %v2067
  %v2069 = vpop.xlane.xlu0 %2068
  %v2070 = vsel %vm28, %v2061, 0.0
  %2071 = vadd.xlane.f32.xlu0 %v2070
  %v2072 = vpop.xlane.xlu0 %2071
  %v2073 = vsel %vm28, %v2063, 0.0
  %2074 = vadd.xlane.f32.xlu0 %v2073
  %v2075 = vpop.xlane.xlu0 %2074
  %v2076 = vrcp.pop %v2066
  %v2077 = vrcp.pop %v2069
  %v2078 = vrcp.pop %v2072
  %v2079 = vrcp.pop %v2075
  %v2080 = vmul.f32 %v2057, %v2076
  %v2081 = vmul.f32 %v2059, %v2077
  %v2082 = vmul.f32 %v2061, %v2078
  %v2083 = vmul.f32 %v2063, %v2079
  %2084 = vrot.lane.b32.xlu0 %v1864, 96
  %v2085 = vpop.permute.xlu0 %2084
  %v2088 = vsel %vm28, %v2080, 0
  %v2091 = vsel %vm28, %v2081, 0
  %2093 = vmatprep.subr.mxu0 0.0
  %2094 = vmatpush1.msra.mxu0 0.0
  %2095 = vmatprep.subr.mxu0 0.0
  %2096 = vmatpush1.msra.mxu0 0.0
  %2097 = vmatprep.subr.mxu0 0.0
  %2098 = vmatpush1.msra.mxu0 0.0
  %2099 = vmatprep.subr.mxu0 0.0
  %2100 = vmatpush1.msra.mxu0 0.0
  %2101 = vmatprep.subr.mxu0 0.0
  %2102 = vmatpush1.msra.mxu0 0.0
  %2103 = vmatprep.subr.mxu0 0.0
  %2104 = vmatpush1.msra.mxu0 0.0
  %2105 = vmatprep.subr.mxu0 0.0
  %2106 = vmatpush1.msra.mxu0 0.0
  %2107 = vmatprep.subr.mxu0 0.0
  %2108 = vmatpush1.msra.mxu0 0.0
  %2109 = vmatprep.subr.mxu0 0.0
  %2110 = vmatpush1.msra.mxu0 0.0
  %2111 = vmatprep.subr.mxu0 0.0
  %2112 = vmatpush1.msra.mxu0 0.0
  %2113 = vmatprep.subr.mxu0 0.0
  %2114 = vmatpush1.msra.mxu0 0.0
  %2115 = vmatprep.subr.mxu0 0.0
  %2116 = vmatpush1.msra.mxu0 0.0
  %2117 = vmatprep.subr.mxu0 0.0
  %2118 = vmatpush1.msra.mxu0 0.0
  %2119 = vmatprep.subr.mxu0 0.0
  %2120 = vmatpush1.msra.mxu0 0.0
  %2121 = vmatprep.subr.mxu0 0.0
  %2122 = vmatpush1.msra.mxu0 0.0
  %2123 = vmatprep.subr.mxu0 0.0
  %2124 = vmatpush1.msra.mxu0 %v2085
  %2125 = vmatprep.subr.mxu0 0.0
  %2126 = vmatpush2.msra.mxu0 0.0
  %2127 = vmatprep.subr.mxu0 0.0
  %2128 = vmatpush2.msra.mxu0 0.0
  %2129 = vmatprep.subr.mxu0 0.0
  %2130 = vmatpush2.msra.mxu0 0.0
  %2131 = vmatprep.subr.mxu0 0.0
  %2132 = vmatpush2.msra.mxu0 0.0
  %2133 = vmatprep.subr.mxu0 0.0
  %2134 = vmatpush2.msra.mxu0 0.0
  %2135 = vmatprep.subr.mxu0 0.0
  %2136 = vmatpush2.msra.mxu0 0.0
  %2137 = vmatprep.subr.mxu0 0.0
  %2138 = vmatpush2.msra.mxu0 0.0
  %2139 = vmatprep.subr.mxu0 0.0
  %2140 = vmatpush2.msra.mxu0 0.0
  %2141 = vmatprep.subr.mxu0 0.0
  %2142 = vmatpush2.msra.mxu0 0.0
  %2143 = vmatprep.subr.mxu0 0.0
  %2144 = vmatpush2.msra.mxu0 0.0
  %2145 = vmatprep.subr.mxu0 0.0
  %2146 = vmatpush2.msra.mxu0 0.0
  %2147 = vmatprep.subr.mxu0 0.0
  %2148 = vmatpush2.msra.mxu0 0.0
  %2149 = vmatprep.subr.mxu0 0.0
  %2150 = vmatpush2.msra.mxu0 0.0
  %2151 = vmatprep.subr.mxu0 0.0
  %2152 = vmatpush2.msra.mxu0 0.0
  %2153 = vmatprep.subr.mxu0 0.0
  %2154 = vmatpush2.msra.mxu0 0.0
  %2155 = vmatprep.subr.mxu0 0.0
  %2156 = vmatpush2.msra.mxu0 0.0
  %2157 = vmatprep.mubr.f32.mxu0 0.0
  %2158 = vmatmul.mubr.f32.gmra.mxu0 %v2088
  %v2159 = vpop.f32.mrf.mxu0
  %v2160 = vadd.f32 0.0, %v2159
  %v2161 = vpop.f32.mrf.mxu0
  %2162 = vmatprep.mubr.f32.mxu0 0.0
  %2163 = vmatmul.mubr.f32.gmra.mxu0 %v2091
  %v2164 = vpop.f32.mrf.mxu0
  %v2165 = vadd.f32 0.0, %v2164
  %v2166 = vpop.f32.mrf.mxu0
  %2167 = vdwg.mxu0
  %2168 = vrot.lane.b32.xlu0 %v1869, 96
  %v2169 = vpop.permute.xlu0 %2168
  %v2172 = vsel %vm28, %v2082, 0
  %v2175 = vsel %vm28, %v2083, 0
  %2177 = vmatprep.subr.mxu0 0.0
  %2178 = vmatpush1.msra.mxu0 0.0
  %2179 = vmatprep.subr.mxu0 0.0
  %2180 = vmatpush1.msra.mxu0 0.0
  %2181 = vmatprep.subr.mxu0 0.0
  %2182 = vmatpush1.msra.mxu0 0.0
  %2183 = vmatprep.subr.mxu0 0.0
  %2184 = vmatpush1.msra.mxu0 0.0
  %2185 = vmatprep.subr.mxu0 0.0
  %2186 = vmatpush1.msra.mxu0 0.0
  %2187 = vmatprep.subr.mxu0 0.0
  %2188 = vmatpush1.msra.mxu0 0.0
  %2189 = vmatprep.subr.mxu0 0.0
  %2190 = vmatpush1.msra.mxu0 0.0
  %2191 = vmatprep.subr.mxu0 0.0
  %2192 = vmatpush1.msra.mxu0 0.0
  %2193 = vmatprep.subr.mxu0 0.0
  %2194 = vmatpush1.msra.mxu0 0.0
  %2195 = vmatprep.subr.mxu0 0.0
  %2196 = vmatpush1.msra.mxu0 0.0
  %2197 = vmatprep.subr.mxu0 0.0
  %2198 = vmatpush1.msra.mxu0 0.0
  %2199 = vmatprep.subr.mxu0 0.0
  %2200 = vmatpush1.msra.mxu0 0.0
  %2201 = vmatprep.subr.mxu0 0.0
  %2202 = vmatpush1.msra.mxu0 0.0
  %2203 = vmatprep.subr.mxu0 0.0
  %2204 = vmatpush1.msra.mxu0 0.0
  %2205 = vmatprep.subr.mxu0 0.0
  %2206 = vmatpush1.msra.mxu0 0.0
  %2207 = vmatprep.subr.mxu0 0.0
  %2208 = vmatpush1.msra.mxu0 %v2169
  %2209 = vmatprep.subr.mxu0 0.0
  %2210 = vmatpush2.msra.mxu0 0.0
  %2211 = vmatprep.subr.mxu0 0.0
  %2212 = vmatpush2.msra.mxu0 0.0
  %2213 = vmatprep.subr.mxu0 0.0
  %2214 = vmatpush2.msra.mxu0 0.0
  %2215 = vmatprep.subr.mxu0 0.0
  %2216 = vmatpush2.msra.mxu0 0.0
  %2217 = vmatprep.subr.mxu0 0.0
  %2218 = vmatpush2.msra.mxu0 0.0
  %2219 = vmatprep.subr.mxu0 0.0
  %2220 = vmatpush2.msra.mxu0 0.0
  %2221 = vmatprep.subr.mxu0 0.0
  %2222 = vmatpush2.msra.mxu0 0.0
  %2223 = vmatprep.subr.mxu0 0.0
  %2224 = vmatpush2.msra.mxu0 0.0
  %2225 = vmatprep.subr.mxu0 0.0
  %2226 = vmatpush2.msra.mxu0 0.0
  %2227 = vmatprep.subr.mxu0 0.0
  %2228 = vmatpush2.msra.mxu0 0.0
  %2229 = vmatprep.subr.mxu0 0.0
  %2230 = vmatpush2.msra.mxu0 0.0
  %2231 = vmatprep.subr.mxu0 0.0
  %2232 = vmatpush2.msra.mxu0 0.0
  %2233 = vmatprep.subr.mxu0 0.0
  %2234 = vmatpush2.msra.mxu0 0.0
  %2235 = vmatprep.subr.mxu0 0.0
  %2236 = vmatpush2.msra.mxu0 0.0
  %2237 = vmatprep.subr.mxu0 0.0
  %2238 = vmatpush2.msra.mxu0 0.0
  %2239 = vmatprep.subr.mxu0 0.0
  %2240 = vmatpush2.msra.mxu0 0.0
  %2241 = vmatprep.mubr.f32.mxu0 0.0
  %2242 = vmatmul.mubr.f32.gmra.mxu0 %v2172
  %v2243 = vpop.f32.mrf.mxu0
  %v2244 = vadd.f32 0.0, %v2243
  %v2245 = vpop.f32.mrf.mxu0
  %2246 = vmatprep.mubr.f32.mxu0 0.0
  %2247 = vmatmul.mubr.f32.gmra.mxu0 %v2175
  %v2248 = vpop.f32.mrf.mxu0
  %v2249 = vadd.f32 0.0, %v2248
  %v2250 = vpop.f32.mrf.mxu0
  %2251 = vdwg.mxu0
  %2252 = vrot.lane.b32.xlu0 %v1764, 120
  %v2253 = vpop.permute.xlu0 %2252
  %2254 = vrot.lane.b32.xlu0 %v1769, 120
  %v2255 = vpop.permute.xlu0 %2254
  %2256 = vrot.lane.b32.xlu0 %v1864, 120
  %v2257 = vpop.permute.xlu0 %2256
  %v2258 = vsel %vm28, %v2253, 0
  %v2260 = vsel %vm28, %v2255, 0
  %v2262 = vsel %vm28, %v2257, 0
  %2264 = vmatprep.subr.mxu0 0.0
  %2265 = vmatpush1.xpose.msra.mxu0 0.0
  %2266 = vmatprep.subr.mxu0 0.0
  %2267 = vmatpush1.xpose.msra.mxu0 0.0
  %2268 = vmatprep.subr.mxu0 0.0
  %2269 = vmatpush1.xpose.msra.mxu0 0.0
  %2270 = vmatprep.subr.mxu0 0.0
  %2271 = vmatpush1.xpose.msra.mxu0 0.0
  %2272 = vmatprep.subr.mxu0 0.0
  %2273 = vmatpush1.xpose.msra.mxu0 0.0
  %2274 = vmatprep.subr.mxu0 0.0
  %2275 = vmatpush1.xpose.msra.mxu0 0.0
  %2276 = vmatprep.subr.mxu0 0.0
  %2277 = vmatpush1.xpose.msra.mxu0 0.0
  %2278 = vmatprep.subr.mxu0 0.0
  %2279 = vmatpush1.xpose.msra.mxu0 0.0
  %2280 = vmatprep.subr.mxu0 0.0
  %2281 = vmatpush1.xpose.msra.mxu0 0.0
  %2282 = vmatprep.subr.mxu0 0.0
  %2283 = vmatpush1.xpose.msra.mxu0 0.0
  %2284 = vmatprep.subr.mxu0 0.0
  %2285 = vmatpush1.xpose.msra.mxu0 0.0
  %2286 = vmatprep.subr.mxu0 0.0
  %2287 = vmatpush1.xpose.msra.mxu0 0.0
  %2288 = vmatprep.subr.mxu0 0.0
  %2289 = vmatpush1.xpose.msra.mxu0 0.0
  %2290 = vmatprep.subr.mxu0 0.0
  %2291 = vmatpush1.xpose.msra.mxu0 0.0
  %2292 = vmatprep.subr.mxu0 0.0
  %2293 = vmatpush1.xpose.msra.mxu0 0.0
  %2294 = vmatprep.subr.mxu0 0.0
  %2295 = vmatpush1.xpose.msra.mxu0 %v2262
  %2296 = vmatprep.subr.mxu0 0.0
  %2297 = vmatpush2.xpose.msra.mxu0 0.0
  %2298 = vmatprep.subr.mxu0 0.0
  %2299 = vmatpush2.xpose.msra.mxu0 0.0
  %2300 = vmatprep.subr.mxu0 0.0
  %2301 = vmatpush2.xpose.msra.mxu0 0.0
  %2302 = vmatprep.subr.mxu0 0.0
  %2303 = vmatpush2.xpose.msra.mxu0 0.0
  %2304 = vmatprep.subr.mxu0 0.0
  %2305 = vmatpush2.xpose.msra.mxu0 0.0
  %2306 = vmatprep.subr.mxu0 0.0
  %2307 = vmatpush2.xpose.msra.mxu0 0.0
  %2308 = vmatprep.subr.mxu0 0.0
  %2309 = vmatpush2.xpose.msra.mxu0 0.0
  %2310 = vmatprep.subr.mxu0 0.0
  %2311 = vmatpush2.xpose.msra.mxu0 0.0
  %2312 = vmatprep.subr.mxu0 0.0
  %2313 = vmatpush2.xpose.msra.mxu0 0.0
  %2314 = vmatprep.subr.mxu0 0.0
  %2315 = vmatpush2.xpose.msra.mxu0 0.0
  %2316 = vmatprep.subr.mxu0 0.0
  %2317 = vmatpush2.xpose.msra.mxu0 0.0
  %2318 = vmatprep.subr.mxu0 0.0
  %2319 = vmatpush2.xpose.msra.mxu0 0.0
  %2320 = vmatprep.subr.mxu0 0.0
  %2321 = vmatpush2.xpose.msra.mxu0 0.0
  %2322 = vmatprep.subr.mxu0 0.0
  %2323 = vmatpush2.xpose.msra.mxu0 0.0
  %2324 = vmatprep.subr.mxu0 0.0
  %2325 = vmatpush2.xpose.msra.mxu0 0.0
  %2326 = vmatprep.subr.mxu0 0.0
  %2327 = vmatpush2.xpose.msra.mxu0 0.0
  %2328 = vmatprep.mubr.f32.mxu0 0.0
  %2329 = vmatmul.mubr.f32.gmra.mxu0 %v2258
  %v2330 = vpop.f32.mrf.mxu0
  %v2331 = vadd.f32 0.0, %v2330
  %v2332 = vpop.f32.mrf.mxu0
  %2333 = vmatprep.mubr.f32.mxu0 0.0
  %2334 = vmatmul.mubr.f32.gmra.mxu0 %v2260
  %v2335 = vpop.f32.mrf.mxu0
  %v2336 = vadd.f32 0.0, %v2335
  %v2337 = vpop.f32.mrf.mxu0
  %2338 = vdwg.mxu0
  %2339 = vrot.lane.b32.xlu0 %v1774, 120
  %v2340 = vpop.permute.xlu0 %2339
  %2341 = vrot.lane.b32.xlu0 %v1779, 120
  %v2342 = vpop.permute.xlu0 %2341
  %2343 = vrot.lane.b32.xlu0 %v1869, 120
  %v2344 = vpop.permute.xlu0 %2343
  %v2345 = vsel %vm28, %v2340, 0
  %v2347 = vsel %vm28, %v2342, 0
  %v2349 = vsel %vm28, %v2344, 0
  %2351 = vmatprep.subr.mxu0 0.0
  %2352 = vmatpush1.xpose.msra.mxu0 0.0
  %2353 = vmatprep.subr.mxu0 0.0
  %2354 = vmatpush1.xpose.msra.mxu0 0.0
  %2355 = vmatprep.subr.mxu0 0.0
  %2356 = vmatpush1.xpose.msra.mxu0 0.0
  %2357 = vmatprep.subr.mxu0 0.0
  %2358 = vmatpush1.xpose.msra.mxu0 0.0
  %2359 = vmatprep.subr.mxu0 0.0
  %2360 = vmatpush1.xpose.msra.mxu0 0.0
  %2361 = vmatprep.subr.mxu0 0.0
  %2362 = vmatpush1.xpose.msra.mxu0 0.0
  %2363 = vmatprep.subr.mxu0 0.0
  %2364 = vmatpush1.xpose.msra.mxu0 0.0
  %2365 = vmatprep.subr.mxu0 0.0
  %2366 = vmatpush1.xpose.msra.mxu0 0.0
  %2367 = vmatprep.subr.mxu0 0.0
  %2368 = vmatpush1.xpose.msra.mxu0 0.0
  %2369 = vmatprep.subr.mxu0 0.0
  %2370 = vmatpush1.xpose.msra.mxu0 0.0
  %2371 = vmatprep.subr.mxu0 0.0
  %2372 = vmatpush1.xpose.msra.mxu0 0.0
  %2373 = vmatprep.subr.mxu0 0.0
  %2374 = vmatpush1.xpose.msra.mxu0 0.0
  %2375 = vmatprep.subr.mxu0 0.0
  %2376 = vmatpush1.xpose.msra.mxu0 0.0
  %2377 = vmatprep.subr.mxu0 0.0
  %2378 = vmatpush1.xpose.msra.mxu0 0.0
  %2379 = vmatprep.subr.mxu0 0.0
  %2380 = vmatpush1.xpose.msra.mxu0 0.0
  %2381 = vmatprep.subr.mxu0 0.0
  %2382 = vmatpush1.xpose.msra.mxu0 %v2349
  %2383 = vmatprep.subr.mxu0 0.0
  %2384 = vmatpush2.xpose.msra.mxu0 0.0
  %2385 = vmatprep.subr.mxu0 0.0
  %2386 = vmatpush2.xpose.msra.mxu0 0.0
  %2387 = vmatprep.subr.mxu0 0.0
  %2388 = vmatpush2.xpose.msra.mxu0 0.0
  %2389 = vmatprep.subr.mxu0 0.0
  %2390 = vmatpush2.xpose.msra.mxu0 0.0
  %2391 = vmatprep.subr.mxu0 0.0
  %2392 = vmatpush2.xpose.msra.mxu0 0.0
  %2393 = vmatprep.subr.mxu0 0.0
  %2394 = vmatpush2.xpose.msra.mxu0 0.0
  %2395 = vmatprep.subr.mxu0 0.0
  %2396 = vmatpush2.xpose.msra.mxu0 0.0
  %2397 = vmatprep.subr.mxu0 0.0
  %2398 = vmatpush2.xpose.msra.mxu0 0.0
  %2399 = vmatprep.subr.mxu0 0.0
  %2400 = vmatpush2.xpose.msra.mxu0 0.0
  %2401 = vmatprep.subr.mxu0 0.0
  %2402 = vmatpush2.xpose.msra.mxu0 0.0
  %2403 = vmatprep.subr.mxu0 0.0
  %2404 = vmatpush2.xpose.msra.mxu0 0.0
  %2405 = vmatprep.subr.mxu0 0.0
  %2406 = vmatpush2.xpose.msra.mxu0 0.0
  %2407 = vmatprep.subr.mxu0 0.0
  %2408 = vmatpush2.xpose.msra.mxu0 0.0
  %2409 = vmatprep.subr.mxu0 0.0
  %2410 = vmatpush2.xpose.msra.mxu0 0.0
  %2411 = vmatprep.subr.mxu0 0.0
  %2412 = vmatpush2.xpose.msra.mxu0 0.0
  %2413 = vmatprep.subr.mxu0 0.0
  %2414 = vmatpush2.xpose.msra.mxu0 0.0
  %2415 = vmatprep.mubr.f32.mxu0 0.0
  %2416 = vmatmul.mubr.f32.gmra.mxu0 %v2345
  %v2417 = vpop.f32.mrf.mxu0
  %v2418 = vadd.f32 0.0, %v2417
  %v2419 = vpop.f32.mrf.mxu0
  %2420 = vmatprep.mubr.f32.mxu0 0.0
  %2421 = vmatmul.mubr.f32.gmra.mxu0 %v2347
  %v2422 = vpop.f32.mrf.mxu0
  %v2423 = vadd.f32 0.0, %v2422
  %v2424 = vpop.f32.mrf.mxu0
  %2425 = vdwg.mxu0
  %v2426 = vsel %vm28, %v2331, -inf
  %2427 = vmax.xlane.f32.xlu0 %v2426
  %v2428 = vpop.xlane.xlu0 %2427
  %v2429 = vsel %vm28, %v2336, -inf
  %2430 = vmax.xlane.f32.xlu0 %v2429
  %v2431 = vpop.xlane.xlu0 %2430
  %v2432 = vsel %vm28, %v2418, -inf
  %2433 = vmax.xlane.f32.xlu0 %v2432
  %v2434 = vpop.xlane.xlu0 %2433
  %v2435 = vsel %vm28, %v2423, -inf
  %2436 = vmax.xlane.f32.xlu0 %v2435
  %v2437 = vpop.xlane.xlu0 %2436
  %v2438 = vsub.f32 %v2331, %v2428
  %v2439 = vsub.f32 %v2336, %v2431
  %v2440 = vsub.f32 %v2418, %v2434
  %v2441 = vsub.f32 %v2423, %v2437
  %v2442 = vmul.f32 %v2438, 1.442695
  %v2443 = vpow.pop %v2442
  %v2444 = vmul.f32 %v2439, 1.442695
  %v2445 = vpow.pop %v2444
  %v2446 = vmul.f32 %v2440, 1.442695
  %v2447 = vpow.pop %v2446
  %v2448 = vmul.f32 %v2441, 1.442695
  %v2449 = vpow.pop %v2448
  %v2450 = vsel %vm28, %v2443, 0.0
  %2451 = vadd.xlane.f32.xlu0 %v2450
  %v2452 = vpop.xlane.xlu0 %2451
  %v2453 = vsel %vm28, %v2445, 0.0
  %2454 = vadd.xlane.f32.xlu0 %v2453
  %v2455 = vpop.xlane.xlu0 %2454
  %v2456 = vsel %vm28, %v2447, 0.0
  %2457 = vadd.xlane.f32.xlu0 %v2456
  %v2458 = vpop.xlane.xlu0 %2457
  %v2459 = vsel %vm28, %v2449, 0.0
  %2460 = vadd.xlane.f32.xlu0 %v2459
  %v2461 = vpop.xlane.xlu0 %2460
  %v2462 = vrcp.pop %v2452
  %v2463 = vrcp.pop %v2455
  %v2464 = vrcp.pop %v2458
  %v2465 = vrcp.pop %v2461
  %v2466 = vmul.f32 %v2443, %v2462
  %v2467 = vmul.f32 %v2445, %v2463
  %v2468 = vmul.f32 %v2447, %v2464
  %v2469 = vmul.f32 %v2449, %v2465
  %2470 = vrot.lane.b32.xlu0 %v1864, 88
  %v2471 = vpop.permute.xlu0 %2470
  %v2474 = vsel %vm28, %v2466, 0
  %v2477 = vsel %vm28, %v2467, 0
  %2479 = vmatprep.subr.mxu0 0.0
  %2480 = vmatpush1.msra.mxu0 0.0
  %2481 = vmatprep.subr.mxu0 0.0
  %2482 = vmatpush1.msra.mxu0 0.0
  %2483 = vmatprep.subr.mxu0 0.0
  %2484 = vmatpush1.msra.mxu0 0.0
  %2485 = vmatprep.subr.mxu0 0.0
  %2486 = vmatpush1.msra.mxu0 0.0
  %2487 = vmatprep.subr.mxu0 0.0
  %2488 = vmatpush1.msra.mxu0 0.0
  %2489 = vmatprep.subr.mxu0 0.0
  %2490 = vmatpush1.msra.mxu0 0.0
  %2491 = vmatprep.subr.mxu0 0.0
  %2492 = vmatpush1.msra.mxu0 0.0
  %2493 = vmatprep.subr.mxu0 0.0
  %2494 = vmatpush1.msra.mxu0 0.0
  %2495 = vmatprep.subr.mxu0 0.0
  %2496 = vmatpush1.msra.mxu0 0.0
  %2497 = vmatprep.subr.mxu0 0.0
  %2498 = vmatpush1.msra.mxu0 0.0
  %2499 = vmatprep.subr.mxu0 0.0
  %2500 = vmatpush1.msra.mxu0 0.0
  %2501 = vmatprep.subr.mxu0 0.0
  %2502 = vmatpush1.msra.mxu0 0.0
  %2503 = vmatprep.subr.mxu0 0.0
  %2504 = vmatpush1.msra.mxu0 0.0
  %2505 = vmatprep.subr.mxu0 0.0
  %2506 = vmatpush1.msra.mxu0 0.0
  %2507 = vmatprep.subr.mxu0 0.0
  %2508 = vmatpush1.msra.mxu0 0.0
  %2509 = vmatprep.subr.mxu0 0.0
  %2510 = vmatpush1.msra.mxu0 %v2471
  %2511 = vmatprep.subr.mxu0 0.0
  %2512 = vmatpush2.msra.mxu0 0.0
  %2513 = vmatprep.subr.mxu0 0.0
  %2514 = vmatpush2.msra.mxu0 0.0
  %2515 = vmatprep.subr.mxu0 0.0
  %2516 = vmatpush2.msra.mxu0 0.0
  %2517 = vmatprep.subr.mxu0 0.0
  %2518 = vmatpush2.msra.mxu0 0.0
  %2519 = vmatprep.subr.mxu0 0.0
  %2520 = vmatpush2.msra.mxu0 0.0
  %2521 = vmatprep.subr.mxu0 0.0
  %2522 = vmatpush2.msra.mxu0 0.0
  %2523 = vmatprep.subr.mxu0 0.0
  %2524 = vmatpush2.msra.mxu0 0.0
  %2525 = vmatprep.subr.mxu0 0.0
  %2526 = vmatpush2.msra.mxu0 0.0
  %2527 = vmatprep.subr.mxu0 0.0
  %2528 = vmatpush2.msra.mxu0 0.0
  %2529 = vmatprep.subr.mxu0 0.0
  %2530 = vmatpush2.msra.mxu0 0.0
  %2531 = vmatprep.subr.mxu0 0.0
  %2532 = vmatpush2.msra.mxu0 0.0
  %2533 = vmatprep.subr.mxu0 0.0
  %2534 = vmatpush2.msra.mxu0 0.0
  %2535 = vmatprep.subr.mxu0 0.0
  %2536 = vmatpush2.msra.mxu0 0.0
  %2537 = vmatprep.subr.mxu0 0.0
  %2538 = vmatpush2.msra.mxu0 0.0
  %2539 = vmatprep.subr.mxu0 0.0
  %2540 = vmatpush2.msra.mxu0 0.0
  %2541 = vmatprep.subr.mxu0 0.0
  %2542 = vmatpush2.msra.mxu0 0.0
  %2543 = vmatprep.mubr.f32.mxu0 0.0
  %2544 = vmatmul.mubr.f32.gmra.mxu0 %v2474
  %v2545 = vpop.f32.mrf.mxu0
  %v2546 = vadd.f32 0.0, %v2545
  %v2547 = vpop.f32.mrf.mxu0
  %2548 = vmatprep.mubr.f32.mxu0 0.0
  %2549 = vmatmul.mubr.f32.gmra.mxu0 %v2477
  %v2550 = vpop.f32.mrf.mxu0
  %v2551 = vadd.f32 0.0, %v2550
  %v2552 = vpop.f32.mrf.mxu0
  %2553 = vdwg.mxu0
  %2554 = vrot.lane.b32.xlu0 %v1869, 88
  %v2555 = vpop.permute.xlu0 %2554
  %v2558 = vsel %vm28, %v2468, 0
  %v2561 = vsel %vm28, %v2469, 0
  %2563 = vmatprep.subr.mxu0 0.0
  %2564 = vmatpush1.msra.mxu0 0.0
  %2565 = vmatprep.subr.mxu0 0.0
  %2566 = vmatpush1.msra.mxu0 0.0
  %2567 = vmatprep.subr.mxu0 0.0
  %2568 = vmatpush1.msra.mxu0 0.0
  %2569 = vmatprep.subr.mxu0 0.0
  %2570 = vmatpush1.msra.mxu0 0.0
  %2571 = vmatprep.subr.mxu0 0.0
  %2572 = vmatpush1.msra.mxu0 0.0
  %2573 = vmatprep.subr.mxu0 0.0
  %2574 = vmatpush1.msra.mxu0 0.0
  %2575 = vmatprep.subr.mxu0 0.0
  %2576 = vmatpush1.msra.mxu0 0.0
  %2577 = vmatprep.subr.mxu0 0.0
  %2578 = vmatpush1.msra.mxu0 0.0
  %2579 = vmatprep.subr.mxu0 0.0
  %2580 = vmatpush1.msra.mxu0 0.0
  %2581 = vmatprep.subr.mxu0 0.0
  %2582 = vmatpush1.msra.mxu0 0.0
  %2583 = vmatprep.subr.mxu0 0.0
  %2584 = vmatpush1.msra.mxu0 0.0
  %2585 = vmatprep.subr.mxu0 0.0
  %2586 = vmatpush1.msra.mxu0 0.0
  %2587 = vmatprep.subr.mxu0 0.0
  %2588 = vmatpush1.msra.mxu0 0.0
  %2589 = vmatprep.subr.mxu0 0.0
  %2590 = vmatpush1.msra.mxu0 0.0
  %2591 = vmatprep.subr.mxu0 0.0
  %2592 = vmatpush1.msra.mxu0 0.0
  %2593 = vmatprep.subr.mxu0 0.0
  %2594 = vmatpush1.msra.mxu0 %v2555
  %2595 = vmatprep.subr.mxu0 0.0
  %2596 = vmatpush2.msra.mxu0 0.0
  %2597 = vmatprep.subr.mxu0 0.0
  %2598 = vmatpush2.msra.mxu0 0.0
  %2599 = vmatprep.subr.mxu0 0.0
  %2600 = vmatpush2.msra.mxu0 0.0
  %2601 = vmatprep.subr.mxu0 0.0
  %2602 = vmatpush2.msra.mxu0 0.0
  %2603 = vmatprep.subr.mxu0 0.0
  %2604 = vmatpush2.msra.mxu0 0.0
  %2605 = vmatprep.subr.mxu0 0.0
  %2606 = vmatpush2.msra.mxu0 0.0
  %2607 = vmatprep.subr.mxu0 0.0
  %2608 = vmatpush2.msra.mxu0 0.0
  %2609 = vmatprep.subr.mxu0 0.0
  %2610 = vmatpush2.msra.mxu0 0.0
  %2611 = vmatprep.subr.mxu0 0.0
  %2612 = vmatpush2.msra.mxu0 0.0
  %2613 = vmatprep.subr.mxu0 0.0
  %2614 = vmatpush2.msra.mxu0 0.0
  %2615 = vmatprep.subr.mxu0 0.0
  %2616 = vmatpush2.msra.mxu0 0.0
  %2617 = vmatprep.subr.mxu0 0.0
  %2618 = vmatpush2.msra.mxu0 0.0
  %2619 = vmatprep.subr.mxu0 0.0
  %2620 = vmatpush2.msra.mxu0 0.0
  %2621 = vmatprep.subr.mxu0 0.0
  %2622 = vmatpush2.msra.mxu0 0.0
  %2623 = vmatprep.subr.mxu0 0.0
  %2624 = vmatpush2.msra.mxu0 0.0
  %2625 = vmatprep.subr.mxu0 0.0
  %2626 = vmatpush2.msra.mxu0 0.0
  %2627 = vmatprep.mubr.f32.mxu0 0.0
  %2628 = vmatmul.mubr.f32.gmra.mxu0 %v2558
  %v2629 = vpop.f32.mrf.mxu0
  %v2630 = vadd.f32 0.0, %v2629
  %v2631 = vpop.f32.mrf.mxu0
  %2632 = vmatprep.mubr.f32.mxu0 0.0
  %2633 = vmatmul.mubr.f32.gmra.mxu0 %v2561
  %v2634 = vpop.f32.mrf.mxu0
  %v2635 = vadd.f32 0.0, %v2634
  %v2636 = vpop.f32.mrf.mxu0
  %2637 = vdwg.mxu0
  %2638 = vrot.lane.b32.xlu0 %v1764, 112
  %v2639 = vpop.permute.xlu0 %2638
  %2640 = vrot.lane.b32.xlu0 %v1769, 112
  %v2641 = vpop.permute.xlu0 %2640
  %2642 = vrot.lane.b32.xlu0 %v1864, 112
  %v2643 = vpop.permute.xlu0 %2642
  %v2644 = vsel %vm28, %v2639, 0
  %v2646 = vsel %vm28, %v2641, 0
  %v2648 = vsel %vm28, %v2643, 0
  %2650 = vmatprep.subr.mxu0 0.0
  %2651 = vmatpush1.xpose.msra.mxu0 0.0
  %2652 = vmatprep.subr.mxu0 0.0
  %2653 = vmatpush1.xpose.msra.mxu0 0.0
  %2654 = vmatprep.subr.mxu0 0.0
  %2655 = vmatpush1.xpose.msra.mxu0 0.0
  %2656 = vmatprep.subr.mxu0 0.0
  %2657 = vmatpush1.xpose.msra.mxu0 0.0
  %2658 = vmatprep.subr.mxu0 0.0
  %2659 = vmatpush1.xpose.msra.mxu0 0.0
  %2660 = vmatprep.subr.mxu0 0.0
  %2661 = vmatpush1.xpose.msra.mxu0 0.0
  %2662 = vmatprep.subr.mxu0 0.0
  %2663 = vmatpush1.xpose.msra.mxu0 0.0
  %2664 = vmatprep.subr.mxu0 0.0
  %2665 = vmatpush1.xpose.msra.mxu0 0.0
  %2666 = vmatprep.subr.mxu0 0.0
  %2667 = vmatpush1.xpose.msra.mxu0 0.0
  %2668 = vmatprep.subr.mxu0 0.0
  %2669 = vmatpush1.xpose.msra.mxu0 0.0
  %2670 = vmatprep.subr.mxu0 0.0
  %2671 = vmatpush1.xpose.msra.mxu0 0.0
  %2672 = vmatprep.subr.mxu0 0.0
  %2673 = vmatpush1.xpose.msra.mxu0 0.0
  %2674 = vmatprep.subr.mxu0 0.0
  %2675 = vmatpush1.xpose.msra.mxu0 0.0
  %2676 = vmatprep.subr.mxu0 0.0
  %2677 = vmatpush1.xpose.msra.mxu0 0.0
  %2678 = vmatprep.subr.mxu0 0.0
  %2679 = vmatpush1.xpose.msra.mxu0 0.0
  %2680 = vmatprep.subr.mxu0 0.0
  %2681 = vmatpush1.xpose.msra.mxu0 %v2648
  %2682 = vmatprep.subr.mxu0 0.0
  %2683 = vmatpush2.xpose.msra.mxu0 0.0
  %2684 = vmatprep.subr.mxu0 0.0
  %2685 = vmatpush2.xpose.msra.mxu0 0.0
  %2686 = vmatprep.subr.mxu0 0.0
  %2687 = vmatpush2.xpose.msra.mxu0 0.0
  %2688 = vmatprep.subr.mxu0 0.0
  %2689 = vmatpush2.xpose.msra.mxu0 0.0
  %2690 = vmatprep.subr.mxu0 0.0
  %2691 = vmatpush2.xpose.msra.mxu0 0.0
  %2692 = vmatprep.subr.mxu0 0.0
  %2693 = vmatpush2.xpose.msra.mxu0 0.0
  %2694 = vmatprep.subr.mxu0 0.0
  %2695 = vmatpush2.xpose.msra.mxu0 0.0
  %2696 = vmatprep.subr.mxu0 0.0
  %2697 = vmatpush2.xpose.msra.mxu0 0.0
  %2698 = vmatprep.subr.mxu0 0.0
  %2699 = vmatpush2.xpose.msra.mxu0 0.0
  %2700 = vmatprep.subr.mxu0 0.0
  %2701 = vmatpush2.xpose.msra.mxu0 0.0
  %2702 = vmatprep.subr.mxu0 0.0
  %2703 = vmatpush2.xpose.msra.mxu0 0.0
  %2704 = vmatprep.subr.mxu0 0.0
  %2705 = vmatpush2.xpose.msra.mxu0 0.0
  %2706 = vmatprep.subr.mxu0 0.0
  %2707 = vmatpush2.xpose.msra.mxu0 0.0
  %2708 = vmatprep.subr.mxu0 0.0
  %2709 = vmatpush2.xpose.msra.mxu0 0.0
  %2710 = vmatprep.subr.mxu0 0.0
  %2711 = vmatpush2.xpose.msra.mxu0 0.0
  %2712 = vmatprep.subr.mxu0 0.0
  %2713 = vmatpush2.xpose.msra.mxu0 0.0
  %2714 = vmatprep.mubr.f32.mxu0 0.0
  %2715 = vmatmul.mubr.f32.gmra.mxu0 %v2644
  %v2716 = vpop.f32.mrf.mxu0
  %v2717 = vadd.f32 0.0, %v2716
  %v2718 = vpop.f32.mrf.mxu0
  %2719 = vmatprep.mubr.f32.mxu0 0.0
  %2720 = vmatmul.mubr.f32.gmra.mxu0 %v2646
  %v2721 = vpop.f32.mrf.mxu0
  %v2722 = vadd.f32 0.0, %v2721
  %v2723 = vpop.f32.mrf.mxu0
  %2724 = vdwg.mxu0
  %2725 = vrot.lane.b32.xlu0 %v1774, 112
  %v2726 = vpop.permute.xlu0 %2725
  %2727 = vrot.lane.b32.xlu0 %v1779, 112
  %v2728 = vpop.permute.xlu0 %2727
  %2729 = vrot.lane.b32.xlu0 %v1869, 112
  %v2730 = vpop.permute.xlu0 %2729
  %v2731 = vsel %vm28, %v2726, 0
  %v2733 = vsel %vm28, %v2728, 0
  %v2735 = vsel %vm28, %v2730, 0
  %2737 = vmatprep.subr.mxu0 0.0
  %2738 = vmatpush1.xpose.msra.mxu0 0.0
  %2739 = vmatprep.subr.mxu0 0.0
  %2740 = vmatpush1.xpose.msra.mxu0 0.0
  %2741 = vmatprep.subr.mxu0 0.0
  %2742 = vmatpush1.xpose.msra.mxu0 0.0
  %2743 = vmatprep.subr.mxu0 0.0
  %2744 = vmatpush1.xpose.msra.mxu0 0.0
  %2745 = vmatprep.subr.mxu0 0.0
  %2746 = vmatpush1.xpose.msra.mxu0 0.0
  %2747 = vmatprep.subr.mxu0 0.0
  %2748 = vmatpush1.xpose.msra.mxu0 0.0
  %2749 = vmatprep.subr.mxu0 0.0
  %2750 = vmatpush1.xpose.msra.mxu0 0.0
  %2751 = vmatprep.subr.mxu0 0.0
  %2752 = vmatpush1.xpose.msra.mxu0 0.0
  %2753 = vmatprep.subr.mxu0 0.0
  %2754 = vmatpush1.xpose.msra.mxu0 0.0
  %2755 = vmatprep.subr.mxu0 0.0
  %2756 = vmatpush1.xpose.msra.mxu0 0.0
  %2757 = vmatprep.subr.mxu0 0.0
  %2758 = vmatpush1.xpose.msra.mxu0 0.0
  %2759 = vmatprep.subr.mxu0 0.0
  %2760 = vmatpush1.xpose.msra.mxu0 0.0
  %2761 = vmatprep.subr.mxu0 0.0
  %2762 = vmatpush1.xpose.msra.mxu0 0.0
  %2763 = vmatprep.subr.mxu0 0.0
  %2764 = vmatpush1.xpose.msra.mxu0 0.0
  %2765 = vmatprep.subr.mxu0 0.0
  %2766 = vmatpush1.xpose.msra.mxu0 0.0
  %2767 = vmatprep.subr.mxu0 0.0
  %2768 = vmatpush1.xpose.msra.mxu0 %v2735
  %2769 = vmatprep.subr.mxu0 0.0
  %2770 = vmatpush2.xpose.msra.mxu0 0.0
  %2771 = vmatprep.subr.mxu0 0.0
  %2772 = vmatpush2.xpose.msra.mxu0 0.0
  %2773 = vmatprep.subr.mxu0 0.0
  %2774 = vmatpush2.xpose.msra.mxu0 0.0
  %2775 = vmatprep.subr.mxu0 0.0
  %2776 = vmatpush2.xpose.msra.mxu0 0.0
  %2777 = vmatprep.subr.mxu0 0.0
  %2778 = vmatpush2.xpose.msra.mxu0 0.0
  %2779 = vmatprep.subr.mxu0 0.0
  %2780 = vmatpush2.xpose.msra.mxu0 0.0
  %2781 = vmatprep.subr.mxu0 0.0
  %2782 = vmatpush2.xpose.msra.mxu0 0.0
  %2783 = vmatprep.subr.mxu0 0.0
  %2784 = vmatpush2.xpose.msra.mxu0 0.0
  %2785 = vmatprep.subr.mxu0 0.0
  %2786 = vmatpush2.xpose.msra.mxu0 0.0
  %2787 = vmatprep.subr.mxu0 0.0
  %2788 = vmatpush2.xpose.msra.mxu0 0.0
  %2789 = vmatprep.subr.mxu0 0.0
  %2790 = vmatpush2.xpose.msra.mxu0 0.0
  %2791 = vmatprep.subr.mxu0 0.0
  %2792 = vmatpush2.xpose.msra.mxu0 0.0
  %2793 = vmatprep.subr.mxu0 0.0
  %2794 = vmatpush2.xpose.msra.mxu0 0.0
  %2795 = vmatprep.subr.mxu0 0.0
  %2796 = vmatpush2.xpose.msra.mxu0 0.0
  %2797 = vmatprep.subr.mxu0 0.0
  %2798 = vmatpush2.xpose.msra.mxu0 0.0
  %2799 = vmatprep.subr.mxu0 0.0
  %2800 = vmatpush2.xpose.msra.mxu0 0.0
  %2801 = vmatprep.mubr.f32.mxu0 0.0
  %2802 = vmatmul.mubr.f32.gmra.mxu0 %v2731
  %v2803 = vpop.f32.mrf.mxu0
  %v2804 = vadd.f32 0.0, %v2803
  %v2805 = vpop.f32.mrf.mxu0
  %2806 = vmatprep.mubr.f32.mxu0 0.0
  %2807 = vmatmul.mubr.f32.gmra.mxu0 %v2733
  %v2808 = vpop.f32.mrf.mxu0
  %v2809 = vadd.f32 0.0, %v2808
  %v2810 = vpop.f32.mrf.mxu0
  %2811 = vdwg.mxu0
  %v2812 = vsel %vm28, %v2717, -inf
  %2813 = vmax.xlane.f32.xlu0 %v2812
  %v2814 = vpop.xlane.xlu0 %2813
  %v2815 = vsel %vm28, %v2722, -inf
  %2816 = vmax.xlane.f32.xlu0 %v2815
  %v2817 = vpop.xlane.xlu0 %2816
  %v2818 = vsel %vm28, %v2804, -inf
  %2819 = vmax.xlane.f32.xlu0 %v2818
  %v2820 = vpop.xlane.xlu0 %2819
  %v2821 = vsel %vm28, %v2809, -inf
  %2822 = vmax.xlane.f32.xlu0 %v2821
  %v2823 = vpop.xlane.xlu0 %2822
  %v2824 = vsub.f32 %v2717, %v2814
  %v2825 = vsub.f32 %v2722, %v2817
  %v2826 = vsub.f32 %v2804, %v2820
  %v2827 = vsub.f32 %v2809, %v2823
  %v2828 = vmul.f32 %v2824, 1.442695
  %v2829 = vpow.pop %v2828
  %v2830 = vmul.f32 %v2825, 1.442695
  %v2831 = vpow.pop %v2830
  %v2832 = vmul.f32 %v2826, 1.442695
  %v2833 = vpow.pop %v2832
  %v2834 = vmul.f32 %v2827, 1.442695
  %v2835 = vpow.pop %v2834
  %v2836 = vsel %vm28, %v2829, 0.0
  %2837 = vadd.xlane.f32.xlu0 %v2836
  %v2838 = vpop.xlane.xlu0 %2837
  %v2839 = vsel %vm28, %v2831, 0.0
  %2840 = vadd.xlane.f32.xlu0 %v2839
  %v2841 = vpop.xlane.xlu0 %2840
  %v2842 = vsel %vm28, %v2833, 0.0
  %2843 = vadd.xlane.f32.xlu0 %v2842
  %v2844 = vpop.xlane.xlu0 %2843
  %v2845 = vsel %vm28, %v2835, 0.0
  %2846 = vadd.xlane.f32.xlu0 %v2845
  %v2847 = vpop.xlane.xlu0 %2846
  %v2848 = vrcp.pop %v2838
  %v2849 = vrcp.pop %v2841
  %v2850 = vrcp.pop %v2844
  %v2851 = vrcp.pop %v2847
  %v2852 = vmul.f32 %v2829, %v2848
  %v2853 = vmul.f32 %v2831, %v2849
  %v2854 = vmul.f32 %v2833, %v2850
  %v2855 = vmul.f32 %v2835, %v2851
  %2856 = vrot.lane.b32.xlu0 %v1864, 80
  %v2857 = vpop.permute.xlu0 %2856
  %v2860 = vsel %vm28, %v2852, 0
  %v2863 = vsel %vm28, %v2853, 0
  %2865 = vmatprep.subr.mxu0 0.0
  %2866 = vmatpush1.msra.mxu0 0.0
  %2867 = vmatprep.subr.mxu0 0.0
  %2868 = vmatpush1.msra.mxu0 0.0
  %2869 = vmatprep.subr.mxu0 0.0
  %2870 = vmatpush1.msra.mxu0 0.0
  %2871 = vmatprep.subr.mxu0 0.0
  %2872 = vmatpush1.msra.mxu0 0.0
  %2873 = vmatprep.subr.mxu0 0.0
  %2874 = vmatpush1.msra.mxu0 0.0
  %2875 = vmatprep.subr.mxu0 0.0
  %2876 = vmatpush1.msra.mxu0 0.0
  %2877 = vmatprep.subr.mxu0 0.0
  %2878 = vmatpush1.msra.mxu0 0.0
  %2879 = vmatprep.subr.mxu0 0.0
  %2880 = vmatpush1.msra.mxu0 0.0
  %2881 = vmatprep.subr.mxu0 0.0
  %2882 = vmatpush1.msra.mxu0 0.0
  %2883 = vmatprep.subr.mxu0 0.0
  %2884 = vmatpush1.msra.mxu0 0.0
  %2885 = vmatprep.subr.mxu0 0.0
  %2886 = vmatpush1.msra.mxu0 0.0
  %2887 = vmatprep.subr.mxu0 0.0
  %2888 = vmatpush1.msra.mxu0 0.0
  %2889 = vmatprep.subr.mxu0 0.0
  %2890 = vmatpush1.msra.mxu0 0.0
  %2891 = vmatprep.subr.mxu0 0.0
  %2892 = vmatpush1.msra.mxu0 0.0
  %2893 = vmatprep.subr.mxu0 0.0
  %2894 = vmatpush1.msra.mxu0 0.0
  %2895 = vmatprep.subr.mxu0 0.0
  %2896 = vmatpush1.msra.mxu0 %v2857
  %2897 = vmatprep.subr.mxu0 0.0
  %2898 = vmatpush2.msra.mxu0 0.0
  %2899 = vmatprep.subr.mxu0 0.0
  %2900 = vmatpush2.msra.mxu0 0.0
  %2901 = vmatprep.subr.mxu0 0.0
  %2902 = vmatpush2.msra.mxu0 0.0
  %2903 = vmatprep.subr.mxu0 0.0
  %2904 = vmatpush2.msra.mxu0 0.0
  %2905 = vmatprep.subr.mxu0 0.0
  %2906 = vmatpush2.msra.mxu0 0.0
  %2907 = vmatprep.subr.mxu0 0.0
  %2908 = vmatpush2.msra.mxu0 0.0
  %2909 = vmatprep.subr.mxu0 0.0
  %2910 = vmatpush2.msra.mxu0 0.0
  %2911 = vmatprep.subr.mxu0 0.0
  %2912 = vmatpush2.msra.mxu0 0.0
  %2913 = vmatprep.subr.mxu0 0.0
  %2914 = vmatpush2.msra.mxu0 0.0
  %2915 = vmatprep.subr.mxu0 0.0
  %2916 = vmatpush2.msra.mxu0 0.0
  %2917 = vmatprep.subr.mxu0 0.0
  %2918 = vmatpush2.msra.mxu0 0.0
  %2919 = vmatprep.subr.mxu0 0.0
  %2920 = vmatpush2.msra.mxu0 0.0
  %2921 = vmatprep.subr.mxu0 0.0
  %2922 = vmatpush2.msra.mxu0 0.0
  %2923 = vmatprep.subr.mxu0 0.0
  %2924 = vmatpush2.msra.mxu0 0.0
  %2925 = vmatprep.subr.mxu0 0.0
  %2926 = vmatpush2.msra.mxu0 0.0
  %2927 = vmatprep.subr.mxu0 0.0
  %2928 = vmatpush2.msra.mxu0 0.0
  %2929 = vmatprep.mubr.f32.mxu0 0.0
  %2930 = vmatmul.mubr.f32.gmra.mxu0 %v2860
  %v2931 = vpop.f32.mrf.mxu0
  %v2932 = vadd.f32 0.0, %v2931
  %v2933 = vpop.f32.mrf.mxu0
  %2934 = vmatprep.mubr.f32.mxu0 0.0
  %2935 = vmatmul.mubr.f32.gmra.mxu0 %v2863
  %v2936 = vpop.f32.mrf.mxu0
  %v2937 = vadd.f32 0.0, %v2936
  %v2938 = vpop.f32.mrf.mxu0
  %2939 = vdwg.mxu0
  %2940 = vrot.lane.b32.xlu0 %v1869, 80
  %v2941 = vpop.permute.xlu0 %2940
  %v2944 = vsel %vm28, %v2854, 0
  %v2947 = vsel %vm28, %v2855, 0
  %2949 = vmatprep.subr.mxu0 0.0
  %2950 = vmatpush1.msra.mxu0 0.0
  %2951 = vmatprep.subr.mxu0 0.0
  %2952 = vmatpush1.msra.mxu0 0.0
  %2953 = vmatprep.subr.mxu0 0.0
  %2954 = vmatpush1.msra.mxu0 0.0
  %2955 = vmatprep.subr.mxu0 0.0
  %2956 = vmatpush1.msra.mxu0 0.0
  %2957 = vmatprep.subr.mxu0 0.0
  %2958 = vmatpush1.msra.mxu0 0.0
  %2959 = vmatprep.subr.mxu0 0.0
  %2960 = vmatpush1.msra.mxu0 0.0
  %2961 = vmatprep.subr.mxu0 0.0
  %2962 = vmatpush1.msra.mxu0 0.0
  %2963 = vmatprep.subr.mxu0 0.0
  %2964 = vmatpush1.msra.mxu0 0.0
  %2965 = vmatprep.subr.mxu0 0.0
  %2966 = vmatpush1.msra.mxu0 0.0
  %2967 = vmatprep.subr.mxu0 0.0
  %2968 = vmatpush1.msra.mxu0 0.0
  %2969 = vmatprep.subr.mxu0 0.0
  %2970 = vmatpush1.msra.mxu0 0.0
  %2971 = vmatprep.subr.mxu0 0.0
  %2972 = vmatpush1.msra.mxu0 0.0
  %2973 = vmatprep.subr.mxu0 0.0
  %2974 = vmatpush1.msra.mxu0 0.0
  %2975 = vmatprep.subr.mxu0 0.0
  %2976 = vmatpush1.msra.mxu0 0.0
  %2977 = vmatprep.subr.mxu0 0.0
  %2978 = vmatpush1.msra.mxu0 0.0
  %2979 = vmatprep.subr.mxu0 0.0
  %2980 = vmatpush1.msra.mxu0 %v2941
  %2981 = vmatprep.subr.mxu0 0.0
  %2982 = vmatpush2.msra.mxu0 0.0
  %2983 = vmatprep.subr.mxu0 0.0
  %2984 = vmatpush2.msra.mxu0 0.0
  %2985 = vmatprep.subr.mxu0 0.0
  %2986 = vmatpush2.msra.mxu0 0.0
  %2987 = vmatprep.subr.mxu0 0.0
  %2988 = vmatpush2.msra.mxu0 0.0
  %2989 = vmatprep.subr.mxu0 0.0
  %2990 = vmatpush2.msra.mxu0 0.0
  %2991 = vmatprep.subr.mxu0 0.0
  %2992 = vmatpush2.msra.mxu0 0.0
  %2993 = vmatprep.subr.mxu0 0.0
  %2994 = vmatpush2.msra.mxu0 0.0
  %2995 = vmatprep.subr.mxu0 0.0
  %2996 = vmatpush2.msra.mxu0 0.0
  %2997 = vmatprep.subr.mxu0 0.0
  %2998 = vmatpush2.msra.mxu0 0.0
  %2999 = vmatprep.subr.mxu0 0.0
  %3000 = vmatpush2.msra.mxu0 0.0
  %3001 = vmatprep.subr.mxu0 0.0
  %3002 = vmatpush2.msra.mxu0 0.0
  %3003 = vmatprep.subr.mxu0 0.0
  %3004 = vmatpush2.msra.mxu0 0.0
  %3005 = vmatprep.subr.mxu0 0.0
  %3006 = vmatpush2.msra.mxu0 0.0
  %3007 = vmatprep.subr.mxu0 0.0
  %3008 = vmatpush2.msra.mxu0 0.0
  %3009 = vmatprep.subr.mxu0 0.0
  %3010 = vmatpush2.msra.mxu0 0.0
  %3011 = vmatprep.subr.mxu0 0.0
  %3012 = vmatpush2.msra.mxu0 0.0
  %3013 = vmatprep.mubr.f32.mxu0 0.0
  %3014 = vmatmul.mubr.f32.gmra.mxu0 %v2944
  %v3015 = vpop.f32.mrf.mxu0
  %v3016 = vadd.f32 0.0, %v3015
  %v3017 = vpop.f32.mrf.mxu0
  %3018 = vmatprep.mubr.f32.mxu0 0.0
  %3019 = vmatmul.mubr.f32.gmra.mxu0 %v2947
  %v3020 = vpop.f32.mrf.mxu0
  %v3021 = vadd.f32 0.0, %v3020
  %v3022 = vpop.f32.mrf.mxu0
  %3023 = vdwg.mxu0
  %3024 = vrot.lane.b32.xlu0 %v1764, 104
  %v3025 = vpop.permute.xlu0 %3024
  %3026 = vrot.lane.b32.xlu0 %v1769, 104
  %v3027 = vpop.permute.xlu0 %3026
  %3028 = vrot.lane.b32.xlu0 %v1864, 104
  %v3029 = vpop.permute.xlu0 %3028
  %v3030 = vsel %vm28, %v3025, 0
  %v3032 = vsel %vm28, %v3027, 0
  %v3034 = vsel %vm28, %v3029, 0
  %3036 = vmatprep.subr.mxu0 0.0
  %3037 = vmatpush1.xpose.msra.mxu0 0.0
  %3038 = vmatprep.subr.mxu0 0.0
  %3039 = vmatpush1.xpose.msra.mxu0 0.0
  %3040 = vmatprep.subr.mxu0 0.0
  %3041 = vmatpush1.xpose.msra.mxu0 0.0
  %3042 = vmatprep.subr.mxu0 0.0
  %3043 = vmatpush1.xpose.msra.mxu0 0.0
  %3044 = vmatprep.subr.mxu0 0.0
  %3045 = vmatpush1.xpose.msra.mxu0 0.0
  %3046 = vmatprep.subr.mxu0 0.0
  %3047 = vmatpush1.xpose.msra.mxu0 0.0
  %3048 = vmatprep.subr.mxu0 0.0
  %3049 = vmatpush1.xpose.msra.mxu0 0.0
  %3050 = vmatprep.subr.mxu0 0.0
  %3051 = vmatpush1.xpose.msra.mxu0 0.0
  %3052 = vmatprep.subr.mxu0 0.0
  %3053 = vmatpush1.xpose.msra.mxu0 0.0
  %3054 = vmatprep.subr.mxu0 0.0
  %3055 = vmatpush1.xpose.msra.mxu0 0.0
  %3056 = vmatprep.subr.mxu0 0.0
  %3057 = vmatpush1.xpose.msra.mxu0 0.0
  %3058 = vmatprep.subr.mxu0 0.0
  %3059 = vmatpush1.xpose.msra.mxu0 0.0
  %3060 = vmatprep.subr.mxu0 0.0
  %3061 = vmatpush1.xpose.msra.mxu0 0.0
  %3062 = vmatprep.subr.mxu0 0.0
  %3063 = vmatpush1.xpose.msra.mxu0 0.0
  %3064 = vmatprep.subr.mxu0 0.0
  %3065 = vmatpush1.xpose.msra.mxu0 0.0
  %3066 = vmatprep.subr.mxu0 0.0
  %3067 = vmatpush1.xpose.msra.mxu0 %v3034
  %3068 = vmatprep.subr.mxu0 0.0
  %3069 = vmatpush2.xpose.msra.mxu0 0.0
  %3070 = vmatprep.subr.mxu0 0.0
  %3071 = vmatpush2.xpose.msra.mxu0 0.0
  %3072 = vmatprep.subr.mxu0 0.0
  %3073 = vmatpush2.xpose.msra.mxu0 0.0
  %3074 = vmatprep.subr.mxu0 0.0
  %3075 = vmatpush2.xpose.msra.mxu0 0.0
  %3076 = vmatprep.subr.mxu0 0.0
  %3077 = vmatpush2.xpose.msra.mxu0 0.0
  %3078 = vmatprep.subr.mxu0 0.0
  %3079 = vmatpush2.xpose.msra.mxu0 0.0
  %3080 = vmatprep.subr.mxu0 0.0
  %3081 = vmatpush2.xpose.msra.mxu0 0.0
  %3082 = vmatprep.subr.mxu0 0.0
  %3083 = vmatpush2.xpose.msra.mxu0 0.0
  %3084 = vmatprep.subr.mxu0 0.0
  %3085 = vmatpush2.xpose.msra.mxu0 0.0
  %3086 = vmatprep.subr.mxu0 0.0
  %3087 = vmatpush2.xpose.msra.mxu0 0.0
  %3088 = vmatprep.subr.mxu0 0.0
  %3089 = vmatpush2.xpose.msra.mxu0 0.0
  %3090 = vmatprep.subr.mxu0 0.0
  %3091 = vmatpush2.xpose.msra.mxu0 0.0
  %3092 = vmatprep.subr.mxu0 0.0
  %3093 = vmatpush2.xpose.msra.mxu0 0.0
  %3094 = vmatprep.subr.mxu0 0.0
  %3095 = vmatpush2.xpose.msra.mxu0 0.0
  %3096 = vmatprep.subr.mxu0 0.0
  %3097 = vmatpush2.xpose.msra.mxu0 0.0
  %3098 = vmatprep.subr.mxu0 0.0
  %3099 = vmatpush2.xpose.msra.mxu0 0.0
  %3100 = vmatprep.mubr.f32.mxu0 0.0
  %3101 = vmatmul.mubr.f32.gmra.mxu0 %v3030
  %v3102 = vpop.f32.mrf.mxu0
  %v3103 = vadd.f32 0.0, %v3102
  %v3104 = vpop.f32.mrf.mxu0
  %3105 = vmatprep.mubr.f32.mxu0 0.0
  %3106 = vmatmul.mubr.f32.gmra.mxu0 %v3032
  %v3107 = vpop.f32.mrf.mxu0
  %v3108 = vadd.f32 0.0, %v3107
  %v3109 = vpop.f32.mrf.mxu0
  %3110 = vdwg.mxu0
  %3111 = vrot.lane.b32.xlu0 %v1774, 104
  %v3112 = vpop.permute.xlu0 %3111
  %3113 = vrot.lane.b32.xlu0 %v1779, 104
  %v3114 = vpop.permute.xlu0 %3113
  %3115 = vrot.lane.b32.xlu0 %v1869, 104
  %v3116 = vpop.permute.xlu0 %3115
  %v3117 = vsel %vm28, %v3112, 0
  %v3119 = vsel %vm28, %v3114, 0
  %v3121 = vsel %vm28, %v3116, 0
  %3123 = vmatprep.subr.mxu0 0.0
  %3124 = vmatpush1.xpose.msra.mxu0 0.0
  %3125 = vmatprep.subr.mxu0 0.0
  %3126 = vmatpush1.xpose.msra.mxu0 0.0
  %3127 = vmatprep.subr.mxu0 0.0
  %3128 = vmatpush1.xpose.msra.mxu0 0.0
  %3129 = vmatprep.subr.mxu0 0.0
  %3130 = vmatpush1.xpose.msra.mxu0 0.0
  %3131 = vmatprep.subr.mxu0 0.0
  %3132 = vmatpush1.xpose.msra.mxu0 0.0
  %3133 = vmatprep.subr.mxu0 0.0
  %3134 = vmatpush1.xpose.msra.mxu0 0.0
  %3135 = vmatprep.subr.mxu0 0.0
  %3136 = vmatpush1.xpose.msra.mxu0 0.0
  %3137 = vmatprep.subr.mxu0 0.0
  %3138 = vmatpush1.xpose.msra.mxu0 0.0
  %3139 = vmatprep.subr.mxu0 0.0
  %3140 = vmatpush1.xpose.msra.mxu0 0.0
  %3141 = vmatprep.subr.mxu0 0.0
  %3142 = vmatpush1.xpose.msra.mxu0 0.0
  %3143 = vmatprep.subr.mxu0 0.0
  %3144 = vmatpush1.xpose.msra.mxu0 0.0
  %3145 = vmatprep.subr.mxu0 0.0
  %3146 = vmatpush1.xpose.msra.mxu0 0.0
  %3147 = vmatprep.subr.mxu0 0.0
  %3148 = vmatpush1.xpose.msra.mxu0 0.0
  %3149 = vmatprep.subr.mxu0 0.0
  %3150 = vmatpush1.xpose.msra.mxu0 0.0
  %3151 = vmatprep.subr.mxu0 0.0
  %3152 = vmatpush1.xpose.msra.mxu0 0.0
  %3153 = vmatprep.subr.mxu0 0.0
  %3154 = vmatpush1.xpose.msra.mxu0 %v3121
  %3155 = vmatprep.subr.mxu0 0.0
  %3156 = vmatpush2.xpose.msra.mxu0 0.0
  %3157 = vmatprep.subr.mxu0 0.0
  %3158 = vmatpush2.xpose.msra.mxu0 0.0
  %3159 = vmatprep.subr.mxu0 0.0
  %3160 = vmatpush2.xpose.msra.mxu0 0.0
  %3161 = vmatprep.subr.mxu0 0.0
  %3162 = vmatpush2.xpose.msra.mxu0 0.0
  %3163 = vmatprep.subr.mxu0 0.0
  %3164 = vmatpush2.xpose.msra.mxu0 0.0
  %3165 = vmatprep.subr.mxu0 0.0
  %3166 = vmatpush2.xpose.msra.mxu0 0.0
  %3167 = vmatprep.subr.mxu0 0.0
  %3168 = vmatpush2.xpose.msra.mxu0 0.0
  %3169 = vmatprep.subr.mxu0 0.0
  %3170 = vmatpush2.xpose.msra.mxu0 0.0
  %3171 = vmatprep.subr.mxu0 0.0
  %3172 = vmatpush2.xpose.msra.mxu0 0.0
  %3173 = vmatprep.subr.mxu0 0.0
  %3174 = vmatpush2.xpose.msra.mxu0 0.0
  %3175 = vmatprep.subr.mxu0 0.0
  %3176 = vmatpush2.xpose.msra.mxu0 0.0
  %3177 = vmatprep.subr.mxu0 0.0
  %3178 = vmatpush2.xpose.msra.mxu0 0.0
  %3179 = vmatprep.subr.mxu0 0.0
  %3180 = vmatpush2.xpose.msra.mxu0 0.0
  %3181 = vmatprep.subr.mxu0 0.0
  %3182 = vmatpush2.xpose.msra.mxu0 0.0
  %3183 = vmatprep.subr.mxu0 0.0
  %3184 = vmatpush2.xpose.msra.mxu0 0.0
  %3185 = vmatprep.subr.mxu0 0.0
  %3186 = vmatpush2.xpose.msra.mxu0 0.0
  %3187 = vmatprep.mubr.f32.mxu0 0.0
  %3188 = vmatmul.mubr.f32.gmra.mxu0 %v3117
  %v3189 = vpop.f32.mrf.mxu0
  %v3190 = vadd.f32 0.0, %v3189
  %v3191 = vpop.f32.mrf.mxu0
  %3192 = vmatprep.mubr.f32.mxu0 0.0
  %3193 = vmatmul.mubr.f32.gmra.mxu0 %v3119
  %v3194 = vpop.f32.mrf.mxu0
  %v3195 = vadd.f32 0.0, %v3194
  %v3196 = vpop.f32.mrf.mxu0
  %3197 = vdwg.mxu0
  %v3198 = vsel %vm28, %v3103, -inf
  %3199 = vmax.xlane.f32.xlu0 %v3198
  %v3200 = vpop.xlane.xlu0 %3199
  %v3201 = vsel %vm28, %v3108, -inf
  %3202 = vmax.xlane.f32.xlu0 %v3201
  %v3203 = vpop.xlane.xlu0 %3202
  %v3204 = vsel %vm28, %v3190, -inf
  %3205 = vmax.xlane.f32.xlu0 %v3204
  %v3206 = vpop.xlane.xlu0 %3205
  %v3207 = vsel %vm28, %v3195, -inf
  %3208 = vmax.xlane.f32.xlu0 %v3207
  %v3209 = vpop.xlane.xlu0 %3208
  %v3210 = vsub.f32 %v3103, %v3200
  %v3211 = vsub.f32 %v3108, %v3203
  %v3212 = vsub.f32 %v3190, %v3206
  %v3213 = vsub.f32 %v3195, %v3209
  %v3214 = vmul.f32 %v3210, 1.442695
  %v3215 = vpow.pop %v3214
  %v3216 = vmul.f32 %v3211, 1.442695
  %v3217 = vpow.pop %v3216
  %v3218 = vmul.f32 %v3212, 1.442695
  %v3219 = vpow.pop %v3218
  %v3220 = vmul.f32 %v3213, 1.442695
  %v3221 = vpow.pop %v3220
  %v3222 = vsel %vm28, %v3215, 0.0
  %3223 = vadd.xlane.f32.xlu0 %v3222
  %v3224 = vpop.xlane.xlu0 %3223
  %v3225 = vsel %vm28, %v3217, 0.0
  %3226 = vadd.xlane.f32.xlu0 %v3225
  %v3227 = vpop.xlane.xlu0 %3226
  %v3228 = vsel %vm28, %v3219, 0.0
  %3229 = vadd.xlane.f32.xlu0 %v3228
  %v3230 = vpop.xlane.xlu0 %3229
  %v3231 = vsel %vm28, %v3221, 0.0
  %3232 = vadd.xlane.f32.xlu0 %v3231
  %v3233 = vpop.xlane.xlu0 %3232
  %v3234 = vrcp.pop %v3224
  %v3235 = vrcp.pop %v3227
  %v3236 = vrcp.pop %v3230
  %v3237 = vrcp.pop %v3233
  %v3238 = vmul.f32 %v3215, %v3234
  %v3239 = vmul.f32 %v3217, %v3235
  %v3240 = vmul.f32 %v3219, %v3236
  %v3241 = vmul.f32 %v3221, %v3237
  %3242 = vrot.lane.b32.xlu0 %v1864, 72
  %v3243 = vpop.permute.xlu0 %3242
  %v3246 = vsel %vm28, %v3238, 0
  %v3249 = vsel %vm28, %v3239, 0
  %3251 = vmatprep.subr.mxu0 0.0
  %3252 = vmatpush1.msra.mxu0 0.0
  %3253 = vmatprep.subr.mxu0 0.0
  %3254 = vmatpush1.msra.mxu0 0.0
  %3255 = vmatprep.subr.mxu0 0.0
  %3256 = vmatpush1.msra.mxu0 0.0
  %3257 = vmatprep.subr.mxu0 0.0
  %3258 = vmatpush1.msra.mxu0 0.0
  %3259 = vmatprep.subr.mxu0 0.0
  %3260 = vmatpush1.msra.mxu0 0.0
  %3261 = vmatprep.subr.mxu0 0.0
  %3262 = vmatpush1.msra.mxu0 0.0
  %3263 = vmatprep.subr.mxu0 0.0
  %3264 = vmatpush1.msra.mxu0 0.0
  %3265 = vmatprep.subr.mxu0 0.0
  %3266 = vmatpush1.msra.mxu0 0.0
  %3267 = vmatprep.subr.mxu0 0.0
  %3268 = vmatpush1.msra.mxu0 0.0
  %3269 = vmatprep.subr.mxu0 0.0
  %3270 = vmatpush1.msra.mxu0 0.0
  %3271 = vmatprep.subr.mxu0 0.0
  %3272 = vmatpush1.msra.mxu0 0.0
  %3273 = vmatprep.subr.mxu0 0.0
  %3274 = vmatpush1.msra.mxu0 0.0
  %3275 = vmatprep.subr.mxu0 0.0
  %3276 = vmatpush1.msra.mxu0 0.0
  %3277 = vmatprep.subr.mxu0 0.0
  %3278 = vmatpush1.msra.mxu0 0.0
  %3279 = vmatprep.subr.mxu0 0.0
  %3280 = vmatpush1.msra.mxu0 0.0
  %3281 = vmatprep.subr.mxu0 0.0
  %3282 = vmatpush1.msra.mxu0 %v3243
  %3283 = vmatprep.subr.mxu0 0.0
  %3284 = vmatpush2.msra.mxu0 0.0
  %3285 = vmatprep.subr.mxu0 0.0
  %3286 = vmatpush2.msra.mxu0 0.0
  %3287 = vmatprep.subr.mxu0 0.0
  %3288 = vmatpush2.msra.mxu0 0.0
  %3289 = vmatprep.subr.mxu0 0.0
  %3290 = vmatpush2.msra.mxu0 0.0
  %3291 = vmatprep.subr.mxu0 0.0
  %3292 = vmatpush2.msra.mxu0 0.0
  %3293 = vmatprep.subr.mxu0 0.0
  %3294 = vmatpush2.msra.mxu0 0.0
  %3295 = vmatprep.subr.mxu0 0.0
  %3296 = vmatpush2.msra.mxu0 0.0
  %3297 = vmatprep.subr.mxu0 0.0
  %3298 = vmatpush2.msra.mxu0 0.0
  %3299 = vmatprep.subr.mxu0 0.0
  %3300 = vmatpush2.msra.mxu0 0.0
  %3301 = vmatprep.subr.mxu0 0.0
  %3302 = vmatpush2.msra.mxu0 0.0
  %3303 = vmatprep.subr.mxu0 0.0
  %3304 = vmatpush2.msra.mxu0 0.0
  %3305 = vmatprep.subr.mxu0 0.0
  %3306 = vmatpush2.msra.mxu0 0.0
  %3307 = vmatprep.subr.mxu0 0.0
  %3308 = vmatpush2.msra.mxu0 0.0
  %3309 = vmatprep.subr.mxu0 0.0
  %3310 = vmatpush2.msra.mxu0 0.0
  %3311 = vmatprep.subr.mxu0 0.0
  %3312 = vmatpush2.msra.mxu0 0.0
  %3313 = vmatprep.subr.mxu0 0.0
  %3314 = vmatpush2.msra.mxu0 0.0
  %3315 = vmatprep.mubr.f32.mxu0 0.0
  %3316 = vmatmul.mubr.f32.gmra.mxu0 %v3246
  %v3317 = vpop.f32.mrf.mxu0
  %v3318 = vadd.f32 0.0, %v3317
  %v3319 = vpop.f32.mrf.mxu0
  %3320 = vmatprep.mubr.f32.mxu0 0.0
  %3321 = vmatmul.mubr.f32.gmra.mxu0 %v3249
  %v3322 = vpop.f32.mrf.mxu0
  %v3323 = vadd.f32 0.0, %v3322
  %v3324 = vpop.f32.mrf.mxu0
  %3325 = vdwg.mxu0
  %3326 = vrot.lane.b32.xlu0 %v1869, 72
  %v3327 = vpop.permute.xlu0 %3326
  %v3330 = vsel %vm28, %v3240, 0
  %v3333 = vsel %vm28, %v3241, 0
  %3335 = vmatprep.subr.mxu0 0.0
  %3336 = vmatpush1.msra.mxu0 0.0
  %3337 = vmatprep.subr.mxu0 0.0
  %3338 = vmatpush1.msra.mxu0 0.0
  %3339 = vmatprep.subr.mxu0 0.0
  %3340 = vmatpush1.msra.mxu0 0.0
  %3341 = vmatprep.subr.mxu0 0.0
  %3342 = vmatpush1.msra.mxu0 0.0
  %3343 = vmatprep.subr.mxu0 0.0
  %3344 = vmatpush1.msra.mxu0 0.0
  %3345 = vmatprep.subr.mxu0 0.0
  %3346 = vmatpush1.msra.mxu0 0.0
  %3347 = vmatprep.subr.mxu0 0.0
  %3348 = vmatpush1.msra.mxu0 0.0
  %3349 = vmatprep.subr.mxu0 0.0
  %3350 = vmatpush1.msra.mxu0 0.0
  %3351 = vmatprep.subr.mxu0 0.0
  %3352 = vmatpush1.msra.mxu0 0.0
  %3353 = vmatprep.subr.mxu0 0.0
  %3354 = vmatpush1.msra.mxu0 0.0
  %3355 = vmatprep.subr.mxu0 0.0
  %3356 = vmatpush1.msra.mxu0 0.0
  %3357 = vmatprep.subr.mxu0 0.0
  %3358 = vmatpush1.msra.mxu0 0.0
  %3359 = vmatprep.subr.mxu0 0.0
  %3360 = vmatpush1.msra.mxu0 0.0
  %3361 = vmatprep.subr.mxu0 0.0
  %3362 = vmatpush1.msra.mxu0 0.0
  %3363 = vmatprep.subr.mxu0 0.0
  %3364 = vmatpush1.msra.mxu0 0.0
  %3365 = vmatprep.subr.mxu0 0.0
  %3366 = vmatpush1.msra.mxu0 %v3327
  %3367 = vmatprep.subr.mxu0 0.0
  %3368 = vmatpush2.msra.mxu0 0.0
  %3369 = vmatprep.subr.mxu0 0.0
  %3370 = vmatpush2.msra.mxu0 0.0
  %3371 = vmatprep.subr.mxu0 0.0
  %3372 = vmatpush2.msra.mxu0 0.0
  %3373 = vmatprep.subr.mxu0 0.0
  %3374 = vmatpush2.msra.mxu0 0.0
  %3375 = vmatprep.subr.mxu0 0.0
  %3376 = vmatpush2.msra.mxu0 0.0
  %3377 = vmatprep.subr.mxu0 0.0
  %3378 = vmatpush2.msra.mxu0 0.0
  %3379 = vmatprep.subr.mxu0 0.0
  %3380 = vmatpush2.msra.mxu0 0.0
  %3381 = vmatprep.subr.mxu0 0.0
  %3382 = vmatpush2.msra.mxu0 0.0
  %3383 = vmatprep.subr.mxu0 0.0
  %3384 = vmatpush2.msra.mxu0 0.0
  %3385 = vmatprep.subr.mxu0 0.0
  %3386 = vmatpush2.msra.mxu0 0.0
  %3387 = vmatprep.subr.mxu0 0.0
  %3388 = vmatpush2.msra.mxu0 0.0
  %3389 = vmatprep.subr.mxu0 0.0
  %3390 = vmatpush2.msra.mxu0 0.0
  %3391 = vmatprep.subr.mxu0 0.0
  %3392 = vmatpush2.msra.mxu0 0.0
  %3393 = vmatprep.subr.mxu0 0.0
  %3394 = vmatpush2.msra.mxu0 0.0
  %3395 = vmatprep.subr.mxu0 0.0
  %3396 = vmatpush2.msra.mxu0 0.0
  %3397 = vmatprep.subr.mxu0 0.0
  %3398 = vmatpush2.msra.mxu0 0.0
  %3399 = vmatprep.mubr.f32.mxu0 0.0
  %3400 = vmatmul.mubr.f32.gmra.mxu0 %v3330
  %v3401 = vpop.f32.mrf.mxu0
  %v3402 = vadd.f32 0.0, %v3401
  %v3403 = vpop.f32.mrf.mxu0
  %3404 = vmatprep.mubr.f32.mxu0 0.0
  %3405 = vmatmul.mubr.f32.gmra.mxu0 %v3333
  %v3406 = vpop.f32.mrf.mxu0
  %v3407 = vadd.f32 0.0, %v3406
  %v3408 = vpop.f32.mrf.mxu0
  %3409 = vdwg.mxu0
  %3414 = vrot.lane.b32.xlu0 %v2546, 8
  %v3415 = vpop.permute.xlu0 %3414
  %3416 = vrot.lane.b32.xlu0 %v2551, 8
  %v3417 = vpop.permute.xlu0 %3416
  %3418 = vrot.lane.b32.xlu0 %v2630, 8
  %v3419 = vpop.permute.xlu0 %3418
  %3420 = vrot.lane.b32.xlu0 %v2635, 8
  %v3421 = vpop.permute.xlu0 %3420
  %3430 = vrot.lane.b32.xlu0 %v2932, 16
  %v3431 = vpop.permute.xlu0 %3430
  %3432 = vrot.lane.b32.xlu0 %v2937, 16
  %v3433 = vpop.permute.xlu0 %3432
  %3434 = vrot.lane.b32.xlu0 %v3016, 16
  %v3435 = vpop.permute.xlu0 %3434
  %3436 = vrot.lane.b32.xlu0 %v3021, 16
  %v3437 = vpop.permute.xlu0 %3436
  %3446 = vrot.lane.b32.xlu0 %v3318, 24
  %v3447 = vpop.permute.xlu0 %3446
  %3448 = vrot.lane.b32.xlu0 %v3323, 24
  %v3449 = vpop.permute.xlu0 %3448
  %3450 = vrot.lane.b32.xlu0 %v3402, 24
  %v3451 = vpop.permute.xlu0 %3450
  %3452 = vrot.lane.b32.xlu0 %v3407, 24
  %v3453 = vpop.permute.xlu0 %3452
  %v3458 = vsel %vm28, %v2160, %v3415
  %v3459 = vsel %vm28, %v2165, %v3417
  %v3460 = vsel %vm28, %v2244, %v3419
  %v3461 = vsel %vm28, %v2249, %v3421
  %v3462 = vsel %vm281, %v3458, %v3431
  %v3463 = vsel %vm281, %v3459, %v3433
  %v3464 = vsel %vm281, %v3460, %v3435
  %v3465 = vsel %vm281, %v3461, %v3437
  %v3466 = vsel %vm1510, %v3462, %v3447
  %v3467 = vsel %vm1510, %v3463, %v3449
  %v3468 = vsel %vm1510, %v3464, %v3451
  %v3469 = vsel %vm1510, %v3465, %v3453
  %v3470 = vadd.f32 %v1764, %v3466
  %v3471 = vadd.f32 %v1769, %v3467
  %v3472 = vadd.f32 %v1774, %v3468
  %v3473 = vadd.f32 %v1779, %v3469
  %v3474 = vld [vmem:[%s2 + $0xb] sm:$0x1]
  %v3475 = vld [vmem:[%s2 + $0xc] sm:$0x1]
  %v3476 = vsel %vm1517, %v3470, 0.0
  %3477 = vadd.xlane.f32.xlu0 %v3476
  %v3478 = vpop.xlane.xlu0 %3477
  %v3479 = vsel %vm1517, %v3471, 0.0
  %3480 = vadd.xlane.f32.xlu0 %v3479
  %v3481 = vpop.xlane.xlu0 %3480
  %v3482 = vsel %vm1517, %v3472, 0.0
  %3483 = vadd.xlane.f32.xlu0 %v3482
  %v3484 = vpop.xlane.xlu0 %3483
  %v3485 = vsel %vm1517, %v3473, 0.0
  %3486 = vadd.xlane.f32.xlu0 %v3485
  %v3487 = vpop.xlane.xlu0 %3486
  %v3488 = vmul.f32 %v3478, %v1524
  %v3489 = vmul.f32 %v3481, %v1524
  %v3490 = vmul.f32 %v3484, %v1524
  %v3491 = vmul.f32 %v3487, %v1524
  %v3492 = vsub.f32 %v3470, %v3488
  %v3493 = vsub.f32 %v3471, %v3489
  %v3494 = vsub.f32 %v3472, %v3490
  %v3495 = vsub.f32 %v3473, %v3491
  %v3496 = vmul.f32 %v3492, %v3492
  %v3497 = vmul.f32 %v3493, %v3493
  %v3498 = vmul.f32 %v3494, %v3494
  %v3499 = vmul.f32 %v3495, %v3495
  %v3500 = vsel %vm1517, %v3496, 0.0
  %3501 = vadd.xlane.f32.xlu0 %v3500
  %v3502 = vpop.xlane.xlu0 %3501
  %v3503 = vsel %vm1517, %v3497, 0.0
  %3504 = vadd.xlane.f32.xlu0 %v3503
  %v3505 = vpop.xlane.xlu0 %3504
  %v3506 = vsel %vm1517, %v3498, 0.0
  %3507 = vadd.xlane.f32.xlu0 %v3506
  %v3508 = vpop.xlane.xlu0 %3507
  %v3509 = vsel %vm1517, %v3499, 0.0
  %3510 = vadd.xlane.f32.xlu0 %v3509
  %v3511 = vpop.xlane.xlu0 %3510
  %v3512 = vmul.f32 %v3502, %v1524
  %v3513 = vmul.f32 %v3505, %v1524
  %v3514 = vmul.f32 %v3508, %v1524
  %v3515 = vmul.f32 %v3511, %v1524
  %v3516 = vadd.f32 %v3512, 1e-05
  %v3517 = vadd.f32 %v3513, 1e-05
  %v3518 = vadd.f32 %v3514, 1e-05
  %v3519 = vadd.f32 %v3515, 1e-05
  %v3520 = vrsqrt.pop %v3516
  %v3521 = vrsqrt.pop %v3517
  %v3522 = vrsqrt.pop %v3518
  %v3523 = vrsqrt.pop %v3519
  %v3524 = vmul.f32 %v3492, %v3520
  %v3525 = vmul.f32 %v3493, %v3521
  %v3526 = vmul.f32 %v3494, %v3522
  %v3527 = vmul.f32 %v3495, %v3523
  %v3528 = vlaneseq
  %v3529 = vshrl.u32 %v3528, 7
  %v3530 = vsub.s32 0, %v3529
  %v3531 = vrot.slane %v3474, %v3530
  %v3532 = vmul.f32 %v3524, %v3531
  %v3533 = vmul.f32 %v3525, %v3531
  %v3534 = vmul.f32 %v3526, %v3531
  %v3535 = vmul.f32 %v3527, %v3531
  %v3536 = vlaneseq
  %v3537 = vshrl.u32 %v3536, 7
  %v3538 = vsub.s32 0, %v3537
  %v3539 = vrot.slane %v3475, %v3538
  %v3540 = vadd.f32 %v3532, %v3539
  %v3541 = vadd.f32 %v3533, %v3539
  %v3542 = vadd.f32 %v3534, %v3539
  %v3543 = vadd.f32 %v3535, %v3539
  %v3544 = vld [vmem:[%s1 + $0x50] sm:$0xff]
  %v3545 = vld [vmem:[%s1 + $0x58] sm:$0xff]
  %v3546 = vld [vmem:[%s1 + $0x60] sm:$0xff]
  %v3547 = vld [vmem:[%s1 + $0x68] sm:$0xff]
  %v3548 = vld [vmem:[%s2 + $0xa] sm:$0x1]
  %v3549 = vlaneseq
  %v3550 = vshrl.u32 %v3549, 7
  %v3551 = vsub.s32 0, %v3550
  %v3552 = vrot.slane %v3548, %v3551
  %v3554 = vsel %vm1517, %v3540, 0
  %v3557 = vsel %vm1517, %v3541, 0
  %v3560 = vsel %vm1517, %v3542, 0
  %v3563 = vsel %vm1517, %v3543, 0
  %3565 = vmatprep.subr.mxu0 0.0
  %3566 = vmatpush1.msra.mxu0 0.0
  %3567 = vmatprep.subr.mxu0 0.0
  %3568 = vmatpush1.msra.mxu0 0.0
  %3569 = vmatprep.subr.mxu0 0.0
  %3570 = vmatpush1.msra.mxu0 0.0
  %3571 = vmatprep.subr.mxu0 0.0
  %3572 = vmatpush1.msra.mxu0 0.0
  %3573 = vmatprep.subr.mxu0 0.0
  %3574 = vmatpush1.msra.mxu0 0.0
  %3575 = vmatprep.subr.mxu0 0.0
  %3576 = vmatpush1.msra.mxu0 0.0
  %3577 = vmatprep.subr.mxu0 0.0
  %3578 = vmatpush1.msra.mxu0 0.0
  %3579 = vmatprep.subr.mxu0 0.0
  %3580 = vmatpush1.msra.mxu0 0.0
  %3581 = vmatprep.subr.mxu0 0.0
  %3582 = vmatpush1.msra.mxu0 0.0
  %3583 = vmatprep.subr.mxu0 0.0
  %3584 = vmatpush1.msra.mxu0 0.0
  %3585 = vmatprep.subr.mxu0 0.0
  %3586 = vmatpush1.msra.mxu0 0.0
  %3587 = vmatprep.subr.mxu0 0.0
  %3588 = vmatpush1.msra.mxu0 0.0
  %3589 = vmatprep.subr.mxu0 0.0
  %3590 = vmatpush1.msra.mxu0 %v3547
  %3591 = vmatprep.subr.mxu0 0.0
  %3592 = vmatpush1.msra.mxu0 %v3546
  %3593 = vmatprep.subr.mxu0 0.0
  %3594 = vmatpush1.msra.mxu0 %v3545
  %3595 = vmatprep.subr.mxu0 0.0
  %3596 = vmatpush1.msra.mxu0 %v3544
  %3597 = vmatprep.subr.mxu0 0.0
  %3598 = vmatpush2.msra.mxu0 0.0
  %3599 = vmatprep.subr.mxu0 0.0
  %3600 = vmatpush2.msra.mxu0 0.0
  %3601 = vmatprep.subr.mxu0 0.0
  %3602 = vmatpush2.msra.mxu0 0.0
  %3603 = vmatprep.subr.mxu0 0.0
  %3604 = vmatpush2.msra.mxu0 0.0
  %3605 = vmatprep.subr.mxu0 0.0
  %3606 = vmatpush2.msra.mxu0 0.0
  %3607 = vmatprep.subr.mxu0 0.0
  %3608 = vmatpush2.msra.mxu0 0.0
  %3609 = vmatprep.subr.mxu0 0.0
  %3610 = vmatpush2.msra.mxu0 0.0
  %3611 = vmatprep.subr.mxu0 0.0
  %3612 = vmatpush2.msra.mxu0 0.0
  %3613 = vmatprep.subr.mxu0 0.0
  %3614 = vmatpush2.msra.mxu0 0.0
  %3615 = vmatprep.subr.mxu0 0.0
  %3616 = vmatpush2.msra.mxu0 0.0
  %3617 = vmatprep.subr.mxu0 0.0
  %3618 = vmatpush2.msra.mxu0 0.0
  %3619 = vmatprep.subr.mxu0 0.0
  %3620 = vmatpush2.msra.mxu0 0.0
  %3621 = vmatprep.subr.mxu0 0.0
  %3622 = vmatpush2.msra.mxu0 0.0
  %3623 = vmatprep.subr.mxu0 0.0
  %3624 = vmatpush2.msra.mxu0 0.0
  %3625 = vmatprep.subr.mxu0 0.0
  %3626 = vmatpush2.msra.mxu0 0.0
  %3627 = vmatprep.subr.mxu0 0.0
  %3628 = vmatpush2.msra.mxu0 0.0
  %3629 = vmatprep.mubr.f32.mxu0 0.0
  %3630 = vmatmul.mubr.f32.gmra.mxu0 %v3554
  %v3631 = vpop.f32.mrf.mxu0
  %v3632 = vadd.f32 %v3552, %v3631
  %v3633 = vpop.f32.mrf.mxu0
  %3634 = vmatprep.mubr.f32.mxu0 0.0
  %3635 = vmatmul.mubr.f32.gmra.mxu0 %v3557
  %v3636 = vpop.f32.mrf.mxu0
  %v3637 = vadd.f32 %v3552, %v3636
  %v3638 = vpop.f32.mrf.mxu0
  %3639 = vmatprep.mubr.f32.mxu0 0.0
  %3640 = vmatmul.mubr.f32.gmra.mxu0 %v3560
  %v3641 = vpop.f32.mrf.mxu0
  %v3642 = vadd.f32 %v3552, %v3641
  %v3643 = vpop.f32.mrf.mxu0
  %3644 = vmatprep.mubr.f32.mxu0 0.0
  %3645 = vmatmul.mubr.f32.gmra.mxu0 %v3563
  %v3646 = vpop.f32.mrf.mxu0
  %v3647 = vadd.f32 %v3552, %v3646
  %v3648 = vpop.f32.mrf.mxu0
  %3649 = vdwg.mxu0
  %v3650 = vmax.f32 %v3632, 0.0
  %v3651 = vmax.f32 %v3637, 0.0
  %v3652 = vmax.f32 %v3642, 0.0
  %v3653 = vmax.f32 %v3647, 0.0
  %v3654 = vadd.f32 %v3540, %v3650
  %v3655 = vadd.f32 %v3541, %v3651
  %v3656 = vadd.f32 %v3542, %v3652
  %v3657 = vadd.f32 %v3543, %v3653
  %v3658 = vld [vmem:[%s2 + $0xd] sm:$0x1]
  %v3659 = vld [vmem:[%s2 + $0xe] sm:$0x1]
  %v3660 = vsel %vm1517, %v3654, 0.0
  %3661 = vadd.xlane.f32.xlu0 %v3660
  %v3662 = vpop.xlane.xlu0 %3661
  %v3663 = vsel %vm1517, %v3655, 0.0
  %3664 = vadd.xlane.f32.xlu0 %v3663
  %v3665 = vpop.xlane.xlu0 %3664
  %v3666 = vsel %vm1517, %v3656, 0.0
  %3667 = vadd.xlane.f32.xlu0 %v3666
  %v3668 = vpop.xlane.xlu0 %3667
  %v3669 = vsel %vm1517, %v3657, 0.0
  %3670 = vadd.xlane.f32.xlu0 %v3669
  %v3671 = vpop.xlane.xlu0 %3670
  %v3672 = vmul.f32 %v3662, %v1524
  %v3673 = vmul.f32 %v3665, %v1524
  %v3674 = vmul.f32 %v3668, %v1524
  %v3675 = vmul.f32 %v3671, %v1524
  %v3676 = vsub.f32 %v3654, %v3672
  %v3677 = vsub.f32 %v3655, %v3673
  %v3678 = vsub.f32 %v3656, %v3674
  %v3679 = vsub.f32 %v3657, %v3675
  %v3680 = vmul.f32 %v3676, %v3676
  %v3681 = vmul.f32 %v3677, %v3677
  %v3682 = vmul.f32 %v3678, %v3678
  %v3683 = vmul.f32 %v3679, %v3679
  %v3684 = vsel %vm1517, %v3680, 0.0
  %3685 = vadd.xlane.f32.xlu0 %v3684
  %v3686 = vpop.xlane.xlu0 %3685
  %v3687 = vsel %vm1517, %v3681, 0.0
  %3688 = vadd.xlane.f32.xlu0 %v3687
  %v3689 = vpop.xlane.xlu0 %3688
  %v3690 = vsel %vm1517, %v3682, 0.0
  %3691 = vadd.xlane.f32.xlu0 %v3690
  %v3692 = vpop.xlane.xlu0 %3691
  %v3693 = vsel %vm1517, %v3683, 0.0
  %3694 = vadd.xlane.f32.xlu0 %v3693
  %v3695 = vpop.xlane.xlu0 %3694
  %v3696 = vmul.f32 %v3686, %v1524
  %v3697 = vmul.f32 %v3689, %v1524
  %v3698 = vmul.f32 %v3692, %v1524
  %v3699 = vmul.f32 %v3695, %v1524
  %v3700 = vadd.f32 %v3696, 1e-05
  %v3701 = vadd.f32 %v3697, 1e-05
  %v3702 = vadd.f32 %v3698, 1e-05
  %v3703 = vadd.f32 %v3699, 1e-05
  %v3704 = vrsqrt.pop %v3700
  %v3705 = vrsqrt.pop %v3701
  %v3706 = vrsqrt.pop %v3702
  %v3707 = vrsqrt.pop %v3703
  %v3708 = vmul.f32 %v3676, %v3704
  %v3709 = vmul.f32 %v3677, %v3705
  %v3710 = vmul.f32 %v3678, %v3706
  %v3711 = vmul.f32 %v3679, %v3707
  %v3712 = vlaneseq
  %v3713 = vshrl.u32 %v3712, 7
  %v3714 = vsub.s32 0, %v3713
  %v3715 = vrot.slane %v3658, %v3714
  %v3716 = vmul.f32 %v3708, %v3715
  %v3717 = vmul.f32 %v3709, %v3715
  %v3718 = vmul.f32 %v3710, %v3715
  %v3719 = vmul.f32 %v3711, %v3715
  %v3720 = vlaneseq
  %v3721 = vshrl.u32 %v3720, 7
  %v3722 = vsub.s32 0, %v3721
  %v3723 = vrot.slane %v3659, %v3722
  %v3724 = vadd.f32 %v3716, %v3723
  %v3725 = vadd.f32 %v3717, %v3723
  %v3726 = vadd.f32 %v3718, %v3723
  %v3727 = vadd.f32 %v3719, %v3723
  %v3728 = vld [vmem:[%s3 + $0x8] sm:$0xff]
  %v3729 = vld [vmem:[%s1 + $0x70] sm:$0xff]
  %v3730 = vld [vmem:[%s1 + $0x78] sm:$0xff]
  %v3731 = vld [vmem:[%s1 + $0x80] sm:$0xff]
  %v3732 = vld [vmem:[%s1 + $0x88] sm:$0xff]
  %v3733 = vld [vmem:[%s2 + $0x11] sm:$0x1]
  %v3734 = vlaneseq
  %v3735 = vshrl.u32 %v3734, 7
  %v3736 = vsub.s32 0, %v3735
  %v3737 = vrot.slane %v3733, %v3736
  %v3739 = vsel %vm1517, %v3724, 0
  %v3742 = vsel %vm1517, %v3725, 0
  %v3745 = vsel %vm1517, %v3726, 0
  %v3748 = vsel %vm1517, %v3727, 0
  %3750 = vmatprep.subr.mxu0 0.0
  %3751 = vmatpush1.msra.mxu0 0.0
  %3752 = vmatprep.subr.mxu0 0.0
  %3753 = vmatpush1.msra.mxu0 0.0
  %3754 = vmatprep.subr.mxu0 0.0
  %3755 = vmatpush1.msra.mxu0 0.0
  %3756 = vmatprep.subr.mxu0 0.0
  %3757 = vmatpush1.msra.mxu0 0.0
  %3758 = vmatprep.subr.mxu0 0.0
  %3759 = vmatpush1.msra.mxu0 0.0
  %3760 = vmatprep.subr.mxu0 0.0
  %3761 = vmatpush1.msra.mxu0 0.0
  %3762 = vmatprep.subr.mxu0 0.0
  %3763 = vmatpush1.msra.mxu0 0.0
  %3764 = vmatprep.subr.mxu0 0.0
  %3765 = vmatpush1.msra.mxu0 0.0
  %3766 = vmatprep.subr.mxu0 0.0
  %3767 = vmatpush1.msra.mxu0 0.0
  %3768 = vmatprep.subr.mxu0 0.0
  %3769 = vmatpush1.msra.mxu0 0.0
  %3770 = vmatprep.subr.mxu0 0.0
  %3771 = vmatpush1.msra.mxu0 0.0
  %3772 = vmatprep.subr.mxu0 0.0
  %3773 = vmatpush1.msra.mxu0 0.0
  %3774 = vmatprep.subr.mxu0 0.0
  %3775 = vmatpush1.msra.mxu0 %v3732
  %3776 = vmatprep.subr.mxu0 0.0
  %3777 = vmatpush1.msra.mxu0 %v3731
  %3778 = vmatprep.subr.mxu0 0.0
  %3779 = vmatpush1.msra.mxu0 %v3730
  %3780 = vmatprep.subr.mxu0 0.0
  %3781 = vmatpush1.msra.mxu0 %v3729
  %3782 = vmatprep.subr.mxu0 0.0
  %3783 = vmatpush2.msra.mxu0 0.0
  %3784 = vmatprep.subr.mxu0 0.0
  %3785 = vmatpush2.msra.mxu0 0.0
  %3786 = vmatprep.subr.mxu0 0.0
  %3787 = vmatpush2.msra.mxu0 0.0
  %3788 = vmatprep.subr.mxu0 0.0
  %3789 = vmatpush2.msra.mxu0 0.0
  %3790 = vmatprep.subr.mxu0 0.0
  %3791 = vmatpush2.msra.mxu0 0.0
  %3792 = vmatprep.subr.mxu0 0.0
  %3793 = vmatpush2.msra.mxu0 0.0
  %3794 = vmatprep.subr.mxu0 0.0
  %3795 = vmatpush2.msra.mxu0 0.0
  %3796 = vmatprep.subr.mxu0 0.0
  %3797 = vmatpush2.msra.mxu0 0.0
  %3798 = vmatprep.subr.mxu0 0.0
  %3799 = vmatpush2.msra.mxu0 0.0
  %3800 = vmatprep.subr.mxu0 0.0
  %3801 = vmatpush2.msra.mxu0 0.0
  %3802 = vmatprep.subr.mxu0 0.0
  %3803 = vmatpush2.msra.mxu0 0.0
  %3804 = vmatprep.subr.mxu0 0.0
  %3805 = vmatpush2.msra.mxu0 0.0
  %3806 = vmatprep.subr.mxu0 0.0
  %3807 = vmatpush2.msra.mxu0 0.0
  %3808 = vmatprep.subr.mxu0 0.0
  %3809 = vmatpush2.msra.mxu0 0.0
  %3810 = vmatprep.subr.mxu0 0.0
  %3811 = vmatpush2.msra.mxu0 0.0
  %3812 = vmatprep.subr.mxu0 0.0
  %3813 = vmatpush2.msra.mxu0 0.0
  %3814 = vmatprep.mubr.f32.mxu0 0.0
  %3815 = vmatmul.mubr.f32.gmra.mxu0 %v3739
  %v3816 = vpop.f32.mrf.mxu0
  %v3817 = vadd.f32 %v3737, %v3816
  %v3818 = vpop.f32.mrf.mxu0
  %3819 = vmatprep.mubr.f32.mxu0 0.0
  %3820 = vmatmul.mubr.f32.gmra.mxu0 %v3742
  %v3821 = vpop.f32.mrf.mxu0
  %v3822 = vadd.f32 %v3737, %v3821
  %v3823 = vpop.f32.mrf.mxu0
  %3824 = vmatprep.mubr.f32.mxu0 0.0
  %3825 = vmatmul.mubr.f32.gmra.mxu0 %v3745
  %v3826 = vpop.f32.mrf.mxu0
  %v3827 = vadd.f32 %v3737, %v3826
  %v3828 = vpop.f32.mrf.mxu0
  %3829 = vmatprep.mubr.f32.mxu0 0.0
  %3830 = vmatmul.mubr.f32.gmra.mxu0 %v3748
  %v3831 = vpop.f32.mrf.mxu0
  %v3832 = vadd.f32 %v3737, %v3831
  %v3833 = vpop.f32.mrf.mxu0
  %3834 = vdwg.mxu0
  %v3836 = vsel %vm28, %v3728, 0
  %v3839 = vsel %vm28, %v3817, 0
  %v3842 = vsel %vm28, %v3822, 0
  %3844 = vmatprep.subr.mxu0 0.0
  %3845 = vmatpush1.xpose.msra.mxu0 0.0
  %3846 = vmatprep.subr.mxu0 0.0
  %3847 = vmatpush1.xpose.msra.mxu0 0.0
  %3848 = vmatprep.subr.mxu0 0.0
  %3849 = vmatpush1.xpose.msra.mxu0 0.0
  %3850 = vmatprep.subr.mxu0 0.0
  %3851 = vmatpush1.xpose.msra.mxu0 0.0
  %3852 = vmatprep.subr.mxu0 0.0
  %3853 = vmatpush1.xpose.msra.mxu0 0.0
  %3854 = vmatprep.subr.mxu0 0.0
  %3855 = vmatpush1.xpose.msra.mxu0 0.0
  %3856 = vmatprep.subr.mxu0 0.0
  %3857 = vmatpush1.xpose.msra.mxu0 0.0
  %3858 = vmatprep.subr.mxu0 0.0
  %3859 = vmatpush1.xpose.msra.mxu0 0.0
  %3860 = vmatprep.subr.mxu0 0.0
  %3861 = vmatpush1.xpose.msra.mxu0 0.0
  %3862 = vmatprep.subr.mxu0 0.0
  %3863 = vmatpush1.xpose.msra.mxu0 0.0
  %3864 = vmatprep.subr.mxu0 0.0
  %3865 = vmatpush1.xpose.msra.mxu0 0.0
  %3866 = vmatprep.subr.mxu0 0.0
  %3867 = vmatpush1.xpose.msra.mxu0 0.0
  %3868 = vmatprep.subr.mxu0 0.0
  %3869 = vmatpush1.xpose.msra.mxu0 0.0
  %3870 = vmatprep.subr.mxu0 0.0
  %3871 = vmatpush1.xpose.msra.mxu0 0.0
  %3872 = vmatprep.subr.mxu0 0.0
  %3873 = vmatpush1.xpose.msra.mxu0 %v3842
  %3874 = vmatprep.subr.mxu0 0.0
  %3875 = vmatpush1.xpose.msra.mxu0 %v3839
  %3876 = vmatprep.subr.mxu0 0.0
  %3877 = vmatpush2.xpose.msra.mxu0 0.0
  %3878 = vmatprep.subr.mxu0 0.0
  %3879 = vmatpush2.xpose.msra.mxu0 0.0
  %3880 = vmatprep.subr.mxu0 0.0
  %3881 = vmatpush2.xpose.msra.mxu0 0.0
  %3882 = vmatprep.subr.mxu0 0.0
  %3883 = vmatpush2.xpose.msra.mxu0 0.0
  %3884 = vmatprep.subr.mxu0 0.0
  %3885 = vmatpush2.xpose.msra.mxu0 0.0
  %3886 = vmatprep.subr.mxu0 0.0
  %3887 = vmatpush2.xpose.msra.mxu0 0.0
  %3888 = vmatprep.subr.mxu0 0.0
  %3889 = vmatpush2.xpose.msra.mxu0 0.0
  %3890 = vmatprep.subr.mxu0 0.0
  %3891 = vmatpush2.xpose.msra.mxu0 0.0
  %3892 = vmatprep.subr.mxu0 0.0
  %3893 = vmatpush2.xpose.msra.mxu0 0.0
  %3894 = vmatprep.subr.mxu0 0.0
  %3895 = vmatpush2.xpose.msra.mxu0 0.0
  %3896 = vmatprep.subr.mxu0 0.0
  %3897 = vmatpush2.xpose.msra.mxu0 0.0
  %3898 = vmatprep.subr.mxu0 0.0
  %3899 = vmatpush2.xpose.msra.mxu0 0.0
  %3900 = vmatprep.subr.mxu0 0.0
  %3901 = vmatpush2.xpose.msra.mxu0 0.0
  %3902 = vmatprep.subr.mxu0 0.0
  %3903 = vmatpush2.xpose.msra.mxu0 0.0
  %3904 = vmatprep.subr.mxu0 0.0
  %3905 = vmatpush2.xpose.msra.mxu0 0.0
  %3906 = vmatprep.subr.mxu0 0.0
  %3907 = vmatpush2.xpose.msra.mxu0 0.0
  %3908 = vmatprep.mubr.f32.mxu0 0.0
  %3909 = vmatmul.mubr.f32.gmra.mxu0 %v3836
  %v3910 = vpop.f32.mrf.mxu0
  %v3911 = vadd.f32 0.0, %v3910
  %v3912 = vpop.f32.mrf.mxu0
  %3913 = vdwg.mxu0
  %v3915 = vsel %vm28, %v3827, 0
  %v3918 = vsel %vm28, %v3832, 0
  %3920 = vmatprep.subr.mxu0 0.0
  %3921 = vmatpush1.xpose.msra.mxu0 0.0
  %3922 = vmatprep.subr.mxu0 0.0
  %3923 = vmatpush1.xpose.msra.mxu0 0.0
  %3924 = vmatprep.subr.mxu0 0.0
  %3925 = vmatpush1.xpose.msra.mxu0 0.0
  %3926 = vmatprep.subr.mxu0 0.0
  %3927 = vmatpush1.xpose.msra.mxu0 0.0
  %3928 = vmatprep.subr.mxu0 0.0
  %3929 = vmatpush1.xpose.msra.mxu0 0.0
  %3930 = vmatprep.subr.mxu0 0.0
  %3931 = vmatpush1.xpose.msra.mxu0 0.0
  %3932 = vmatprep.subr.mxu0 0.0
  %3933 = vmatpush1.xpose.msra.mxu0 0.0
  %3934 = vmatprep.subr.mxu0 0.0
  %3935 = vmatpush1.xpose.msra.mxu0 0.0
  %3936 = vmatprep.subr.mxu0 0.0
  %3937 = vmatpush1.xpose.msra.mxu0 0.0
  %3938 = vmatprep.subr.mxu0 0.0
  %3939 = vmatpush1.xpose.msra.mxu0 0.0
  %3940 = vmatprep.subr.mxu0 0.0
  %3941 = vmatpush1.xpose.msra.mxu0 0.0
  %3942 = vmatprep.subr.mxu0 0.0
  %3943 = vmatpush1.xpose.msra.mxu0 0.0
  %3944 = vmatprep.subr.mxu0 0.0
  %3945 = vmatpush1.xpose.msra.mxu0 0.0
  %3946 = vmatprep.subr.mxu0 0.0
  %3947 = vmatpush1.xpose.msra.mxu0 0.0
  %3948 = vmatprep.subr.mxu0 0.0
  %3949 = vmatpush1.xpose.msra.mxu0 %v3918
  %3950 = vmatprep.subr.mxu0 0.0
  %3951 = vmatpush1.xpose.msra.mxu0 %v3915
  %3952 = vmatprep.subr.mxu0 0.0
  %3953 = vmatpush2.xpose.msra.mxu0 0.0
  %3954 = vmatprep.subr.mxu0 0.0
  %3955 = vmatpush2.xpose.msra.mxu0 0.0
  %3956 = vmatprep.subr.mxu0 0.0
  %3957 = vmatpush2.xpose.msra.mxu0 0.0
  %3958 = vmatprep.subr.mxu0 0.0
  %3959 = vmatpush2.xpose.msra.mxu0 0.0
  %3960 = vmatprep.subr.mxu0 0.0
  %3961 = vmatpush2.xpose.msra.mxu0 0.0
  %3962 = vmatprep.subr.mxu0 0.0
  %3963 = vmatpush2.xpose.msra.mxu0 0.0
  %3964 = vmatprep.subr.mxu0 0.0
  %3965 = vmatpush2.xpose.msra.mxu0 0.0
  %3966 = vmatprep.subr.mxu0 0.0
  %3967 = vmatpush2.xpose.msra.mxu0 0.0
  %3968 = vmatprep.subr.mxu0 0.0
  %3969 = vmatpush2.xpose.msra.mxu0 0.0
  %3970 = vmatprep.subr.mxu0 0.0
  %3971 = vmatpush2.xpose.msra.mxu0 0.0
  %3972 = vmatprep.subr.mxu0 0.0
  %3973 = vmatpush2.xpose.msra.mxu0 0.0
  %3974 = vmatprep.subr.mxu0 0.0
  %3975 = vmatpush2.xpose.msra.mxu0 0.0
  %3976 = vmatprep.subr.mxu0 0.0
  %3977 = vmatpush2.xpose.msra.mxu0 0.0
  %3978 = vmatprep.subr.mxu0 0.0
  %3979 = vmatpush2.xpose.msra.mxu0 0.0
  %3980 = vmatprep.subr.mxu0 0.0
  %3981 = vmatpush2.xpose.msra.mxu0 0.0
  %3982 = vmatprep.subr.mxu0 0.0
  %3983 = vmatpush2.xpose.msra.mxu0 0.0
  %3984 = vmatprep.mubr.f32.mxu0 0.0
  %3985 = vmatmul.mubr.f32.gmra.mxu0 %v3836
  %v3986 = vpop.f32.mrf.mxu0
  %v3987 = vadd.f32 0.0, %v3986
  %v3988 = vpop.f32.mrf.mxu0
  %3989 = vdwg.mxu0
  %v3990 = vsel %vm281, %v3911, -inf
  %3991 = vmax.xlane.f32.xlu0 %v3990
  %v3992 = vpop.xlane.xlu0 %3991
  %v3993 = vsel %vm281, %v3987, -inf
  %3994 = vmax.xlane.f32.xlu0 %v3993
  %v3995 = vpop.xlane.xlu0 %3994
  %v3996 = vsub.f32 %v3911, %v3992
  %v3997 = vsub.f32 %v3987, %v3995
  %v3998 = vmul.f32 %v3996, 1.442695
  %v3999 = vpow.pop %v3998
  %v4000 = vmul.f32 %v3997, 1.442695
  %v4001 = vpow.pop %v4000
  %v4002 = vsel %vm281, %v3999, 0.0
  %4003 = vadd.xlane.f32.xlu0 %v4002
  %v4004 = vpop.xlane.xlu0 %4003
  %v4005 = vsel %vm281, %v4001, 0.0
  %4006 = vadd.xlane.f32.xlu0 %v4005
  %v4007 = vpop.xlane.xlu0 %4006
  %v4008 = vrcp.pop %v4004
  %v4009 = vrcp.pop %v4007
  %v4010 = vmul.f32 %v3999, %v4008
  %v4011 = vmul.f32 %v4001, %v4009
  %4012 = vrot.lane.b32.xlu0 %v3817, 96
  %v4013 = vpop.permute.xlu0 %4012
  %4014 = vrot.lane.b32.xlu0 %v3822, 96
  %v4015 = vpop.permute.xlu0 %4014
  %v4019 = vsel %vm281, %v4010, 0
  %4021 = vmatprep.subr.mxu0 0.0
  %4022 = vmatpush1.msra.mxu0 0.0
  %4023 = vmatprep.subr.mxu0 0.0
  %4024 = vmatpush1.msra.mxu0 0.0
  %4025 = vmatprep.subr.mxu0 0.0
  %4026 = vmatpush1.msra.mxu0 0.0
  %4027 = vmatprep.subr.mxu0 0.0
  %4028 = vmatpush1.msra.mxu0 0.0
  %4029 = vmatprep.subr.mxu0 0.0
  %4030 = vmatpush1.msra.mxu0 0.0
  %4031 = vmatprep.subr.mxu0 0.0
  %4032 = vmatpush1.msra.mxu0 0.0
  %4033 = vmatprep.subr.mxu0 0.0
  %4034 = vmatpush1.msra.mxu0 0.0
  %4035 = vmatprep.subr.mxu0 0.0
  %4036 = vmatpush1.msra.mxu0 0.0
  %4037 = vmatprep.subr.mxu0 0.0
  %4038 = vmatpush1.msra.mxu0 0.0
  %4039 = vmatprep.subr.mxu0 0.0
  %4040 = vmatpush1.msra.mxu0 0.0
  %4041 = vmatprep.subr.mxu0 0.0
  %4042 = vmatpush1.msra.mxu0 0.0
  %4043 = vmatprep.subr.mxu0 0.0
  %4044 = vmatpush1.msra.mxu0 0.0
  %4045 = vmatprep.subr.mxu0 0.0
  %4046 = vmatpush1.msra.mxu0 0.0
  %4047 = vmatprep.subr.mxu0 0.0
  %4048 = vmatpush1.msra.mxu0 0.0
  %4049 = vmatprep.subr.mxu0 0.0
  %4050 = vmatpush1.msra.mxu0 %v4015
  %4051 = vmatprep.subr.mxu0 0.0
  %4052 = vmatpush1.msra.mxu0 %v4013
  %4053 = vmatprep.subr.mxu0 0.0
  %4054 = vmatpush2.msra.mxu0 0.0
  %4055 = vmatprep.subr.mxu0 0.0
  %4056 = vmatpush2.msra.mxu0 0.0
  %4057 = vmatprep.subr.mxu0 0.0
  %4058 = vmatpush2.msra.mxu0 0.0
  %4059 = vmatprep.subr.mxu0 0.0
  %4060 = vmatpush2.msra.mxu0 0.0
  %4061 = vmatprep.subr.mxu0 0.0
  %4062 = vmatpush2.msra.mxu0 0.0
  %4063 = vmatprep.subr.mxu0 0.0
  %4064 = vmatpush2.msra.mxu0 0.0
  %4065 = vmatprep.subr.mxu0 0.0
  %4066 = vmatpush2.msra.mxu0 0.0
  %4067 = vmatprep.subr.mxu0 0.0
  %4068 = vmatpush2.msra.mxu0 0.0
  %4069 = vmatprep.subr.mxu0 0.0
  %4070 = vmatpush2.msra.mxu0 0.0
  %4071 = vmatprep.subr.mxu0 0.0
  %4072 = vmatpush2.msra.mxu0 0.0
  %4073 = vmatprep.subr.mxu0 0.0
  %4074 = vmatpush2.msra.mxu0 0.0
  %4075 = vmatprep.subr.mxu0 0.0
  %4076 = vmatpush2.msra.mxu0 0.0
  %4077 = vmatprep.subr.mxu0 0.0
  %4078 = vmatpush2.msra.mxu0 0.0
  %4079 = vmatprep.subr.mxu0 0.0
  %4080 = vmatpush2.msra.mxu0 0.0
  %4081 = vmatprep.subr.mxu0 0.0
  %4082 = vmatpush2.msra.mxu0 0.0
  %4083 = vmatprep.subr.mxu0 0.0
  %4084 = vmatpush2.msra.mxu0 0.0
  %4085 = vmatprep.mubr.f32.mxu0 0.0
  %4086 = vmatmul.mubr.f32.gmra.mxu0 %v4019
  %v4087 = vpop.f32.mrf.mxu0
  %v4088 = vadd.f32 0.0, %v4087
  %v4089 = vpop.f32.mrf.mxu0
  %4090 = vdwg.mxu0
  %4091 = vrot.lane.b32.xlu0 %v3827, 96
  %v4092 = vpop.permute.xlu0 %4091
  %4093 = vrot.lane.b32.xlu0 %v3832, 96
  %v4094 = vpop.permute.xlu0 %4093
  %v4098 = vsel %vm281, %v4011, 0
  %4100 = vmatprep.subr.mxu0 0.0
  %4101 = vmatpush1.msra.mxu0 0.0
  %4102 = vmatprep.subr.mxu0 0.0
  %4103 = vmatpush1.msra.mxu0 0.0
  %4104 = vmatprep.subr.mxu0 0.0
  %4105 = vmatpush1.msra.mxu0 0.0
  %4106 = vmatprep.subr.mxu0 0.0
  %4107 = vmatpush1.msra.mxu0 0.0
  %4108 = vmatprep.subr.mxu0 0.0
  %4109 = vmatpush1.msra.mxu0 0.0
  %4110 = vmatprep.subr.mxu0 0.0
  %4111 = vmatpush1.msra.mxu0 0.0
  %4112 = vmatprep.subr.mxu0 0.0
  %4113 = vmatpush1.msra.mxu0 0.0
  %4114 = vmatprep.subr.mxu0 0.0
  %4115 = vmatpush1.msra.mxu0 0.0
  %4116 = vmatprep.subr.mxu0 0.0
  %4117 = vmatpush1.msra.mxu0 0.0
  %4118 = vmatprep.subr.mxu0 0.0
  %4119 = vmatpush1.msra.mxu0 0.0
  %4120 = vmatprep.subr.mxu0 0.0
  %4121 = vmatpush1.msra.mxu0 0.0
  %4122 = vmatprep.subr.mxu0 0.0
  %4123 = vmatpush1.msra.mxu0 0.0
  %4124 = vmatprep.subr.mxu0 0.0
  %4125 = vmatpush1.msra.mxu0 0.0
  %4126 = vmatprep.subr.mxu0 0.0
  %4127 = vmatpush1.msra.mxu0 0.0
  %4128 = vmatprep.subr.mxu0 0.0
  %4129 = vmatpush1.msra.mxu0 %v4094
  %4130 = vmatprep.subr.mxu0 0.0
  %4131 = vmatpush1.msra.mxu0 %v4092
  %4132 = vmatprep.subr.mxu0 0.0
  %4133 = vmatpush2.msra.mxu0 0.0
  %4134 = vmatprep.subr.mxu0 0.0
  %4135 = vmatpush2.msra.mxu0 0.0
  %4136 = vmatprep.subr.mxu0 0.0
  %4137 = vmatpush2.msra.mxu0 0.0
  %4138 = vmatprep.subr.mxu0 0.0
  %4139 = vmatpush2.msra.mxu0 0.0
  %4140 = vmatprep.subr.mxu0 0.0
  %4141 = vmatpush2.msra.mxu0 0.0
  %4142 = vmatprep.subr.mxu0 0.0
  %4143 = vmatpush2.msra.mxu0 0.0
  %4144 = vmatprep.subr.mxu0 0.0
  %4145 = vmatpush2.msra.mxu0 0.0
  %4146 = vmatprep.subr.mxu0 0.0
  %4147 = vmatpush2.msra.mxu0 0.0
  %4148 = vmatprep.subr.mxu0 0.0
  %4149 = vmatpush2.msra.mxu0 0.0
  %4150 = vmatprep.subr.mxu0 0.0
  %4151 = vmatpush2.msra.mxu0 0.0
  %4152 = vmatprep.subr.mxu0 0.0
  %4153 = vmatpush2.msra.mxu0 0.0
  %4154 = vmatprep.subr.mxu0 0.0
  %4155 = vmatpush2.msra.mxu0 0.0
  %4156 = vmatprep.subr.mxu0 0.0
  %4157 = vmatpush2.msra.mxu0 0.0
  %4158 = vmatprep.subr.mxu0 0.0
  %4159 = vmatpush2.msra.mxu0 0.0
  %4160 = vmatprep.subr.mxu0 0.0
  %4161 = vmatpush2.msra.mxu0 0.0
  %4162 = vmatprep.subr.mxu0 0.0
  %4163 = vmatpush2.msra.mxu0 0.0
  %4164 = vmatprep.mubr.f32.mxu0 0.0
  %4165 = vmatmul.mubr.f32.gmra.mxu0 %v4098
  %v4166 = vpop.f32.mrf.mxu0
  %v4167 = vadd.f32 0.0, %v4166
  %v4168 = vpop.f32.mrf.mxu0
  %4169 = vdwg.mxu0
  %4170 = vrot.lane.b32.xlu0 %v3728, 120
  %v4171 = vpop.permute.xlu0 %4170
  %4172 = vrot.lane.b32.xlu0 %v3817, 120
  %v4173 = vpop.permute.xlu0 %4172
  %4174 = vrot.lane.b32.xlu0 %v3822, 120
  %v4175 = vpop.permute.xlu0 %4174
  %v4176 = vsel %vm28, %v4171, 0
  %v4178 = vsel %vm28, %v4173, 0
  %v4180 = vsel %vm28, %v4175, 0
  %4182 = vmatprep.subr.mxu0 0.0
  %4183 = vmatpush1.xpose.msra.mxu0 0.0
  %4184 = vmatprep.subr.mxu0 0.0
  %4185 = vmatpush1.xpose.msra.mxu0 0.0
  %4186 = vmatprep.subr.mxu0 0.0
  %4187 = vmatpush1.xpose.msra.mxu0 0.0
  %4188 = vmatprep.subr.mxu0 0.0
  %4189 = vmatpush1.xpose.msra.mxu0 0.0
  %4190 = vmatprep.subr.mxu0 0.0
  %4191 = vmatpush1.xpose.msra.mxu0 0.0
  %4192 = vmatprep.subr.mxu0 0.0
  %4193 = vmatpush1.xpose.msra.mxu0 0.0
  %4194 = vmatprep.subr.mxu0 0.0
  %4195 = vmatpush1.xpose.msra.mxu0 0.0
  %4196 = vmatprep.subr.mxu0 0.0
  %4197 = vmatpush1.xpose.msra.mxu0 0.0
  %4198 = vmatprep.subr.mxu0 0.0
  %4199 = vmatpush1.xpose.msra.mxu0 0.0
  %4200 = vmatprep.subr.mxu0 0.0
  %4201 = vmatpush1.xpose.msra.mxu0 0.0
  %4202 = vmatprep.subr.mxu0 0.0
  %4203 = vmatpush1.xpose.msra.mxu0 0.0
  %4204 = vmatprep.subr.mxu0 0.0
  %4205 = vmatpush1.xpose.msra.mxu0 0.0
  %4206 = vmatprep.subr.mxu0 0.0
  %4207 = vmatpush1.xpose.msra.mxu0 0.0
  %4208 = vmatprep.subr.mxu0 0.0
  %4209 = vmatpush1.xpose.msra.mxu0 0.0
  %4210 = vmatprep.subr.mxu0 0.0
  %4211 = vmatpush1.xpose.msra.mxu0 %v4180
  %4212 = vmatprep.subr.mxu0 0.0
  %4213 = vmatpush1.xpose.msra.mxu0 %v4178
  %4214 = vmatprep.subr.mxu0 0.0
  %4215 = vmatpush2.xpose.msra.mxu0 0.0
  %4216 = vmatprep.subr.mxu0 0.0
  %4217 = vmatpush2.xpose.msra.mxu0 0.0
  %4218 = vmatprep.subr.mxu0 0.0
  %4219 = vmatpush2.xpose.msra.mxu0 0.0
  %4220 = vmatprep.subr.mxu0 0.0
  %4221 = vmatpush2.xpose.msra.mxu0 0.0
  %4222 = vmatprep.subr.mxu0 0.0
  %4223 = vmatpush2.xpose.msra.mxu0 0.0
  %4224 = vmatprep.subr.mxu0 0.0
  %4225 = vmatpush2.xpose.msra.mxu0 0.0
  %4226 = vmatprep.subr.mxu0 0.0
  %4227 = vmatpush2.xpose.msra.mxu0 0.0
  %4228 = vmatprep.subr.mxu0 0.0
  %4229 = vmatpush2.xpose.msra.mxu0 0.0
  %4230 = vmatprep.subr.mxu0 0.0
  %4231 = vmatpush2.xpose.msra.mxu0 0.0
  %4232 = vmatprep.subr.mxu0 0.0
  %4233 = vmatpush2.xpose.msra.mxu0 0.0
  %4234 = vmatprep.subr.mxu0 0.0
  %4235 = vmatpush2.xpose.msra.mxu0 0.0
  %4236 = vmatprep.subr.mxu0 0.0
  %4237 = vmatpush2.xpose.msra.mxu0 0.0
  %4238 = vmatprep.subr.mxu0 0.0
  %4239 = vmatpush2.xpose.msra.mxu0 0.0
  %4240 = vmatprep.subr.mxu0 0.0
  %4241 = vmatpush2.xpose.msra.mxu0 0.0
  %4242 = vmatprep.subr.mxu0 0.0
  %4243 = vmatpush2.xpose.msra.mxu0 0.0
  %4244 = vmatprep.subr.mxu0 0.0
  %4245 = vmatpush2.xpose.msra.mxu0 0.0
  %4246 = vmatprep.mubr.f32.mxu0 0.0
  %4247 = vmatmul.mubr.f32.gmra.mxu0 %v4176
  %v4248 = vpop.f32.mrf.mxu0
  %v4249 = vadd.f32 0.0, %v4248
  %v4250 = vpop.f32.mrf.mxu0
  %4251 = vdwg.mxu0
  %4252 = vrot.lane.b32.xlu0 %v3827, 120
  %v4253 = vpop.permute.xlu0 %4252
  %4254 = vrot.lane.b32.xlu0 %v3832, 120
  %v4255 = vpop.permute.xlu0 %4254
  %v4256 = vsel %vm28, %v4253, 0
  %v4258 = vsel %vm28, %v4255, 0
  %4260 = vmatprep.subr.mxu0 0.0
  %4261 = vmatpush1.xpose.msra.mxu0 0.0
  %4262 = vmatprep.subr.mxu0 0.0
  %4263 = vmatpush1.xpose.msra.mxu0 0.0
  %4264 = vmatprep.subr.mxu0 0.0
  %4265 = vmatpush1.xpose.msra.mxu0 0.0
  %4266 = vmatprep.subr.mxu0 0.0
  %4267 = vmatpush1.xpose.msra.mxu0 0.0
  %4268 = vmatprep.subr.mxu0 0.0
  %4269 = vmatpush1.xpose.msra.mxu0 0.0
  %4270 = vmatprep.subr.mxu0 0.0
  %4271 = vmatpush1.xpose.msra.mxu0 0.0
  %4272 = vmatprep.subr.mxu0 0.0
  %4273 = vmatpush1.xpose.msra.mxu0 0.0
  %4274 = vmatprep.subr.mxu0 0.0
  %4275 = vmatpush1.xpose.msra.mxu0 0.0
  %4276 = vmatprep.subr.mxu0 0.0
  %4277 = vmatpush1.xpose.msra.mxu0 0.0
  %4278 = vmatprep.subr.mxu0 0.0
  %4279 = vmatpush1.xpose.msra.mxu0 0.0
  %4280 = vmatprep.subr.mxu0 0.0
  %4281 = vmatpush1.xpose.msra.mxu0 0.0
  %4282 = vmatprep.subr.mxu0 0.0
  %4283 = vmatpush1.xpose.msra.mxu0 0.0
  %4284 = vmatprep.subr.mxu0 0.0
  %4285 = vmatpush1.xpose.msra.mxu0 0.0
  %4286 = vmatprep.subr.mxu0 0.0
  %4287 = vmatpush1.xpose.msra.mxu0 0.0
  %4288 = vmatprep.subr.mxu0 0.0
  %4289 = vmatpush1.xpose.msra.mxu0 %v4258
  %4290 = vmatprep.subr.mxu0 0.0
  %4291 = vmatpush1.xpose.msra.mxu0 %v4256
  %4292 = vmatprep.subr.mxu0 0.0
  %4293 = vmatpush2.xpose.msra.mxu0 0.0
  %4294 = vmatprep.subr.mxu0 0.0
  %4295 = vmatpush2.xpose.msra.mxu0 0.0
  %4296 = vmatprep.subr.mxu0 0.0
  %4297 = vmatpush2.xpose.msra.mxu0 0.0
  %4298 = vmatprep.subr.mxu0 0.0
  %4299 = vmatpush2.xpose.msra.mxu0 0.0
  %4300 = vmatprep.subr.mxu0 0.0
  %4301 = vmatpush2.xpose.msra.mxu0 0.0
  %4302 = vmatprep.subr.mxu0 0.0
  %4303 = vmatpush2.xpose.msra.mxu0 0.0
  %4304 = vmatprep.subr.mxu0 0.0
  %4305 = vmatpush2.xpose.msra.mxu0 0.0
  %4306 = vmatprep.subr.mxu0 0.0
  %4307 = vmatpush2.xpose.msra.mxu0 0.0
  %4308 = vmatprep.subr.mxu0 0.0
  %4309 = vmatpush2.xpose.msra.mxu0 0.0
  %4310 = vmatprep.subr.mxu0 0.0
  %4311 = vmatpush2.xpose.msra.mxu0 0.0
  %4312 = vmatprep.subr.mxu0 0.0
  %4313 = vmatpush2.xpose.msra.mxu0 0.0
  %4314 = vmatprep.subr.mxu0 0.0
  %4315 = vmatpush2.xpose.msra.mxu0 0.0
  %4316 = vmatprep.subr.mxu0 0.0
  %4317 = vmatpush2.xpose.msra.mxu0 0.0
  %4318 = vmatprep.subr.mxu0 0.0
  %4319 = vmatpush2.xpose.msra.mxu0 0.0
  %4320 = vmatprep.subr.mxu0 0.0
  %4321 = vmatpush2.xpose.msra.mxu0 0.0
  %4322 = vmatprep.subr.mxu0 0.0
  %4323 = vmatpush2.xpose.msra.mxu0 0.0
  %4324 = vmatprep.mubr.f32.mxu0 0.0
  %4325 = vmatmul.mubr.f32.gmra.mxu0 %v4176
  %v4326 = vpop.f32.mrf.mxu0
  %v4327 = vadd.f32 0.0, %v4326
  %v4328 = vpop.f32.mrf.mxu0
  %4329 = vdwg.mxu0
  %v4330 = vsel %vm281, %v4249, -inf
  %4331 = vmax.xlane.f32.xlu0 %v4330
  %v4332 = vpop.xlane.xlu0 %4331
  %v4333 = vsel %vm281, %v4327, -inf
  %4334 = vmax.xlane.f32.xlu0 %v4333
  %v4335 = vpop.xlane.xlu0 %4334
  %v4336 = vsub.f32 %v4249, %v4332
  %v4337 = vsub.f32 %v4327, %v4335
  %v4338 = vmul.f32 %v4336, 1.442695
  %v4339 = vpow.pop %v4338
  %v4340 = vmul.f32 %v4337, 1.442695
  %v4341 = vpow.pop %v4340
  %v4342 = vsel %vm281, %v4339, 0.0
  %4343 = vadd.xlane.f32.xlu0 %v4342
  %v4344 = vpop.xlane.xlu0 %4343
  %v4345 = vsel %vm281, %v4341, 0.0
  %4346 = vadd.xlane.f32.xlu0 %v4345
  %v4347 = vpop.xlane.xlu0 %4346
  %v4348 = vrcp.pop %v4344
  %v4349 = vrcp.pop %v4347
  %v4350 = vmul.f32 %v4339, %v4348
  %v4351 = vmul.f32 %v4341, %v4349
  %4352 = vrot.lane.b32.xlu0 %v3817, 88
  %v4353 = vpop.permute.xlu0 %4352
  %4354 = vrot.lane.b32.xlu0 %v3822, 88
  %v4355 = vpop.permute.xlu0 %4354
  %v4359 = vsel %vm281, %v4350, 0
  %4361 = vmatprep.subr.mxu0 0.0
  %4362 = vmatpush1.msra.mxu0 0.0
  %4363 = vmatprep.subr.mxu0 0.0
  %4364 = vmatpush1.msra.mxu0 0.0
  %4365 = vmatprep.subr.mxu0 0.0
  %4366 = vmatpush1.msra.mxu0 0.0
  %4367 = vmatprep.subr.mxu0 0.0
  %4368 = vmatpush1.msra.mxu0 0.0
  %4369 = vmatprep.subr.mxu0 0.0
  %4370 = vmatpush1.msra.mxu0 0.0
  %4371 = vmatprep.subr.mxu0 0.0
  %4372 = vmatpush1.msra.mxu0 0.0
  %4373 = vmatprep.subr.mxu0 0.0
  %4374 = vmatpush1.msra.mxu0 0.0
  %4375 = vmatprep.subr.mxu0 0.0
  %4376 = vmatpush1.msra.mxu0 0.0
  %4377 = vmatprep.subr.mxu0 0.0
  %4378 = vmatpush1.msra.mxu0 0.0
  %4379 = vmatprep.subr.mxu0 0.0
  %4380 = vmatpush1.msra.mxu0 0.0
  %4381 = vmatprep.subr.mxu0 0.0
  %4382 = vmatpush1.msra.mxu0 0.0
  %4383 = vmatprep.subr.mxu0 0.0
  %4384 = vmatpush1.msra.mxu0 0.0
  %4385 = vmatprep.subr.mxu0 0.0
  %4386 = vmatpush1.msra.mxu0 0.0
  %4387 = vmatprep.subr.mxu0 0.0
  %4388 = vmatpush1.msra.mxu0 0.0
  %4389 = vmatprep.subr.mxu0 0.0
  %4390 = vmatpush1.msra.mxu0 %v4355
  %4391 = vmatprep.subr.mxu0 0.0
  %4392 = vmatpush1.msra.mxu0 %v4353
  %4393 = vmatprep.subr.mxu0 0.0
  %4394 = vmatpush2.msra.mxu0 0.0
  %4395 = vmatprep.subr.mxu0 0.0
  %4396 = vmatpush2.msra.mxu0 0.0
  %4397 = vmatprep.subr.mxu0 0.0
  %4398 = vmatpush2.msra.mxu0 0.0
  %4399 = vmatprep.subr.mxu0 0.0
  %4400 = vmatpush2.msra.mxu0 0.0
  %4401 = vmatprep.subr.mxu0 0.0
  %4402 = vmatpush2.msra.mxu0 0.0
  %4403 = vmatprep.subr.mxu0 0.0
  %4404 = vmatpush2.msra.mxu0 0.0
  %4405 = vmatprep.subr.mxu0 0.0
  %4406 = vmatpush2.msra.mxu0 0.0
  %4407 = vmatprep.subr.mxu0 0.0
  %4408 = vmatpush2.msra.mxu0 0.0
  %4409 = vmatprep.subr.mxu0 0.0
  %4410 = vmatpush2.msra.mxu0 0.0
  %4411 = vmatprep.subr.mxu0 0.0
  %4412 = vmatpush2.msra.mxu0 0.0
  %4413 = vmatprep.subr.mxu0 0.0
  %4414 = vmatpush2.msra.mxu0 0.0
  %4415 = vmatprep.subr.mxu0 0.0
  %4416 = vmatpush2.msra.mxu0 0.0
  %4417 = vmatprep.subr.mxu0 0.0
  %4418 = vmatpush2.msra.mxu0 0.0
  %4419 = vmatprep.subr.mxu0 0.0
  %4420 = vmatpush2.msra.mxu0 0.0
  %4421 = vmatprep.subr.mxu0 0.0
  %4422 = vmatpush2.msra.mxu0 0.0
  %4423 = vmatprep.subr.mxu0 0.0
  %4424 = vmatpush2.msra.mxu0 0.0
  %4425 = vmatprep.mubr.f32.mxu0 0.0
  %4426 = vmatmul.mubr.f32.gmra.mxu0 %v4359
  %v4427 = vpop.f32.mrf.mxu0
  %v4428 = vadd.f32 0.0, %v4427
  %v4429 = vpop.f32.mrf.mxu0
  %4430 = vdwg.mxu0
  %4431 = vrot.lane.b32.xlu0 %v3827, 88
  %v4432 = vpop.permute.xlu0 %4431
  %4433 = vrot.lane.b32.xlu0 %v3832, 88
  %v4434 = vpop.permute.xlu0 %4433
  %v4438 = vsel %vm281, %v4351, 0
  %4440 = vmatprep.subr.mxu0 0.0
  %4441 = vmatpush1.msra.mxu0 0.0
  %4442 = vmatprep.subr.mxu0 0.0
  %4443 = vmatpush1.msra.mxu0 0.0
  %4444 = vmatprep.subr.mxu0 0.0
  %4445 = vmatpush1.msra.mxu0 0.0
  %4446 = vmatprep.subr.mxu0 0.0
  %4447 = vmatpush1.msra.mxu0 0.0
  %4448 = vmatprep.subr.mxu0 0.0
  %4449 = vmatpush1.msra.mxu0 0.0
  %4450 = vmatprep.subr.mxu0 0.0
  %4451 = vmatpush1.msra.mxu0 0.0
  %4452 = vmatprep.subr.mxu0 0.0
  %4453 = vmatpush1.msra.mxu0 0.0
  %4454 = vmatprep.subr.mxu0 0.0
  %4455 = vmatpush1.msra.mxu0 0.0
  %4456 = vmatprep.subr.mxu0 0.0
  %4457 = vmatpush1.msra.mxu0 0.0
  %4458 = vmatprep.subr.mxu0 0.0
  %4459 = vmatpush1.msra.mxu0 0.0
  %4460 = vmatprep.subr.mxu0 0.0
  %4461 = vmatpush1.msra.mxu0 0.0
  %4462 = vmatprep.subr.mxu0 0.0
  %4463 = vmatpush1.msra.mxu0 0.0
  %4464 = vmatprep.subr.mxu0 0.0
  %4465 = vmatpush1.msra.mxu0 0.0
  %4466 = vmatprep.subr.mxu0 0.0
  %4467 = vmatpush1.msra.mxu0 0.0
  %4468 = vmatprep.subr.mxu0 0.0
  %4469 = vmatpush1.msra.mxu0 %v4434
  %4470 = vmatprep.subr.mxu0 0.0
  %4471 = vmatpush1.msra.mxu0 %v4432
  %4472 = vmatprep.subr.mxu0 0.0
  %4473 = vmatpush2.msra.mxu0 0.0
  %4474 = vmatprep.subr.mxu0 0.0
  %4475 = vmatpush2.msra.mxu0 0.0
  %4476 = vmatprep.subr.mxu0 0.0
  %4477 = vmatpush2.msra.mxu0 0.0
  %4478 = vmatprep.subr.mxu0 0.0
  %4479 = vmatpush2.msra.mxu0 0.0
  %4480 = vmatprep.subr.mxu0 0.0
  %4481 = vmatpush2.msra.mxu0 0.0
  %4482 = vmatprep.subr.mxu0 0.0
  %4483 = vmatpush2.msra.mxu0 0.0
  %4484 = vmatprep.subr.mxu0 0.0
  %4485 = vmatpush2.msra.mxu0 0.0
  %4486 = vmatprep.subr.mxu0 0.0
  %4487 = vmatpush2.msra.mxu0 0.0
  %4488 = vmatprep.subr.mxu0 0.0
  %4489 = vmatpush2.msra.mxu0 0.0
  %4490 = vmatprep.subr.mxu0 0.0
  %4491 = vmatpush2.msra.mxu0 0.0
  %4492 = vmatprep.subr.mxu0 0.0
  %4493 = vmatpush2.msra.mxu0 0.0
  %4494 = vmatprep.subr.mxu0 0.0
  %4495 = vmatpush2.msra.mxu0 0.0
  %4496 = vmatprep.subr.mxu0 0.0
  %4497 = vmatpush2.msra.mxu0 0.0
  %4498 = vmatprep.subr.mxu0 0.0
  %4499 = vmatpush2.msra.mxu0 0.0
  %4500 = vmatprep.subr.mxu0 0.0
  %4501 = vmatpush2.msra.mxu0 0.0
  %4502 = vmatprep.subr.mxu0 0.0
  %4503 = vmatpush2.msra.mxu0 0.0
  %4504 = vmatprep.mubr.f32.mxu0 0.0
  %4505 = vmatmul.mubr.f32.gmra.mxu0 %v4438
  %v4506 = vpop.f32.mrf.mxu0
  %v4507 = vadd.f32 0.0, %v4506
  %v4508 = vpop.f32.mrf.mxu0
  %4509 = vdwg.mxu0
  %4510 = vrot.lane.b32.xlu0 %v3728, 112
  %v4511 = vpop.permute.xlu0 %4510
  %4512 = vrot.lane.b32.xlu0 %v3817, 112
  %v4513 = vpop.permute.xlu0 %4512
  %4514 = vrot.lane.b32.xlu0 %v3822, 112
  %v4515 = vpop.permute.xlu0 %4514
  %v4516 = vsel %vm28, %v4511, 0
  %v4518 = vsel %vm28, %v4513, 0
  %v4520 = vsel %vm28, %v4515, 0
  %4522 = vmatprep.subr.mxu0 0.0
  %4523 = vmatpush1.xpose.msra.mxu0 0.0
  %4524 = vmatprep.subr.mxu0 0.0
  %4525 = vmatpush1.xpose.msra.mxu0 0.0
  %4526 = vmatprep.subr.mxu0 0.0
  %4527 = vmatpush1.xpose.msra.mxu0 0.0
  %4528 = vmatprep.subr.mxu0 0.0
  %4529 = vmatpush1.xpose.msra.mxu0 0.0
  %4530 = vmatprep.subr.mxu0 0.0
  %4531 = vmatpush1.xpose.msra.mxu0 0.0
  %4532 = vmatprep.subr.mxu0 0.0
  %4533 = vmatpush1.xpose.msra.mxu0 0.0
  %4534 = vmatprep.subr.mxu0 0.0
  %4535 = vmatpush1.xpose.msra.mxu0 0.0
  %4536 = vmatprep.subr.mxu0 0.0
  %4537 = vmatpush1.xpose.msra.mxu0 0.0
  %4538 = vmatprep.subr.mxu0 0.0
  %4539 = vmatpush1.xpose.msra.mxu0 0.0
  %4540 = vmatprep.subr.mxu0 0.0
  %4541 = vmatpush1.xpose.msra.mxu0 0.0
  %4542 = vmatprep.subr.mxu0 0.0
  %4543 = vmatpush1.xpose.msra.mxu0 0.0
  %4544 = vmatprep.subr.mxu0 0.0
  %4545 = vmatpush1.xpose.msra.mxu0 0.0
  %4546 = vmatprep.subr.mxu0 0.0
  %4547 = vmatpush1.xpose.msra.mxu0 0.0
  %4548 = vmatprep.subr.mxu0 0.0
  %4549 = vmatpush1.xpose.msra.mxu0 0.0
  %4550 = vmatprep.subr.mxu0 0.0
  %4551 = vmatpush1.xpose.msra.mxu0 %v4520
  %4552 = vmatprep.subr.mxu0 0.0
  %4553 = vmatpush1.xpose.msra.mxu0 %v4518
  %4554 = vmatprep.subr.mxu0 0.0
  %4555 = vmatpush2.xpose.msra.mxu0 0.0
  %4556 = vmatprep.subr.mxu0 0.0
  %4557 = vmatpush2.xpose.msra.mxu0 0.0
  %4558 = vmatprep.subr.mxu0 0.0
  %4559 = vmatpush2.xpose.msra.mxu0 0.0
  %4560 = vmatprep.subr.mxu0 0.0
  %4561 = vmatpush2.xpose.msra.mxu0 0.0
  %4562 = vmatprep.subr.mxu0 0.0
  %4563 = vmatpush2.xpose.msra.mxu0 0.0
  %4564 = vmatprep.subr.mxu0 0.0
  %4565 = vmatpush2.xpose.msra.mxu0 0.0
  %4566 = vmatprep.subr.mxu0 0.0
  %4567 = vmatpush2.xpose.msra.mxu0 0.0
  %4568 = vmatprep.subr.mxu0 0.0
  %4569 = vmatpush2.xpose.msra.mxu0 0.0
  %4570 = vmatprep.subr.mxu0 0.0
  %4571 = vmatpush2.xpose.msra.mxu0 0.0
  %4572 = vmatprep.subr.mxu0 0.0
  %4573 = vmatpush2.xpose.msra.mxu0 0.0
  %4574 = vmatprep.subr.mxu0 0.0
  %4575 = vmatpush2.xpose.msra.mxu0 0.0
  %4576 = vmatprep.subr.mxu0 0.0
  %4577 = vmatpush2.xpose.msra.mxu0 0.0
  %4578 = vmatprep.subr.mxu0 0.0
  %4579 = vmatpush2.xpose.msra.mxu0 0.0
  %4580 = vmatprep.subr.mxu0 0.0
  %4581 = vmatpush2.xpose.msra.mxu0 0.0
  %4582 = vmatprep.subr.mxu0 0.0
  %4583 = vmatpush2.xpose.msra.mxu0 0.0
  %4584 = vmatprep.subr.mxu0 0.0
  %4585 = vmatpush2.xpose.msra.mxu0 0.0
  %4586 = vmatprep.mubr.f32.mxu0 0.0
  %4587 = vmatmul.mubr.f32.gmra.mxu0 %v4516
  %v4588 = vpop.f32.mrf.mxu0
  %v4589 = vadd.f32 0.0, %v4588
  %v4590 = vpop.f32.mrf.mxu0
  %4591 = vdwg.mxu0
  %4592 = vrot.lane.b32.xlu0 %v3827, 112
  %v4593 = vpop.permute.xlu0 %4592
  %4594 = vrot.lane.b32.xlu0 %v3832, 112
  %v4595 = vpop.permute.xlu0 %4594
  %v4596 = vsel %vm28, %v4593, 0
  %v4598 = vsel %vm28, %v4595, 0
  %4600 = vmatprep.subr.mxu0 0.0
  %4601 = vmatpush1.xpose.msra.mxu0 0.0
  %4602 = vmatprep.subr.mxu0 0.0
  %4603 = vmatpush1.xpose.msra.mxu0 0.0
  %4604 = vmatprep.subr.mxu0 0.0
  %4605 = vmatpush1.xpose.msra.mxu0 0.0
  %4606 = vmatprep.subr.mxu0 0.0
  %4607 = vmatpush1.xpose.msra.mxu0 0.0
  %4608 = vmatprep.subr.mxu0 0.0
  %4609 = vmatpush1.xpose.msra.mxu0 0.0
  %4610 = vmatprep.subr.mxu0 0.0
  %4611 = vmatpush1.xpose.msra.mxu0 0.0
  %4612 = vmatprep.subr.mxu0 0.0
  %4613 = vmatpush1.xpose.msra.mxu0 0.0
  %4614 = vmatprep.subr.mxu0 0.0
  %4615 = vmatpush1.xpose.msra.mxu0 0.0
  %4616 = vmatprep.subr.mxu0 0.0
  %4617 = vmatpush1.xpose.msra.mxu0 0.0
  %4618 = vmatprep.subr.mxu0 0.0
  %4619 = vmatpush1.xpose.msra.mxu0 0.0
  %4620 = vmatprep.subr.mxu0 0.0
  %4621 = vmatpush1.xpose.msra.mxu0 0.0
  %4622 = vmatprep.subr.mxu0 0.0
  %4623 = vmatpush1.xpose.msra.mxu0 0.0
  %4624 = vmatprep.subr.mxu0 0.0
  %4625 = vmatpush1.xpose.msra.mxu0 0.0
  %4626 = vmatprep.subr.mxu0 0.0
  %4627 = vmatpush1.xpose.msra.mxu0 0.0
  %4628 = vmatprep.subr.mxu0 0.0
  %4629 = vmatpush1.xpose.msra.mxu0 %v4598
  %4630 = vmatprep.subr.mxu0 0.0
  %4631 = vmatpush1.xpose.msra.mxu0 %v4596
  %4632 = vmatprep.subr.mxu0 0.0
  %4633 = vmatpush2.xpose.msra.mxu0 0.0
  %4634 = vmatprep.subr.mxu0 0.0
  %4635 = vmatpush2.xpose.msra.mxu0 0.0
  %4636 = vmatprep.subr.mxu0 0.0
  %4637 = vmatpush2.xpose.msra.mxu0 0.0
  %4638 = vmatprep.subr.mxu0 0.0
  %4639 = vmatpush2.xpose.msra.mxu0 0.0
  %4640 = vmatprep.subr.mxu0 0.0
  %4641 = vmatpush2.xpose.msra.mxu0 0.0
  %4642 = vmatprep.subr.mxu0 0.0
  %4643 = vmatpush2.xpose.msra.mxu0 0.0
  %4644 = vmatprep.subr.mxu0 0.0
  %4645 = vmatpush2.xpose.msra.mxu0 0.0
  %4646 = vmatprep.subr.mxu0 0.0
  %4647 = vmatpush2.xpose.msra.mxu0 0.0
  %4648 = vmatprep.subr.mxu0 0.0
  %4649 = vmatpush2.xpose.msra.mxu0 0.0
  %4650 = vmatprep.subr.mxu0 0.0
  %4651 = vmatpush2.xpose.msra.mxu0 0.0
  %4652 = vmatprep.subr.mxu0 0.0
  %4653 = vmatpush2.xpose.msra.mxu0 0.0
  %4654 = vmatprep.subr.mxu0 0.0
  %4655 = vmatpush2.xpose.msra.mxu0 0.0
  %4656 = vmatprep.subr.mxu0 0.0
  %4657 = vmatpush2.xpose.msra.mxu0 0.0
  %4658 = vmatprep.subr.mxu0 0.0
  %4659 = vmatpush2.xpose.msra.mxu0 0.0
  %4660 = vmatprep.subr.mxu0 0.0
  %4661 = vmatpush2.xpose.msra.mxu0 0.0
  %4662 = vmatprep.subr.mxu0 0.0
  %4663 = vmatpush2.xpose.msra.mxu0 0.0
  %4664 = vmatprep.mubr.f32.mxu0 0.0
  %4665 = vmatmul.mubr.f32.gmra.mxu0 %v4516
  %v4666 = vpop.f32.mrf.mxu0
  %v4667 = vadd.f32 0.0, %v4666
  %v4668 = vpop.f32.mrf.mxu0
  %4669 = vdwg.mxu0
  %v4670 = vsel %vm281, %v4589, -inf
  %4671 = vmax.xlane.f32.xlu0 %v4670
  %v4672 = vpop.xlane.xlu0 %4671
  %v4673 = vsel %vm281, %v4667, -inf
  %4674 = vmax.xlane.f32.xlu0 %v4673
  %v4675 = vpop.xlane.xlu0 %4674
  %v4676 = vsub.f32 %v4589, %v4672
  %v4677 = vsub.f32 %v4667, %v4675
  %v4678 = vmul.f32 %v4676, 1.442695
  %v4679 = vpow.pop %v4678
  %v4680 = vmul.f32 %v4677, 1.442695
  %v4681 = vpow.pop %v4680
  %v4682 = vsel %vm281, %v4679, 0.0
  %4683 = vadd.xlane.f32.xlu0 %v4682
  %v4684 = vpop.xlane.xlu0 %4683
  %v4685 = vsel %vm281, %v4681, 0.0
  %4686 = vadd.xlane.f32.xlu0 %v4685
  %v4687 = vpop.xlane.xlu0 %4686
  %v4688 = vrcp.pop %v4684
  %v4689 = vrcp.pop %v4687
  %v4690 = vmul.f32 %v4679, %v4688
  %v4691 = vmul.f32 %v4681, %v4689
  %4692 = vrot.lane.b32.xlu0 %v3817, 80
  %v4693 = vpop.permute.xlu0 %4692
  %4694 = vrot.lane.b32.xlu0 %v3822, 80
  %v4695 = vpop.permute.xlu0 %4694
  %v4699 = vsel %vm281, %v4690, 0
  %4701 = vmatprep.subr.mxu0 0.0
  %4702 = vmatpush1.msra.mxu0 0.0
  %4703 = vmatprep.subr.mxu0 0.0
  %4704 = vmatpush1.msra.mxu0 0.0
  %4705 = vmatprep.subr.mxu0 0.0
  %4706 = vmatpush1.msra.mxu0 0.0
  %4707 = vmatprep.subr.mxu0 0.0
  %4708 = vmatpush1.msra.mxu0 0.0
  %4709 = vmatprep.subr.mxu0 0.0
  %4710 = vmatpush1.msra.mxu0 0.0
  %4711 = vmatprep.subr.mxu0 0.0
  %4712 = vmatpush1.msra.mxu0 0.0
  %4713 = vmatprep.subr.mxu0 0.0
  %4714 = vmatpush1.msra.mxu0 0.0
  %4715 = vmatprep.subr.mxu0 0.0
  %4716 = vmatpush1.msra.mxu0 0.0
  %4717 = vmatprep.subr.mxu0 0.0
  %4718 = vmatpush1.msra.mxu0 0.0
  %4719 = vmatprep.subr.mxu0 0.0
  %4720 = vmatpush1.msra.mxu0 0.0
  %4721 = vmatprep.subr.mxu0 0.0
  %4722 = vmatpush1.msra.mxu0 0.0
  %4723 = vmatprep.subr.mxu0 0.0
  %4724 = vmatpush1.msra.mxu0 0.0
  %4725 = vmatprep.subr.mxu0 0.0
  %4726 = vmatpush1.msra.mxu0 0.0
  %4727 = vmatprep.subr.mxu0 0.0
  %4728 = vmatpush1.msra.mxu0 0.0
  %4729 = vmatprep.subr.mxu0 0.0
  %4730 = vmatpush1.msra.mxu0 %v4695
  %4731 = vmatprep.subr.mxu0 0.0
  %4732 = vmatpush1.msra.mxu0 %v4693
  %4733 = vmatprep.subr.mxu0 0.0
  %4734 = vmatpush2.msra.mxu0 0.0
  %4735 = vmatprep.subr.mxu0 0.0
  %4736 = vmatpush2.msra.mxu0 0.0
  %4737 = vmatprep.subr.mxu0 0.0
  %4738 = vmatpush2.msra.mxu0 0.0
  %4739 = vmatprep.subr.mxu0 0.0
  %4740 = vmatpush2.msra.mxu0 0.0
  %4741 = vmatprep.subr.mxu0 0.0
  %4742 = vmatpush2.msra.mxu0 0.0
  %4743 = vmatprep.subr.mxu0 0.0
  %4744 = vmatpush2.msra.mxu0 0.0
  %4745 = vmatprep.subr.mxu0 0.0
  %4746 = vmatpush2.msra.mxu0 0.0
  %4747 = vmatprep.subr.mxu0 0.0
  %4748 = vmatpush2.msra.mxu0 0.0
  %4749 = vmatprep.subr.mxu0 0.0
  %4750 = vmatpush2.msra.mxu0 0.0
  %4751 = vmatprep.subr.mxu0 0.0
  %4752 = vmatpush2.msra.mxu0 0.0
  %4753 = vmatprep.subr.mxu0 0.0
  %4754 = vmatpush2.msra.mxu0 0.0
  %4755 = vmatprep.subr.mxu0 0.0
  %4756 = vmatpush2.msra.mxu0 0.0
  %4757 = vmatprep.subr.mxu0 0.0
  %4758 = vmatpush2.msra.mxu0 0.0
  %4759 = vmatprep.subr.mxu0 0.0
  %4760 = vmatpush2.msra.mxu0 0.0
  %4761 = vmatprep.subr.mxu0 0.0
  %4762 = vmatpush2.msra.mxu0 0.0
  %4763 = vmatprep.subr.mxu0 0.0
  %4764 = vmatpush2.msra.mxu0 0.0
  %4765 = vmatprep.mubr.f32.mxu0 0.0
  %4766 = vmatmul.mubr.f32.gmra.mxu0 %v4699
  %v4767 = vpop.f32.mrf.mxu0
  %v4768 = vadd.f32 0.0, %v4767
  %v4769 = vpop.f32.mrf.mxu0
  %4770 = vdwg.mxu0
  %4771 = vrot.lane.b32.xlu0 %v3827, 80
  %v4772 = vpop.permute.xlu0 %4771
  %4773 = vrot.lane.b32.xlu0 %v3832, 80
  %v4774 = vpop.permute.xlu0 %4773
  %v4778 = vsel %vm281, %v4691, 0
  %4780 = vmatprep.subr.mxu0 0.0
  %4781 = vmatpush1.msra.mxu0 0.0
  %4782 = vmatprep.subr.mxu0 0.0
  %4783 = vmatpush1.msra.mxu0 0.0
  %4784 = vmatprep.subr.mxu0 0.0
  %4785 = vmatpush1.msra.mxu0 0.0
  %4786 = vmatprep.subr.mxu0 0.0
  %4787 = vmatpush1.msra.mxu0 0.0
  %4788 = vmatprep.subr.mxu0 0.0
  %4789 = vmatpush1.msra.mxu0 0.0
  %4790 = vmatprep.subr.mxu0 0.0
  %4791 = vmatpush1.msra.mxu0 0.0
  %4792 = vmatprep.subr.mxu0 0.0
  %4793 = vmatpush1.msra.mxu0 0.0
  %4794 = vmatprep.subr.mxu0 0.0
  %4795 = vmatpush1.msra.mxu0 0.0
  %4796 = vmatprep.subr.mxu0 0.0
  %4797 = vmatpush1.msra.mxu0 0.0
  %4798 = vmatprep.subr.mxu0 0.0
  %4799 = vmatpush1.msra.mxu0 0.0
  %4800 = vmatprep.subr.mxu0 0.0
  %4801 = vmatpush1.msra.mxu0 0.0
  %4802 = vmatprep.subr.mxu0 0.0
  %4803 = vmatpush1.msra.mxu0 0.0
  %4804 = vmatprep.subr.mxu0 0.0
  %4805 = vmatpush1.msra.mxu0 0.0
  %4806 = vmatprep.subr.mxu0 0.0
  %4807 = vmatpush1.msra.mxu0 0.0
  %4808 = vmatprep.subr.mxu0 0.0
  %4809 = vmatpush1.msra.mxu0 %v4774
  %4810 = vmatprep.subr.mxu0 0.0
  %4811 = vmatpush1.msra.mxu0 %v4772
  %4812 = vmatprep.subr.mxu0 0.0
  %4813 = vmatpush2.msra.mxu0 0.0
  %4814 = vmatprep.subr.mxu0 0.0
  %4815 = vmatpush2.msra.mxu0 0.0
  %4816 = vmatprep.subr.mxu0 0.0
  %4817 = vmatpush2.msra.mxu0 0.0
  %4818 = vmatprep.subr.mxu0 0.0
  %4819 = vmatpush2.msra.mxu0 0.0
  %4820 = vmatprep.subr.mxu0 0.0
  %4821 = vmatpush2.msra.mxu0 0.0
  %4822 = vmatprep.subr.mxu0 0.0
  %4823 = vmatpush2.msra.mxu0 0.0
  %4824 = vmatprep.subr.mxu0 0.0
  %4825 = vmatpush2.msra.mxu0 0.0
  %4826 = vmatprep.subr.mxu0 0.0
  %4827 = vmatpush2.msra.mxu0 0.0
  %4828 = vmatprep.subr.mxu0 0.0
  %4829 = vmatpush2.msra.mxu0 0.0
  %4830 = vmatprep.subr.mxu0 0.0
  %4831 = vmatpush2.msra.mxu0 0.0
  %4832 = vmatprep.subr.mxu0 0.0
  %4833 = vmatpush2.msra.mxu0 0.0
  %4834 = vmatprep.subr.mxu0 0.0
  %4835 = vmatpush2.msra.mxu0 0.0
  %4836 = vmatprep.subr.mxu0 0.0
  %4837 = vmatpush2.msra.mxu0 0.0
  %4838 = vmatprep.subr.mxu0 0.0
  %4839 = vmatpush2.msra.mxu0 0.0
  %4840 = vmatprep.subr.mxu0 0.0
  %4841 = vmatpush2.msra.mxu0 0.0
  %4842 = vmatprep.subr.mxu0 0.0
  %4843 = vmatpush2.msra.mxu0 0.0
  %4844 = vmatprep.mubr.f32.mxu0 0.0
  %4845 = vmatmul.mubr.f32.gmra.mxu0 %v4778
  %v4846 = vpop.f32.mrf.mxu0
  %v4847 = vadd.f32 0.0, %v4846
  %v4848 = vpop.f32.mrf.mxu0
  %4849 = vdwg.mxu0
  %4850 = vrot.lane.b32.xlu0 %v3728, 104
  %v4851 = vpop.permute.xlu0 %4850
  %4852 = vrot.lane.b32.xlu0 %v3817, 104
  %v4853 = vpop.permute.xlu0 %4852
  %4854 = vrot.lane.b32.xlu0 %v3822, 104
  %v4855 = vpop.permute.xlu0 %4854
  %v4856 = vsel %vm28, %v4851, 0
  %v4858 = vsel %vm28, %v4853, 0
  %v4860 = vsel %vm28, %v4855, 0
  %4862 = vmatprep.subr.mxu0 0.0
  %4863 = vmatpush1.xpose.msra.mxu0 0.0
  %4864 = vmatprep.subr.mxu0 0.0
  %4865 = vmatpush1.xpose.msra.mxu0 0.0
  %4866 = vmatprep.subr.mxu0 0.0
  %4867 = vmatpush1.xpose.msra.mxu0 0.0
  %4868 = vmatprep.subr.mxu0 0.0
  %4869 = vmatpush1.xpose.msra.mxu0 0.0
  %4870 = vmatprep.subr.mxu0 0.0
  %4871 = vmatpush1.xpose.msra.mxu0 0.0
  %4872 = vmatprep.subr.mxu0 0.0
  %4873 = vmatpush1.xpose.msra.mxu0 0.0
  %4874 = vmatprep.subr.mxu0 0.0
  %4875 = vmatpush1.xpose.msra.mxu0 0.0
  %4876 = vmatprep.subr.mxu0 0.0
  %4877 = vmatpush1.xpose.msra.mxu0 0.0
  %4878 = vmatprep.subr.mxu0 0.0
  %4879 = vmatpush1.xpose.msra.mxu0 0.0
  %4880 = vmatprep.subr.mxu0 0.0
  %4881 = vmatpush1.xpose.msra.mxu0 0.0
  %4882 = vmatprep.subr.mxu0 0.0
  %4883 = vmatpush1.xpose.msra.mxu0 0.0
  %4884 = vmatprep.subr.mxu0 0.0
  %4885 = vmatpush1.xpose.msra.mxu0 0.0
  %4886 = vmatprep.subr.mxu0 0.0
  %4887 = vmatpush1.xpose.msra.mxu0 0.0
  %4888 = vmatprep.subr.mxu0 0.0
  %4889 = vmatpush1.xpose.msra.mxu0 0.0
  %4890 = vmatprep.subr.mxu0 0.0
  %4891 = vmatpush1.xpose.msra.mxu0 %v4860
  %4892 = vmatprep.subr.mxu0 0.0
  %4893 = vmatpush1.xpose.msra.mxu0 %v4858
  %4894 = vmatprep.subr.mxu0 0.0
  %4895 = vmatpush2.xpose.msra.mxu0 0.0
  %4896 = vmatprep.subr.mxu0 0.0
  %4897 = vmatpush2.xpose.msra.mxu0 0.0
  %4898 = vmatprep.subr.mxu0 0.0
  %4899 = vmatpush2.xpose.msra.mxu0 0.0
  %4900 = vmatprep.subr.mxu0 0.0
  %4901 = vmatpush2.xpose.msra.mxu0 0.0
  %4902 = vmatprep.subr.mxu0 0.0
  %4903 = vmatpush2.xpose.msra.mxu0 0.0
  %4904 = vmatprep.subr.mxu0 0.0
  %4905 = vmatpush2.xpose.msra.mxu0 0.0
  %4906 = vmatprep.subr.mxu0 0.0
  %4907 = vmatpush2.xpose.msra.mxu0 0.0
  %4908 = vmatprep.subr.mxu0 0.0
  %4909 = vmatpush2.xpose.msra.mxu0 0.0
  %4910 = vmatprep.subr.mxu0 0.0
  %4911 = vmatpush2.xpose.msra.mxu0 0.0
  %4912 = vmatprep.subr.mxu0 0.0
  %4913 = vmatpush2.xpose.msra.mxu0 0.0
  %4914 = vmatprep.subr.mxu0 0.0
  %4915 = vmatpush2.xpose.msra.mxu0 0.0
  %4916 = vmatprep.subr.mxu0 0.0
  %4917 = vmatpush2.xpose.msra.mxu0 0.0
  %4918 = vmatprep.subr.mxu0 0.0
  %4919 = vmatpush2.xpose.msra.mxu0 0.0
  %4920 = vmatprep.subr.mxu0 0.0
  %4921 = vmatpush2.xpose.msra.mxu0 0.0
  %4922 = vmatprep.subr.mxu0 0.0
  %4923 = vmatpush2.xpose.msra.mxu0 0.0
  %4924 = vmatprep.subr.mxu0 0.0
  %4925 = vmatpush2.xpose.msra.mxu0 0.0
  %4926 = vmatprep.mubr.f32.mxu0 0.0
  %4927 = vmatmul.mubr.f32.gmra.mxu0 %v4856
  %v4928 = vpop.f32.mrf.mxu0
  %v4929 = vadd.f32 0.0, %v4928
  %v4930 = vpop.f32.mrf.mxu0
  %4931 = vdwg.mxu0
  %4932 = vrot.lane.b32.xlu0 %v3827, 104
  %v4933 = vpop.permute.xlu0 %4932
  %4934 = vrot.lane.b32.xlu0 %v3832, 104
  %v4935 = vpop.permute.xlu0 %4934
  %v4936 = vsel %vm28, %v4933, 0
  %v4938 = vsel %vm28, %v4935, 0
  %4940 = vmatprep.subr.mxu0 0.0
  %4941 = vmatpush1.xpose.msra.mxu0 0.0
  %4942 = vmatprep.subr.mxu0 0.0
  %4943 = vmatpush1.xpose.msra.mxu0 0.0
  %4944 = vmatprep.subr.mxu0 0.0
  %4945 = vmatpush1.xpose.msra.mxu0 0.0
  %4946 = vmatprep.subr.mxu0 0.0
  %4947 = vmatpush1.xpose.msra.mxu0 0.0
  %4948 = vmatprep.subr.mxu0 0.0
  %4949 = vmatpush1.xpose.msra.mxu0 0.0
  %4950 = vmatprep.subr.mxu0 0.0
  %4951 = vmatpush1.xpose.msra.mxu0 0.0
  %4952 = vmatprep.subr.mxu0 0.0
  %4953 = vmatpush1.xpose.msra.mxu0 0.0
  %4954 = vmatprep.subr.mxu0 0.0
  %4955 = vmatpush1.xpose.msra.mxu0 0.0
  %4956 = vmatprep.subr.mxu0 0.0
  %4957 = vmatpush1.xpose.msra.mxu0 0.0
  %4958 = vmatprep.subr.mxu0 0.0
  %4959 = vmatpush1.xpose.msra.mxu0 0.0
  %4960 = vmatprep.subr.mxu0 0.0
  %4961 = vmatpush1.xpose.msra.mxu0 0.0
  %4962 = vmatprep.subr.mxu0 0.0
  %4963 = vmatpush1.xpose.msra.mxu0 0.0
  %4964 = vmatprep.subr.mxu0 0.0
  %4965 = vmatpush1.xpose.msra.mxu0 0.0
  %4966 = vmatprep.subr.mxu0 0.0
  %4967 = vmatpush1.xpose.msra.mxu0 0.0
  %4968 = vmatprep.subr.mxu0 0.0
  %4969 = vmatpush1.xpose.msra.mxu0 %v4938
  %4970 = vmatprep.subr.mxu0 0.0
  %4971 = vmatpush1.xpose.msra.mxu0 %v4936
  %4972 = vmatprep.subr.mxu0 0.0
  %4973 = vmatpush2.xpose.msra.mxu0 0.0
  %4974 = vmatprep.subr.mxu0 0.0
  %4975 = vmatpush2.xpose.msra.mxu0 0.0
  %4976 = vmatprep.subr.mxu0 0.0
  %4977 = vmatpush2.xpose.msra.mxu0 0.0
  %4978 = vmatprep.subr.mxu0 0.0
  %4979 = vmatpush2.xpose.msra.mxu0 0.0
  %4980 = vmatprep.subr.mxu0 0.0
  %4981 = vmatpush2.xpose.msra.mxu0 0.0
  %4982 = vmatprep.subr.mxu0 0.0
  %4983 = vmatpush2.xpose.msra.mxu0 0.0
  %4984 = vmatprep.subr.mxu0 0.0
  %4985 = vmatpush2.xpose.msra.mxu0 0.0
  %4986 = vmatprep.subr.mxu0 0.0
  %4987 = vmatpush2.xpose.msra.mxu0 0.0
  %4988 = vmatprep.subr.mxu0 0.0
  %4989 = vmatpush2.xpose.msra.mxu0 0.0
  %4990 = vmatprep.subr.mxu0 0.0
  %4991 = vmatpush2.xpose.msra.mxu0 0.0
  %4992 = vmatprep.subr.mxu0 0.0
  %4993 = vmatpush2.xpose.msra.mxu0 0.0
  %4994 = vmatprep.subr.mxu0 0.0
  %4995 = vmatpush2.xpose.msra.mxu0 0.0
  %4996 = vmatprep.subr.mxu0 0.0
  %4997 = vmatpush2.xpose.msra.mxu0 0.0
  %4998 = vmatprep.subr.mxu0 0.0
  %4999 = vmatpush2.xpose.msra.mxu0 0.0
  %5000 = vmatprep.subr.mxu0 0.0
  %5001 = vmatpush2.xpose.msra.mxu0 0.0
  %5002 = vmatprep.subr.mxu0 0.0
  %5003 = vmatpush2.xpose.msra.mxu0 0.0
  %5004 = vmatprep.mubr.f32.mxu0 0.0
  %5005 = vmatmul.mubr.f32.gmra.mxu0 %v4856
  %v5006 = vpop.f32.mrf.mxu0
  %v5007 = vadd.f32 0.0, %v5006
  %v5008 = vpop.f32.mrf.mxu0
  %5009 = vdwg.mxu0
  %v5010 = vsel %vm281, %v4929, -inf
  %5011 = vmax.xlane.f32.xlu0 %v5010
  %v5012 = vpop.xlane.xlu0 %5011
  %v5013 = vsel %vm281, %v5007, -inf
  %5014 = vmax.xlane.f32.xlu0 %v5013
  %v5015 = vpop.xlane.xlu0 %5014
  %v5016 = vsub.f32 %v4929, %v5012
  %v5017 = vsub.f32 %v5007, %v5015
  %v5018 = vmul.f32 %v5016, 1.442695
  %v5019 = vpow.pop %v5018
  %v5020 = vmul.f32 %v5017, 1.442695
  %v5021 = vpow.pop %v5020
  %v5022 = vsel %vm281, %v5019, 0.0
  %5023 = vadd.xlane.f32.xlu0 %v5022
  %v5024 = vpop.xlane.xlu0 %5023
  %v5025 = vsel %vm281, %v5021, 0.0
  %5026 = vadd.xlane.f32.xlu0 %v5025
  %v5027 = vpop.xlane.xlu0 %5026
  %v5028 = vrcp.pop %v5024
  %v5029 = vrcp.pop %v5027
  %v5030 = vmul.f32 %v5019, %v5028
  %v5031 = vmul.f32 %v5021, %v5029
  %5032 = vrot.lane.b32.xlu0 %v3817, 72
  %v5033 = vpop.permute.xlu0 %5032
  %5034 = vrot.lane.b32.xlu0 %v3822, 72
  %v5035 = vpop.permute.xlu0 %5034
  %v5039 = vsel %vm281, %v5030, 0
  %5041 = vmatprep.subr.mxu0 0.0
  %5042 = vmatpush1.msra.mxu0 0.0
  %5043 = vmatprep.subr.mxu0 0.0
  %5044 = vmatpush1.msra.mxu0 0.0
  %5045 = vmatprep.subr.mxu0 0.0
  %5046 = vmatpush1.msra.mxu0 0.0
  %5047 = vmatprep.subr.mxu0 0.0
  %5048 = vmatpush1.msra.mxu0 0.0
  %5049 = vmatprep.subr.mxu0 0.0
  %5050 = vmatpush1.msra.mxu0 0.0
  %5051 = vmatprep.subr.mxu0 0.0
  %5052 = vmatpush1.msra.mxu0 0.0
  %5053 = vmatprep.subr.mxu0 0.0
  %5054 = vmatpush1.msra.mxu0 0.0
  %5055 = vmatprep.subr.mxu0 0.0
  %5056 = vmatpush1.msra.mxu0 0.0
  %5057 = vmatprep.subr.mxu0 0.0
  %5058 = vmatpush1.msra.mxu0 0.0
  %5059 = vmatprep.subr.mxu0 0.0
  %5060 = vmatpush1.msra.mxu0 0.0
  %5061 = vmatprep.subr.mxu0 0.0
  %5062 = vmatpush1.msra.mxu0 0.0
  %5063 = vmatprep.subr.mxu0 0.0
  %5064 = vmatpush1.msra.mxu0 0.0
  %5065 = vmatprep.subr.mxu0 0.0
  %5066 = vmatpush1.msra.mxu0 0.0
  %5067 = vmatprep.subr.mxu0 0.0
  %5068 = vmatpush1.msra.mxu0 0.0
  %5069 = vmatprep.subr.mxu0 0.0
  %5070 = vmatpush1.msra.mxu0 %v5035
  %5071 = vmatprep.subr.mxu0 0.0
  %5072 = vmatpush1.msra.mxu0 %v5033
  %5073 = vmatprep.subr.mxu0 0.0
  %5074 = vmatpush2.msra.mxu0 0.0
  %5075 = vmatprep.subr.mxu0 0.0
  %5076 = vmatpush2.msra.mxu0 0.0
  %5077 = vmatprep.subr.mxu0 0.0
  %5078 = vmatpush2.msra.mxu0 0.0
  %5079 = vmatprep.subr.mxu0 0.0
  %5080 = vmatpush2.msra.mxu0 0.0
  %5081 = vmatprep.subr.mxu0 0.0
  %5082 = vmatpush2.msra.mxu0 0.0
  %5083 = vmatprep.subr.mxu0 0.0
  %5084 = vmatpush2.msra.mxu0 0.0
  %5085 = vmatprep.subr.mxu0 0.0
  %5086 = vmatpush2.msra.mxu0 0.0
  %5087 = vmatprep.subr.mxu0 0.0
  %5088 = vmatpush2.msra.mxu0 0.0
  %5089 = vmatprep.subr.mxu0 0.0
  %5090 = vmatpush2.msra.mxu0 0.0
  %5091 = vmatprep.subr.mxu0 0.0
  %5092 = vmatpush2.msra.mxu0 0.0
  %5093 = vmatprep.subr.mxu0 0.0
  %5094 = vmatpush2.msra.mxu0 0.0
  %5095 = vmatprep.subr.mxu0 0.0
  %5096 = vmatpush2.msra.mxu0 0.0
  %5097 = vmatprep.subr.mxu0 0.0
  %5098 = vmatpush2.msra.mxu0 0.0
  %5099 = vmatprep.subr.mxu0 0.0
  %5100 = vmatpush2.msra.mxu0 0.0
  %5101 = vmatprep.subr.mxu0 0.0
  %5102 = vmatpush2.msra.mxu0 0.0
  %5103 = vmatprep.subr.mxu0 0.0
  %5104 = vmatpush2.msra.mxu0 0.0
  %5105 = vmatprep.mubr.f32.mxu0 0.0
  %5106 = vmatmul.mubr.f32.gmra.mxu0 %v5039
  %v5107 = vpop.f32.mrf.mxu0
  %v5108 = vadd.f32 0.0, %v5107
  %v5109 = vpop.f32.mrf.mxu0
  %5110 = vdwg.mxu0
  %5111 = vrot.lane.b32.xlu0 %v3827, 72
  %v5112 = vpop.permute.xlu0 %5111
  %5113 = vrot.lane.b32.xlu0 %v3832, 72
  %v5114 = vpop.permute.xlu0 %5113
  %v5118 = vsel %vm281, %v5031, 0
  %5120 = vmatprep.subr.mxu0 0.0
  %5121 = vmatpush1.msra.mxu0 0.0
  %5122 = vmatprep.subr.mxu0 0.0
  %5123 = vmatpush1.msra.mxu0 0.0
  %5124 = vmatprep.subr.mxu0 0.0
  %5125 = vmatpush1.msra.mxu0 0.0
  %5126 = vmatprep.subr.mxu0 0.0
  %5127 = vmatpush1.msra.mxu0 0.0
  %5128 = vmatprep.subr.mxu0 0.0
  %5129 = vmatpush1.msra.mxu0 0.0
  %5130 = vmatprep.subr.mxu0 0.0
  %5131 = vmatpush1.msra.mxu0 0.0
  %5132 = vmatprep.subr.mxu0 0.0
  %5133 = vmatpush1.msra.mxu0 0.0
  %5134 = vmatprep.subr.mxu0 0.0
  %5135 = vmatpush1.msra.mxu0 0.0
  %5136 = vmatprep.subr.mxu0 0.0
  %5137 = vmatpush1.msra.mxu0 0.0
  %5138 = vmatprep.subr.mxu0 0.0
  %5139 = vmatpush1.msra.mxu0 0.0
  %5140 = vmatprep.subr.mxu0 0.0
  %5141 = vmatpush1.msra.mxu0 0.0
  %5142 = vmatprep.subr.mxu0 0.0
  %5143 = vmatpush1.msra.mxu0 0.0
  %5144 = vmatprep.subr.mxu0 0.0
  %5145 = vmatpush1.msra.mxu0 0.0
  %5146 = vmatprep.subr.mxu0 0.0
  %5147 = vmatpush1.msra.mxu0 0.0
  %5148 = vmatprep.subr.mxu0 0.0
  %5149 = vmatpush1.msra.mxu0 %v5114
  %5150 = vmatprep.subr.mxu0 0.0
  %5151 = vmatpush1.msra.mxu0 %v5112
  %5152 = vmatprep.subr.mxu0 0.0
  %5153 = vmatpush2.msra.mxu0 0.0
  %5154 = vmatprep.subr.mxu0 0.0
  %5155 = vmatpush2.msra.mxu0 0.0
  %5156 = vmatprep.subr.mxu0 0.0
  %5157 = vmatpush2.msra.mxu0 0.0
  %5158 = vmatprep.subr.mxu0 0.0
  %5159 = vmatpush2.msra.mxu0 0.0
  %5160 = vmatprep.subr.mxu0 0.0
  %5161 = vmatpush2.msra.mxu0 0.0
  %5162 = vmatprep.subr.mxu0 0.0
  %5163 = vmatpush2.msra.mxu0 0.0
  %5164 = vmatprep.subr.mxu0 0.0
  %5165 = vmatpush2.msra.mxu0 0.0
  %5166 = vmatprep.subr.mxu0 0.0
  %5167 = vmatpush2.msra.mxu0 0.0
  %5168 = vmatprep.subr.mxu0 0.0
  %5169 = vmatpush2.msra.mxu0 0.0
  %5170 = vmatprep.subr.mxu0 0.0
  %5171 = vmatpush2.msra.mxu0 0.0
  %5172 = vmatprep.subr.mxu0 0.0
  %5173 = vmatpush2.msra.mxu0 0.0
  %5174 = vmatprep.subr.mxu0 0.0
  %5175 = vmatpush2.msra.mxu0 0.0
  %5176 = vmatprep.subr.mxu0 0.0
  %5177 = vmatpush2.msra.mxu0 0.0
  %5178 = vmatprep.subr.mxu0 0.0
  %5179 = vmatpush2.msra.mxu0 0.0
  %5180 = vmatprep.subr.mxu0 0.0
  %5181 = vmatpush2.msra.mxu0 0.0
  %5182 = vmatprep.subr.mxu0 0.0
  %5183 = vmatpush2.msra.mxu0 0.0
  %5184 = vmatprep.mubr.f32.mxu0 0.0
  %5185 = vmatmul.mubr.f32.gmra.mxu0 %v5118
  %v5186 = vpop.f32.mrf.mxu0
  %v5187 = vadd.f32 0.0, %v5186
  %v5188 = vpop.f32.mrf.mxu0
  %5189 = vdwg.mxu0
  %5192 = vrot.lane.b32.xlu0 %v4428, 8
  %v5193 = vpop.permute.xlu0 %5192
  %5194 = vrot.lane.b32.xlu0 %v4507, 8
  %v5195 = vpop.permute.xlu0 %5194
  %5200 = vrot.lane.b32.xlu0 %v4768, 16
  %v5201 = vpop.permute.xlu0 %5200
  %5202 = vrot.lane.b32.xlu0 %v4847, 16
  %v5203 = vpop.permute.xlu0 %5202
  %5208 = vrot.lane.b32.xlu0 %v5108, 24
  %v5209 = vpop.permute.xlu0 %5208
  %5210 = vrot.lane.b32.xlu0 %v5187, 24
  %v5211 = vpop.permute.xlu0 %5210
  %v5214 = vsel %vm28, %v4088, %v5193
  %v5215 = vsel %vm28, %v4167, %v5195
  %v5216 = vsel %vm281, %v5214, %v5201
  %v5217 = vsel %vm281, %v5215, %v5203
  %v5218 = vsel %vm1510, %v5216, %v5209
  %v5219 = vsel %vm1510, %v5217, %v5211
  %v5220 = vadd.f32 %v3728, %v5218
  %v5221 = vadd.f32 %v3728, %v5219
  %v5222 = vld [vmem:[%s2 + $0x13] sm:$0x1]
  %v5223 = vld [vmem:[%s2 + $0x14] sm:$0x1]
  %v5224 = vsel %vm1517, %v5220, 0.0
  %5225 = vadd.xlane.f32.xlu0 %v5224
  %v5226 = vpop.xlane.xlu0 %5225
  %v5227 = vsel %vm1517, %v5221, 0.0
  %5228 = vadd.xlane.f32.xlu0 %v5227
  %v5229 = vpop.xlane.xlu0 %5228
  %v5230 = vmul.f32 %v5226, %v1524
  %v5231 = vmul.f32 %v5229, %v1524
  %v5232 = vsub.f32 %v5220, %v5230
  %v5233 = vsub.f32 %v5221, %v5231
  %v5234 = vmul.f32 %v5232, %v5232
  %v5235 = vmul.f32 %v5233, %v5233
  %v5236 = vsel %vm1517, %v5234, 0.0
  %5237 = vadd.xlane.f32.xlu0 %v5236
  %v5238 = vpop.xlane.xlu0 %5237
  %v5239 = vsel %vm1517, %v5235, 0.0
  %5240 = vadd.xlane.f32.xlu0 %v5239
  %v5241 = vpop.xlane.xlu0 %5240
  %v5242 = vmul.f32 %v5238, %v1524
  %v5243 = vmul.f32 %v5241, %v1524
  %v5244 = vadd.f32 %v5242, 1e-05
  %v5245 = vadd.f32 %v5243, 1e-05
  %v5246 = vrsqrt.pop %v5244
  %v5247 = vrsqrt.pop %v5245
  %v5248 = vmul.f32 %v5232, %v5246
  %v5249 = vmul.f32 %v5233, %v5247
  %v5250 = vlaneseq
  %v5251 = vshrl.u32 %v5250, 7
  %v5252 = vsub.s32 0, %v5251
  %v5253 = vrot.slane %v5222, %v5252
  %v5254 = vmul.f32 %v5248, %v5253
  %v5255 = vmul.f32 %v5249, %v5253
  %v5256 = vlaneseq
  %v5257 = vshrl.u32 %v5256, 7
  %v5258 = vsub.s32 0, %v5257
  %v5259 = vrot.slane %v5223, %v5258
  %v5260 = vadd.f32 %v5254, %v5259
  %v5261 = vadd.f32 %v5255, %v5259
  %v5262 = vld [vmem:[%s1 + $0x90] sm:$0xff]
  %v5263 = vld [vmem:[%s1 + $0x98] sm:$0xff]
  %v5264 = vld [vmem:[%s1 + $0xa0] sm:$0xff]
  %v5265 = vld [vmem:[%s1 + $0xa8] sm:$0xff]
  %v5266 = vld [vmem:[%s2 + $0x12] sm:$0x1]
  %v5267 = vlaneseq
  %v5268 = vshrl.u32 %v5267, 7
  %v5269 = vsub.s32 0, %v5268
  %v5270 = vrot.slane %v5266, %v5269
  %v5272 = vsel %vm1517, %v5260, 0
  %v5275 = vsel %vm1517, %v5261, 0
  %5277 = vmatprep.subr.mxu0 0.0
  %5278 = vmatpush1.msra.mxu0 0.0
  %5279 = vmatprep.subr.mxu0 0.0
  %5280 = vmatpush1.msra.mxu0 0.0
  %5281 = vmatprep.subr.mxu0 0.0
  %5282 = vmatpush1.msra.mxu0 0.0
  %5283 = vmatprep.subr.mxu0 0.0
  %5284 = vmatpush1.msra.mxu0 0.0
  %5285 = vmatprep.subr.mxu0 0.0
  %5286 = vmatpush1.msra.mxu0 0.0
  %5287 = vmatprep.subr.mxu0 0.0
  %5288 = vmatpush1.msra.mxu0 0.0
  %5289 = vmatprep.subr.mxu0 0.0
  %5290 = vmatpush1.msra.mxu0 0.0
  %5291 = vmatprep.subr.mxu0 0.0
  %5292 = vmatpush1.msra.mxu0 0.0
  %5293 = vmatprep.subr.mxu0 0.0
  %5294 = vmatpush1.msra.mxu0 0.0
  %5295 = vmatprep.subr.mxu0 0.0
  %5296 = vmatpush1.msra.mxu0 0.0
  %5297 = vmatprep.subr.mxu0 0.0
  %5298 = vmatpush1.msra.mxu0 0.0
  %5299 = vmatprep.subr.mxu0 0.0
  %5300 = vmatpush1.msra.mxu0 0.0
  %5301 = vmatprep.subr.mxu0 0.0
  %5302 = vmatpush1.msra.mxu0 %v5265
  %5303 = vmatprep.subr.mxu0 0.0
  %5304 = vmatpush1.msra.mxu0 %v5264
  %5305 = vmatprep.subr.mxu0 0.0
  %5306 = vmatpush1.msra.mxu0 %v5263
  %5307 = vmatprep.subr.mxu0 0.0
  %5308 = vmatpush1.msra.mxu0 %v5262
  %5309 = vmatprep.subr.mxu0 0.0
  %5310 = vmatpush2.msra.mxu0 0.0
  %5311 = vmatprep.subr.mxu0 0.0
  %5312 = vmatpush2.msra.mxu0 0.0
  %5313 = vmatprep.subr.mxu0 0.0
  %5314 = vmatpush2.msra.mxu0 0.0
  %5315 = vmatprep.subr.mxu0 0.0
  %5316 = vmatpush2.msra.mxu0 0.0
  %5317 = vmatprep.subr.mxu0 0.0
  %5318 = vmatpush2.msra.mxu0 0.0
  %5319 = vmatprep.subr.mxu0 0.0
  %5320 = vmatpush2.msra.mxu0 0.0
  %5321 = vmatprep.subr.mxu0 0.0
  %5322 = vmatpush2.msra.mxu0 0.0
  %5323 = vmatprep.subr.mxu0 0.0
  %5324 = vmatpush2.msra.mxu0 0.0
  %5325 = vmatprep.subr.mxu0 0.0
  %5326 = vmatpush2.msra.mxu0 0.0
  %5327 = vmatprep.subr.mxu0 0.0
  %5328 = vmatpush2.msra.mxu0 0.0
  %5329 = vmatprep.subr.mxu0 0.0
  %5330 = vmatpush2.msra.mxu0 0.0
  %5331 = vmatprep.subr.mxu0 0.0
  %5332 = vmatpush2.msra.mxu0 0.0
  %5333 = vmatprep.subr.mxu0 0.0
  %5334 = vmatpush2.msra.mxu0 0.0
  %5335 = vmatprep.subr.mxu0 0.0
  %5336 = vmatpush2.msra.mxu0 0.0
  %5337 = vmatprep.subr.mxu0 0.0
  %5338 = vmatpush2.msra.mxu0 0.0
  %5339 = vmatprep.subr.mxu0 0.0
  %5340 = vmatpush2.msra.mxu0 0.0
  %5341 = vmatprep.mubr.f32.mxu0 0.0
  %5342 = vmatmul.mubr.f32.gmra.mxu0 %v5272
  %v5343 = vpop.f32.mrf.mxu0
  %v5344 = vadd.f32 %v5270, %v5343
  %v5345 = vpop.f32.mrf.mxu0
  %5346 = vmatprep.mubr.f32.mxu0 0.0
  %5347 = vmatmul.mubr.f32.gmra.mxu0 %v5275
  %v5348 = vpop.f32.mrf.mxu0
  %v5349 = vadd.f32 %v5270, %v5348
  %v5350 = vpop.f32.mrf.mxu0
  %5351 = vdwg.mxu0
  %v5352 = vmax.f32 %v5344, 0.0
  %v5353 = vmax.f32 %v5349, 0.0
  %v5354 = vadd.f32 %v5260, %v5352
  %v5355 = vadd.f32 %v5261, %v5353
  %v5356 = vld [vmem:[%s2 + $0x15] sm:$0x1]
  %v5357 = vld [vmem:[%s2 + $0x16] sm:$0x1]
  %v5358 = vsel %vm1517, %v5354, 0.0
  %5359 = vadd.xlane.f32.xlu0 %v5358
  %v5360 = vpop.xlane.xlu0 %5359
  %v5361 = vsel %vm1517, %v5355, 0.0
  %5362 = vadd.xlane.f32.xlu0 %v5361
  %v5363 = vpop.xlane.xlu0 %5362
  %v5364 = vmul.f32 %v5360, %v1524
  %v5365 = vmul.f32 %v5363, %v1524
  %v5366 = vsub.f32 %v5354, %v5364
  %v5367 = vsub.f32 %v5355, %v5365
  %v5368 = vmul.f32 %v5366, %v5366
  %v5369 = vmul.f32 %v5367, %v5367
  %v5370 = vsel %vm1517, %v5368, 0.0
  %5371 = vadd.xlane.f32.xlu0 %v5370
  %v5372 = vpop.xlane.xlu0 %5371
  %v5373 = vsel %vm1517, %v5369, 0.0
  %5374 = vadd.xlane.f32.xlu0 %v5373
  %v5375 = vpop.xlane.xlu0 %5374
  %v5376 = vmul.f32 %v5372, %v1524
  %v5377 = vmul.f32 %v5375, %v1524
  %v5378 = vadd.f32 %v5376, 1e-05
  %v5379 = vadd.f32 %v5377, 1e-05
  %v5380 = vrsqrt.pop %v5378
  %v5381 = vrsqrt.pop %v5379
  %v5382 = vmul.f32 %v5366, %v5380
  %v5383 = vmul.f32 %v5367, %v5381
  %v5384 = vlaneseq
  %v5385 = vshrl.u32 %v5384, 7
  %v5386 = vsub.s32 0, %v5385
  %v5387 = vrot.slane %v5356, %v5386
  %v5388 = vmul.f32 %v5382, %v5387
  %v5389 = vmul.f32 %v5383, %v5387
  %v5390 = vlaneseq
  %v5391 = vshrl.u32 %v5390, 7
  %v5392 = vsub.s32 0, %v5391
  %v5393 = vrot.slane %v5357, %v5392
  %v5394 = vadd.f32 %v5388, %v5393
  %v5395 = vadd.f32 %v5389, %v5393
  %v5396 = vld [vmem:[%s1 + $0xb0] sm:$0xff]
  %v5397 = vld [vmem:[%s1 + $0xb8] sm:$0xff]
  %v5398 = vld [vmem:[%s1 + $0xc0] sm:$0xff]
  %v5399 = vld [vmem:[%s1 + $0xc8] sm:$0xff]
  %v5400 = vld [vmem:[%s2 + $0x18] sm:$0x1]
  %v5401 = vlaneseq
  %v5402 = vshrl.u32 %v5401, 7
  %v5403 = vsub.s32 0, %v5402
  %v5404 = vrot.slane %v5400, %v5403
  %5405 = vmatprep.subr.mxu0 0.0
  %5406 = vmatpush1.msra.mxu0 0.0
  %5407 = vmatprep.subr.mxu0 0.0
  %5408 = vmatpush1.msra.mxu0 0.0
  %5409 = vmatprep.subr.mxu0 0.0
  %5410 = vmatpush1.msra.mxu0 0.0
  %5411 = vmatprep.subr.mxu0 0.0
  %5412 = vmatpush1.msra.mxu0 0.0
  %5413 = vmatprep.subr.mxu0 0.0
  %5414 = vmatpush1.msra.mxu0 0.0
  %5415 = vmatprep.subr.mxu0 0.0
  %5416 = vmatpush1.msra.mxu0 0.0
  %5417 = vmatprep.subr.mxu0 0.0
  %5418 = vmatpush1.msra.mxu0 0.0
  %5419 = vmatprep.subr.mxu0 0.0
  %5420 = vmatpush1.msra.mxu0 0.0
  %5421 = vmatprep.subr.mxu0 0.0
  %5422 = vmatpush1.msra.mxu0 0.0
  %5423 = vmatprep.subr.mxu0 0.0
  %5424 = vmatpush1.msra.mxu0 0.0
  %5425 = vmatprep.subr.mxu0 0.0
  %5426 = vmatpush1.msra.mxu0 0.0
  %5427 = vmatprep.subr.mxu0 0.0
  %5428 = vmatpush1.msra.mxu0 0.0
  %5429 = vmatprep.subr.mxu0 0.0
  %5430 = vmatpush1.msra.mxu0 %v5399
  %5431 = vmatprep.subr.mxu0 0.0
  %5432 = vmatpush1.msra.mxu0 %v5398
  %5433 = vmatprep.subr.mxu0 0.0
  %5434 = vmatpush1.msra.mxu0 %v5397
  %5435 = vmatprep.subr.mxu0 0.0
  %5436 = vmatpush1.msra.mxu0 %v5396
  %5437 = vmatprep.subr.mxu0 0.0
  %5438 = vmatpush2.msra.mxu0 0.0
  %5439 = vmatprep.subr.mxu0 0.0
  %5440 = vmatpush2.msra.mxu0 0.0
  %5441 = vmatprep.subr.mxu0 0.0
  %5442 = vmatpush2.msra.mxu0 0.0
  %5443 = vmatprep.subr.mxu0 0.0
  %5444 = vmatpush2.msra.mxu0 0.0
  %5445 = vmatprep.subr.mxu0 0.0
  %5446 = vmatpush2.msra.mxu0 0.0
  %5447 = vmatprep.subr.mxu0 0.0
  %5448 = vmatpush2.msra.mxu0 0.0
  %5449 = vmatprep.subr.mxu0 0.0
  %5450 = vmatpush2.msra.mxu0 0.0
  %5451 = vmatprep.subr.mxu0 0.0
  %5452 = vmatpush2.msra.mxu0 0.0
  %5453 = vmatprep.subr.mxu0 0.0
  %5454 = vmatpush2.msra.mxu0 0.0
  %5455 = vmatprep.subr.mxu0 0.0
  %5456 = vmatpush2.msra.mxu0 0.0
  %5457 = vmatprep.subr.mxu0 0.0
  %5458 = vmatpush2.msra.mxu0 0.0
  %5459 = vmatprep.subr.mxu0 0.0
  %5460 = vmatpush2.msra.mxu0 0.0
  %5461 = vmatprep.subr.mxu0 0.0
  %5462 = vmatpush2.msra.mxu0 0.0
  %5463 = vmatprep.subr.mxu0 0.0
  %5464 = vmatpush2.msra.mxu0 0.0
  %5465 = vmatprep.subr.mxu0 0.0
  %5466 = vmatpush2.msra.mxu0 0.0
  %5467 = vmatprep.subr.mxu0 0.0
  %5468 = vmatpush2.msra.mxu0 0.0
  %5469 = vmatprep.mubr.f32.mxu0 0.0
  %5470 = vmatmul.mubr.f32.gmra.mxu0 %v3739
  %v5471 = vpop.f32.mrf.mxu0
  %v5472 = vadd.f32 %v5404, %v5471
  %v5473 = vpop.f32.mrf.mxu0
  %5474 = vmatprep.mubr.f32.mxu0 0.0
  %5475 = vmatmul.mubr.f32.gmra.mxu0 %v3742
  %v5476 = vpop.f32.mrf.mxu0
  %v5477 = vadd.f32 %v5404, %v5476
  %v5478 = vpop.f32.mrf.mxu0
  %5479 = vmatprep.mubr.f32.mxu0 0.0
  %5480 = vmatmul.mubr.f32.gmra.mxu0 %v3745
  %v5481 = vpop.f32.mrf.mxu0
  %v5482 = vadd.f32 %v5404, %v5481
  %v5483 = vpop.f32.mrf.mxu0
  %5484 = vmatprep.mubr.f32.mxu0 0.0
  %5485 = vmatmul.mubr.f32.gmra.mxu0 %v3748
  %v5486 = vpop.f32.mrf.mxu0
  %v5487 = vadd.f32 %v5404, %v5486
  %v5488 = vpop.f32.mrf.mxu0
  %5489 = vdwg.mxu0
  %v5490 = vld [vmem:[%s1 + $0xd0] sm:$0xff]
  %v5491 = vld [vmem:[%s1 + $0xd8] sm:$0xff]
  %v5492 = vld [vmem:[%s1 + $0xe0] sm:$0xff]
  %v5493 = vld [vmem:[%s1 + $0xe8] sm:$0xff]
  %v5494 = vld [vmem:[%s2 + $0x19] sm:$0x1]
  %v5495 = vlaneseq
  %v5496 = vshrl.u32 %v5495, 7
  %v5497 = vsub.s32 0, %v5496
  %v5498 = vrot.slane %v5494, %v5497
  %v5500 = vsel %vm1517, %v5394, 0
  %v5503 = vsel %vm1517, %v5395, 0
  %5505 = vmatprep.subr.mxu0 0.0
  %5506 = vmatpush1.msra.mxu0 0.0
  %5507 = vmatprep.subr.mxu0 0.0
  %5508 = vmatpush1.msra.mxu0 0.0
  %5509 = vmatprep.subr.mxu0 0.0
  %5510 = vmatpush1.msra.mxu0 0.0
  %5511 = vmatprep.subr.mxu0 0.0
  %5512 = vmatpush1.msra.mxu0 0.0
  %5513 = vmatprep.subr.mxu0 0.0
  %5514 = vmatpush1.msra.mxu0 0.0
  %5515 = vmatprep.subr.mxu0 0.0
  %5516 = vmatpush1.msra.mxu0 0.0
  %5517 = vmatprep.subr.mxu0 0.0
  %5518 = vmatpush1.msra.mxu0 0.0
  %5519 = vmatprep.subr.mxu0 0.0
  %5520 = vmatpush1.msra.mxu0 0.0
  %5521 = vmatprep.subr.mxu0 0.0
  %5522 = vmatpush1.msra.mxu0 0.0
  %5523 = vmatprep.subr.mxu0 0.0
  %5524 = vmatpush1.msra.mxu0 0.0
  %5525 = vmatprep.subr.mxu0 0.0
  %5526 = vmatpush1.msra.mxu0 0.0
  %5527 = vmatprep.subr.mxu0 0.0
  %5528 = vmatpush1.msra.mxu0 0.0
  %5529 = vmatprep.subr.mxu0 0.0
  %5530 = vmatpush1.msra.mxu0 %v5493
  %5531 = vmatprep.subr.mxu0 0.0
  %5532 = vmatpush1.msra.mxu0 %v5492
  %5533 = vmatprep.subr.mxu0 0.0
  %5534 = vmatpush1.msra.mxu0 %v5491
  %5535 = vmatprep.subr.mxu0 0.0
  %5536 = vmatpush1.msra.mxu0 %v5490
  %5537 = vmatprep.subr.mxu0 0.0
  %5538 = vmatpush2.msra.mxu0 0.0
  %5539 = vmatprep.subr.mxu0 0.0
  %5540 = vmatpush2.msra.mxu0 0.0
  %5541 = vmatprep.subr.mxu0 0.0
  %5542 = vmatpush2.msra.mxu0 0.0
  %5543 = vmatprep.subr.mxu0 0.0
  %5544 = vmatpush2.msra.mxu0 0.0
  %5545 = vmatprep.subr.mxu0 0.0
  %5546 = vmatpush2.msra.mxu0 0.0
  %5547 = vmatprep.subr.mxu0 0.0
  %5548 = vmatpush2.msra.mxu0 0.0
  %5549 = vmatprep.subr.mxu0 0.0
  %5550 = vmatpush2.msra.mxu0 0.0
  %5551 = vmatprep.subr.mxu0 0.0
  %5552 = vmatpush2.msra.mxu0 0.0
  %5553 = vmatprep.subr.mxu0 0.0
  %5554 = vmatpush2.msra.mxu0 0.0
  %5555 = vmatprep.subr.mxu0 0.0
  %5556 = vmatpush2.msra.mxu0 0.0
  %5557 = vmatprep.subr.mxu0 0.0
  %5558 = vmatpush2.msra.mxu0 0.0
  %5559 = vmatprep.subr.mxu0 0.0
  %5560 = vmatpush2.msra.mxu0 0.0
  %5561 = vmatprep.subr.mxu0 0.0
  %5562 = vmatpush2.msra.mxu0 0.0
  %5563 = vmatprep.subr.mxu0 0.0
  %5564 = vmatpush2.msra.mxu0 0.0
  %5565 = vmatprep.subr.mxu0 0.0
  %5566 = vmatpush2.msra.mxu0 0.0
  %5567 = vmatprep.subr.mxu0 0.0
  %5568 = vmatpush2.msra.mxu0 0.0
  %5569 = vmatprep.mubr.f32.mxu0 0.0
  %5570 = vmatmul.mubr.f32.gmra.mxu0 %v5500
  %v5571 = vpop.f32.mrf.mxu0
  %v5572 = vadd.f32 %v5498, %v5571
  %v5573 = vpop.f32.mrf.mxu0
  %5574 = vmatprep.mubr.f32.mxu0 0.0
  %5575 = vmatmul.mubr.f32.gmra.mxu0 %v5503
  %v5576 = vpop.f32.mrf.mxu0
  %v5577 = vadd.f32 %v5498, %v5576
  %v5578 = vpop.f32.mrf.mxu0
  %5579 = vdwg.mxu0
  %v5581 = vsel %vm28, %v5472, 0
  %v5584 = vsel %vm28, %v5477, 0
  %v5587 = vsel %vm28, %v5572, 0
  %5589 = vmatprep.subr.mxu0 0.0
  %5590 = vmatpush1.xpose.msra.mxu0 0.0
  %5591 = vmatprep.subr.mxu0 0.0
  %5592 = vmatpush1.xpose.msra.mxu0 0.0
  %5593 = vmatprep.subr.mxu0 0.0
  %5594 = vmatpush1.xpose.msra.mxu0 0.0
  %5595 = vmatprep.subr.mxu0 0.0
  %5596 = vmatpush1.xpose.msra.mxu0 0.0
  %5597 = vmatprep.subr.mxu0 0.0
  %5598 = vmatpush1.xpose.msra.mxu0 0.0
  %5599 = vmatprep.subr.mxu0 0.0
  %5600 = vmatpush1.xpose.msra.mxu0 0.0
  %5601 = vmatprep.subr.mxu0 0.0
  %5602 = vmatpush1.xpose.msra.mxu0 0.0
  %5603 = vmatprep.subr.mxu0 0.0
  %5604 = vmatpush1.xpose.msra.mxu0 0.0
  %5605 = vmatprep.subr.mxu0 0.0
  %5606 = vmatpush1.xpose.msra.mxu0 0.0
  %5607 = vmatprep.subr.mxu0 0.0
  %5608 = vmatpush1.xpose.msra.mxu0 0.0
  %5609 = vmatprep.subr.mxu0 0.0
  %5610 = vmatpush1.xpose.msra.mxu0 0.0
  %5611 = vmatprep.subr.mxu0 0.0
  %5612 = vmatpush1.xpose.msra.mxu0 0.0
  %5613 = vmatprep.subr.mxu0 0.0
  %5614 = vmatpush1.xpose.msra.mxu0 0.0
  %5615 = vmatprep.subr.mxu0 0.0
  %5616 = vmatpush1.xpose.msra.mxu0 0.0
  %5617 = vmatprep.subr.mxu0 0.0
  %5618 = vmatpush1.xpose.msra.mxu0 0.0
  %5619 = vmatprep.subr.mxu0 0.0
  %5620 = vmatpush1.xpose.msra.mxu0 %v5587
  %5621 = vmatprep.subr.mxu0 0.0
  %5622 = vmatpush2.xpose.msra.mxu0 0.0
  %5623 = vmatprep.subr.mxu0 0.0
  %5624 = vmatpush2.xpose.msra.mxu0 0.0
  %5625 = vmatprep.subr.mxu0 0.0
  %5626 = vmatpush2.xpose.msra.mxu0 0.0
  %5627 = vmatprep.subr.mxu0 0.0
  %5628 = vmatpush2.xpose.msra.mxu0 0.0
  %5629 = vmatprep.subr.mxu0 0.0
  %5630 = vmatpush2.xpose.msra.mxu0 0.0
  %5631 = vmatprep.subr.mxu0 0.0
  %5632 = vmatpush2.xpose.msra.mxu0 0.0
  %5633 = vmatprep.subr.mxu0 0.0
  %5634 = vmatpush2.xpose.msra.mxu0 0.0
  %5635 = vmatprep.subr.mxu0 0.0
  %5636 = vmatpush2.xpose.msra.mxu0 0.0
  %5637 = vmatprep.subr.mxu0 0.0
  %5638 = vmatpush2.xpose.msra.mxu0 0.0
  %5639 = vmatprep.subr.mxu0 0.0
  %5640 = vmatpush2.xpose.msra.mxu0 0.0
  %5641 = vmatprep.subr.mxu0 0.0
  %5642 = vmatpush2.xpose.msra.mxu0 0.0
  %5643 = vmatprep.subr.mxu0 0.0
  %5644 = vmatpush2.xpose.msra.mxu0 0.0
  %5645 = vmatprep.subr.mxu0 0.0
  %5646 = vmatpush2.xpose.msra.mxu0 0.0
  %5647 = vmatprep.subr.mxu0 0.0
  %5648 = vmatpush2.xpose.msra.mxu0 0.0
  %5649 = vmatprep.subr.mxu0 0.0
  %5650 = vmatpush2.xpose.msra.mxu0 0.0
  %5651 = vmatprep.subr.mxu0 0.0
  %5652 = vmatpush2.xpose.msra.mxu0 0.0
  %5653 = vmatprep.mubr.f32.mxu0 0.0
  %5654 = vmatmul.mubr.f32.gmra.mxu0 %v5581
  %v5655 = vpop.f32.mrf.mxu0
  %v5656 = vadd.f32 0.0, %v5655
  %v5657 = vpop.f32.mrf.mxu0
  %5658 = vmatprep.mubr.f32.mxu0 0.0
  %5659 = vmatmul.mubr.f32.gmra.mxu0 %v5584
  %v5660 = vpop.f32.mrf.mxu0
  %v5661 = vadd.f32 0.0, %v5660
  %v5662 = vpop.f32.mrf.mxu0
  %5663 = vdwg.mxu0
  %v5665 = vsel %vm28, %v5482, 0
  %v5668 = vsel %vm28, %v5487, 0
  %v5671 = vsel %vm28, %v5577, 0
  %5673 = vmatprep.subr.mxu0 0.0
  %5674 = vmatpush1.xpose.msra.mxu0 0.0
  %5675 = vmatprep.subr.mxu0 0.0
  %5676 = vmatpush1.xpose.msra.mxu0 0.0
  %5677 = vmatprep.subr.mxu0 0.0
  %5678 = vmatpush1.xpose.msra.mxu0 0.0
  %5679 = vmatprep.subr.mxu0 0.0
  %5680 = vmatpush1.xpose.msra.mxu0 0.0
  %5681 = vmatprep.subr.mxu0 0.0
  %5682 = vmatpush1.xpose.msra.mxu0 0.0
  %5683 = vmatprep.subr.mxu0 0.0
  %5684 = vmatpush1.xpose.msra.mxu0 0.0
  %5685 = vmatprep.subr.mxu0 0.0
  %5686 = vmatpush1.xpose.msra.mxu0 0.0
  %5687 = vmatprep.subr.mxu0 0.0
  %5688 = vmatpush1.xpose.msra.mxu0 0.0
  %5689 = vmatprep.subr.mxu0 0.0
  %5690 = vmatpush1.xpose.msra.mxu0 0.0
  %5691 = vmatprep.subr.mxu0 0.0
  %5692 = vmatpush1.xpose.msra.mxu0 0.0
  %5693 = vmatprep.subr.mxu0 0.0
  %5694 = vmatpush1.xpose.msra.mxu0 0.0
  %5695 = vmatprep.subr.mxu0 0.0
  %5696 = vmatpush1.xpose.msra.mxu0 0.0
  %5697 = vmatprep.subr.mxu0 0.0
  %5698 = vmatpush1.xpose.msra.mxu0 0.0
  %5699 = vmatprep.subr.mxu0 0.0
  %5700 = vmatpush1.xpose.msra.mxu0 0.0
  %5701 = vmatprep.subr.mxu0 0.0
  %5702 = vmatpush1.xpose.msra.mxu0 0.0
  %5703 = vmatprep.subr.mxu0 0.0
  %5704 = vmatpush1.xpose.msra.mxu0 %v5671
  %5705 = vmatprep.subr.mxu0 0.0
  %5706 = vmatpush2.xpose.msra.mxu0 0.0
  %5707 = vmatprep.subr.mxu0 0.0
  %5708 = vmatpush2.xpose.msra.mxu0 0.0
  %5709 = vmatprep.subr.mxu0 0.0
  %5710 = vmatpush2.xpose.msra.mxu0 0.0
  %5711 = vmatprep.subr.mxu0 0.0
  %5712 = vmatpush2.xpose.msra.mxu0 0.0
  %5713 = vmatprep.subr.mxu0 0.0
  %5714 = vmatpush2.xpose.msra.mxu0 0.0
  %5715 = vmatprep.subr.mxu0 0.0
  %5716 = vmatpush2.xpose.msra.mxu0 0.0
  %5717 = vmatprep.subr.mxu0 0.0
  %5718 = vmatpush2.xpose.msra.mxu0 0.0
  %5719 = vmatprep.subr.mxu0 0.0
  %5720 = vmatpush2.xpose.msra.mxu0 0.0
  %5721 = vmatprep.subr.mxu0 0.0
  %5722 = vmatpush2.xpose.msra.mxu0 0.0
  %5723 = vmatprep.subr.mxu0 0.0
  %5724 = vmatpush2.xpose.msra.mxu0 0.0
  %5725 = vmatprep.subr.mxu0 0.0
  %5726 = vmatpush2.xpose.msra.mxu0 0.0
  %5727 = vmatprep.subr.mxu0 0.0
  %5728 = vmatpush2.xpose.msra.mxu0 0.0
  %5729 = vmatprep.subr.mxu0 0.0
  %5730 = vmatpush2.xpose.msra.mxu0 0.0
  %5731 = vmatprep.subr.mxu0 0.0
  %5732 = vmatpush2.xpose.msra.mxu0 0.0
  %5733 = vmatprep.subr.mxu0 0.0
  %5734 = vmatpush2.xpose.msra.mxu0 0.0
  %5735 = vmatprep.subr.mxu0 0.0
  %5736 = vmatpush2.xpose.msra.mxu0 0.0
  %5737 = vmatprep.mubr.f32.mxu0 0.0
  %5738 = vmatmul.mubr.f32.gmra.mxu0 %v5665
  %v5739 = vpop.f32.mrf.mxu0
  %v5740 = vadd.f32 0.0, %v5739
  %v5741 = vpop.f32.mrf.mxu0
  %5742 = vmatprep.mubr.f32.mxu0 0.0
  %5743 = vmatmul.mubr.f32.gmra.mxu0 %v5668
  %v5744 = vpop.f32.mrf.mxu0
  %v5745 = vadd.f32 0.0, %v5744
  %v5746 = vpop.f32.mrf.mxu0
  %5747 = vdwg.mxu0
  %v5748 = vsel %vm28, %v5656, -inf
  %5749 = vmax.xlane.f32.xlu0 %v5748
  %v5750 = vpop.xlane.xlu0 %5749
  %v5751 = vsel %vm28, %v5661, -inf
  %5752 = vmax.xlane.f32.xlu0 %v5751
  %v5753 = vpop.xlane.xlu0 %5752
  %v5754 = vsel %vm28, %v5740, -inf
  %5755 = vmax.xlane.f32.xlu0 %v5754
  %v5756 = vpop.xlane.xlu0 %5755
  %v5757 = vsel %vm28, %v5745, -inf
  %5758 = vmax.xlane.f32.xlu0 %v5757
  %v5759 = vpop.xlane.xlu0 %5758
  %v5760 = vsub.f32 %v5656, %v5750
  %v5761 = vsub.f32 %v5661, %v5753
  %v5762 = vsub.f32 %v5740, %v5756
  %v5763 = vsub.f32 %v5745, %v5759
  %v5764 = vmul.f32 %v5760, 1.442695
  %v5765 = vpow.pop %v5764
  %v5766 = vmul.f32 %v5761, 1.442695
  %v5767 = vpow.pop %v5766
  %v5768 = vmul.f32 %v5762, 1.442695
  %v5769 = vpow.pop %v5768
  %v5770 = vmul.f32 %v5763, 1.442695
  %v5771 = vpow.pop %v5770
  %v5772 = vsel %vm28, %v5765, 0.0
  %5773 = vadd.xlane.f32.xlu0 %v5772
  %v5774 = vpop.xlane.xlu0 %5773
  %v5775 = vsel %vm28, %v5767, 0.0
  %5776 = vadd.xlane.f32.xlu0 %v5775
  %v5777 = vpop.xlane.xlu0 %5776
  %v5778 = vsel %vm28, %v5769, 0.0
  %5779 = vadd.xlane.f32.xlu0 %v5778
  %v5780 = vpop.xlane.xlu0 %5779
  %v5781 = vsel %vm28, %v5771, 0.0
  %5782 = vadd.xlane.f32.xlu0 %v5781
  %v5783 = vpop.xlane.xlu0 %5782
  %v5784 = vrcp.pop %v5774
  %v5785 = vrcp.pop %v5777
  %v5786 = vrcp.pop %v5780
  %v5787 = vrcp.pop %v5783
  %v5788 = vmul.f32 %v5765, %v5784
  %v5789 = vmul.f32 %v5767, %v5785
  %v5790 = vmul.f32 %v5769, %v5786
  %v5791 = vmul.f32 %v5771, %v5787
  %5792 = vrot.lane.b32.xlu0 %v5572, 96
  %v5793 = vpop.permute.xlu0 %5792
  %v5796 = vsel %vm28, %v5788, 0
  %v5799 = vsel %vm28, %v5789, 0
  %5801 = vmatprep.subr.mxu0 0.0
  %5802 = vmatpush1.msra.mxu0 0.0
  %5803 = vmatprep.subr.mxu0 0.0
  %5804 = vmatpush1.msra.mxu0 0.0
  %5805 = vmatprep.subr.mxu0 0.0
  %5806 = vmatpush1.msra.mxu0 0.0
  %5807 = vmatprep.subr.mxu0 0.0
  %5808 = vmatpush1.msra.mxu0 0.0
  %5809 = vmatprep.subr.mxu0 0.0
  %5810 = vmatpush1.msra.mxu0 0.0
  %5811 = vmatprep.subr.mxu0 0.0
  %5812 = vmatpush1.msra.mxu0 0.0
  %5813 = vmatprep.subr.mxu0 0.0
  %5814 = vmatpush1.msra.mxu0 0.0
  %5815 = vmatprep.subr.mxu0 0.0
  %5816 = vmatpush1.msra.mxu0 0.0
  %5817 = vmatprep.subr.mxu0 0.0
  %5818 = vmatpush1.msra.mxu0 0.0
  %5819 = vmatprep.subr.mxu0 0.0
  %5820 = vmatpush1.msra.mxu0 0.0
  %5821 = vmatprep.subr.mxu0 0.0
  %5822 = vmatpush1.msra.mxu0 0.0
  %5823 = vmatprep.subr.mxu0 0.0
  %5824 = vmatpush1.msra.mxu0 0.0
  %5825 = vmatprep.subr.mxu0 0.0
  %5826 = vmatpush1.msra.mxu0 0.0
  %5827 = vmatprep.subr.mxu0 0.0
  %5828 = vmatpush1.msra.mxu0 0.0
  %5829 = vmatprep.subr.mxu0 0.0
  %5830 = vmatpush1.msra.mxu0 0.0
  %5831 = vmatprep.subr.mxu0 0.0
  %5832 = vmatpush1.msra.mxu0 %v5793
  %5833 = vmatprep.subr.mxu0 0.0
  %5834 = vmatpush2.msra.mxu0 0.0
  %5835 = vmatprep.subr.mxu0 0.0
  %5836 = vmatpush2.msra.mxu0 0.0
  %5837 = vmatprep.subr.mxu0 0.0
  %5838 = vmatpush2.msra.mxu0 0.0
  %5839 = vmatprep.subr.mxu0 0.0
  %5840 = vmatpush2.msra.mxu0 0.0
  %5841 = vmatprep.subr.mxu0 0.0
  %5842 = vmatpush2.msra.mxu0 0.0
  %5843 = vmatprep.subr.mxu0 0.0
  %5844 = vmatpush2.msra.mxu0 0.0
  %5845 = vmatprep.subr.mxu0 0.0
  %5846 = vmatpush2.msra.mxu0 0.0
  %5847 = vmatprep.subr.mxu0 0.0
  %5848 = vmatpush2.msra.mxu0 0.0
  %5849 = vmatprep.subr.mxu0 0.0
  %5850 = vmatpush2.msra.mxu0 0.0
  %5851 = vmatprep.subr.mxu0 0.0
  %5852 = vmatpush2.msra.mxu0 0.0
  %5853 = vmatprep.subr.mxu0 0.0
  %5854 = vmatpush2.msra.mxu0 0.0
  %5855 = vmatprep.subr.mxu0 0.0
  %5856 = vmatpush2.msra.mxu0 0.0
  %5857 = vmatprep.subr.mxu0 0.0
  %5858 = vmatpush2.msra.mxu0 0.0
  %5859 = vmatprep.subr.mxu0 0.0
  %5860 = vmatpush2.msra.mxu0 0.0
  %5861 = vmatprep.subr.mxu0 0.0
  %5862 = vmatpush2.msra.mxu0 0.0
  %5863 = vmatprep.subr.mxu0 0.0
  %5864 = vmatpush2.msra.mxu0 0.0
  %5865 = vmatprep.mubr.f32.mxu0 0.0
  %5866 = vmatmul.mubr.f32.gmra.mxu0 %v5796
  %v5867 = vpop.f32.mrf.mxu0
  %v5868 = vadd.f32 0.0, %v5867
  %v5869 = vpop.f32.mrf.mxu0
  %5870 = vmatprep.mubr.f32.mxu0 0.0
  %5871 = vmatmul.mubr.f32.gmra.mxu0 %v5799
  %v5872 = vpop.f32.mrf.mxu0
  %v5873 = vadd.f32 0.0, %v5872
  %v5874 = vpop.f32.mrf.mxu0
  %5875 = vdwg.mxu0
  %5876 = vrot.lane.b32.xlu0 %v5577, 96
  %v5877 = vpop.permute.xlu0 %5876
  %v5880 = vsel %vm28, %v5790, 0
  %v5883 = vsel %vm28, %v5791, 0
  %5885 = vmatprep.subr.mxu0 0.0
  %5886 = vmatpush1.msra.mxu0 0.0
  %5887 = vmatprep.subr.mxu0 0.0
  %5888 = vmatpush1.msra.mxu0 0.0
  %5889 = vmatprep.subr.mxu0 0.0
  %5890 = vmatpush1.msra.mxu0 0.0
  %5891 = vmatprep.subr.mxu0 0.0
  %5892 = vmatpush1.msra.mxu0 0.0
  %5893 = vmatprep.subr.mxu0 0.0
  %5894 = vmatpush1.msra.mxu0 0.0
  %5895 = vmatprep.subr.mxu0 0.0
  %5896 = vmatpush1.msra.mxu0 0.0
  %5897 = vmatprep.subr.mxu0 0.0
  %5898 = vmatpush1.msra.mxu0 0.0
  %5899 = vmatprep.subr.mxu0 0.0
  %5900 = vmatpush1.msra.mxu0 0.0
  %5901 = vmatprep.subr.mxu0 0.0
  %5902 = vmatpush1.msra.mxu0 0.0
  %5903 = vmatprep.subr.mxu0 0.0
  %5904 = vmatpush1.msra.mxu0 0.0
  %5905 = vmatprep.subr.mxu0 0.0
  %5906 = vmatpush1.msra.mxu0 0.0
  %5907 = vmatprep.subr.mxu0 0.0
  %5908 = vmatpush1.msra.mxu0 0.0
  %5909 = vmatprep.subr.mxu0 0.0
  %5910 = vmatpush1.msra.mxu0 0.0
  %5911 = vmatprep.subr.mxu0 0.0
  %5912 = vmatpush1.msra.mxu0 0.0
  %5913 = vmatprep.subr.mxu0 0.0
  %5914 = vmatpush1.msra.mxu0 0.0
  %5915 = vmatprep.subr.mxu0 0.0
  %5916 = vmatpush1.msra.mxu0 %v5877
  %5917 = vmatprep.subr.mxu0 0.0
  %5918 = vmatpush2.msra.mxu0 0.0
  %5919 = vmatprep.subr.mxu0 0.0
  %5920 = vmatpush2.msra.mxu0 0.0
  %5921 = vmatprep.subr.mxu0 0.0
  %5922 = vmatpush2.msra.mxu0 0.0
  %5923 = vmatprep.subr.mxu0 0.0
  %5924 = vmatpush2.msra.mxu0 0.0
  %5925 = vmatprep.subr.mxu0 0.0
  %5926 = vmatpush2.msra.mxu0 0.0
  %5927 = vmatprep.subr.mxu0 0.0
  %5928 = vmatpush2.msra.mxu0 0.0
  %5929 = vmatprep.subr.mxu0 0.0
  %5930 = vmatpush2.msra.mxu0 0.0
  %5931 = vmatprep.subr.mxu0 0.0
  %5932 = vmatpush2.msra.mxu0 0.0
  %5933 = vmatprep.subr.mxu0 0.0
  %5934 = vmatpush2.msra.mxu0 0.0
  %5935 = vmatprep.subr.mxu0 0.0
  %5936 = vmatpush2.msra.mxu0 0.0
  %5937 = vmatprep.subr.mxu0 0.0
  %5938 = vmatpush2.msra.mxu0 0.0
  %5939 = vmatprep.subr.mxu0 0.0
  %5940 = vmatpush2.msra.mxu0 0.0
  %5941 = vmatprep.subr.mxu0 0.0
  %5942 = vmatpush2.msra.mxu0 0.0
  %5943 = vmatprep.subr.mxu0 0.0
  %5944 = vmatpush2.msra.mxu0 0.0
  %5945 = vmatprep.subr.mxu0 0.0
  %5946 = vmatpush2.msra.mxu0 0.0
  %5947 = vmatprep.subr.mxu0 0.0
  %5948 = vmatpush2.msra.mxu0 0.0
  %5949 = vmatprep.mubr.f32.mxu0 0.0
  %5950 = vmatmul.mubr.f32.gmra.mxu0 %v5880
  %v5951 = vpop.f32.mrf.mxu0
  %v5952 = vadd.f32 0.0, %v5951
  %v5953 = vpop.f32.mrf.mxu0
  %5954 = vmatprep.mubr.f32.mxu0 0.0
  %5955 = vmatmul.mubr.f32.gmra.mxu0 %v5883
  %v5956 = vpop.f32.mrf.mxu0
  %v5957 = vadd.f32 0.0, %v5956
  %v5958 = vpop.f32.mrf.mxu0
  %5959 = vdwg.mxu0
  %5960 = vrot.lane.b32.xlu0 %v5472, 120
  %v5961 = vpop.permute.xlu0 %5960
  %5962 = vrot.lane.b32.xlu0 %v5477, 120
  %v5963 = vpop.permute.xlu0 %5962
  %5964 = vrot.lane.b32.xlu0 %v5572, 120
  %v5965 = vpop.permute.xlu0 %5964
  %v5966 = vsel %vm28, %v5961, 0
  %v5968 = vsel %vm28, %v5963, 0
  %v5970 = vsel %vm28, %v5965, 0
  %5972 = vmatprep.subr.mxu0 0.0
  %5973 = vmatpush1.xpose.msra.mxu0 0.0
  %5974 = vmatprep.subr.mxu0 0.0
  %5975 = vmatpush1.xpose.msra.mxu0 0.0
  %5976 = vmatprep.subr.mxu0 0.0
  %5977 = vmatpush1.xpose.msra.mxu0 0.0
  %5978 = vmatprep.subr.mxu0 0.0
  %5979 = vmatpush1.xpose.msra.mxu0 0.0
  %5980 = vmatprep.subr.mxu0 0.0
  %5981 = vmatpush1.xpose.msra.mxu0 0.0
  %5982 = vmatprep.subr.mxu0 0.0
  %5983 = vmatpush1.xpose.msra.mxu0 0.0
  %5984 = vmatprep.subr.mxu0 0.0
  %5985 = vmatpush1.xpose.msra.mxu0 0.0
  %5986 = vmatprep.subr.mxu0 0.0
  %5987 = vmatpush1.xpose.msra.mxu0 0.0
  %5988 = vmatprep.subr.mxu0 0.0
  %5989 = vmatpush1.xpose.msra.mxu0 0.0
  %5990 = vmatprep.subr.mxu0 0.0
  %5991 = vmatpush1.xpose.msra.mxu0 0.0
  %5992 = vmatprep.subr.mxu0 0.0
  %5993 = vmatpush1.xpose.msra.mxu0 0.0
  %5994 = vmatprep.subr.mxu0 0.0
  %5995 = vmatpush1.xpose.msra.mxu0 0.0
  %5996 = vmatprep.subr.mxu0 0.0
  %5997 = vmatpush1.xpose.msra.mxu0 0.0
  %5998 = vmatprep.subr.mxu0 0.0
  %5999 = vmatpush1.xpose.msra.mxu0 0.0
  %6000 = vmatprep.subr.mxu0 0.0
  %6001 = vmatpush1.xpose.msra.mxu0 0.0
  %6002 = vmatprep.subr.mxu0 0.0
  %6003 = vmatpush1.xpose.msra.mxu0 %v5970
  %6004 = vmatprep.subr.mxu0 0.0
  %6005 = vmatpush2.xpose.msra.mxu0 0.0
  %6006 = vmatprep.subr.mxu0 0.0
  %6007 = vmatpush2.xpose.msra.mxu0 0.0
  %6008 = vmatprep.subr.mxu0 0.0
  %6009 = vmatpush2.xpose.msra.mxu0 0.0
  %6010 = vmatprep.subr.mxu0 0.0
  %6011 = vmatpush2.xpose.msra.mxu0 0.0
  %6012 = vmatprep.subr.mxu0 0.0
  %6013 = vmatpush2.xpose.msra.mxu0 0.0
  %6014 = vmatprep.subr.mxu0 0.0
  %6015 = vmatpush2.xpose.msra.mxu0 0.0
  %6016 = vmatprep.subr.mxu0 0.0
  %6017 = vmatpush2.xpose.msra.mxu0 0.0
  %6018 = vmatprep.subr.mxu0 0.0
  %6019 = vmatpush2.xpose.msra.mxu0 0.0
  %6020 = vmatprep.subr.mxu0 0.0
  %6021 = vmatpush2.xpose.msra.mxu0 0.0
  %6022 = vmatprep.subr.mxu0 0.0
  %6023 = vmatpush2.xpose.msra.mxu0 0.0
  %6024 = vmatprep.subr.mxu0 0.0
  %6025 = vmatpush2.xpose.msra.mxu0 0.0
  %6026 = vmatprep.subr.mxu0 0.0
  %6027 = vmatpush2.xpose.msra.mxu0 0.0
  %6028 = vmatprep.subr.mxu0 0.0
  %6029 = vmatpush2.xpose.msra.mxu0 0.0
  %6030 = vmatprep.subr.mxu0 0.0
  %6031 = vmatpush2.xpose.msra.mxu0 0.0
  %6032 = vmatprep.subr.mxu0 0.0
  %6033 = vmatpush2.xpose.msra.mxu0 0.0
  %6034 = vmatprep.subr.mxu0 0.0
  %6035 = vmatpush2.xpose.msra.mxu0 0.0
  %6036 = vmatprep.mubr.f32.mxu0 0.0
  %6037 = vmatmul.mubr.f32.gmra.mxu0 %v5966
  %v6038 = vpop.f32.mrf.mxu0
  %v6039 = vadd.f32 0.0, %v6038
  %v6040 = vpop.f32.mrf.mxu0
  %6041 = vmatprep.mubr.f32.mxu0 0.0
  %6042 = vmatmul.mubr.f32.gmra.mxu0 %v5968
  %v6043 = vpop.f32.mrf.mxu0
  %v6044 = vadd.f32 0.0, %v6043
  %v6045 = vpop.f32.mrf.mxu0
  %6046 = vdwg.mxu0
  %6047 = vrot.lane.b32.xlu0 %v5482, 120
  %v6048 = vpop.permute.xlu0 %6047
  %6049 = vrot.lane.b32.xlu0 %v5487, 120
  %v6050 = vpop.permute.xlu0 %6049
  %6051 = vrot.lane.b32.xlu0 %v5577, 120
  %v6052 = vpop.permute.xlu0 %6051
  %v6053 = vsel %vm28, %v6048, 0
  %v6055 = vsel %vm28, %v6050, 0
  %v6057 = vsel %vm28, %v6052, 0
  %6059 = vmatprep.subr.mxu0 0.0
  %6060 = vmatpush1.xpose.msra.mxu0 0.0
  %6061 = vmatprep.subr.mxu0 0.0
  %6062 = vmatpush1.xpose.msra.mxu0 0.0
  %6063 = vmatprep.subr.mxu0 0.0
  %6064 = vmatpush1.xpose.msra.mxu0 0.0
  %6065 = vmatprep.subr.mxu0 0.0
  %6066 = vmatpush1.xpose.msra.mxu0 0.0
  %6067 = vmatprep.subr.mxu0 0.0
  %6068 = vmatpush1.xpose.msra.mxu0 0.0
  %6069 = vmatprep.subr.mxu0 0.0
  %6070 = vmatpush1.xpose.msra.mxu0 0.0
  %6071 = vmatprep.subr.mxu0 0.0
  %6072 = vmatpush1.xpose.msra.mxu0 0.0
  %6073 = vmatprep.subr.mxu0 0.0
  %6074 = vmatpush1.xpose.msra.mxu0 0.0
  %6075 = vmatprep.subr.mxu0 0.0
  %6076 = vmatpush1.xpose.msra.mxu0 0.0
  %6077 = vmatprep.subr.mxu0 0.0
  %6078 = vmatpush1.xpose.msra.mxu0 0.0
  %6079 = vmatprep.subr.mxu0 0.0
  %6080 = vmatpush1.xpose.msra.mxu0 0.0
  %6081 = vmatprep.subr.mxu0 0.0
  %6082 = vmatpush1.xpose.msra.mxu0 0.0
  %6083 = vmatprep.subr.mxu0 0.0
  %6084 = vmatpush1.xpose.msra.mxu0 0.0
  %6085 = vmatprep.subr.mxu0 0.0
  %6086 = vmatpush1.xpose.msra.mxu0 0.0
  %6087 = vmatprep.subr.mxu0 0.0
  %6088 = vmatpush1.xpose.msra.mxu0 0.0
  %6089 = vmatprep.subr.mxu0 0.0
  %6090 = vmatpush1.xpose.msra.mxu0 %v6057
  %6091 = vmatprep.subr.mxu0 0.0
  %6092 = vmatpush2.xpose.msra.mxu0 0.0
  %6093 = vmatprep.subr.mxu0 0.0
  %6094 = vmatpush2.xpose.msra.mxu0 0.0
  %6095 = vmatprep.subr.mxu0 0.0
  %6096 = vmatpush2.xpose.msra.mxu0 0.0
  %6097 = vmatprep.subr.mxu0 0.0
  %6098 = vmatpush2.xpose.msra.mxu0 0.0
  %6099 = vmatprep.subr.mxu0 0.0
  %6100 = vmatpush2.xpose.msra.mxu0 0.0
  %6101 = vmatprep.subr.mxu0 0.0
  %6102 = vmatpush2.xpose.msra.mxu0 0.0
  %6103 = vmatprep.subr.mxu0 0.0
  %6104 = vmatpush2.xpose.msra.mxu0 0.0
  %6105 = vmatprep.subr.mxu0 0.0
  %6106 = vmatpush2.xpose.msra.mxu0 0.0
  %6107 = vmatprep.subr.mxu0 0.0
  %6108 = vmatpush2.xpose.msra.mxu0 0.0
  %6109 = vmatprep.subr.mxu0 0.0
  %6110 = vmatpush2.xpose.msra.mxu0 0.0
  %6111 = vmatprep.subr.mxu0 0.0
  %6112 = vmatpush2.xpose.msra.mxu0 0.0
  %6113 = vmatprep.subr.mxu0 0.0
  %6114 = vmatpush2.xpose.msra.mxu0 0.0
  %6115 = vmatprep.subr.mxu0 0.0
  %6116 = vmatpush2.xpose.msra.mxu0 0.0
  %6117 = vmatprep.subr.mxu0 0.0
  %6118 = vmatpush2.xpose.msra.mxu0 0.0
  %6119 = vmatprep.subr.mxu0 0.0
  %6120 = vmatpush2.xpose.msra.mxu0 0.0
  %6121 = vmatprep.subr.mxu0 0.0
  %6122 = vmatpush2.xpose.msra.mxu0 0.0
  %6123 = vmatprep.mubr.f32.mxu0 0.0
  %6124 = vmatmul.mubr.f32.gmra.mxu0 %v6053
  %v6125 = vpop.f32.mrf.mxu0
  %v6126 = vadd.f32 0.0, %v6125
  %v6127 = vpop.f32.mrf.mxu0
  %6128 = vmatprep.mubr.f32.mxu0 0.0
  %6129 = vmatmul.mubr.f32.gmra.mxu0 %v6055
  %v6130 = vpop.f32.mrf.mxu0
  %v6131 = vadd.f32 0.0, %v6130
  %v6132 = vpop.f32.mrf.mxu0
  %6133 = vdwg.mxu0
  %v6134 = vsel %vm28, %v6039, -inf
  %6135 = vmax.xlane.f32.xlu0 %v6134
  %v6136 = vpop.xlane.xlu0 %6135
  %v6137 = vsel %vm28, %v6044, -inf
  %6138 = vmax.xlane.f32.xlu0 %v6137
  %v6139 = vpop.xlane.xlu0 %6138
  %v6140 = vsel %vm28, %v6126, -inf
  %6141 = vmax.xlane.f32.xlu0 %v6140
  %v6142 = vpop.xlane.xlu0 %6141
  %v6143 = vsel %vm28, %v6131, -inf
  %6144 = vmax.xlane.f32.xlu0 %v6143
  %v6145 = vpop.xlane.xlu0 %6144
  %v6146 = vsub.f32 %v6039, %v6136
  %v6147 = vsub.f32 %v6044, %v6139
  %v6148 = vsub.f32 %v6126, %v6142
  %v6149 = vsub.f32 %v6131, %v6145
  %v6150 = vmul.f32 %v6146, 1.442695
  %v6151 = vpow.pop %v6150
  %v6152 = vmul.f32 %v6147, 1.442695
  %v6153 = vpow.pop %v6152
  %v6154 = vmul.f32 %v6148, 1.442695
  %v6155 = vpow.pop %v6154
  %v6156 = vmul.f32 %v6149, 1.442695
  %v6157 = vpow.pop %v6156
  %v6158 = vsel %vm28, %v6151, 0.0
  %6159 = vadd.xlane.f32.xlu0 %v6158
  %v6160 = vpop.xlane.xlu0 %6159
  %v6161 = vsel %vm28, %v6153, 0.0
  %6162 = vadd.xlane.f32.xlu0 %v6161
  %v6163 = vpop.xlane.xlu0 %6162
  %v6164 = vsel %vm28, %v6155, 0.0
  %6165 = vadd.xlane.f32.xlu0 %v6164
  %v6166 = vpop.xlane.xlu0 %6165
  %v6167 = vsel %vm28, %v6157, 0.0
  %6168 = vadd.xlane.f32.xlu0 %v6167
  %v6169 = vpop.xlane.xlu0 %6168
  %v6170 = vrcp.pop %v6160
  %v6171 = vrcp.pop %v6163
  %v6172 = vrcp.pop %v6166
  %v6173 = vrcp.pop %v6169
  %v6174 = vmul.f32 %v6151, %v6170
  %v6175 = vmul.f32 %v6153, %v6171
  %v6176 = vmul.f32 %v6155, %v6172
  %v6177 = vmul.f32 %v6157, %v6173
  %6178 = vrot.lane.b32.xlu0 %v5572, 88
  %v6179 = vpop.permute.xlu0 %6178
  %v6182 = vsel %vm28, %v6174, 0
  %v6185 = vsel %vm28, %v6175, 0
  %6187 = vmatprep.subr.mxu0 0.0
  %6188 = vmatpush1.msra.mxu0 0.0
  %6189 = vmatprep.subr.mxu0 0.0
  %6190 = vmatpush1.msra.mxu0 0.0
  %6191 = vmatprep.subr.mxu0 0.0
  %6192 = vmatpush1.msra.mxu0 0.0
  %6193 = vmatprep.subr.mxu0 0.0
  %6194 = vmatpush1.msra.mxu0 0.0
  %6195 = vmatprep.subr.mxu0 0.0
  %6196 = vmatpush1.msra.mxu0 0.0
  %6197 = vmatprep.subr.mxu0 0.0
  %6198 = vmatpush1.msra.mxu0 0.0
  %6199 = vmatprep.subr.mxu0 0.0
  %6200 = vmatpush1.msra.mxu0 0.0
  %6201 = vmatprep.subr.mxu0 0.0
  %6202 = vmatpush1.msra.mxu0 0.0
  %6203 = vmatprep.subr.mxu0 0.0
  %6204 = vmatpush1.msra.mxu0 0.0
  %6205 = vmatprep.subr.mxu0 0.0
  %6206 = vmatpush1.msra.mxu0 0.0
  %6207 = vmatprep.subr.mxu0 0.0
  %6208 = vmatpush1.msra.mxu0 0.0
  %6209 = vmatprep.subr.mxu0 0.0
  %6210 = vmatpush1.msra.mxu0 0.0
  %6211 = vmatprep.subr.mxu0 0.0
  %6212 = vmatpush1.msra.mxu0 0.0
  %6213 = vmatprep.subr.mxu0 0.0
  %6214 = vmatpush1.msra.mxu0 0.0
  %6215 = vmatprep.subr.mxu0 0.0
  %6216 = vmatpush1.msra.mxu0 0.0
  %6217 = vmatprep.subr.mxu0 0.0
  %6218 = vmatpush1.msra.mxu0 %v6179
  %6219 = vmatprep.subr.mxu0 0.0
  %6220 = vmatpush2.msra.mxu0 0.0
  %6221 = vmatprep.subr.mxu0 0.0
  %6222 = vmatpush2.msra.mxu0 0.0
  %6223 = vmatprep.subr.mxu0 0.0
  %6224 = vmatpush2.msra.mxu0 0.0
  %6225 = vmatprep.subr.mxu0 0.0
  %6226 = vmatpush2.msra.mxu0 0.0
  %6227 = vmatprep.subr.mxu0 0.0
  %6228 = vmatpush2.msra.mxu0 0.0
  %6229 = vmatprep.subr.mxu0 0.0
  %6230 = vmatpush2.msra.mxu0 0.0
  %6231 = vmatprep.subr.mxu0 0.0
  %6232 = vmatpush2.msra.mxu0 0.0
  %6233 = vmatprep.subr.mxu0 0.0
  %6234 = vmatpush2.msra.mxu0 0.0
  %6235 = vmatprep.subr.mxu0 0.0
  %6236 = vmatpush2.msra.mxu0 0.0
  %6237 = vmatprep.subr.mxu0 0.0
  %6238 = vmatpush2.msra.mxu0 0.0
  %6239 = vmatprep.subr.mxu0 0.0
  %6240 = vmatpush2.msra.mxu0 0.0
  %6241 = vmatprep.subr.mxu0 0.0
  %6242 = vmatpush2.msra.mxu0 0.0
  %6243 = vmatprep.subr.mxu0 0.0
  %6244 = vmatpush2.msra.mxu0 0.0
  %6245 = vmatprep.subr.mxu0 0.0
  %6246 = vmatpush2.msra.mxu0 0.0
  %6247 = vmatprep.subr.mxu0 0.0
  %6248 = vmatpush2.msra.mxu0 0.0
  %6249 = vmatprep.subr.mxu0 0.0
  %6250 = vmatpush2.msra.mxu0 0.0
  %6251 = vmatprep.mubr.f32.mxu0 0.0
  %6252 = vmatmul.mubr.f32.gmra.mxu0 %v6182
  %v6253 = vpop.f32.mrf.mxu0
  %v6254 = vadd.f32 0.0, %v6253
  %v6255 = vpop.f32.mrf.mxu0
  %6256 = vmatprep.mubr.f32.mxu0 0.0
  %6257 = vmatmul.mubr.f32.gmra.mxu0 %v6185
  %v6258 = vpop.f32.mrf.mxu0
  %v6259 = vadd.f32 0.0, %v6258
  %v6260 = vpop.f32.mrf.mxu0
  %6261 = vdwg.mxu0
  %6262 = vrot.lane.b32.xlu0 %v5577, 88
  %v6263 = vpop.permute.xlu0 %6262
  %v6266 = vsel %vm28, %v6176, 0
  %v6269 = vsel %vm28, %v6177, 0
  %6271 = vmatprep.subr.mxu0 0.0
  %6272 = vmatpush1.msra.mxu0 0.0
  %6273 = vmatprep.subr.mxu0 0.0
  %6274 = vmatpush1.msra.mxu0 0.0
  %6275 = vmatprep.subr.mxu0 0.0
  %6276 = vmatpush1.msra.mxu0 0.0
  %6277 = vmatprep.subr.mxu0 0.0
  %6278 = vmatpush1.msra.mxu0 0.0
  %6279 = vmatprep.subr.mxu0 0.0
  %6280 = vmatpush1.msra.mxu0 0.0
  %6281 = vmatprep.subr.mxu0 0.0
  %6282 = vmatpush1.msra.mxu0 0.0
  %6283 = vmatprep.subr.mxu0 0.0
  %6284 = vmatpush1.msra.mxu0 0.0
  %6285 = vmatprep.subr.mxu0 0.0
  %6286 = vmatpush1.msra.mxu0 0.0
  %6287 = vmatprep.subr.mxu0 0.0
  %6288 = vmatpush1.msra.mxu0 0.0
  %6289 = vmatprep.subr.mxu0 0.0
  %6290 = vmatpush1.msra.mxu0 0.0
  %6291 = vmatprep.subr.mxu0 0.0
  %6292 = vmatpush1.msra.mxu0 0.0
  %6293 = vmatprep.subr.mxu0 0.0
  %6294 = vmatpush1.msra.mxu0 0.0
  %6295 = vmatprep.subr.mxu0 0.0
  %6296 = vmatpush1.msra.mxu0 0.0
  %6297 = vmatprep.subr.mxu0 0.0
  %6298 = vmatpush1.msra.mxu0 0.0
  %6299 = vmatprep.subr.mxu0 0.0
  %6300 = vmatpush1.msra.mxu0 0.0
  %6301 = vmatprep.subr.mxu0 0.0
  %6302 = vmatpush1.msra.mxu0 %v6263
  %6303 = vmatprep.subr.mxu0 0.0
  %6304 = vmatpush2.msra.mxu0 0.0
  %6305 = vmatprep.subr.mxu0 0.0
  %6306 = vmatpush2.msra.mxu0 0.0
  %6307 = vmatprep.subr.mxu0 0.0
  %6308 = vmatpush2.msra.mxu0 0.0
  %6309 = vmatprep.subr.mxu0 0.0
  %6310 = vmatpush2.msra.mxu0 0.0
  %6311 = vmatprep.subr.mxu0 0.0
  %6312 = vmatpush2.msra.mxu0 0.0
  %6313 = vmatprep.subr.mxu0 0.0
  %6314 = vmatpush2.msra.mxu0 0.0
  %6315 = vmatprep.subr.mxu0 0.0
  %6316 = vmatpush2.msra.mxu0 0.0
  %6317 = vmatprep.subr.mxu0 0.0
  %6318 = vmatpush2.msra.mxu0 0.0
  %6319 = vmatprep.subr.mxu0 0.0
  %6320 = vmatpush2.msra.mxu0 0.0
  %6321 = vmatprep.subr.mxu0 0.0
  %6322 = vmatpush2.msra.mxu0 0.0
  %6323 = vmatprep.subr.mxu0 0.0
  %6324 = vmatpush2.msra.mxu0 0.0
  %6325 = vmatprep.subr.mxu0 0.0
  %6326 = vmatpush2.msra.mxu0 0.0
  %6327 = vmatprep.subr.mxu0 0.0
  %6328 = vmatpush2.msra.mxu0 0.0
  %6329 = vmatprep.subr.mxu0 0.0
  %6330 = vmatpush2.msra.mxu0 0.0
  %6331 = vmatprep.subr.mxu0 0.0
  %6332 = vmatpush2.msra.mxu0 0.0
  %6333 = vmatprep.subr.mxu0 0.0
  %6334 = vmatpush2.msra.mxu0 0.0
  %6335 = vmatprep.mubr.f32.mxu0 0.0
  %6336 = vmatmul.mubr.f32.gmra.mxu0 %v6266
  %v6337 = vpop.f32.mrf.mxu0
  %v6338 = vadd.f32 0.0, %v6337
  %v6339 = vpop.f32.mrf.mxu0
  %6340 = vmatprep.mubr.f32.mxu0 0.0
  %6341 = vmatmul.mubr.f32.gmra.mxu0 %v6269
  %v6342 = vpop.f32.mrf.mxu0
  %v6343 = vadd.f32 0.0, %v6342
  %v6344 = vpop.f32.mrf.mxu0
  %6345 = vdwg.mxu0
  %6346 = vrot.lane.b32.xlu0 %v5472, 112
  %v6347 = vpop.permute.xlu0 %6346
  %6348 = vrot.lane.b32.xlu0 %v5477, 112
  %v6349 = vpop.permute.xlu0 %6348
  %6350 = vrot.lane.b32.xlu0 %v5572, 112
  %v6351 = vpop.permute.xlu0 %6350
  %v6352 = vsel %vm28, %v6347, 0
  %v6354 = vsel %vm28, %v6349, 0
  %v6356 = vsel %vm28, %v6351, 0
  %6358 = vmatprep.subr.mxu0 0.0
  %6359 = vmatpush1.xpose.msra.mxu0 0.0
  %6360 = vmatprep.subr.mxu0 0.0
  %6361 = vmatpush1.xpose.msra.mxu0 0.0
  %6362 = vmatprep.subr.mxu0 0.0
  %6363 = vmatpush1.xpose.msra.mxu0 0.0
  %6364 = vmatprep.subr.mxu0 0.0
  %6365 = vmatpush1.xpose.msra.mxu0 0.0
  %6366 = vmatprep.subr.mxu0 0.0
  %6367 = vmatpush1.xpose.msra.mxu0 0.0
  %6368 = vmatprep.subr.mxu0 0.0
  %6369 = vmatpush1.xpose.msra.mxu0 0.0
  %6370 = vmatprep.subr.mxu0 0.0
  %6371 = vmatpush1.xpose.msra.mxu0 0.0
  %6372 = vmatprep.subr.mxu0 0.0
  %6373 = vmatpush1.xpose.msra.mxu0 0.0
  %6374 = vmatprep.subr.mxu0 0.0
  %6375 = vmatpush1.xpose.msra.mxu0 0.0
  %6376 = vmatprep.subr.mxu0 0.0
  %6377 = vmatpush1.xpose.msra.mxu0 0.0
  %6378 = vmatprep.subr.mxu0 0.0
  %6379 = vmatpush1.xpose.msra.mxu0 0.0
  %6380 = vmatprep.subr.mxu0 0.0
  %6381 = vmatpush1.xpose.msra.mxu0 0.0
  %6382 = vmatprep.subr.mxu0 0.0
  %6383 = vmatpush1.xpose.msra.mxu0 0.0
  %6384 = vmatprep.subr.mxu0 0.0
  %6385 = vmatpush1.xpose.msra.mxu0 0.0
  %6386 = vmatprep.subr.mxu0 0.0
  %6387 = vmatpush1.xpose.msra.mxu0 0.0
  %6388 = vmatprep.subr.mxu0 0.0
  %6389 = vmatpush1.xpose.msra.mxu0 %v6356
  %6390 = vmatprep.subr.mxu0 0.0
  %6391 = vmatpush2.xpose.msra.mxu0 0.0
  %6392 = vmatprep.subr.mxu0 0.0
  %6393 = vmatpush2.xpose.msra.mxu0 0.0
  %6394 = vmatprep.subr.mxu0 0.0
  %6395 = vmatpush2.xpose.msra.mxu0 0.0
  %6396 = vmatprep.subr.mxu0 0.0
  %6397 = vmatpush2.xpose.msra.mxu0 0.0
  %6398 = vmatprep.subr.mxu0 0.0
  %6399 = vmatpush2.xpose.msra.mxu0 0.0
  %6400 = vmatprep.subr.mxu0 0.0
  %6401 = vmatpush2.xpose.msra.mxu0 0.0
  %6402 = vmatprep.subr.mxu0 0.0
  %6403 = vmatpush2.xpose.msra.mxu0 0.0
  %6404 = vmatprep.subr.mxu0 0.0
  %6405 = vmatpush2.xpose.msra.mxu0 0.0
  %6406 = vmatprep.subr.mxu0 0.0
  %6407 = vmatpush2.xpose.msra.mxu0 0.0
  %6408 = vmatprep.subr.mxu0 0.0
  %6409 = vmatpush2.xpose.msra.mxu0 0.0
  %6410 = vmatprep.subr.mxu0 0.0
  %6411 = vmatpush2.xpose.msra.mxu0 0.0
  %6412 = vmatprep.subr.mxu0 0.0
  %6413 = vmatpush2.xpose.msra.mxu0 0.0
  %6414 = vmatprep.subr.mxu0 0.0
  %6415 = vmatpush2.xpose.msra.mxu0 0.0
  %6416 = vmatprep.subr.mxu0 0.0
  %6417 = vmatpush2.xpose.msra.mxu0 0.0
  %6418 = vmatprep.subr.mxu0 0.0
  %6419 = vmatpush2.xpose.msra.mxu0 0.0
  %6420 = vmatprep.subr.mxu0 0.0
  %6421 = vmatpush2.xpose.msra.mxu0 0.0
  %6422 = vmatprep.mubr.f32.mxu0 0.0
  %6423 = vmatmul.mubr.f32.gmra.mxu0 %v6352
  %v6424 = vpop.f32.mrf.mxu0
  %v6425 = vadd.f32 0.0, %v6424
  %v6426 = vpop.f32.mrf.mxu0
  %6427 = vmatprep.mubr.f32.mxu0 0.0
  %6428 = vmatmul.mubr.f32.gmra.mxu0 %v6354
  %v6429 = vpop.f32.mrf.mxu0
  %v6430 = vadd.f32 0.0, %v6429
  %v6431 = vpop.f32.mrf.mxu0
  %6432 = vdwg.mxu0
  %6433 = vrot.lane.b32.xlu0 %v5482, 112
  %v6434 = vpop.permute.xlu0 %6433
  %6435 = vrot.lane.b32.xlu0 %v5487, 112
  %v6436 = vpop.permute.xlu0 %6435
  %6437 = vrot.lane.b32.xlu0 %v5577, 112
  %v6438 = vpop.permute.xlu0 %6437
  %v6439 = vsel %vm28, %v6434, 0
  %v6441 = vsel %vm28, %v6436, 0
  %v6443 = vsel %vm28, %v6438, 0
  %6445 = vmatprep.subr.mxu0 0.0
  %6446 = vmatpush1.xpose.msra.mxu0 0.0
  %6447 = vmatprep.subr.mxu0 0.0
  %6448 = vmatpush1.xpose.msra.mxu0 0.0
  %6449 = vmatprep.subr.mxu0 0.0
  %6450 = vmatpush1.xpose.msra.mxu0 0.0
  %6451 = vmatprep.subr.mxu0 0.0
  %6452 = vmatpush1.xpose.msra.mxu0 0.0
  %6453 = vmatprep.subr.mxu0 0.0
  %6454 = vmatpush1.xpose.msra.mxu0 0.0
  %6455 = vmatprep.subr.mxu0 0.0
  %6456 = vmatpush1.xpose.msra.mxu0 0.0
  %6457 = vmatprep.subr.mxu0 0.0
  %6458 = vmatpush1.xpose.msra.mxu0 0.0
  %6459 = vmatprep.subr.mxu0 0.0
  %6460 = vmatpush1.xpose.msra.mxu0 0.0
  %6461 = vmatprep.subr.mxu0 0.0
  %6462 = vmatpush1.xpose.msra.mxu0 0.0
  %6463 = vmatprep.subr.mxu0 0.0
  %6464 = vmatpush1.xpose.msra.mxu0 0.0
  %6465 = vmatprep.subr.mxu0 0.0
  %6466 = vmatpush1.xpose.msra.mxu0 0.0
  %6467 = vmatprep.subr.mxu0 0.0
  %6468 = vmatpush1.xpose.msra.mxu0 0.0
  %6469 = vmatprep.subr.mxu0 0.0
  %6470 = vmatpush1.xpose.msra.mxu0 0.0
  %6471 = vmatprep.subr.mxu0 0.0
  %6472 = vmatpush1.xpose.msra.mxu0 0.0
  %6473 = vmatprep.subr.mxu0 0.0
  %6474 = vmatpush1.xpose.msra.mxu0 0.0
  %6475 = vmatprep.subr.mxu0 0.0
  %6476 = vmatpush1.xpose.msra.mxu0 %v6443
  %6477 = vmatprep.subr.mxu0 0.0
  %6478 = vmatpush2.xpose.msra.mxu0 0.0
  %6479 = vmatprep.subr.mxu0 0.0
  %6480 = vmatpush2.xpose.msra.mxu0 0.0
  %6481 = vmatprep.subr.mxu0 0.0
  %6482 = vmatpush2.xpose.msra.mxu0 0.0
  %6483 = vmatprep.subr.mxu0 0.0
  %6484 = vmatpush2.xpose.msra.mxu0 0.0
  %6485 = vmatprep.subr.mxu0 0.0
  %6486 = vmatpush2.xpose.msra.mxu0 0.0
  %6487 = vmatprep.subr.mxu0 0.0
  %6488 = vmatpush2.xpose.msra.mxu0 0.0
  %6489 = vmatprep.subr.mxu0 0.0
  %6490 = vmatpush2.xpose.msra.mxu0 0.0
  %6491 = vmatprep.subr.mxu0 0.0
  %6492 = vmatpush2.xpose.msra.mxu0 0.0
  %6493 = vmatprep.subr.mxu0 0.0
  %6494 = vmatpush2.xpose.msra.mxu0 0.0
  %6495 = vmatprep.subr.mxu0 0.0
  %6496 = vmatpush2.xpose.msra.mxu0 0.0
  %6497 = vmatprep.subr.mxu0 0.0
  %6498 = vmatpush2.xpose.msra.mxu0 0.0
  %6499 = vmatprep.subr.mxu0 0.0
  %6500 = vmatpush2.xpose.msra.mxu0 0.0
  %6501 = vmatprep.subr.mxu0 0.0
  %6502 = vmatpush2.xpose.msra.mxu0 0.0
  %6503 = vmatprep.subr.mxu0 0.0
  %6504 = vmatpush2.xpose.msra.mxu0 0.0
  %6505 = vmatprep.subr.mxu0 0.0
  %6506 = vmatpush2.xpose.msra.mxu0 0.0
  %6507 = vmatprep.subr.mxu0 0.0
  %6508 = vmatpush2.xpose.msra.mxu0 0.0
  %6509 = vmatprep.mubr.f32.mxu0 0.0
  %6510 = vmatmul.mubr.f32.gmra.mxu0 %v6439
  %v6511 = vpop.f32.mrf.mxu0
  %v6512 = vadd.f32 0.0, %v6511
  %v6513 = vpop.f32.mrf.mxu0
  %6514 = vmatprep.mubr.f32.mxu0 0.0
  %6515 = vmatmul.mubr.f32.gmra.mxu0 %v6441
  %v6516 = vpop.f32.mrf.mxu0
  %v6517 = vadd.f32 0.0, %v6516
  %v6518 = vpop.f32.mrf.mxu0
  %6519 = vdwg.mxu0
  %v6520 = vsel %vm28, %v6425, -inf
  %6521 = vmax.xlane.f32.xlu0 %v6520
  %v6522 = vpop.xlane.xlu0 %6521
  %v6523 = vsel %vm28, %v6430, -inf
  %6524 = vmax.xlane.f32.xlu0 %v6523
  %v6525 = vpop.xlane.xlu0 %6524
  %v6526 = vsel %vm28, %v6512, -inf
  %6527 = vmax.xlane.f32.xlu0 %v6526
  %v6528 = vpop.xlane.xlu0 %6527
  %v6529 = vsel %vm28, %v6517, -inf
  %6530 = vmax.xlane.f32.xlu0 %v6529
  %v6531 = vpop.xlane.xlu0 %6530
  %v6532 = vsub.f32 %v6425, %v6522
  %v6533 = vsub.f32 %v6430, %v6525
  %v6534 = vsub.f32 %v6512, %v6528
  %v6535 = vsub.f32 %v6517, %v6531
  %v6536 = vmul.f32 %v6532, 1.442695
  %v6537 = vpow.pop %v6536
  %v6538 = vmul.f32 %v6533, 1.442695
  %v6539 = vpow.pop %v6538
  %v6540 = vmul.f32 %v6534, 1.442695
  %v6541 = vpow.pop %v6540
  %v6542 = vmul.f32 %v6535, 1.442695
  %v6543 = vpow.pop %v6542
  %v6544 = vsel %vm28, %v6537, 0.0
  %6545 = vadd.xlane.f32.xlu0 %v6544
  %v6546 = vpop.xlane.xlu0 %6545
  %v6547 = vsel %vm28, %v6539, 0.0
  %6548 = vadd.xlane.f32.xlu0 %v6547
  %v6549 = vpop.xlane.xlu0 %6548
  %v6550 = vsel %vm28, %v6541, 0.0
  %6551 = vadd.xlane.f32.xlu0 %v6550
  %v6552 = vpop.xlane.xlu0 %6551
  %v6553 = vsel %vm28, %v6543, 0.0
  %6554 = vadd.xlane.f32.xlu0 %v6553
  %v6555 = vpop.xlane.xlu0 %6554
  %v6556 = vrcp.pop %v6546
  %v6557 = vrcp.pop %v6549
  %v6558 = vrcp.pop %v6552
  %v6559 = vrcp.pop %v6555
  %v6560 = vmul.f32 %v6537, %v6556
  %v6561 = vmul.f32 %v6539, %v6557
  %v6562 = vmul.f32 %v6541, %v6558
  %v6563 = vmul.f32 %v6543, %v6559
  %6564 = vrot.lane.b32.xlu0 %v5572, 80
  %v6565 = vpop.permute.xlu0 %6564
  %v6568 = vsel %vm28, %v6560, 0
  %v6571 = vsel %vm28, %v6561, 0
  %6573 = vmatprep.subr.mxu0 0.0
  %6574 = vmatpush1.msra.mxu0 0.0
  %6575 = vmatprep.subr.mxu0 0.0
  %6576 = vmatpush1.msra.mxu0 0.0
  %6577 = vmatprep.subr.mxu0 0.0
  %6578 = vmatpush1.msra.mxu0 0.0
  %6579 = vmatprep.subr.mxu0 0.0
  %6580 = vmatpush1.msra.mxu0 0.0
  %6581 = vmatprep.subr.mxu0 0.0
  %6582 = vmatpush1.msra.mxu0 0.0
  %6583 = vmatprep.subr.mxu0 0.0
  %6584 = vmatpush1.msra.mxu0 0.0
  %6585 = vmatprep.subr.mxu0 0.0
  %6586 = vmatpush1.msra.mxu0 0.0
  %6587 = vmatprep.subr.mxu0 0.0
  %6588 = vmatpush1.msra.mxu0 0.0
  %6589 = vmatprep.subr.mxu0 0.0
  %6590 = vmatpush1.msra.mxu0 0.0
  %6591 = vmatprep.subr.mxu0 0.0
  %6592 = vmatpush1.msra.mxu0 0.0
  %6593 = vmatprep.subr.mxu0 0.0
  %6594 = vmatpush1.msra.mxu0 0.0
  %6595 = vmatprep.subr.mxu0 0.0
  %6596 = vmatpush1.msra.mxu0 0.0
  %6597 = vmatprep.subr.mxu0 0.0
  %6598 = vmatpush1.msra.mxu0 0.0
  %6599 = vmatprep.subr.mxu0 0.0
  %6600 = vmatpush1.msra.mxu0 0.0
  %6601 = vmatprep.subr.mxu0 0.0
  %6602 = vmatpush1.msra.mxu0 0.0
  %6603 = vmatprep.subr.mxu0 0.0
  %6604 = vmatpush1.msra.mxu0 %v6565
  %6605 = vmatprep.subr.mxu0 0.0
  %6606 = vmatpush2.msra.mxu0 0.0
  %6607 = vmatprep.subr.mxu0 0.0
  %6608 = vmatpush2.msra.mxu0 0.0
  %6609 = vmatprep.subr.mxu0 0.0
  %6610 = vmatpush2.msra.mxu0 0.0
  %6611 = vmatprep.subr.mxu0 0.0
  %6612 = vmatpush2.msra.mxu0 0.0
  %6613 = vmatprep.subr.mxu0 0.0
  %6614 = vmatpush2.msra.mxu0 0.0
  %6615 = vmatprep.subr.mxu0 0.0
  %6616 = vmatpush2.msra.mxu0 0.0
  %6617 = vmatprep.subr.mxu0 0.0
  %6618 = vmatpush2.msra.mxu0 0.0
  %6619 = vmatprep.subr.mxu0 0.0
  %6620 = vmatpush2.msra.mxu0 0.0
  %6621 = vmatprep.subr.mxu0 0.0
  %6622 = vmatpush2.msra.mxu0 0.0
  %6623 = vmatprep.subr.mxu0 0.0
  %6624 = vmatpush2.msra.mxu0 0.0
  %6625 = vmatprep.subr.mxu0 0.0
  %6626 = vmatpush2.msra.mxu0 0.0
  %6627 = vmatprep.subr.mxu0 0.0
  %6628 = vmatpush2.msra.mxu0 0.0
  %6629 = vmatprep.subr.mxu0 0.0
  %6630 = vmatpush2.msra.mxu0 0.0
  %6631 = vmatprep.subr.mxu0 0.0
  %6632 = vmatpush2.msra.mxu0 0.0
  %6633 = vmatprep.subr.mxu0 0.0
  %6634 = vmatpush2.msra.mxu0 0.0
  %6635 = vmatprep.subr.mxu0 0.0
  %6636 = vmatpush2.msra.mxu0 0.0
  %6637 = vmatprep.mubr.f32.mxu0 0.0
  %6638 = vmatmul.mubr.f32.gmra.mxu0 %v6568
  %v6639 = vpop.f32.mrf.mxu0
  %v6640 = vadd.f32 0.0, %v6639
  %v6641 = vpop.f32.mrf.mxu0
  %6642 = vmatprep.mubr.f32.mxu0 0.0
  %6643 = vmatmul.mubr.f32.gmra.mxu0 %v6571
  %v6644 = vpop.f32.mrf.mxu0
  %v6645 = vadd.f32 0.0, %v6644
  %v6646 = vpop.f32.mrf.mxu0
  %6647 = vdwg.mxu0
  %6648 = vrot.lane.b32.xlu0 %v5577, 80
  %v6649 = vpop.permute.xlu0 %6648
  %v6652 = vsel %vm28, %v6562, 0
  %v6655 = vsel %vm28, %v6563, 0
  %6657 = vmatprep.subr.mxu0 0.0
  %6658 = vmatpush1.msra.mxu0 0.0
  %6659 = vmatprep.subr.mxu0 0.0
  %6660 = vmatpush1.msra.mxu0 0.0
  %6661 = vmatprep.subr.mxu0 0.0
  %6662 = vmatpush1.msra.mxu0 0.0
  %6663 = vmatprep.subr.mxu0 0.0
  %6664 = vmatpush1.msra.mxu0 0.0
  %6665 = vmatprep.subr.mxu0 0.0
  %6666 = vmatpush1.msra.mxu0 0.0
  %6667 = vmatprep.subr.mxu0 0.0
  %6668 = vmatpush1.msra.mxu0 0.0
  %6669 = vmatprep.subr.mxu0 0.0
  %6670 = vmatpush1.msra.mxu0 0.0
  %6671 = vmatprep.subr.mxu0 0.0
  %6672 = vmatpush1.msra.mxu0 0.0
  %6673 = vmatprep.subr.mxu0 0.0
  %6674 = vmatpush1.msra.mxu0 0.0
  %6675 = vmatprep.subr.mxu0 0.0
  %6676 = vmatpush1.msra.mxu0 0.0
  %6677 = vmatprep.subr.mxu0 0.0
  %6678 = vmatpush1.msra.mxu0 0.0
  %6679 = vmatprep.subr.mxu0 0.0
  %6680 = vmatpush1.msra.mxu0 0.0
  %6681 = vmatprep.subr.mxu0 0.0
  %6682 = vmatpush1.msra.mxu0 0.0
  %6683 = vmatprep.subr.mxu0 0.0
  %6684 = vmatpush1.msra.mxu0 0.0
  %6685 = vmatprep.subr.mxu0 0.0
  %6686 = vmatpush1.msra.mxu0 0.0
  %6687 = vmatprep.subr.mxu0 0.0
  %6688 = vmatpush1.msra.mxu0 %v6649
  %6689 = vmatprep.subr.mxu0 0.0
  %6690 = vmatpush2.msra.mxu0 0.0
  %6691 = vmatprep.subr.mxu0 0.0
  %6692 = vmatpush2.msra.mxu0 0.0
  %6693 = vmatprep.subr.mxu0 0.0
  %6694 = vmatpush2.msra.mxu0 0.0
  %6695 = vmatprep.subr.mxu0 0.0
  %6696 = vmatpush2.msra.mxu0 0.0
  %6697 = vmatprep.subr.mxu0 0.0
  %6698 = vmatpush2.msra.mxu0 0.0
  %6699 = vmatprep.subr.mxu0 0.0
  %6700 = vmatpush2.msra.mxu0 0.0
  %6701 = vmatprep.subr.mxu0 0.0
  %6702 = vmatpush2.msra.mxu0 0.0
  %6703 = vmatprep.subr.mxu0 0.0
  %6704 = vmatpush2.msra.mxu0 0.0
  %6705 = vmatprep.subr.mxu0 0.0
  %6706 = vmatpush2.msra.mxu0 0.0
  %6707 = vmatprep.subr.mxu0 0.0
  %6708 = vmatpush2.msra.mxu0 0.0
  %6709 = vmatprep.subr.mxu0 0.0
  %6710 = vmatpush2.msra.mxu0 0.0
  %6711 = vmatprep.subr.mxu0 0.0
  %6712 = vmatpush2.msra.mxu0 0.0
  %6713 = vmatprep.subr.mxu0 0.0
  %6714 = vmatpush2.msra.mxu0 0.0
  %6715 = vmatprep.subr.mxu0 0.0
  %6716 = vmatpush2.msra.mxu0 0.0
  %6717 = vmatprep.subr.mxu0 0.0
  %6718 = vmatpush2.msra.mxu0 0.0
  %6719 = vmatprep.subr.mxu0 0.0
  %6720 = vmatpush2.msra.mxu0 0.0
  %6721 = vmatprep.mubr.f32.mxu0 0.0
  %6722 = vmatmul.mubr.f32.gmra.mxu0 %v6652
  %v6723 = vpop.f32.mrf.mxu0
  %v6724 = vadd.f32 0.0, %v6723
  %v6725 = vpop.f32.mrf.mxu0
  %6726 = vmatprep.mubr.f32.mxu0 0.0
  %6727 = vmatmul.mubr.f32.gmra.mxu0 %v6655
  %v6728 = vpop.f32.mrf.mxu0
  %v6729 = vadd.f32 0.0, %v6728
  %v6730 = vpop.f32.mrf.mxu0
  %6731 = vdwg.mxu0
  %6732 = vrot.lane.b32.xlu0 %v5472, 104
  %v6733 = vpop.permute.xlu0 %6732
  %6734 = vrot.lane.b32.xlu0 %v5477, 104
  %v6735 = vpop.permute.xlu0 %6734
  %6736 = vrot.lane.b32.xlu0 %v5572, 104
  %v6737 = vpop.permute.xlu0 %6736
  %v6738 = vsel %vm28, %v6733, 0
  %v6740 = vsel %vm28, %v6735, 0
  %v6742 = vsel %vm28, %v6737, 0
  %6744 = vmatprep.subr.mxu0 0.0
  %6745 = vmatpush1.xpose.msra.mxu0 0.0
  %6746 = vmatprep.subr.mxu0 0.0
  %6747 = vmatpush1.xpose.msra.mxu0 0.0
  %6748 = vmatprep.subr.mxu0 0.0
  %6749 = vmatpush1.xpose.msra.mxu0 0.0
  %6750 = vmatprep.subr.mxu0 0.0
  %6751 = vmatpush1.xpose.msra.mxu0 0.0
  %6752 = vmatprep.subr.mxu0 0.0
  %6753 = vmatpush1.xpose.msra.mxu0 0.0
  %6754 = vmatprep.subr.mxu0 0.0
  %6755 = vmatpush1.xpose.msra.mxu0 0.0
  %6756 = vmatprep.subr.mxu0 0.0
  %6757 = vmatpush1.xpose.msra.mxu0 0.0
  %6758 = vmatprep.subr.mxu0 0.0
  %6759 = vmatpush1.xpose.msra.mxu0 0.0
  %6760 = vmatprep.subr.mxu0 0.0
  %6761 = vmatpush1.xpose.msra.mxu0 0.0
  %6762 = vmatprep.subr.mxu0 0.0
  %6763 = vmatpush1.xpose.msra.mxu0 0.0
  %6764 = vmatprep.subr.mxu0 0.0
  %6765 = vmatpush1.xpose.msra.mxu0 0.0
  %6766 = vmatprep.subr.mxu0 0.0
  %6767 = vmatpush1.xpose.msra.mxu0 0.0
  %6768 = vmatprep.subr.mxu0 0.0
  %6769 = vmatpush1.xpose.msra.mxu0 0.0
  %6770 = vmatprep.subr.mxu0 0.0
  %6771 = vmatpush1.xpose.msra.mxu0 0.0
  %6772 = vmatprep.subr.mxu0 0.0
  %6773 = vmatpush1.xpose.msra.mxu0 0.0
  %6774 = vmatprep.subr.mxu0 0.0
  %6775 = vmatpush1.xpose.msra.mxu0 %v6742
  %6776 = vmatprep.subr.mxu0 0.0
  %6777 = vmatpush2.xpose.msra.mxu0 0.0
  %6778 = vmatprep.subr.mxu0 0.0
  %6779 = vmatpush2.xpose.msra.mxu0 0.0
  %6780 = vmatprep.subr.mxu0 0.0
  %6781 = vmatpush2.xpose.msra.mxu0 0.0
  %6782 = vmatprep.subr.mxu0 0.0
  %6783 = vmatpush2.xpose.msra.mxu0 0.0
  %6784 = vmatprep.subr.mxu0 0.0
  %6785 = vmatpush2.xpose.msra.mxu0 0.0
  %6786 = vmatprep.subr.mxu0 0.0
  %6787 = vmatpush2.xpose.msra.mxu0 0.0
  %6788 = vmatprep.subr.mxu0 0.0
  %6789 = vmatpush2.xpose.msra.mxu0 0.0
  %6790 = vmatprep.subr.mxu0 0.0
  %6791 = vmatpush2.xpose.msra.mxu0 0.0
  %6792 = vmatprep.subr.mxu0 0.0
  %6793 = vmatpush2.xpose.msra.mxu0 0.0
  %6794 = vmatprep.subr.mxu0 0.0
  %6795 = vmatpush2.xpose.msra.mxu0 0.0
  %6796 = vmatprep.subr.mxu0 0.0
  %6797 = vmatpush2.xpose.msra.mxu0 0.0
  %6798 = vmatprep.subr.mxu0 0.0
  %6799 = vmatpush2.xpose.msra.mxu0 0.0
  %6800 = vmatprep.subr.mxu0 0.0
  %6801 = vmatpush2.xpose.msra.mxu0 0.0
  %6802 = vmatprep.subr.mxu0 0.0
  %6803 = vmatpush2.xpose.msra.mxu0 0.0
  %6804 = vmatprep.subr.mxu0 0.0
  %6805 = vmatpush2.xpose.msra.mxu0 0.0
  %6806 = vmatprep.subr.mxu0 0.0
  %6807 = vmatpush2.xpose.msra.mxu0 0.0
  %6808 = vmatprep.mubr.f32.mxu0 0.0
  %6809 = vmatmul.mubr.f32.gmra.mxu0 %v6738
  %v6810 = vpop.f32.mrf.mxu0
  %v6811 = vadd.f32 0.0, %v6810
  %v6812 = vpop.f32.mrf.mxu0
  %6813 = vmatprep.mubr.f32.mxu0 0.0
  %6814 = vmatmul.mubr.f32.gmra.mxu0 %v6740
  %v6815 = vpop.f32.mrf.mxu0
  %v6816 = vadd.f32 0.0, %v6815
  %v6817 = vpop.f32.mrf.mxu0
  %6818 = vdwg.mxu0
  %6819 = vrot.lane.b32.xlu0 %v5482, 104
  %v6820 = vpop.permute.xlu0 %6819
  %6821 = vrot.lane.b32.xlu0 %v5487, 104
  %v6822 = vpop.permute.xlu0 %6821
  %6823 = vrot.lane.b32.xlu0 %v5577, 104
  %v6824 = vpop.permute.xlu0 %6823
  %v6825 = vsel %vm28, %v6820, 0
  %v6827 = vsel %vm28, %v6822, 0
  %v6829 = vsel %vm28, %v6824, 0
  %6831 = vmatprep.subr.mxu0 0.0
  %6832 = vmatpush1.xpose.msra.mxu0 0.0
  %6833 = vmatprep.subr.mxu0 0.0
  %6834 = vmatpush1.xpose.msra.mxu0 0.0
  %6835 = vmatprep.subr.mxu0 0.0
  %6836 = vmatpush1.xpose.msra.mxu0 0.0
  %6837 = vmatprep.subr.mxu0 0.0
  %6838 = vmatpush1.xpose.msra.mxu0 0.0
  %6839 = vmatprep.subr.mxu0 0.0
  %6840 = vmatpush1.xpose.msra.mxu0 0.0
  %6841 = vmatprep.subr.mxu0 0.0
  %6842 = vmatpush1.xpose.msra.mxu0 0.0
  %6843 = vmatprep.subr.mxu0 0.0
  %6844 = vmatpush1.xpose.msra.mxu0 0.0
  %6845 = vmatprep.subr.mxu0 0.0
  %6846 = vmatpush1.xpose.msra.mxu0 0.0
  %6847 = vmatprep.subr.mxu0 0.0
  %6848 = vmatpush1.xpose.msra.mxu0 0.0
  %6849 = vmatprep.subr.mxu0 0.0
  %6850 = vmatpush1.xpose.msra.mxu0 0.0
  %6851 = vmatprep.subr.mxu0 0.0
  %6852 = vmatpush1.xpose.msra.mxu0 0.0
  %6853 = vmatprep.subr.mxu0 0.0
  %6854 = vmatpush1.xpose.msra.mxu0 0.0
  %6855 = vmatprep.subr.mxu0 0.0
  %6856 = vmatpush1.xpose.msra.mxu0 0.0
  %6857 = vmatprep.subr.mxu0 0.0
  %6858 = vmatpush1.xpose.msra.mxu0 0.0
  %6859 = vmatprep.subr.mxu0 0.0
  %6860 = vmatpush1.xpose.msra.mxu0 0.0
  %6861 = vmatprep.subr.mxu0 0.0
  %6862 = vmatpush1.xpose.msra.mxu0 %v6829
  %6863 = vmatprep.subr.mxu0 0.0
  %6864 = vmatpush2.xpose.msra.mxu0 0.0
  %6865 = vmatprep.subr.mxu0 0.0
  %6866 = vmatpush2.xpose.msra.mxu0 0.0
  %6867 = vmatprep.subr.mxu0 0.0
  %6868 = vmatpush2.xpose.msra.mxu0 0.0
  %6869 = vmatprep.subr.mxu0 0.0
  %6870 = vmatpush2.xpose.msra.mxu0 0.0
  %6871 = vmatprep.subr.mxu0 0.0
  %6872 = vmatpush2.xpose.msra.mxu0 0.0
  %6873 = vmatprep.subr.mxu0 0.0
  %6874 = vmatpush2.xpose.msra.mxu0 0.0
  %6875 = vmatprep.subr.mxu0 0.0
  %6876 = vmatpush2.xpose.msra.mxu0 0.0
  %6877 = vmatprep.subr.mxu0 0.0
  %6878 = vmatpush2.xpose.msra.mxu0 0.0
  %6879 = vmatprep.subr.mxu0 0.0
  %6880 = vmatpush2.xpose.msra.mxu0 0.0
  %6881 = vmatprep.subr.mxu0 0.0
  %6882 = vmatpush2.xpose.msra.mxu0 0.0
  %6883 = vmatprep.subr.mxu0 0.0
  %6884 = vmatpush2.xpose.msra.mxu0 0.0
  %6885 = vmatprep.subr.mxu0 0.0
  %6886 = vmatpush2.xpose.msra.mxu0 0.0
  %6887 = vmatprep.subr.mxu0 0.0
  %6888 = vmatpush2.xpose.msra.mxu0 0.0
  %6889 = vmatprep.subr.mxu0 0.0
  %6890 = vmatpush2.xpose.msra.mxu0 0.0
  %6891 = vmatprep.subr.mxu0 0.0
  %6892 = vmatpush2.xpose.msra.mxu0 0.0
  %6893 = vmatprep.subr.mxu0 0.0
  %6894 = vmatpush2.xpose.msra.mxu0 0.0
  %6895 = vmatprep.mubr.f32.mxu0 0.0
  %6896 = vmatmul.mubr.f32.gmra.mxu0 %v6825
  %v6897 = vpop.f32.mrf.mxu0
  %v6898 = vadd.f32 0.0, %v6897
  %v6899 = vpop.f32.mrf.mxu0
  %6900 = vmatprep.mubr.f32.mxu0 0.0
  %6901 = vmatmul.mubr.f32.gmra.mxu0 %v6827
  %v6902 = vpop.f32.mrf.mxu0
  %v6903 = vadd.f32 0.0, %v6902
  %v6904 = vpop.f32.mrf.mxu0
  %6905 = vdwg.mxu0
  %v6906 = vsel %vm28, %v6811, -inf
  %6907 = vmax.xlane.f32.xlu0 %v6906
  %v6908 = vpop.xlane.xlu0 %6907
  %v6909 = vsel %vm28, %v6816, -inf
  %6910 = vmax.xlane.f32.xlu0 %v6909
  %v6911 = vpop.xlane.xlu0 %6910
  %v6912 = vsel %vm28, %v6898, -inf
  %6913 = vmax.xlane.f32.xlu0 %v6912
  %v6914 = vpop.xlane.xlu0 %6913
  %v6915 = vsel %vm28, %v6903, -inf
  %6916 = vmax.xlane.f32.xlu0 %v6915
  %v6917 = vpop.xlane.xlu0 %6916
  %v6918 = vsub.f32 %v6811, %v6908
  %v6919 = vsub.f32 %v6816, %v6911
  %v6920 = vsub.f32 %v6898, %v6914
  %v6921 = vsub.f32 %v6903, %v6917
  %v6922 = vmul.f32 %v6918, 1.442695
  %v6923 = vpow.pop %v6922
  %v6924 = vmul.f32 %v6919, 1.442695
  %v6925 = vpow.pop %v6924
  %v6926 = vmul.f32 %v6920, 1.442695
  %v6927 = vpow.pop %v6926
  %v6928 = vmul.f32 %v6921, 1.442695
  %v6929 = vpow.pop %v6928
  %v6930 = vsel %vm28, %v6923, 0.0
  %6931 = vadd.xlane.f32.xlu0 %v6930
  %v6932 = vpop.xlane.xlu0 %6931
  %v6933 = vsel %vm28, %v6925, 0.0
  %6934 = vadd.xlane.f32.xlu0 %v6933
  %v6935 = vpop.xlane.xlu0 %6934
  %v6936 = vsel %vm28, %v6927, 0.0
  %6937 = vadd.xlane.f32.xlu0 %v6936
  %v6938 = vpop.xlane.xlu0 %6937
  %v6939 = vsel %vm28, %v6929, 0.0
  %6940 = vadd.xlane.f32.xlu0 %v6939
  %v6941 = vpop.xlane.xlu0 %6940
  %v6942 = vrcp.pop %v6932
  %v6943 = vrcp.pop %v6935
  %v6944 = vrcp.pop %v6938
  %v6945 = vrcp.pop %v6941
  %v6946 = vmul.f32 %v6923, %v6942
  %v6947 = vmul.f32 %v6925, %v6943
  %v6948 = vmul.f32 %v6927, %v6944
  %v6949 = vmul.f32 %v6929, %v6945
  %6950 = vrot.lane.b32.xlu0 %v5572, 72
  %v6951 = vpop.permute.xlu0 %6950
  %v6954 = vsel %vm28, %v6946, 0
  %v6957 = vsel %vm28, %v6947, 0
  %6959 = vmatprep.subr.mxu0 0.0
  %6960 = vmatpush1.msra.mxu0 0.0
  %6961 = vmatprep.subr.mxu0 0.0
  %6962 = vmatpush1.msra.mxu0 0.0
  %6963 = vmatprep.subr.mxu0 0.0
  %6964 = vmatpush1.msra.mxu0 0.0
  %6965 = vmatprep.subr.mxu0 0.0
  %6966 = vmatpush1.msra.mxu0 0.0
  %6967 = vmatprep.subr.mxu0 0.0
  %6968 = vmatpush1.msra.mxu0 0.0
  %6969 = vmatprep.subr.mxu0 0.0
  %6970 = vmatpush1.msra.mxu0 0.0
  %6971 = vmatprep.subr.mxu0 0.0
  %6972 = vmatpush1.msra.mxu0 0.0
  %6973 = vmatprep.subr.mxu0 0.0
  %6974 = vmatpush1.msra.mxu0 0.0
  %6975 = vmatprep.subr.mxu0 0.0
  %6976 = vmatpush1.msra.mxu0 0.0
  %6977 = vmatprep.subr.mxu0 0.0
  %6978 = vmatpush1.msra.mxu0 0.0
  %6979 = vmatprep.subr.mxu0 0.0
  %6980 = vmatpush1.msra.mxu0 0.0
  %6981 = vmatprep.subr.mxu0 0.0
  %6982 = vmatpush1.msra.mxu0 0.0
  %6983 = vmatprep.subr.mxu0 0.0
  %6984 = vmatpush1.msra.mxu0 0.0
  %6985 = vmatprep.subr.mxu0 0.0
  %6986 = vmatpush1.msra.mxu0 0.0
  %6987 = vmatprep.subr.mxu0 0.0
  %6988 = vmatpush1.msra.mxu0 0.0
  %6989 = vmatprep.subr.mxu0 0.0
  %6990 = vmatpush1.msra.mxu0 %v6951
  %6991 = vmatprep.subr.mxu0 0.0
  %6992 = vmatpush2.msra.mxu0 0.0
  %6993 = vmatprep.subr.mxu0 0.0
  %6994 = vmatpush2.msra.mxu0 0.0
  %6995 = vmatprep.subr.mxu0 0.0
  %6996 = vmatpush2.msra.mxu0 0.0
  %6997 = vmatprep.subr.mxu0 0.0
  %6998 = vmatpush2.msra.mxu0 0.0
  %6999 = vmatprep.subr.mxu0 0.0
  %7000 = vmatpush2.msra.mxu0 0.0
  %7001 = vmatprep.subr.mxu0 0.0
  %7002 = vmatpush2.msra.mxu0 0.0
  %7003 = vmatprep.subr.mxu0 0.0
  %7004 = vmatpush2.msra.mxu0 0.0
  %7005 = vmatprep.subr.mxu0 0.0
  %7006 = vmatpush2.msra.mxu0 0.0
  %7007 = vmatprep.subr.mxu0 0.0
  %7008 = vmatpush2.msra.mxu0 0.0
  %7009 = vmatprep.subr.mxu0 0.0
  %7010 = vmatpush2.msra.mxu0 0.0
  %7011 = vmatprep.subr.mxu0 0.0
  %7012 = vmatpush2.msra.mxu0 0.0
  %7013 = vmatprep.subr.mxu0 0.0
  %7014 = vmatpush2.msra.mxu0 0.0
  %7015 = vmatprep.subr.mxu0 0.0
  %7016 = vmatpush2.msra.mxu0 0.0
  %7017 = vmatprep.subr.mxu0 0.0
  %7018 = vmatpush2.msra.mxu0 0.0
  %7019 = vmatprep.subr.mxu0 0.0
  %7020 = vmatpush2.msra.mxu0 0.0
  %7021 = vmatprep.subr.mxu0 0.0
  %7022 = vmatpush2.msra.mxu0 0.0
  %7023 = vmatprep.mubr.f32.mxu0 0.0
  %7024 = vmatmul.mubr.f32.gmra.mxu0 %v6954
  %v7025 = vpop.f32.mrf.mxu0
  %v7026 = vadd.f32 0.0, %v7025
  %v7027 = vpop.f32.mrf.mxu0
  %7028 = vmatprep.mubr.f32.mxu0 0.0
  %7029 = vmatmul.mubr.f32.gmra.mxu0 %v6957
  %v7030 = vpop.f32.mrf.mxu0
  %v7031 = vadd.f32 0.0, %v7030
  %v7032 = vpop.f32.mrf.mxu0
  %7033 = vdwg.mxu0
  %7034 = vrot.lane.b32.xlu0 %v5577, 72
  %v7035 = vpop.permute.xlu0 %7034
  %v7038 = vsel %vm28, %v6948, 0
  %v7041 = vsel %vm28, %v6949, 0
  %7043 = vmatprep.subr.mxu0 0.0
  %7044 = vmatpush1.msra.mxu0 0.0
  %7045 = vmatprep.subr.mxu0 0.0
  %7046 = vmatpush1.msra.mxu0 0.0
  %7047 = vmatprep.subr.mxu0 0.0
  %7048 = vmatpush1.msra.mxu0 0.0
  %7049 = vmatprep.subr.mxu0 0.0
  %7050 = vmatpush1.msra.mxu0 0.0
  %7051 = vmatprep.subr.mxu0 0.0
  %7052 = vmatpush1.msra.mxu0 0.0
  %7053 = vmatprep.subr.mxu0 0.0
  %7054 = vmatpush1.msra.mxu0 0.0
  %7055 = vmatprep.subr.mxu0 0.0
  %7056 = vmatpush1.msra.mxu0 0.0
  %7057 = vmatprep.subr.mxu0 0.0
  %7058 = vmatpush1.msra.mxu0 0.0
  %7059 = vmatprep.subr.mxu0 0.0
  %7060 = vmatpush1.msra.mxu0 0.0
  %7061 = vmatprep.subr.mxu0 0.0
  %7062 = vmatpush1.msra.mxu0 0.0
  %7063 = vmatprep.subr.mxu0 0.0
  %7064 = vmatpush1.msra.mxu0 0.0
  %7065 = vmatprep.subr.mxu0 0.0
  %7066 = vmatpush1.msra.mxu0 0.0
  %7067 = vmatprep.subr.mxu0 0.0
  %7068 = vmatpush1.msra.mxu0 0.0
  %7069 = vmatprep.subr.mxu0 0.0
  %7070 = vmatpush1.msra.mxu0 0.0
  %7071 = vmatprep.subr.mxu0 0.0
  %7072 = vmatpush1.msra.mxu0 0.0
  %7073 = vmatprep.subr.mxu0 0.0
  %7074 = vmatpush1.msra.mxu0 %v7035
  %7075 = vmatprep.subr.mxu0 0.0
  %7076 = vmatpush2.msra.mxu0 0.0
  %7077 = vmatprep.subr.mxu0 0.0
  %7078 = vmatpush2.msra.mxu0 0.0
  %7079 = vmatprep.subr.mxu0 0.0
  %7080 = vmatpush2.msra.mxu0 0.0
  %7081 = vmatprep.subr.mxu0 0.0
  %7082 = vmatpush2.msra.mxu0 0.0
  %7083 = vmatprep.subr.mxu0 0.0
  %7084 = vmatpush2.msra.mxu0 0.0
  %7085 = vmatprep.subr.mxu0 0.0
  %7086 = vmatpush2.msra.mxu0 0.0
  %7087 = vmatprep.subr.mxu0 0.0
  %7088 = vmatpush2.msra.mxu0 0.0
  %7089 = vmatprep.subr.mxu0 0.0
  %7090 = vmatpush2.msra.mxu0 0.0
  %7091 = vmatprep.subr.mxu0 0.0
  %7092 = vmatpush2.msra.mxu0 0.0
  %7093 = vmatprep.subr.mxu0 0.0
  %7094 = vmatpush2.msra.mxu0 0.0
  %7095 = vmatprep.subr.mxu0 0.0
  %7096 = vmatpush2.msra.mxu0 0.0
  %7097 = vmatprep.subr.mxu0 0.0
  %7098 = vmatpush2.msra.mxu0 0.0
  %7099 = vmatprep.subr.mxu0 0.0
  %7100 = vmatpush2.msra.mxu0 0.0
  %7101 = vmatprep.subr.mxu0 0.0
  %7102 = vmatpush2.msra.mxu0 0.0
  %7103 = vmatprep.subr.mxu0 0.0
  %7104 = vmatpush2.msra.mxu0 0.0
  %7105 = vmatprep.subr.mxu0 0.0
  %7106 = vmatpush2.msra.mxu0 0.0
  %7107 = vmatprep.mubr.f32.mxu0 0.0
  %7108 = vmatmul.mubr.f32.gmra.mxu0 %v7038
  %v7109 = vpop.f32.mrf.mxu0
  %v7110 = vadd.f32 0.0, %v7109
  %v7111 = vpop.f32.mrf.mxu0
  %7112 = vmatprep.mubr.f32.mxu0 0.0
  %7113 = vmatmul.mubr.f32.gmra.mxu0 %v7041
  %v7114 = vpop.f32.mrf.mxu0
  %v7115 = vadd.f32 0.0, %v7114
  %v7116 = vpop.f32.mrf.mxu0
  %7117 = vdwg.mxu0
  %7122 = vrot.lane.b32.xlu0 %v6254, 8
  %v7123 = vpop.permute.xlu0 %7122
  %7124 = vrot.lane.b32.xlu0 %v6259, 8
  %v7125 = vpop.permute.xlu0 %7124
  %7126 = vrot.lane.b32.xlu0 %v6338, 8
  %v7127 = vpop.permute.xlu0 %7126
  %7128 = vrot.lane.b32.xlu0 %v6343, 8
  %v7129 = vpop.permute.xlu0 %7128
  %7138 = vrot.lane.b32.xlu0 %v6640, 16
  %v7139 = vpop.permute.xlu0 %7138
  %7140 = vrot.lane.b32.xlu0 %v6645, 16
  %v7141 = vpop.permute.xlu0 %7140
  %7142 = vrot.lane.b32.xlu0 %v6724, 16
  %v7143 = vpop.permute.xlu0 %7142
  %7144 = vrot.lane.b32.xlu0 %v6729, 16
  %v7145 = vpop.permute.xlu0 %7144
  %7154 = vrot.lane.b32.xlu0 %v7026, 24
  %v7155 = vpop.permute.xlu0 %7154
  %7156 = vrot.lane.b32.xlu0 %v7031, 24
  %v7157 = vpop.permute.xlu0 %7156
  %7158 = vrot.lane.b32.xlu0 %v7110, 24
  %v7159 = vpop.permute.xlu0 %7158
  %7160 = vrot.lane.b32.xlu0 %v7115, 24
  %v7161 = vpop.permute.xlu0 %7160
  %v7166 = vsel %vm28, %v5868, %v7123
  %v7167 = vsel %vm28, %v5873, %v7125
  %v7168 = vsel %vm28, %v5952, %v7127
  %v7169 = vsel %vm28, %v5957, %v7129
  %v7170 = vsel %vm281, %v7166, %v7139
  %v7171 = vsel %vm281, %v7167, %v7141
  %v7172 = vsel %vm281, %v7168, %v7143
  %v7173 = vsel %vm281, %v7169, %v7145
  %v7174 = vsel %vm1510, %v7170, %v7155
  %v7175 = vsel %vm1510, %v7171, %v7157
  %v7176 = vsel %vm1510, %v7172, %v7159
  %v7177 = vsel %vm1510, %v7173, %v7161
  %v7178 = vadd.f32 %v5472, %v7174
  %v7179 = vadd.f32 %v5477, %v7175
  %v7180 = vadd.f32 %v5482, %v7176
  %v7181 = vadd.f32 %v5487, %v7177
  %v7182 = vld [vmem:[%s2 + $0x1b] sm:$0x1]
  %v7183 = vld [vmem:[%s2 + $0x1c] sm:$0x1]
  %v7184 = vsel %vm1517, %v7178, 0.0
  %7185 = vadd.xlane.f32.xlu0 %v7184
  %v7186 = vpop.xlane.xlu0 %7185
  %v7187 = vsel %vm1517, %v7179, 0.0
  %7188 = vadd.xlane.f32.xlu0 %v7187
  %v7189 = vpop.xlane.xlu0 %7188
  %v7190 = vsel %vm1517, %v7180, 0.0
  %7191 = vadd.xlane.f32.xlu0 %v7190
  %v7192 = vpop.xlane.xlu0 %7191
  %v7193 = vsel %vm1517, %v7181, 0.0
  %7194 = vadd.xlane.f32.xlu0 %v7193
  %v7195 = vpop.xlane.xlu0 %7194
  %v7196 = vmul.f32 %v7186, %v1524
  %v7197 = vmul.f32 %v7189, %v1524
  %v7198 = vmul.f32 %v7192, %v1524
  %v7199 = vmul.f32 %v7195, %v1524
  %v7200 = vsub.f32 %v7178, %v7196
  %v7201 = vsub.f32 %v7179, %v7197
  %v7202 = vsub.f32 %v7180, %v7198
  %v7203 = vsub.f32 %v7181, %v7199
  %v7204 = vmul.f32 %v7200, %v7200
  %v7205 = vmul.f32 %v7201, %v7201
  %v7206 = vmul.f32 %v7202, %v7202
  %v7207 = vmul.f32 %v7203, %v7203
  %v7208 = vsel %vm1517, %v7204, 0.0
  %7209 = vadd.xlane.f32.xlu0 %v7208
  %v7210 = vpop.xlane.xlu0 %7209
  %v7211 = vsel %vm1517, %v7205, 0.0
  %7212 = vadd.xlane.f32.xlu0 %v7211
  %v7213 = vpop.xlane.xlu0 %7212
  %v7214 = vsel %vm1517, %v7206, 0.0
  %7215 = vadd.xlane.f32.xlu0 %v7214
  %v7216 = vpop.xlane.xlu0 %7215
  %v7217 = vsel %vm1517, %v7207, 0.0
  %7218 = vadd.xlane.f32.xlu0 %v7217
  %v7219 = vpop.xlane.xlu0 %7218
  %v7220 = vmul.f32 %v7210, %v1524
  %v7221 = vmul.f32 %v7213, %v1524
  %v7222 = vmul.f32 %v7216, %v1524
  %v7223 = vmul.f32 %v7219, %v1524
  %v7224 = vadd.f32 %v7220, 1e-05
  %v7225 = vadd.f32 %v7221, 1e-05
  %v7226 = vadd.f32 %v7222, 1e-05
  %v7227 = vadd.f32 %v7223, 1e-05
  %v7228 = vrsqrt.pop %v7224
  %v7229 = vrsqrt.pop %v7225
  %v7230 = vrsqrt.pop %v7226
  %v7231 = vrsqrt.pop %v7227
  %v7232 = vmul.f32 %v7200, %v7228
  %v7233 = vmul.f32 %v7201, %v7229
  %v7234 = vmul.f32 %v7202, %v7230
  %v7235 = vmul.f32 %v7203, %v7231
  %v7236 = vlaneseq
  %v7237 = vshrl.u32 %v7236, 7
  %v7238 = vsub.s32 0, %v7237
  %v7239 = vrot.slane %v7182, %v7238
  %v7240 = vmul.f32 %v7232, %v7239
  %v7241 = vmul.f32 %v7233, %v7239
  %v7242 = vmul.f32 %v7234, %v7239
  %v7243 = vmul.f32 %v7235, %v7239
  %v7244 = vlaneseq
  %v7245 = vshrl.u32 %v7244, 7
  %v7246 = vsub.s32 0, %v7245
  %v7247 = vrot.slane %v7183, %v7246
  %v7248 = vadd.f32 %v7240, %v7247
  %v7249 = vadd.f32 %v7241, %v7247
  %v7250 = vadd.f32 %v7242, %v7247
  %v7251 = vadd.f32 %v7243, %v7247
  %v7252 = vld [vmem:[%s1 + $0xf0] sm:$0xff]
  %v7253 = vld [vmem:[%s1 + $0xf8] sm:$0xff]
  %v7254 = vld [vmem:[%s1 + $0x100] sm:$0xff]
  %v7255 = vld [vmem:[%s1 + $0x108] sm:$0xff]
  %v7256 = vld [vmem:[%s2 + $0x1a] sm:$0x1]
  %v7257 = vlaneseq
  %v7258 = vshrl.u32 %v7257, 7
  %v7259 = vsub.s32 0, %v7258
  %v7260 = vrot.slane %v7256, %v7259
  %v7262 = vsel %vm1517, %v7248, 0
  %v7265 = vsel %vm1517, %v7249, 0
  %v7268 = vsel %vm1517, %v7250, 0
  %v7271 = vsel %vm1517, %v7251, 0
  %7273 = vmatprep.subr.mxu0 0.0
  %7274 = vmatpush1.msra.mxu0 0.0
  %7275 = vmatprep.subr.mxu0 0.0
  %7276 = vmatpush1.msra.mxu0 0.0
  %7277 = vmatprep.subr.mxu0 0.0
  %7278 = vmatpush1.msra.mxu0 0.0
  %7279 = vmatprep.subr.mxu0 0.0
  %7280 = vmatpush1.msra.mxu0 0.0
  %7281 = vmatprep.subr.mxu0 0.0
  %7282 = vmatpush1.msra.mxu0 0.0
  %7283 = vmatprep.subr.mxu0 0.0
  %7284 = vmatpush1.msra.mxu0 0.0
  %7285 = vmatprep.subr.mxu0 0.0
  %7286 = vmatpush1.msra.mxu0 0.0
  %7287 = vmatprep.subr.mxu0 0.0
  %7288 = vmatpush1.msra.mxu0 0.0
  %7289 = vmatprep.subr.mxu0 0.0
  %7290 = vmatpush1.msra.mxu0 0.0
  %7291 = vmatprep.subr.mxu0 0.0
  %7292 = vmatpush1.msra.mxu0 0.0
  %7293 = vmatprep.subr.mxu0 0.0
  %7294 = vmatpush1.msra.mxu0 0.0
  %7295 = vmatprep.subr.mxu0 0.0
  %7296 = vmatpush1.msra.mxu0 0.0
  %7297 = vmatprep.subr.mxu0 0.0
  %7298 = vmatpush1.msra.mxu0 %v7255
  %7299 = vmatprep.subr.mxu0 0.0
  %7300 = vmatpush1.msra.mxu0 %v7254
  %7301 = vmatprep.subr.mxu0 0.0
  %7302 = vmatpush1.msra.mxu0 %v7253
  %7303 = vmatprep.subr.mxu0 0.0
  %7304 = vmatpush1.msra.mxu0 %v7252
  %7305 = vmatprep.subr.mxu0 0.0
  %7306 = vmatpush2.msra.mxu0 0.0
  %7307 = vmatprep.subr.mxu0 0.0
  %7308 = vmatpush2.msra.mxu0 0.0
  %7309 = vmatprep.subr.mxu0 0.0
  %7310 = vmatpush2.msra.mxu0 0.0
  %7311 = vmatprep.subr.mxu0 0.0
  %7312 = vmatpush2.msra.mxu0 0.0
  %7313 = vmatprep.subr.mxu0 0.0
  %7314 = vmatpush2.msra.mxu0 0.0
  %7315 = vmatprep.subr.mxu0 0.0
  %7316 = vmatpush2.msra.mxu0 0.0
  %7317 = vmatprep.subr.mxu0 0.0
  %7318 = vmatpush2.msra.mxu0 0.0
  %7319 = vmatprep.subr.mxu0 0.0
  %7320 = vmatpush2.msra.mxu0 0.0
  %7321 = vmatprep.subr.mxu0 0.0
  %7322 = vmatpush2.msra.mxu0 0.0
  %7323 = vmatprep.subr.mxu0 0.0
  %7324 = vmatpush2.msra.mxu0 0.0
  %7325 = vmatprep.subr.mxu0 0.0
  %7326 = vmatpush2.msra.mxu0 0.0
  %7327 = vmatprep.subr.mxu0 0.0
  %7328 = vmatpush2.msra.mxu0 0.0
  %7329 = vmatprep.subr.mxu0 0.0
  %7330 = vmatpush2.msra.mxu0 0.0
  %7331 = vmatprep.subr.mxu0 0.0
  %7332 = vmatpush2.msra.mxu0 0.0
  %7333 = vmatprep.subr.mxu0 0.0
  %7334 = vmatpush2.msra.mxu0 0.0
  %7335 = vmatprep.subr.mxu0 0.0
  %7336 = vmatpush2.msra.mxu0 0.0
  %7337 = vmatprep.mubr.f32.mxu0 0.0
  %7338 = vmatmul.mubr.f32.gmra.mxu0 %v7262
  %v7339 = vpop.f32.mrf.mxu0
  %v7340 = vadd.f32 %v7260, %v7339
  %v7341 = vpop.f32.mrf.mxu0
  %7342 = vmatprep.mubr.f32.mxu0 0.0
  %7343 = vmatmul.mubr.f32.gmra.mxu0 %v7265
  %v7344 = vpop.f32.mrf.mxu0
  %v7345 = vadd.f32 %v7260, %v7344
  %v7346 = vpop.f32.mrf.mxu0
  %7347 = vmatprep.mubr.f32.mxu0 0.0
  %7348 = vmatmul.mubr.f32.gmra.mxu0 %v7268
  %v7349 = vpop.f32.mrf.mxu0
  %v7350 = vadd.f32 %v7260, %v7349
  %v7351 = vpop.f32.mrf.mxu0
  %7352 = vmatprep.mubr.f32.mxu0 0.0
  %7353 = vmatmul.mubr.f32.gmra.mxu0 %v7271
  %v7354 = vpop.f32.mrf.mxu0
  %v7355 = vadd.f32 %v7260, %v7354
  %v7356 = vpop.f32.mrf.mxu0
  %7357 = vdwg.mxu0
  %v7358 = vmax.f32 %v7340, 0.0
  %v7359 = vmax.f32 %v7345, 0.0
  %v7360 = vmax.f32 %v7350, 0.0
  %v7361 = vmax.f32 %v7355, 0.0
  %v7362 = vadd.f32 %v7248, %v7358
  %v7363 = vadd.f32 %v7249, %v7359
  %v7364 = vadd.f32 %v7250, %v7360
  %v7365 = vadd.f32 %v7251, %v7361
  %v7366 = vld [vmem:[%s2 + $0x1d] sm:$0x1]
  %v7367 = vld [vmem:[%s2 + $0x1e] sm:$0x1]
  %v7368 = vsel %vm1517, %v7362, 0.0
  %7369 = vadd.xlane.f32.xlu0 %v7368
  %v7370 = vpop.xlane.xlu0 %7369
  %v7371 = vsel %vm1517, %v7363, 0.0
  %7372 = vadd.xlane.f32.xlu0 %v7371
  %v7373 = vpop.xlane.xlu0 %7372
  %v7374 = vsel %vm1517, %v7364, 0.0
  %7375 = vadd.xlane.f32.xlu0 %v7374
  %v7376 = vpop.xlane.xlu0 %7375
  %v7377 = vsel %vm1517, %v7365, 0.0
  %7378 = vadd.xlane.f32.xlu0 %v7377
  %v7379 = vpop.xlane.xlu0 %7378
  %v7380 = vmul.f32 %v7370, %v1524
  %v7381 = vmul.f32 %v7373, %v1524
  %v7382 = vmul.f32 %v7376, %v1524
  %v7383 = vmul.f32 %v7379, %v1524
  %v7384 = vsub.f32 %v7362, %v7380
  %v7385 = vsub.f32 %v7363, %v7381
  %v7386 = vsub.f32 %v7364, %v7382
  %v7387 = vsub.f32 %v7365, %v7383
  %v7388 = vmul.f32 %v7384, %v7384
  %v7389 = vmul.f32 %v7385, %v7385
  %v7390 = vmul.f32 %v7386, %v7386
  %v7391 = vmul.f32 %v7387, %v7387
  %v7392 = vsel %vm1517, %v7388, 0.0
  %7393 = vadd.xlane.f32.xlu0 %v7392
  %v7394 = vpop.xlane.xlu0 %7393
  %v7395 = vsel %vm1517, %v7389, 0.0
  %7396 = vadd.xlane.f32.xlu0 %v7395
  %v7397 = vpop.xlane.xlu0 %7396
  %v7398 = vsel %vm1517, %v7390, 0.0
  %7399 = vadd.xlane.f32.xlu0 %v7398
  %v7400 = vpop.xlane.xlu0 %7399
  %v7401 = vsel %vm1517, %v7391, 0.0
  %7402 = vadd.xlane.f32.xlu0 %v7401
  %v7403 = vpop.xlane.xlu0 %7402
  %v7404 = vmul.f32 %v7394, %v1524
  %v7405 = vmul.f32 %v7397, %v1524
  %v7406 = vmul.f32 %v7400, %v1524
  %v7407 = vmul.f32 %v7403, %v1524
  %v7408 = vadd.f32 %v7404, 1e-05
  %v7409 = vadd.f32 %v7405, 1e-05
  %v7410 = vadd.f32 %v7406, 1e-05
  %v7411 = vadd.f32 %v7407, 1e-05
  %v7412 = vrsqrt.pop %v7408
  %v7413 = vrsqrt.pop %v7409
  %v7414 = vrsqrt.pop %v7410
  %v7415 = vrsqrt.pop %v7411
  %v7416 = vmul.f32 %v7384, %v7412
  %v7417 = vmul.f32 %v7385, %v7413
  %v7418 = vmul.f32 %v7386, %v7414
  %v7419 = vmul.f32 %v7387, %v7415
  %v7420 = vlaneseq
  %v7421 = vshrl.u32 %v7420, 7
  %v7422 = vsub.s32 0, %v7421
  %v7423 = vrot.slane %v7366, %v7422
  %v7424 = vmul.f32 %v7416, %v7423
  %v7425 = vmul.f32 %v7417, %v7423
  %v7426 = vmul.f32 %v7418, %v7423
  %v7427 = vmul.f32 %v7419, %v7423
  %v7428 = vlaneseq
  %v7429 = vshrl.u32 %v7428, 7
  %v7430 = vsub.s32 0, %v7429
  %v7431 = vrot.slane %v7367, %v7430
  %v7432 = vadd.f32 %v7424, %v7431
  %v7433 = vadd.f32 %v7425, %v7431
  %v7434 = vadd.f32 %v7426, %v7431
  %v7435 = vadd.f32 %v7427, %v7431
  %v7436 = vld [vmem:[%s3 + $0x10] sm:$0xff]
  %v7437 = vld [vmem:[%s1 + $0x110] sm:$0xff]
  %v7438 = vld [vmem:[%s1 + $0x118] sm:$0xff]
  %v7439 = vld [vmem:[%s1 + $0x120] sm:$0xff]
  %v7440 = vld [vmem:[%s1 + $0x128] sm:$0xff]
  %v7441 = vld [vmem:[%s2 + $0x21] sm:$0x1]
  %v7442 = vlaneseq
  %v7443 = vshrl.u32 %v7442, 7
  %v7444 = vsub.s32 0, %v7443
  %v7445 = vrot.slane %v7441, %v7444
  %v7447 = vsel %vm1517, %v7432, 0
  %v7450 = vsel %vm1517, %v7433, 0
  %v7453 = vsel %vm1517, %v7434, 0
  %v7456 = vsel %vm1517, %v7435, 0
  %7458 = vmatprep.subr.mxu0 0.0
  %7459 = vmatpush1.msra.mxu0 0.0
  %7460 = vmatprep.subr.mxu0 0.0
  %7461 = vmatpush1.msra.mxu0 0.0
  %7462 = vmatprep.subr.mxu0 0.0
  %7463 = vmatpush1.msra.mxu0 0.0
  %7464 = vmatprep.subr.mxu0 0.0
  %7465 = vmatpush1.msra.mxu0 0.0
  %7466 = vmatprep.subr.mxu0 0.0
  %7467 = vmatpush1.msra.mxu0 0.0
  %7468 = vmatprep.subr.mxu0 0.0
  %7469 = vmatpush1.msra.mxu0 0.0
  %7470 = vmatprep.subr.mxu0 0.0
  %7471 = vmatpush1.msra.mxu0 0.0
  %7472 = vmatprep.subr.mxu0 0.0
  %7473 = vmatpush1.msra.mxu0 0.0
  %7474 = vmatprep.subr.mxu0 0.0
  %7475 = vmatpush1.msra.mxu0 0.0
  %7476 = vmatprep.subr.mxu0 0.0
  %7477 = vmatpush1.msra.mxu0 0.0
  %7478 = vmatprep.subr.mxu0 0.0
  %7479 = vmatpush1.msra.mxu0 0.0
  %7480 = vmatprep.subr.mxu0 0.0
  %7481 = vmatpush1.msra.mxu0 0.0
  %7482 = vmatprep.subr.mxu0 0.0
  %7483 = vmatpush1.msra.mxu0 %v7440
  %7484 = vmatprep.subr.mxu0 0.0
  %7485 = vmatpush1.msra.mxu0 %v7439
  %7486 = vmatprep.subr.mxu0 0.0
  %7487 = vmatpush1.msra.mxu0 %v7438
  %7488 = vmatprep.subr.mxu0 0.0
  %7489 = vmatpush1.msra.mxu0 %v7437
  %7490 = vmatprep.subr.mxu0 0.0
  %7491 = vmatpush2.msra.mxu0 0.0
  %7492 = vmatprep.subr.mxu0 0.0
  %7493 = vmatpush2.msra.mxu0 0.0
  %7494 = vmatprep.subr.mxu0 0.0
  %7495 = vmatpush2.msra.mxu0 0.0
  %7496 = vmatprep.subr.mxu0 0.0
  %7497 = vmatpush2.msra.mxu0 0.0
  %7498 = vmatprep.subr.mxu0 0.0
  %7499 = vmatpush2.msra.mxu0 0.0
  %7500 = vmatprep.subr.mxu0 0.0
  %7501 = vmatpush2.msra.mxu0 0.0
  %7502 = vmatprep.subr.mxu0 0.0
  %7503 = vmatpush2.msra.mxu0 0.0
  %7504 = vmatprep.subr.mxu0 0.0
  %7505 = vmatpush2.msra.mxu0 0.0
  %7506 = vmatprep.subr.mxu0 0.0
  %7507 = vmatpush2.msra.mxu0 0.0
  %7508 = vmatprep.subr.mxu0 0.0
  %7509 = vmatpush2.msra.mxu0 0.0
  %7510 = vmatprep.subr.mxu0 0.0
  %7511 = vmatpush2.msra.mxu0 0.0
  %7512 = vmatprep.subr.mxu0 0.0
  %7513 = vmatpush2.msra.mxu0 0.0
  %7514 = vmatprep.subr.mxu0 0.0
  %7515 = vmatpush2.msra.mxu0 0.0
  %7516 = vmatprep.subr.mxu0 0.0
  %7517 = vmatpush2.msra.mxu0 0.0
  %7518 = vmatprep.subr.mxu0 0.0
  %7519 = vmatpush2.msra.mxu0 0.0
  %7520 = vmatprep.subr.mxu0 0.0
  %7521 = vmatpush2.msra.mxu0 0.0
  %7522 = vmatprep.mubr.f32.mxu0 0.0
  %7523 = vmatmul.mubr.f32.gmra.mxu0 %v7447
  %v7524 = vpop.f32.mrf.mxu0
  %v7525 = vadd.f32 %v7445, %v7524
  %v7526 = vpop.f32.mrf.mxu0
  %7527 = vmatprep.mubr.f32.mxu0 0.0
  %7528 = vmatmul.mubr.f32.gmra.mxu0 %v7450
  %v7529 = vpop.f32.mrf.mxu0
  %v7530 = vadd.f32 %v7445, %v7529
  %v7531 = vpop.f32.mrf.mxu0
  %7532 = vmatprep.mubr.f32.mxu0 0.0
  %7533 = vmatmul.mubr.f32.gmra.mxu0 %v7453
  %v7534 = vpop.f32.mrf.mxu0
  %v7535 = vadd.f32 %v7445, %v7534
  %v7536 = vpop.f32.mrf.mxu0
  %7537 = vmatprep.mubr.f32.mxu0 0.0
  %7538 = vmatmul.mubr.f32.gmra.mxu0 %v7456
  %v7539 = vpop.f32.mrf.mxu0
  %v7540 = vadd.f32 %v7445, %v7539
  %v7541 = vpop.f32.mrf.mxu0
  %7542 = vdwg.mxu0
  %v7544 = vsel %vm28, %v7436, 0
  %v7547 = vsel %vm28, %v7525, 0
  %v7550 = vsel %vm28, %v7530, 0
  %7552 = vmatprep.subr.mxu0 0.0
  %7553 = vmatpush1.xpose.msra.mxu0 0.0
  %7554 = vmatprep.subr.mxu0 0.0
  %7555 = vmatpush1.xpose.msra.mxu0 0.0
  %7556 = vmatprep.subr.mxu0 0.0
  %7557 = vmatpush1.xpose.msra.mxu0 0.0
  %7558 = vmatprep.subr.mxu0 0.0
  %7559 = vmatpush1.xpose.msra.mxu0 0.0
  %7560 = vmatprep.subr.mxu0 0.0
  %7561 = vmatpush1.xpose.msra.mxu0 0.0
  %7562 = vmatprep.subr.mxu0 0.0
  %7563 = vmatpush1.xpose.msra.mxu0 0.0
  %7564 = vmatprep.subr.mxu0 0.0
  %7565 = vmatpush1.xpose.msra.mxu0 0.0
  %7566 = vmatprep.subr.mxu0 0.0
  %7567 = vmatpush1.xpose.msra.mxu0 0.0
  %7568 = vmatprep.subr.mxu0 0.0
  %7569 = vmatpush1.xpose.msra.mxu0 0.0
  %7570 = vmatprep.subr.mxu0 0.0
  %7571 = vmatpush1.xpose.msra.mxu0 0.0
  %7572 = vmatprep.subr.mxu0 0.0
  %7573 = vmatpush1.xpose.msra.mxu0 0.0
  %7574 = vmatprep.subr.mxu0 0.0
  %7575 = vmatpush1.xpose.msra.mxu0 0.0
  %7576 = vmatprep.subr.mxu0 0.0
  %7577 = vmatpush1.xpose.msra.mxu0 0.0
  %7578 = vmatprep.subr.mxu0 0.0
  %7579 = vmatpush1.xpose.msra.mxu0 0.0
  %7580 = vmatprep.subr.mxu0 0.0
  %7581 = vmatpush1.xpose.msra.mxu0 %v7550
  %7582 = vmatprep.subr.mxu0 0.0
  %7583 = vmatpush1.xpose.msra.mxu0 %v7547
  %7584 = vmatprep.subr.mxu0 0.0
  %7585 = vmatpush2.xpose.msra.mxu0 0.0
  %7586 = vmatprep.subr.mxu0 0.0
  %7587 = vmatpush2.xpose.msra.mxu0 0.0
  %7588 = vmatprep.subr.mxu0 0.0
  %7589 = vmatpush2.xpose.msra.mxu0 0.0
  %7590 = vmatprep.subr.mxu0 0.0
  %7591 = vmatpush2.xpose.msra.mxu0 0.0
  %7592 = vmatprep.subr.mxu0 0.0
  %7593 = vmatpush2.xpose.msra.mxu0 0.0
  %7594 = vmatprep.subr.mxu0 0.0
  %7595 = vmatpush2.xpose.msra.mxu0 0.0
  %7596 = vmatprep.subr.mxu0 0.0
  %7597 = vmatpush2.xpose.msra.mxu0 0.0
  %7598 = vmatprep.subr.mxu0 0.0
  %7599 = vmatpush2.xpose.msra.mxu0 0.0
  %7600 = vmatprep.subr.mxu0 0.0
  %7601 = vmatpush2.xpose.msra.mxu0 0.0
  %7602 = vmatprep.subr.mxu0 0.0
  %7603 = vmatpush2.xpose.msra.mxu0 0.0
  %7604 = vmatprep.subr.mxu0 0.0
  %7605 = vmatpush2.xpose.msra.mxu0 0.0
  %7606 = vmatprep.subr.mxu0 0.0
  %7607 = vmatpush2.xpose.msra.mxu0 0.0
  %7608 = vmatprep.subr.mxu0 0.0
  %7609 = vmatpush2.xpose.msra.mxu0 0.0
  %7610 = vmatprep.subr.mxu0 0.0
  %7611 = vmatpush2.xpose.msra.mxu0 0.0
  %7612 = vmatprep.subr.mxu0 0.0
  %7613 = vmatpush2.xpose.msra.mxu0 0.0
  %7614 = vmatprep.subr.mxu0 0.0
  %7615 = vmatpush2.xpose.msra.mxu0 0.0
  %7616 = vmatprep.mubr.f32.mxu0 0.0
  %7617 = vmatmul.mubr.f32.gmra.mxu0 %v7544
  %v7618 = vpop.f32.mrf.mxu0
  %v7619 = vadd.f32 0.0, %v7618
  %v7620 = vpop.f32.mrf.mxu0
  %7621 = vdwg.mxu0
  %v7623 = vsel %vm28, %v7535, 0
  %v7626 = vsel %vm28, %v7540, 0
  %7628 = vmatprep.subr.mxu0 0.0
  %7629 = vmatpush1.xpose.msra.mxu0 0.0
  %7630 = vmatprep.subr.mxu0 0.0
  %7631 = vmatpush1.xpose.msra.mxu0 0.0
  %7632 = vmatprep.subr.mxu0 0.0
  %7633 = vmatpush1.xpose.msra.mxu0 0.0
  %7634 = vmatprep.subr.mxu0 0.0
  %7635 = vmatpush1.xpose.msra.mxu0 0.0
  %7636 = vmatprep.subr.mxu0 0.0
  %7637 = vmatpush1.xpose.msra.mxu0 0.0
  %7638 = vmatprep.subr.mxu0 0.0
  %7639 = vmatpush1.xpose.msra.mxu0 0.0
  %7640 = vmatprep.subr.mxu0 0.0
  %7641 = vmatpush1.xpose.msra.mxu0 0.0
  %7642 = vmatprep.subr.mxu0 0.0
  %7643 = vmatpush1.xpose.msra.mxu0 0.0
  %7644 = vmatprep.subr.mxu0 0.0
  %7645 = vmatpush1.xpose.msra.mxu0 0.0
  %7646 = vmatprep.subr.mxu0 0.0
  %7647 = vmatpush1.xpose.msra.mxu0 0.0
  %7648 = vmatprep.subr.mxu0 0.0
  %7649 = vmatpush1.xpose.msra.mxu0 0.0
  %7650 = vmatprep.subr.mxu0 0.0
  %7651 = vmatpush1.xpose.msra.mxu0 0.0
  %7652 = vmatprep.subr.mxu0 0.0
  %7653 = vmatpush1.xpose.msra.mxu0 0.0
  %7654 = vmatprep.subr.mxu0 0.0
  %7655 = vmatpush1.xpose.msra.mxu0 0.0
  %7656 = vmatprep.subr.mxu0 0.0
  %7657 = vmatpush1.xpose.msra.mxu0 %v7626
  %7658 = vmatprep.subr.mxu0 0.0
  %7659 = vmatpush1.xpose.msra.mxu0 %v7623
  %7660 = vmatprep.subr.mxu0 0.0
  %7661 = vmatpush2.xpose.msra.mxu0 0.0
  %7662 = vmatprep.subr.mxu0 0.0
  %7663 = vmatpush2.xpose.msra.mxu0 0.0
  %7664 = vmatprep.subr.mxu0 0.0
  %7665 = vmatpush2.xpose.msra.mxu0 0.0
  %7666 = vmatprep.subr.mxu0 0.0
  %7667 = vmatpush2.xpose.msra.mxu0 0.0
  %7668 = vmatprep.subr.mxu0 0.0
  %7669 = vmatpush2.xpose.msra.mxu0 0.0
  %7670 = vmatprep.subr.mxu0 0.0
  %7671 = vmatpush2.xpose.msra.mxu0 0.0
  %7672 = vmatprep.subr.mxu0 0.0
  %7673 = vmatpush2.xpose.msra.mxu0 0.0
  %7674 = vmatprep.subr.mxu0 0.0
  %7675 = vmatpush2.xpose.msra.mxu0 0.0
  %7676 = vmatprep.subr.mxu0 0.0
  %7677 = vmatpush2.xpose.msra.mxu0 0.0
  %7678 = vmatprep.subr.mxu0 0.0
  %7679 = vmatpush2.xpose.msra.mxu0 0.0
  %7680 = vmatprep.subr.mxu0 0.0
  %7681 = vmatpush2.xpose.msra.mxu0 0.0
  %7682 = vmatprep.subr.mxu0 0.0
  %7683 = vmatpush2.xpose.msra.mxu0 0.0
  %7684 = vmatprep.subr.mxu0 0.0
  %7685 = vmatpush2.xpose.msra.mxu0 0.0
  %7686 = vmatprep.subr.mxu0 0.0
  %7687 = vmatpush2.xpose.msra.mxu0 0.0
  %7688 = vmatprep.subr.mxu0 0.0
  %7689 = vmatpush2.xpose.msra.mxu0 0.0
  %7690 = vmatprep.subr.mxu0 0.0
  %7691 = vmatpush2.xpose.msra.mxu0 0.0
  %7692 = vmatprep.mubr.f32.mxu0 0.0
  %7693 = vmatmul.mubr.f32.gmra.mxu0 %v7544
  %v7694 = vpop.f32.mrf.mxu0
  %v7695 = vadd.f32 0.0, %v7694
  %v7696 = vpop.f32.mrf.mxu0
  %7697 = vdwg.mxu0
  %v7698 = vsel %vm281, %v7619, -inf
  %7699 = vmax.xlane.f32.xlu0 %v7698
  %v7700 = vpop.xlane.xlu0 %7699
  %v7701 = vsel %vm281, %v7695, -inf
  %7702 = vmax.xlane.f32.xlu0 %v7701
  %v7703 = vpop.xlane.xlu0 %7702
  %v7704 = vsub.f32 %v7619, %v7700
  %v7705 = vsub.f32 %v7695, %v7703
  %v7706 = vmul.f32 %v7704, 1.442695
  %v7707 = vpow.pop %v7706
  %v7708 = vmul.f32 %v7705, 1.442695
  %v7709 = vpow.pop %v7708
  %v7710 = vsel %vm281, %v7707, 0.0
  %7711 = vadd.xlane.f32.xlu0 %v7710
  %v7712 = vpop.xlane.xlu0 %7711
  %v7713 = vsel %vm281, %v7709, 0.0
  %7714 = vadd.xlane.f32.xlu0 %v7713
  %v7715 = vpop.xlane.xlu0 %7714
  %v7716 = vrcp.pop %v7712
  %v7717 = vrcp.pop %v7715
  %v7718 = vmul.f32 %v7707, %v7716
  %v7719 = vmul.f32 %v7709, %v7717
  %7720 = vrot.lane.b32.xlu0 %v7525, 96
  %v7721 = vpop.permute.xlu0 %7720
  %7722 = vrot.lane.b32.xlu0 %v7530, 96
  %v7723 = vpop.permute.xlu0 %7722
  %v7727 = vsel %vm281, %v7718, 0
  %7729 = vmatprep.subr.mxu0 0.0
  %7730 = vmatpush1.msra.mxu0 0.0
  %7731 = vmatprep.subr.mxu0 0.0
  %7732 = vmatpush1.msra.mxu0 0.0
  %7733 = vmatprep.subr.mxu0 0.0
  %7734 = vmatpush1.msra.mxu0 0.0
  %7735 = vmatprep.subr.mxu0 0.0
  %7736 = vmatpush1.msra.mxu0 0.0
  %7737 = vmatprep.subr.mxu0 0.0
  %7738 = vmatpush1.msra.mxu0 0.0
  %7739 = vmatprep.subr.mxu0 0.0
  %7740 = vmatpush1.msra.mxu0 0.0
  %7741 = vmatprep.subr.mxu0 0.0
  %7742 = vmatpush1.msra.mxu0 0.0
  %7743 = vmatprep.subr.mxu0 0.0
  %7744 = vmatpush1.msra.mxu0 0.0
  %7745 = vmatprep.subr.mxu0 0.0
  %7746 = vmatpush1.msra.mxu0 0.0
  %7747 = vmatprep.subr.mxu0 0.0
  %7748 = vmatpush1.msra.mxu0 0.0
  %7749 = vmatprep.subr.mxu0 0.0
  %7750 = vmatpush1.msra.mxu0 0.0
  %7751 = vmatprep.subr.mxu0 0.0
  %7752 = vmatpush1.msra.mxu0 0.0
  %7753 = vmatprep.subr.mxu0 0.0
  %7754 = vmatpush1.msra.mxu0 0.0
  %7755 = vmatprep.subr.mxu0 0.0
  %7756 = vmatpush1.msra.mxu0 0.0
  %7757 = vmatprep.subr.mxu0 0.0
  %7758 = vmatpush1.msra.mxu0 %v7723
  %7759 = vmatprep.subr.mxu0 0.0
  %7760 = vmatpush1.msra.mxu0 %v7721
  %7761 = vmatprep.subr.mxu0 0.0
  %7762 = vmatpush2.msra.mxu0 0.0
  %7763 = vmatprep.subr.mxu0 0.0
  %7764 = vmatpush2.msra.mxu0 0.0
  %7765 = vmatprep.subr.mxu0 0.0
  %7766 = vmatpush2.msra.mxu0 0.0
  %7767 = vmatprep.subr.mxu0 0.0
  %7768 = vmatpush2.msra.mxu0 0.0
  %7769 = vmatprep.subr.mxu0 0.0
  %7770 = vmatpush2.msra.mxu0 0.0
  %7771 = vmatprep.subr.mxu0 0.0
  %7772 = vmatpush2.msra.mxu0 0.0
  %7773 = vmatprep.subr.mxu0 0.0
  %7774 = vmatpush2.msra.mxu0 0.0
  %7775 = vmatprep.subr.mxu0 0.0
  %7776 = vmatpush2.msra.mxu0 0.0
  %7777 = vmatprep.subr.mxu0 0.0
  %7778 = vmatpush2.msra.mxu0 0.0
  %7779 = vmatprep.subr.mxu0 0.0
  %7780 = vmatpush2.msra.mxu0 0.0
  %7781 = vmatprep.subr.mxu0 0.0
  %7782 = vmatpush2.msra.mxu0 0.0
  %7783 = vmatprep.subr.mxu0 0.0
  %7784 = vmatpush2.msra.mxu0 0.0
  %7785 = vmatprep.subr.mxu0 0.0
  %7786 = vmatpush2.msra.mxu0 0.0
  %7787 = vmatprep.subr.mxu0 0.0
  %7788 = vmatpush2.msra.mxu0 0.0
  %7789 = vmatprep.subr.mxu0 0.0
  %7790 = vmatpush2.msra.mxu0 0.0
  %7791 = vmatprep.subr.mxu0 0.0
  %7792 = vmatpush2.msra.mxu0 0.0
  %7793 = vmatprep.mubr.f32.mxu0 0.0
  %7794 = vmatmul.mubr.f32.gmra.mxu0 %v7727
  %v7795 = vpop.f32.mrf.mxu0
  %v7796 = vadd.f32 0.0, %v7795
  %v7797 = vpop.f32.mrf.mxu0
  %7798 = vdwg.mxu0
  %7799 = vrot.lane.b32.xlu0 %v7535, 96
  %v7800 = vpop.permute.xlu0 %7799
  %7801 = vrot.lane.b32.xlu0 %v7540, 96
  %v7802 = vpop.permute.xlu0 %7801
  %v7806 = vsel %vm281, %v7719, 0
  %7808 = vmatprep.subr.mxu0 0.0
  %7809 = vmatpush1.msra.mxu0 0.0
  %7810 = vmatprep.subr.mxu0 0.0
  %7811 = vmatpush1.msra.mxu0 0.0
  %7812 = vmatprep.subr.mxu0 0.0
  %7813 = vmatpush1.msra.mxu0 0.0
  %7814 = vmatprep.subr.mxu0 0.0
  %7815 = vmatpush1.msra.mxu0 0.0
  %7816 = vmatprep.subr.mxu0 0.0
  %7817 = vmatpush1.msra.mxu0 0.0
  %7818 = vmatprep.subr.mxu0 0.0
  %7819 = vmatpush1.msra.mxu0 0.0
  %7820 = vmatprep.subr.mxu0 0.0
  %7821 = vmatpush1.msra.mxu0 0.0
  %7822 = vmatprep.subr.mxu0 0.0
  %7823 = vmatpush1.msra.mxu0 0.0
  %7824 = vmatprep.subr.mxu0 0.0
  %7825 = vmatpush1.msra.mxu0 0.0
  %7826 = vmatprep.subr.mxu0 0.0
  %7827 = vmatpush1.msra.mxu0 0.0
  %7828 = vmatprep.subr.mxu0 0.0
  %7829 = vmatpush1.msra.mxu0 0.0
  %7830 = vmatprep.subr.mxu0 0.0
  %7831 = vmatpush1.msra.mxu0 0.0
  %7832 = vmatprep.subr.mxu0 0.0
  %7833 = vmatpush1.msra.mxu0 0.0
  %7834 = vmatprep.subr.mxu0 0.0
  %7835 = vmatpush1.msra.mxu0 0.0
  %7836 = vmatprep.subr.mxu0 0.0
  %7837 = vmatpush1.msra.mxu0 %v7802
  %7838 = vmatprep.subr.mxu0 0.0
  %7839 = vmatpush1.msra.mxu0 %v7800
  %7840 = vmatprep.subr.mxu0 0.0
  %7841 = vmatpush2.msra.mxu0 0.0
  %7842 = vmatprep.subr.mxu0 0.0
  %7843 = vmatpush2.msra.mxu0 0.0
  %7844 = vmatprep.subr.mxu0 0.0
  %7845 = vmatpush2.msra.mxu0 0.0
  %7846 = vmatprep.subr.mxu0 0.0
  %7847 = vmatpush2.msra.mxu0 0.0
  %7848 = vmatprep.subr.mxu0 0.0
  %7849 = vmatpush2.msra.mxu0 0.0
  %7850 = vmatprep.subr.mxu0 0.0
  %7851 = vmatpush2.msra.mxu0 0.0
  %7852 = vmatprep.subr.mxu0 0.0
  %7853 = vmatpush2.msra.mxu0 0.0
  %7854 = vmatprep.subr.mxu0 0.0
  %7855 = vmatpush2.msra.mxu0 0.0
  %7856 = vmatprep.subr.mxu0 0.0
  %7857 = vmatpush2.msra.mxu0 0.0
  %7858 = vmatprep.subr.mxu0 0.0
  %7859 = vmatpush2.msra.mxu0 0.0
  %7860 = vmatprep.subr.mxu0 0.0
  %7861 = vmatpush2.msra.mxu0 0.0
  %7862 = vmatprep.subr.mxu0 0.0
  %7863 = vmatpush2.msra.mxu0 0.0
  %7864 = vmatprep.subr.mxu0 0.0
  %7865 = vmatpush2.msra.mxu0 0.0
  %7866 = vmatprep.subr.mxu0 0.0
  %7867 = vmatpush2.msra.mxu0 0.0
  %7868 = vmatprep.subr.mxu0 0.0
  %7869 = vmatpush2.msra.mxu0 0.0
  %7870 = vmatprep.subr.mxu0 0.0
  %7871 = vmatpush2.msra.mxu0 0.0
  %7872 = vmatprep.mubr.f32.mxu0 0.0
  %7873 = vmatmul.mubr.f32.gmra.mxu0 %v7806
  %v7874 = vpop.f32.mrf.mxu0
  %v7875 = vadd.f32 0.0, %v7874
  %v7876 = vpop.f32.mrf.mxu0
  %7877 = vdwg.mxu0
  %7878 = vrot.lane.b32.xlu0 %v7436, 120
  %v7879 = vpop.permute.xlu0 %7878
  %7880 = vrot.lane.b32.xlu0 %v7525, 120
  %v7881 = vpop.permute.xlu0 %7880
  %7882 = vrot.lane.b32.xlu0 %v7530, 120
  %v7883 = vpop.permute.xlu0 %7882
  %v7884 = vsel %vm28, %v7879, 0
  %v7886 = vsel %vm28, %v7881, 0
  %v7888 = vsel %vm28, %v7883, 0
  %7890 = vmatprep.subr.mxu0 0.0
  %7891 = vmatpush1.xpose.msra.mxu0 0.0
  %7892 = vmatprep.subr.mxu0 0.0
  %7893 = vmatpush1.xpose.msra.mxu0 0.0
  %7894 = vmatprep.subr.mxu0 0.0
  %7895 = vmatpush1.xpose.msra.mxu0 0.0
  %7896 = vmatprep.subr.mxu0 0.0
  %7897 = vmatpush1.xpose.msra.mxu0 0.0
  %7898 = vmatprep.subr.mxu0 0.0
  %7899 = vmatpush1.xpose.msra.mxu0 0.0
  %7900 = vmatprep.subr.mxu0 0.0
  %7901 = vmatpush1.xpose.msra.mxu0 0.0
  %7902 = vmatprep.subr.mxu0 0.0
  %7903 = vmatpush1.xpose.msra.mxu0 0.0
  %7904 = vmatprep.subr.mxu0 0.0
  %7905 = vmatpush1.xpose.msra.mxu0 0.0
  %7906 = vmatprep.subr.mxu0 0.0
  %7907 = vmatpush1.xpose.msra.mxu0 0.0
  %7908 = vmatprep.subr.mxu0 0.0
  %7909 = vmatpush1.xpose.msra.mxu0 0.0
  %7910 = vmatprep.subr.mxu0 0.0
  %7911 = vmatpush1.xpose.msra.mxu0 0.0
  %7912 = vmatprep.subr.mxu0 0.0
  %7913 = vmatpush1.xpose.msra.mxu0 0.0
  %7914 = vmatprep.subr.mxu0 0.0
  %7915 = vmatpush1.xpose.msra.mxu0 0.0
  %7916 = vmatprep.subr.mxu0 0.0
  %7917 = vmatpush1.xpose.msra.mxu0 0.0
  %7918 = vmatprep.subr.mxu0 0.0
  %7919 = vmatpush1.xpose.msra.mxu0 %v7888
  %7920 = vmatprep.subr.mxu0 0.0
  %7921 = vmatpush1.xpose.msra.mxu0 %v7886
  %7922 = vmatprep.subr.mxu0 0.0
  %7923 = vmatpush2.xpose.msra.mxu0 0.0
  %7924 = vmatprep.subr.mxu0 0.0
  %7925 = vmatpush2.xpose.msra.mxu0 0.0
  %7926 = vmatprep.subr.mxu0 0.0
  %7927 = vmatpush2.xpose.msra.mxu0 0.0
  %7928 = vmatprep.subr.mxu0 0.0
  %7929 = vmatpush2.xpose.msra.mxu0 0.0
  %7930 = vmatprep.subr.mxu0 0.0
  %7931 = vmatpush2.xpose.msra.mxu0 0.0
  %7932 = vmatprep.subr.mxu0 0.0
  %7933 = vmatpush2.xpose.msra.mxu0 0.0
  %7934 = vmatprep.subr.mxu0 0.0
  %7935 = vmatpush2.xpose.msra.mxu0 0.0
  %7936 = vmatprep.subr.mxu0 0.0
  %7937 = vmatpush2.xpose.msra.mxu0 0.0
  %7938 = vmatprep.subr.mxu0 0.0
  %7939 = vmatpush2.xpose.msra.mxu0 0.0
  %7940 = vmatprep.subr.mxu0 0.0
  %7941 = vmatpush2.xpose.msra.mxu0 0.0
  %7942 = vmatprep.subr.mxu0 0.0
  %7943 = vmatpush2.xpose.msra.mxu0 0.0
  %7944 = vmatprep.subr.mxu0 0.0
  %7945 = vmatpush2.xpose.msra.mxu0 0.0
  %7946 = vmatprep.subr.mxu0 0.0
  %7947 = vmatpush2.xpose.msra.mxu0 0.0
  %7948 = vmatprep.subr.mxu0 0.0
  %7949 = vmatpush2.xpose.msra.mxu0 0.0
  %7950 = vmatprep.subr.mxu0 0.0
  %7951 = vmatpush2.xpose.msra.mxu0 0.0
  %7952 = vmatprep.subr.mxu0 0.0
  %7953 = vmatpush2.xpose.msra.mxu0 0.0
  %7954 = vmatprep.mubr.f32.mxu0 0.0
  %7955 = vmatmul.mubr.f32.gmra.mxu0 %v7884
  %v7956 = vpop.f32.mrf.mxu0
  %v7957 = vadd.f32 0.0, %v7956
  %v7958 = vpop.f32.mrf.mxu0
  %7959 = vdwg.mxu0
  %7960 = vrot.lane.b32.xlu0 %v7535, 120
  %v7961 = vpop.permute.xlu0 %7960
  %7962 = vrot.lane.b32.xlu0 %v7540, 120
  %v7963 = vpop.permute.xlu0 %7962
  %v7964 = vsel %vm28, %v7961, 0
  %v7966 = vsel %vm28, %v7963, 0
  %7968 = vmatprep.subr.mxu0 0.0
  %7969 = vmatpush1.xpose.msra.mxu0 0.0
  %7970 = vmatprep.subr.mxu0 0.0
  %7971 = vmatpush1.xpose.msra.mxu0 0.0
  %7972 = vmatprep.subr.mxu0 0.0
  %7973 = vmatpush1.xpose.msra.mxu0 0.0
  %7974 = vmatprep.subr.mxu0 0.0
  %7975 = vmatpush1.xpose.msra.mxu0 0.0
  %7976 = vmatprep.subr.mxu0 0.0
  %7977 = vmatpush1.xpose.msra.mxu0 0.0
  %7978 = vmatprep.subr.mxu0 0.0
  %7979 = vmatpush1.xpose.msra.mxu0 0.0
  %7980 = vmatprep.subr.mxu0 0.0
  %7981 = vmatpush1.xpose.msra.mxu0 0.0
  %7982 = vmatprep.subr.mxu0 0.0
  %7983 = vmatpush1.xpose.msra.mxu0 0.0
  %7984 = vmatprep.subr.mxu0 0.0
  %7985 = vmatpush1.xpose.msra.mxu0 0.0
  %7986 = vmatprep.subr.mxu0 0.0
  %7987 = vmatpush1.xpose.msra.mxu0 0.0
  %7988 = vmatprep.subr.mxu0 0.0
  %7989 = vmatpush1.xpose.msra.mxu0 0.0
  %7990 = vmatprep.subr.mxu0 0.0
  %7991 = vmatpush1.xpose.msra.mxu0 0.0
  %7992 = vmatprep.subr.mxu0 0.0
  %7993 = vmatpush1.xpose.msra.mxu0 0.0
  %7994 = vmatprep.subr.mxu0 0.0
  %7995 = vmatpush1.xpose.msra.mxu0 0.0
  %7996 = vmatprep.subr.mxu0 0.0
  %7997 = vmatpush1.xpose.msra.mxu0 %v7966
  %7998 = vmatprep.subr.mxu0 0.0
  %7999 = vmatpush1.xpose.msra.mxu0 %v7964
  %8000 = vmatprep.subr.mxu0 0.0
  %8001 = vmatpush2.xpose.msra.mxu0 0.0
  %8002 = vmatprep.subr.mxu0 0.0
  %8003 = vmatpush2.xpose.msra.mxu0 0.0
  %8004 = vmatprep.subr.mxu0 0.0
  %8005 = vmatpush2.xpose.msra.mxu0 0.0
  %8006 = vmatprep.subr.mxu0 0.0
  %8007 = vmatpush2.xpose.msra.mxu0 0.0
  %8008 = vmatprep.subr.mxu0 0.0
  %8009 = vmatpush2.xpose.msra.mxu0 0.0
  %8010 = vmatprep.subr.mxu0 0.0
  %8011 = vmatpush2.xpose.msra.mxu0 0.0
  %8012 = vmatprep.subr.mxu0 0.0
  %8013 = vmatpush2.xpose.msra.mxu0 0.0
  %8014 = vmatprep.subr.mxu0 0.0
  %8015 = vmatpush2.xpose.msra.mxu0 0.0
  %8016 = vmatprep.subr.mxu0 0.0
  %8017 = vmatpush2.xpose.msra.mxu0 0.0
  %8018 = vmatprep.subr.mxu0 0.0
  %8019 = vmatpush2.xpose.msra.mxu0 0.0
  %8020 = vmatprep.subr.mxu0 0.0
  %8021 = vmatpush2.xpose.msra.mxu0 0.0
  %8022 = vmatprep.subr.mxu0 0.0
  %8023 = vmatpush2.xpose.msra.mxu0 0.0
  %8024 = vmatprep.subr.mxu0 0.0
  %8025 = vmatpush2.xpose.msra.mxu0 0.0
  %8026 = vmatprep.subr.mxu0 0.0
  %8027 = vmatpush2.xpose.msra.mxu0 0.0
  %8028 = vmatprep.subr.mxu0 0.0
  %8029 = vmatpush2.xpose.msra.mxu0 0.0
  %8030 = vmatprep.subr.mxu0 0.0
  %8031 = vmatpush2.xpose.msra.mxu0 0.0
  %8032 = vmatprep.mubr.f32.mxu0 0.0
  %8033 = vmatmul.mubr.f32.gmra.mxu0 %v7884
  %v8034 = vpop.f32.mrf.mxu0
  %v8035 = vadd.f32 0.0, %v8034
  %v8036 = vpop.f32.mrf.mxu0
  %8037 = vdwg.mxu0
  %v8038 = vsel %vm281, %v7957, -inf
  %8039 = vmax.xlane.f32.xlu0 %v8038
  %v8040 = vpop.xlane.xlu0 %8039
  %v8041 = vsel %vm281, %v8035, -inf
  %8042 = vmax.xlane.f32.xlu0 %v8041
  %v8043 = vpop.xlane.xlu0 %8042
  %v8044 = vsub.f32 %v7957, %v8040
  %v8045 = vsub.f32 %v8035, %v8043
  %v8046 = vmul.f32 %v8044, 1.442695
  %v8047 = vpow.pop %v8046
  %v8048 = vmul.f32 %v8045, 1.442695
  %v8049 = vpow.pop %v8048
  %v8050 = vsel %vm281, %v8047, 0.0
  %8051 = vadd.xlane.f32.xlu0 %v8050
  %v8052 = vpop.xlane.xlu0 %8051
  %v8053 = vsel %vm281, %v8049, 0.0
  %8054 = vadd.xlane.f32.xlu0 %v8053
  %v8055 = vpop.xlane.xlu0 %8054
  %v8056 = vrcp.pop %v8052
  %v8057 = vrcp.pop %v8055
  %v8058 = vmul.f32 %v8047, %v8056
  %v8059 = vmul.f32 %v8049, %v8057
  %8060 = vrot.lane.b32.xlu0 %v7525, 88
  %v8061 = vpop.permute.xlu0 %8060
  %8062 = vrot.lane.b32.xlu0 %v7530, 88
  %v8063 = vpop.permute.xlu0 %8062
  %v8067 = vsel %vm281, %v8058, 0
  %8069 = vmatprep.subr.mxu0 0.0
  %8070 = vmatpush1.msra.mxu0 0.0
  %8071 = vmatprep.subr.mxu0 0.0
  %8072 = vmatpush1.msra.mxu0 0.0
  %8073 = vmatprep.subr.mxu0 0.0
  %8074 = vmatpush1.msra.mxu0 0.0
  %8075 = vmatprep.subr.mxu0 0.0
  %8076 = vmatpush1.msra.mxu0 0.0
  %8077 = vmatprep.subr.mxu0 0.0
  %8078 = vmatpush1.msra.mxu0 0.0
  %8079 = vmatprep.subr.mxu0 0.0
  %8080 = vmatpush1.msra.mxu0 0.0
  %8081 = vmatprep.subr.mxu0 0.0
  %8082 = vmatpush1.msra.mxu0 0.0
  %8083 = vmatprep.subr.mxu0 0.0
  %8084 = vmatpush1.msra.mxu0 0.0
  %8085 = vmatprep.subr.mxu0 0.0
  %8086 = vmatpush1.msra.mxu0 0.0
  %8087 = vmatprep.subr.mxu0 0.0
  %8088 = vmatpush1.msra.mxu0 0.0
  %8089 = vmatprep.subr.mxu0 0.0
  %8090 = vmatpush1.msra.mxu0 0.0
  %8091 = vmatprep.subr.mxu0 0.0
  %8092 = vmatpush1.msra.mxu0 0.0
  %8093 = vmatprep.subr.mxu0 0.0
  %8094 = vmatpush1.msra.mxu0 0.0
  %8095 = vmatprep.subr.mxu0 0.0
  %8096 = vmatpush1.msra.mxu0 0.0
  %8097 = vmatprep.subr.mxu0 0.0
  %8098 = vmatpush1.msra.mxu0 %v8063
  %8099 = vmatprep.subr.mxu0 0.0
  %8100 = vmatpush1.msra.mxu0 %v8061
  %8101 = vmatprep.subr.mxu0 0.0
  %8102 = vmatpush2.msra.mxu0 0.0
  %8103 = vmatprep.subr.mxu0 0.0
  %8104 = vmatpush2.msra.mxu0 0.0
  %8105 = vmatprep.subr.mxu0 0.0
  %8106 = vmatpush2.msra.mxu0 0.0
  %8107 = vmatprep.subr.mxu0 0.0
  %8108 = vmatpush2.msra.mxu0 0.0
  %8109 = vmatprep.subr.mxu0 0.0
  %8110 = vmatpush2.msra.mxu0 0.0
  %8111 = vmatprep.subr.mxu0 0.0
  %8112 = vmatpush2.msra.mxu0 0.0
  %8113 = vmatprep.subr.mxu0 0.0
  %8114 = vmatpush2.msra.mxu0 0.0
  %8115 = vmatprep.subr.mxu0 0.0
  %8116 = vmatpush2.msra.mxu0 0.0
  %8117 = vmatprep.subr.mxu0 0.0
  %8118 = vmatpush2.msra.mxu0 0.0
  %8119 = vmatprep.subr.mxu0 0.0
  %8120 = vmatpush2.msra.mxu0 0.0
  %8121 = vmatprep.subr.mxu0 0.0
  %8122 = vmatpush2.msra.mxu0 0.0
  %8123 = vmatprep.subr.mxu0 0.0
  %8124 = vmatpush2.msra.mxu0 0.0
  %8125 = vmatprep.subr.mxu0 0.0
  %8126 = vmatpush2.msra.mxu0 0.0
  %8127 = vmatprep.subr.mxu0 0.0
  %8128 = vmatpush2.msra.mxu0 0.0
  %8129 = vmatprep.subr.mxu0 0.0
  %8130 = vmatpush2.msra.mxu0 0.0
  %8131 = vmatprep.subr.mxu0 0.0
  %8132 = vmatpush2.msra.mxu0 0.0
  %8133 = vmatprep.mubr.f32.mxu0 0.0
  %8134 = vmatmul.mubr.f32.gmra.mxu0 %v8067
  %v8135 = vpop.f32.mrf.mxu0
  %v8136 = vadd.f32 0.0, %v8135
  %v8137 = vpop.f32.mrf.mxu0
  %8138 = vdwg.mxu0
  %8139 = vrot.lane.b32.xlu0 %v7535, 88
  %v8140 = vpop.permute.xlu0 %8139
  %8141 = vrot.lane.b32.xlu0 %v7540, 88
  %v8142 = vpop.permute.xlu0 %8141
  %v8146 = vsel %vm281, %v8059, 0
  %8148 = vmatprep.subr.mxu0 0.0
  %8149 = vmatpush1.msra.mxu0 0.0
  %8150 = vmatprep.subr.mxu0 0.0
  %8151 = vmatpush1.msra.mxu0 0.0
  %8152 = vmatprep.subr.mxu0 0.0
  %8153 = vmatpush1.msra.mxu0 0.0
  %8154 = vmatprep.subr.mxu0 0.0
  %8155 = vmatpush1.msra.mxu0 0.0
  %8156 = vmatprep.subr.mxu0 0.0
  %8157 = vmatpush1.msra.mxu0 0.0
  %8158 = vmatprep.subr.mxu0 0.0
  %8159 = vmatpush1.msra.mxu0 0.0
  %8160 = vmatprep.subr.mxu0 0.0
  %8161 = vmatpush1.msra.mxu0 0.0
  %8162 = vmatprep.subr.mxu0 0.0
  %8163 = vmatpush1.msra.mxu0 0.0
  %8164 = vmatprep.subr.mxu0 0.0
  %8165 = vmatpush1.msra.mxu0 0.0
  %8166 = vmatprep.subr.mxu0 0.0
  %8167 = vmatpush1.msra.mxu0 0.0
  %8168 = vmatprep.subr.mxu0 0.0
  %8169 = vmatpush1.msra.mxu0 0.0
  %8170 = vmatprep.subr.mxu0 0.0
  %8171 = vmatpush1.msra.mxu0 0.0
  %8172 = vmatprep.subr.mxu0 0.0
  %8173 = vmatpush1.msra.mxu0 0.0
  %8174 = vmatprep.subr.mxu0 0.0
  %8175 = vmatpush1.msra.mxu0 0.0
  %8176 = vmatprep.subr.mxu0 0.0
  %8177 = vmatpush1.msra.mxu0 %v8142
  %8178 = vmatprep.subr.mxu0 0.0
  %8179 = vmatpush1.msra.mxu0 %v8140
  %8180 = vmatprep.subr.mxu0 0.0
  %8181 = vmatpush2.msra.mxu0 0.0
  %8182 = vmatprep.subr.mxu0 0.0
  %8183 = vmatpush2.msra.mxu0 0.0
  %8184 = vmatprep.subr.mxu0 0.0
  %8185 = vmatpush2.msra.mxu0 0.0
  %8186 = vmatprep.subr.mxu0 0.0
  %8187 = vmatpush2.msra.mxu0 0.0
  %8188 = vmatprep.subr.mxu0 0.0
  %8189 = vmatpush2.msra.mxu0 0.0
  %8190 = vmatprep.subr.mxu0 0.0
  %8191 = vmatpush2.msra.mxu0 0.0
  %8192 = vmatprep.subr.mxu0 0.0
  %8193 = vmatpush2.msra.mxu0 0.0
  %8194 = vmatprep.subr.mxu0 0.0
  %8195 = vmatpush2.msra.mxu0 0.0
  %8196 = vmatprep.subr.mxu0 0.0
  %8197 = vmatpush2.msra.mxu0 0.0
  %8198 = vmatprep.subr.mxu0 0.0
  %8199 = vmatpush2.msra.mxu0 0.0
  %8200 = vmatprep.subr.mxu0 0.0
  %8201 = vmatpush2.msra.mxu0 0.0
  %8202 = vmatprep.subr.mxu0 0.0
  %8203 = vmatpush2.msra.mxu0 0.0
  %8204 = vmatprep.subr.mxu0 0.0
  %8205 = vmatpush2.msra.mxu0 0.0
  %8206 = vmatprep.subr.mxu0 0.0
  %8207 = vmatpush2.msra.mxu0 0.0
  %8208 = vmatprep.subr.mxu0 0.0
  %8209 = vmatpush2.msra.mxu0 0.0
  %8210 = vmatprep.subr.mxu0 0.0
  %8211 = vmatpush2.msra.mxu0 0.0
  %8212 = vmatprep.mubr.f32.mxu0 0.0
  %8213 = vmatmul.mubr.f32.gmra.mxu0 %v8146
  %v8214 = vpop.f32.mrf.mxu0
  %v8215 = vadd.f32 0.0, %v8214
  %v8216 = vpop.f32.mrf.mxu0
  %8217 = vdwg.mxu0
  %8218 = vrot.lane.b32.xlu0 %v7436, 112
  %v8219 = vpop.permute.xlu0 %8218
  %8220 = vrot.lane.b32.xlu0 %v7525, 112
  %v8221 = vpop.permute.xlu0 %8220
  %8222 = vrot.lane.b32.xlu0 %v7530, 112
  %v8223 = vpop.permute.xlu0 %8222
  %v8224 = vsel %vm28, %v8219, 0
  %v8226 = vsel %vm28, %v8221, 0
  %v8228 = vsel %vm28, %v8223, 0
  %8230 = vmatprep.subr.mxu0 0.0
  %8231 = vmatpush1.xpose.msra.mxu0 0.0
  %8232 = vmatprep.subr.mxu0 0.0
  %8233 = vmatpush1.xpose.msra.mxu0 0.0
  %8234 = vmatprep.subr.mxu0 0.0
  %8235 = vmatpush1.xpose.msra.mxu0 0.0
  %8236 = vmatprep.subr.mxu0 0.0
  %8237 = vmatpush1.xpose.msra.mxu0 0.0
  %8238 = vmatprep.subr.mxu0 0.0
  %8239 = vmatpush1.xpose.msra.mxu0 0.0
  %8240 = vmatprep.subr.mxu0 0.0
  %8241 = vmatpush1.xpose.msra.mxu0 0.0
  %8242 = vmatprep.subr.mxu0 0.0
  %8243 = vmatpush1.xpose.msra.mxu0 0.0
  %8244 = vmatprep.subr.mxu0 0.0
  %8245 = vmatpush1.xpose.msra.mxu0 0.0
  %8246 = vmatprep.subr.mxu0 0.0
  %8247 = vmatpush1.xpose.msra.mxu0 0.0
  %8248 = vmatprep.subr.mxu0 0.0
  %8249 = vmatpush1.xpose.msra.mxu0 0.0
  %8250 = vmatprep.subr.mxu0 0.0
  %8251 = vmatpush1.xpose.msra.mxu0 0.0
  %8252 = vmatprep.subr.mxu0 0.0
  %8253 = vmatpush1.xpose.msra.mxu0 0.0
  %8254 = vmatprep.subr.mxu0 0.0
  %8255 = vmatpush1.xpose.msra.mxu0 0.0
  %8256 = vmatprep.subr.mxu0 0.0
  %8257 = vmatpush1.xpose.msra.mxu0 0.0
  %8258 = vmatprep.subr.mxu0 0.0
  %8259 = vmatpush1.xpose.msra.mxu0 %v8228
  %8260 = vmatprep.subr.mxu0 0.0
  %8261 = vmatpush1.xpose.msra.mxu0 %v8226
  %8262 = vmatprep.subr.mxu0 0.0
  %8263 = vmatpush2.xpose.msra.mxu0 0.0
  %8264 = vmatprep.subr.mxu0 0.0
  %8265 = vmatpush2.xpose.msra.mxu0 0.0
  %8266 = vmatprep.subr.mxu0 0.0
  %8267 = vmatpush2.xpose.msra.mxu0 0.0
  %8268 = vmatprep.subr.mxu0 0.0
  %8269 = vmatpush2.xpose.msra.mxu0 0.0
  %8270 = vmatprep.subr.mxu0 0.0
  %8271 = vmatpush2.xpose.msra.mxu0 0.0
  %8272 = vmatprep.subr.mxu0 0.0
  %8273 = vmatpush2.xpose.msra.mxu0 0.0
  %8274 = vmatprep.subr.mxu0 0.0
  %8275 = vmatpush2.xpose.msra.mxu0 0.0
  %8276 = vmatprep.subr.mxu0 0.0
  %8277 = vmatpush2.xpose.msra.mxu0 0.0
  %8278 = vmatprep.subr.mxu0 0.0
  %8279 = vmatpush2.xpose.msra.mxu0 0.0
  %8280 = vmatprep.subr.mxu0 0.0
  %8281 = vmatpush2.xpose.msra.mxu0 0.0
  %8282 = vmatprep.subr.mxu0 0.0
  %8283 = vmatpush2.xpose.msra.mxu0 0.0
  %8284 = vmatprep.subr.mxu0 0.0
  %8285 = vmatpush2.xpose.msra.mxu0 0.0
  %8286 = vmatprep.subr.mxu0 0.0
  %8287 = vmatpush2.xpose.msra.mxu0 0.0
  %8288 = vmatprep.subr.mxu0 0.0
  %8289 = vmatpush2.xpose.msra.mxu0 0.0
  %8290 = vmatprep.subr.mxu0 0.0
  %8291 = vmatpush2.xpose.msra.mxu0 0.0
  %8292 = vmatprep.subr.mxu0 0.0
  %8293 = vmatpush2.xpose.msra.mxu0 0.0
  %8294 = vmatprep.mubr.f32.mxu0 0.0
  %8295 = vmatmul.mubr.f32.gmra.mxu0 %v8224
  %v8296 = vpop.f32.mrf.mxu0
  %v8297 = vadd.f32 0.0, %v8296
  %v8298 = vpop.f32.mrf.mxu0
  %8299 = vdwg.mxu0
  %8300 = vrot.lane.b32.xlu0 %v7535, 112
  %v8301 = vpop.permute.xlu0 %8300
  %8302 = vrot.lane.b32.xlu0 %v7540, 112
  %v8303 = vpop.permute.xlu0 %8302
  %v8304 = vsel %vm28, %v8301, 0
  %v8306 = vsel %vm28, %v8303, 0
  %8308 = vmatprep.subr.mxu0 0.0
  %8309 = vmatpush1.xpose.msra.mxu0 0.0
  %8310 = vmatprep.subr.mxu0 0.0
  %8311 = vmatpush1.xpose.msra.mxu0 0.0
  %8312 = vmatprep.subr.mxu0 0.0
  %8313 = vmatpush1.xpose.msra.mxu0 0.0
  %8314 = vmatprep.subr.mxu0 0.0
  %8315 = vmatpush1.xpose.msra.mxu0 0.0
  %8316 = vmatprep.subr.mxu0 0.0
  %8317 = vmatpush1.xpose.msra.mxu0 0.0
  %8318 = vmatprep.subr.mxu0 0.0
  %8319 = vmatpush1.xpose.msra.mxu0 0.0
  %8320 = vmatprep.subr.mxu0 0.0
  %8321 = vmatpush1.xpose.msra.mxu0 0.0
  %8322 = vmatprep.subr.mxu0 0.0
  %8323 = vmatpush1.xpose.msra.mxu0 0.0
  %8324 = vmatprep.subr.mxu0 0.0
  %8325 = vmatpush1.xpose.msra.mxu0 0.0
  %8326 = vmatprep.subr.mxu0 0.0
  %8327 = vmatpush1.xpose.msra.mxu0 0.0
  %8328 = vmatprep.subr.mxu0 0.0
  %8329 = vmatpush1.xpose.msra.mxu0 0.0
  %8330 = vmatprep.subr.mxu0 0.0
  %8331 = vmatpush1.xpose.msra.mxu0 0.0
  %8332 = vmatprep.subr.mxu0 0.0
  %8333 = vmatpush1.xpose.msra.mxu0 0.0
  %8334 = vmatprep.subr.mxu0 0.0
  %8335 = vmatpush1.xpose.msra.mxu0 0.0
  %8336 = vmatprep.subr.mxu0 0.0
  %8337 = vmatpush1.xpose.msra.mxu0 %v8306
  %8338 = vmatprep.subr.mxu0 0.0
  %8339 = vmatpush1.xpose.msra.mxu0 %v8304
  %8340 = vmatprep.subr.mxu0 0.0
  %8341 = vmatpush2.xpose.msra.mxu0 0.0
  %8342 = vmatprep.subr.mxu0 0.0
  %8343 = vmatpush2.xpose.msra.mxu0 0.0
  %8344 = vmatprep.subr.mxu0 0.0
  %8345 = vmatpush2.xpose.msra.mxu0 0.0
  %8346 = vmatprep.subr.mxu0 0.0
  %8347 = vmatpush2.xpose.msra.mxu0 0.0
  %8348 = vmatprep.subr.mxu0 0.0
  %8349 = vmatpush2.xpose.msra.mxu0 0.0
  %8350 = vmatprep.subr.mxu0 0.0
  %8351 = vmatpush2.xpose.msra.mxu0 0.0
  %8352 = vmatprep.subr.mxu0 0.0
  %8353 = vmatpush2.xpose.msra.mxu0 0.0
  %8354 = vmatprep.subr.mxu0 0.0
  %8355 = vmatpush2.xpose.msra.mxu0 0.0
  %8356 = vmatprep.subr.mxu0 0.0
  %8357 = vmatpush2.xpose.msra.mxu0 0.0
  %8358 = vmatprep.subr.mxu0 0.0
  %8359 = vmatpush2.xpose.msra.mxu0 0.0
  %8360 = vmatprep.subr.mxu0 0.0
  %8361 = vmatpush2.xpose.msra.mxu0 0.0
  %8362 = vmatprep.subr.mxu0 0.0
  %8363 = vmatpush2.xpose.msra.mxu0 0.0
  %8364 = vmatprep.subr.mxu0 0.0
  %8365 = vmatpush2.xpose.msra.mxu0 0.0
  %8366 = vmatprep.subr.mxu0 0.0
  %8367 = vmatpush2.xpose.msra.mxu0 0.0
  %8368 = vmatprep.subr.mxu0 0.0
  %8369 = vmatpush2.xpose.msra.mxu0 0.0
  %8370 = vmatprep.subr.mxu0 0.0
  %8371 = vmatpush2.xpose.msra.mxu0 0.0
  %8372 = vmatprep.mubr.f32.mxu0 0.0
  %8373 = vmatmul.mubr.f32.gmra.mxu0 %v8224
  %v8374 = vpop.f32.mrf.mxu0
  %v8375 = vadd.f32 0.0, %v8374
  %v8376 = vpop.f32.mrf.mxu0
  %8377 = vdwg.mxu0
  %v8378 = vsel %vm281, %v8297, -inf
  %8379 = vmax.xlane.f32.xlu0 %v8378
  %v8380 = vpop.xlane.xlu0 %8379
  %v8381 = vsel %vm281, %v8375, -inf
  %8382 = vmax.xlane.f32.xlu0 %v8381
  %v8383 = vpop.xlane.xlu0 %8382
  %v8384 = vsub.f32 %v8297, %v8380
  %v8385 = vsub.f32 %v8375, %v8383
  %v8386 = vmul.f32 %v8384, 1.442695
  %v8387 = vpow.pop %v8386
  %v8388 = vmul.f32 %v8385, 1.442695
  %v8389 = vpow.pop %v8388
  %v8390 = vsel %vm281, %v8387, 0.0
  %8391 = vadd.xlane.f32.xlu0 %v8390
  %v8392 = vpop.xlane.xlu0 %8391
  %v8393 = vsel %vm281, %v8389, 0.0
  %8394 = vadd.xlane.f32.xlu0 %v8393
  %v8395 = vpop.xlane.xlu0 %8394
  %v8396 = vrcp.pop %v8392
  %v8397 = vrcp.pop %v8395
  %v8398 = vmul.f32 %v8387, %v8396
  %v8399 = vmul.f32 %v8389, %v8397
  %8400 = vrot.lane.b32.xlu0 %v7525, 80
  %v8401 = vpop.permute.xlu0 %8400
  %8402 = vrot.lane.b32.xlu0 %v7530, 80
  %v8403 = vpop.permute.xlu0 %8402
  %v8407 = vsel %vm281, %v8398, 0
  %8409 = vmatprep.subr.mxu0 0.0
  %8410 = vmatpush1.msra.mxu0 0.0
  %8411 = vmatprep.subr.mxu0 0.0
  %8412 = vmatpush1.msra.mxu0 0.0
  %8413 = vmatprep.subr.mxu0 0.0
  %8414 = vmatpush1.msra.mxu0 0.0
  %8415 = vmatprep.subr.mxu0 0.0
  %8416 = vmatpush1.msra.mxu0 0.0
  %8417 = vmatprep.subr.mxu0 0.0
  %8418 = vmatpush1.msra.mxu0 0.0
  %8419 = vmatprep.subr.mxu0 0.0
  %8420 = vmatpush1.msra.mxu0 0.0
  %8421 = vmatprep.subr.mxu0 0.0
  %8422 = vmatpush1.msra.mxu0 0.0
  %8423 = vmatprep.subr.mxu0 0.0
  %8424 = vmatpush1.msra.mxu0 0.0
  %8425 = vmatprep.subr.mxu0 0.0
  %8426 = vmatpush1.msra.mxu0 0.0
  %8427 = vmatprep.subr.mxu0 0.0
  %8428 = vmatpush1.msra.mxu0 0.0
  %8429 = vmatprep.subr.mxu0 0.0
  %8430 = vmatpush1.msra.mxu0 0.0
  %8431 = vmatprep.subr.mxu0 0.0
  %8432 = vmatpush1.msra.mxu0 0.0
  %8433 = vmatprep.subr.mxu0 0.0
  %8434 = vmatpush1.msra.mxu0 0.0
  %8435 = vmatprep.subr.mxu0 0.0
  %8436 = vmatpush1.msra.mxu0 0.0
  %8437 = vmatprep.subr.mxu0 0.0
  %8438 = vmatpush1.msra.mxu0 %v8403
  %8439 = vmatprep.subr.mxu0 0.0
  %8440 = vmatpush1.msra.mxu0 %v8401
  %8441 = vmatprep.subr.mxu0 0.0
  %8442 = vmatpush2.msra.mxu0 0.0
  %8443 = vmatprep.subr.mxu0 0.0
  %8444 = vmatpush2.msra.mxu0 0.0
  %8445 = vmatprep.subr.mxu0 0.0
  %8446 = vmatpush2.msra.mxu0 0.0
  %8447 = vmatprep.subr.mxu0 0.0
  %8448 = vmatpush2.msra.mxu0 0.0
  %8449 = vmatprep.subr.mxu0 0.0
  %8450 = vmatpush2.msra.mxu0 0.0
  %8451 = vmatprep.subr.mxu0 0.0
  %8452 = vmatpush2.msra.mxu0 0.0
  %8453 = vmatprep.subr.mxu0 0.0
  %8454 = vmatpush2.msra.mxu0 0.0
  %8455 = vmatprep.subr.mxu0 0.0
  %8456 = vmatpush2.msra.mxu0 0.0
  %8457 = vmatprep.subr.mxu0 0.0
  %8458 = vmatpush2.msra.mxu0 0.0
  %8459 = vmatprep.subr.mxu0 0.0
  %8460 = vmatpush2.msra.mxu0 0.0
  %8461 = vmatprep.subr.mxu0 0.0
  %8462 = vmatpush2.msra.mxu0 0.0
  %8463 = vmatprep.subr.mxu0 0.0
  %8464 = vmatpush2.msra.mxu0 0.0
  %8465 = vmatprep.subr.mxu0 0.0
  %8466 = vmatpush2.msra.mxu0 0.0
  %8467 = vmatprep.subr.mxu0 0.0
  %8468 = vmatpush2.msra.mxu0 0.0
  %8469 = vmatprep.subr.mxu0 0.0
  %8470 = vmatpush2.msra.mxu0 0.0
  %8471 = vmatprep.subr.mxu0 0.0
  %8472 = vmatpush2.msra.mxu0 0.0
  %8473 = vmatprep.mubr.f32.mxu0 0.0
  %8474 = vmatmul.mubr.f32.gmra.mxu0 %v8407
  %v8475 = vpop.f32.mrf.mxu0
  %v8476 = vadd.f32 0.0, %v8475
  %v8477 = vpop.f32.mrf.mxu0
  %8478 = vdwg.mxu0
  %8479 = vrot.lane.b32.xlu0 %v7535, 80
  %v8480 = vpop.permute.xlu0 %8479
  %8481 = vrot.lane.b32.xlu0 %v7540, 80
  %v8482 = vpop.permute.xlu0 %8481
  %v8486 = vsel %vm281, %v8399, 0
  %8488 = vmatprep.subr.mxu0 0.0
  %8489 = vmatpush1.msra.mxu0 0.0
  %8490 = vmatprep.subr.mxu0 0.0
  %8491 = vmatpush1.msra.mxu0 0.0
  %8492 = vmatprep.subr.mxu0 0.0
  %8493 = vmatpush1.msra.mxu0 0.0
  %8494 = vmatprep.subr.mxu0 0.0
  %8495 = vmatpush1.msra.mxu0 0.0
  %8496 = vmatprep.subr.mxu0 0.0
  %8497 = vmatpush1.msra.mxu0 0.0
  %8498 = vmatprep.subr.mxu0 0.0
  %8499 = vmatpush1.msra.mxu0 0.0
  %8500 = vmatprep.subr.mxu0 0.0
  %8501 = vmatpush1.msra.mxu0 0.0
  %8502 = vmatprep.subr.mxu0 0.0
  %8503 = vmatpush1.msra.mxu0 0.0
  %8504 = vmatprep.subr.mxu0 0.0
  %8505 = vmatpush1.msra.mxu0 0.0
  %8506 = vmatprep.subr.mxu0 0.0
  %8507 = vmatpush1.msra.mxu0 0.0
  %8508 = vmatprep.subr.mxu0 0.0
  %8509 = vmatpush1.msra.mxu0 0.0
  %8510 = vmatprep.subr.mxu0 0.0
  %8511 = vmatpush1.msra.mxu0 0.0
  %8512 = vmatprep.subr.mxu0 0.0
  %8513 = vmatpush1.msra.mxu0 0.0
  %8514 = vmatprep.subr.mxu0 0.0
  %8515 = vmatpush1.msra.mxu0 0.0
  %8516 = vmatprep.subr.mxu0 0.0
  %8517 = vmatpush1.msra.mxu0 %v8482
  %8518 = vmatprep.subr.mxu0 0.0
  %8519 = vmatpush1.msra.mxu0 %v8480
  %8520 = vmatprep.subr.mxu0 0.0
  %8521 = vmatpush2.msra.mxu0 0.0
  %8522 = vmatprep.subr.mxu0 0.0
  %8523 = vmatpush2.msra.mxu0 0.0
  %8524 = vmatprep.subr.mxu0 0.0
  %8525 = vmatpush2.msra.mxu0 0.0
  %8526 = vmatprep.subr.mxu0 0.0
  %8527 = vmatpush2.msra.mxu0 0.0
  %8528 = vmatprep.subr.mxu0 0.0
  %8529 = vmatpush2.msra.mxu0 0.0
  %8530 = vmatprep.subr.mxu0 0.0
  %8531 = vmatpush2.msra.mxu0 0.0
  %8532 = vmatprep.subr.mxu0 0.0
  %8533 = vmatpush2.msra.mxu0 0.0
  %8534 = vmatprep.subr.mxu0 0.0
  %8535 = vmatpush2.msra.mxu0 0.0
  %8536 = vmatprep.subr.mxu0 0.0
  %8537 = vmatpush2.msra.mxu0 0.0
  %8538 = vmatprep.subr.mxu0 0.0
  %8539 = vmatpush2.msra.mxu0 0.0
  %8540 = vmatprep.subr.mxu0 0.0
  %8541 = vmatpush2.msra.mxu0 0.0
  %8542 = vmatprep.subr.mxu0 0.0
  %8543 = vmatpush2.msra.mxu0 0.0
  %8544 = vmatprep.subr.mxu0 0.0
  %8545 = vmatpush2.msra.mxu0 0.0
  %8546 = vmatprep.subr.mxu0 0.0
  %8547 = vmatpush2.msra.mxu0 0.0
  %8548 = vmatprep.subr.mxu0 0.0
  %8549 = vmatpush2.msra.mxu0 0.0
  %8550 = vmatprep.subr.mxu0 0.0
  %8551 = vmatpush2.msra.mxu0 0.0
  %8552 = vmatprep.mubr.f32.mxu0 0.0
  %8553 = vmatmul.mubr.f32.gmra.mxu0 %v8486
  %v8554 = vpop.f32.mrf.mxu0
  %v8555 = vadd.f32 0.0, %v8554
  %v8556 = vpop.f32.mrf.mxu0
  %8557 = vdwg.mxu0
  %8558 = vrot.lane.b32.xlu0 %v7436, 104
  %v8559 = vpop.permute.xlu0 %8558
  %8560 = vrot.lane.b32.xlu0 %v7525, 104
  %v8561 = vpop.permute.xlu0 %8560
  %8562 = vrot.lane.b32.xlu0 %v7530, 104
  %v8563 = vpop.permute.xlu0 %8562
  %v8564 = vsel %vm28, %v8559, 0
  %v8566 = vsel %vm28, %v8561, 0
  %v8568 = vsel %vm28, %v8563, 0
  %8570 = vmatprep.subr.mxu0 0.0
  %8571 = vmatpush1.xpose.msra.mxu0 0.0
  %8572 = vmatprep.subr.mxu0 0.0
  %8573 = vmatpush1.xpose.msra.mxu0 0.0
  %8574 = vmatprep.subr.mxu0 0.0
  %8575 = vmatpush1.xpose.msra.mxu0 0.0
  %8576 = vmatprep.subr.mxu0 0.0
  %8577 = vmatpush1.xpose.msra.mxu0 0.0
  %8578 = vmatprep.subr.mxu0 0.0
  %8579 = vmatpush1.xpose.msra.mxu0 0.0
  %8580 = vmatprep.subr.mxu0 0.0
  %8581 = vmatpush1.xpose.msra.mxu0 0.0
  %8582 = vmatprep.subr.mxu0 0.0
  %8583 = vmatpush1.xpose.msra.mxu0 0.0
  %8584 = vmatprep.subr.mxu0 0.0
  %8585 = vmatpush1.xpose.msra.mxu0 0.0
  %8586 = vmatprep.subr.mxu0 0.0
  %8587 = vmatpush1.xpose.msra.mxu0 0.0
  %8588 = vmatprep.subr.mxu0 0.0
  %8589 = vmatpush1.xpose.msra.mxu0 0.0
  %8590 = vmatprep.subr.mxu0 0.0
  %8591 = vmatpush1.xpose.msra.mxu0 0.0
  %8592 = vmatprep.subr.mxu0 0.0
  %8593 = vmatpush1.xpose.msra.mxu0 0.0
  %8594 = vmatprep.subr.mxu0 0.0
  %8595 = vmatpush1.xpose.msra.mxu0 0.0
  %8596 = vmatprep.subr.mxu0 0.0
  %8597 = vmatpush1.xpose.msra.mxu0 0.0
  %8598 = vmatprep.subr.mxu0 0.0
  %8599 = vmatpush1.xpose.msra.mxu0 %v8568
  %8600 = vmatprep.subr.mxu0 0.0
  %8601 = vmatpush1.xpose.msra.mxu0 %v8566
  %8602 = vmatprep.subr.mxu0 0.0
  %8603 = vmatpush2.xpose.msra.mxu0 0.0
  %8604 = vmatprep.subr.mxu0 0.0
  %8605 = vmatpush2.xpose.msra.mxu0 0.0
  %8606 = vmatprep.subr.mxu0 0.0
  %8607 = vmatpush2.xpose.msra.mxu0 0.0
  %8608 = vmatprep.subr.mxu0 0.0
  %8609 = vmatpush2.xpose.msra.mxu0 0.0
  %8610 = vmatprep.subr.mxu0 0.0
  %8611 = vmatpush2.xpose.msra.mxu0 0.0
  %8612 = vmatprep.subr.mxu0 0.0
  %8613 = vmatpush2.xpose.msra.mxu0 0.0
  %8614 = vmatprep.subr.mxu0 0.0
  %8615 = vmatpush2.xpose.msra.mxu0 0.0
  %8616 = vmatprep.subr.mxu0 0.0
  %8617 = vmatpush2.xpose.msra.mxu0 0.0
  %8618 = vmatprep.subr.mxu0 0.0
  %8619 = vmatpush2.xpose.msra.mxu0 0.0
  %8620 = vmatprep.subr.mxu0 0.0
  %8621 = vmatpush2.xpose.msra.mxu0 0.0
  %8622 = vmatprep.subr.mxu0 0.0
  %8623 = vmatpush2.xpose.msra.mxu0 0.0
  %8624 = vmatprep.subr.mxu0 0.0
  %8625 = vmatpush2.xpose.msra.mxu0 0.0
  %8626 = vmatprep.subr.mxu0 0.0
  %8627 = vmatpush2.xpose.msra.mxu0 0.0
  %8628 = vmatprep.subr.mxu0 0.0
  %8629 = vmatpush2.xpose.msra.mxu0 0.0
  %8630 = vmatprep.subr.mxu0 0.0
  %8631 = vmatpush2.xpose.msra.mxu0 0.0
  %8632 = vmatprep.subr.mxu0 0.0
  %8633 = vmatpush2.xpose.msra.mxu0 0.0
  %8634 = vmatprep.mubr.f32.mxu0 0.0
  %8635 = vmatmul.mubr.f32.gmra.mxu0 %v8564
  %v8636 = vpop.f32.mrf.mxu0
  %v8637 = vadd.f32 0.0, %v8636
  %v8638 = vpop.f32.mrf.mxu0
  %8639 = vdwg.mxu0
  %8640 = vrot.lane.b32.xlu0 %v7535, 104
  %v8641 = vpop.permute.xlu0 %8640
  %8642 = vrot.lane.b32.xlu0 %v7540, 104
  %v8643 = vpop.permute.xlu0 %8642
  %v8644 = vsel %vm28, %v8641, 0
  %v8646 = vsel %vm28, %v8643, 0
  %8648 = vmatprep.subr.mxu0 0.0
  %8649 = vmatpush1.xpose.msra.mxu0 0.0
  %8650 = vmatprep.subr.mxu0 0.0
  %8651 = vmatpush1.xpose.msra.mxu0 0.0
  %8652 = vmatprep.subr.mxu0 0.0
  %8653 = vmatpush1.xpose.msra.mxu0 0.0
  %8654 = vmatprep.subr.mxu0 0.0
  %8655 = vmatpush1.xpose.msra.mxu0 0.0
  %8656 = vmatprep.subr.mxu0 0.0
  %8657 = vmatpush1.xpose.msra.mxu0 0.0
  %8658 = vmatprep.subr.mxu0 0.0
  %8659 = vmatpush1.xpose.msra.mxu0 0.0
  %8660 = vmatprep.subr.mxu0 0.0
  %8661 = vmatpush1.xpose.msra.mxu0 0.0
  %8662 = vmatprep.subr.mxu0 0.0
  %8663 = vmatpush1.xpose.msra.mxu0 0.0
  %8664 = vmatprep.subr.mxu0 0.0
  %8665 = vmatpush1.xpose.msra.mxu0 0.0
  %8666 = vmatprep.subr.mxu0 0.0
  %8667 = vmatpush1.xpose.msra.mxu0 0.0
  %8668 = vmatprep.subr.mxu0 0.0
  %8669 = vmatpush1.xpose.msra.mxu0 0.0
  %8670 = vmatprep.subr.mxu0 0.0
  %8671 = vmatpush1.xpose.msra.mxu0 0.0
  %8672 = vmatprep.subr.mxu0 0.0
  %8673 = vmatpush1.xpose.msra.mxu0 0.0
  %8674 = vmatprep.subr.mxu0 0.0
  %8675 = vmatpush1.xpose.msra.mxu0 0.0
  %8676 = vmatprep.subr.mxu0 0.0
  %8677 = vmatpush1.xpose.msra.mxu0 %v8646
  %8678 = vmatprep.subr.mxu0 0.0
  %8679 = vmatpush1.xpose.msra.mxu0 %v8644
  %8680 = vmatprep.subr.mxu0 0.0
  %8681 = vmatpush2.xpose.msra.mxu0 0.0
  %8682 = vmatprep.subr.mxu0 0.0
  %8683 = vmatpush2.xpose.msra.mxu0 0.0
  %8684 = vmatprep.subr.mxu0 0.0
  %8685 = vmatpush2.xpose.msra.mxu0 0.0
  %8686 = vmatprep.subr.mxu0 0.0
  %8687 = vmatpush2.xpose.msra.mxu0 0.0
  %8688 = vmatprep.subr.mxu0 0.0
  %8689 = vmatpush2.xpose.msra.mxu0 0.0
  %8690 = vmatprep.subr.mxu0 0.0
  %8691 = vmatpush2.xpose.msra.mxu0 0.0
  %8692 = vmatprep.subr.mxu0 0.0
  %8693 = vmatpush2.xpose.msra.mxu0 0.0
  %8694 = vmatprep.subr.mxu0 0.0
  %8695 = vmatpush2.xpose.msra.mxu0 0.0
  %8696 = vmatprep.subr.mxu0 0.0
  %8697 = vmatpush2.xpose.msra.mxu0 0.0
  %8698 = vmatprep.subr.mxu0 0.0
  %8699 = vmatpush2.xpose.msra.mxu0 0.0
  %8700 = vmatprep.subr.mxu0 0.0
  %8701 = vmatpush2.xpose.msra.mxu0 0.0
  %8702 = vmatprep.subr.mxu0 0.0
  %8703 = vmatpush2.xpose.msra.mxu0 0.0
  %8704 = vmatprep.subr.mxu0 0.0
  %8705 = vmatpush2.xpose.msra.mxu0 0.0
  %8706 = vmatprep.subr.mxu0 0.0
  %8707 = vmatpush2.xpose.msra.mxu0 0.0
  %8708 = vmatprep.subr.mxu0 0.0
  %8709 = vmatpush2.xpose.msra.mxu0 0.0
  %8710 = vmatprep.subr.mxu0 0.0
  %8711 = vmatpush2.xpose.msra.mxu0 0.0
  %8712 = vmatprep.mubr.f32.mxu0 0.0
  %8713 = vmatmul.mubr.f32.gmra.mxu0 %v8564
  %v8714 = vpop.f32.mrf.mxu0
  %v8715 = vadd.f32 0.0, %v8714
  %v8716 = vpop.f32.mrf.mxu0
  %8717 = vdwg.mxu0
  %v8718 = vsel %vm281, %v8637, -inf
  %8719 = vmax.xlane.f32.xlu0 %v8718
  %v8720 = vpop.xlane.xlu0 %8719
  %v8721 = vsel %vm281, %v8715, -inf
  %8722 = vmax.xlane.f32.xlu0 %v8721
  %v8723 = vpop.xlane.xlu0 %8722
  %v8724 = vsub.f32 %v8637, %v8720
  %v8725 = vsub.f32 %v8715, %v8723
  %v8726 = vmul.f32 %v8724, 1.442695
  %v8727 = vpow.pop %v8726
  %v8728 = vmul.f32 %v8725, 1.442695
  %v8729 = vpow.pop %v8728
  %v8730 = vsel %vm281, %v8727, 0.0
  %8731 = vadd.xlane.f32.xlu0 %v8730
  %v8732 = vpop.xlane.xlu0 %8731
  %v8733 = vsel %vm281, %v8729, 0.0
  %8734 = vadd.xlane.f32.xlu0 %v8733
  %v8735 = vpop.xlane.xlu0 %8734
  %v8736 = vrcp.pop %v8732
  %v8737 = vrcp.pop %v8735
  %v8738 = vmul.f32 %v8727, %v8736
  %v8739 = vmul.f32 %v8729, %v8737
  %8740 = vrot.lane.b32.xlu0 %v7525, 72
  %v8741 = vpop.permute.xlu0 %8740
  %8742 = vrot.lane.b32.xlu0 %v7530, 72
  %v8743 = vpop.permute.xlu0 %8742
  %v8747 = vsel %vm281, %v8738, 0
  %8749 = vmatprep.subr.mxu0 0.0
  %8750 = vmatpush1.msra.mxu0 0.0
  %8751 = vmatprep.subr.mxu0 0.0
  %8752 = vmatpush1.msra.mxu0 0.0
  %8753 = vmatprep.subr.mxu0 0.0
  %8754 = vmatpush1.msra.mxu0 0.0
  %8755 = vmatprep.subr.mxu0 0.0
  %8756 = vmatpush1.msra.mxu0 0.0
  %8757 = vmatprep.subr.mxu0 0.0
  %8758 = vmatpush1.msra.mxu0 0.0
  %8759 = vmatprep.subr.mxu0 0.0
  %8760 = vmatpush1.msra.mxu0 0.0
  %8761 = vmatprep.subr.mxu0 0.0
  %8762 = vmatpush1.msra.mxu0 0.0
  %8763 = vmatprep.subr.mxu0 0.0
  %8764 = vmatpush1.msra.mxu0 0.0
  %8765 = vmatprep.subr.mxu0 0.0
  %8766 = vmatpush1.msra.mxu0 0.0
  %8767 = vmatprep.subr.mxu0 0.0
  %8768 = vmatpush1.msra.mxu0 0.0
  %8769 = vmatprep.subr.mxu0 0.0
  %8770 = vmatpush1.msra.mxu0 0.0
  %8771 = vmatprep.subr.mxu0 0.0
  %8772 = vmatpush1.msra.mxu0 0.0
  %8773 = vmatprep.subr.mxu0 0.0
  %8774 = vmatpush1.msra.mxu0 0.0
  %8775 = vmatprep.subr.mxu0 0.0
  %8776 = vmatpush1.msra.mxu0 0.0
  %8777 = vmatprep.subr.mxu0 0.0
  %8778 = vmatpush1.msra.mxu0 %v8743
  %8779 = vmatprep.subr.mxu0 0.0
  %8780 = vmatpush1.msra.mxu0 %v8741
  %8781 = vmatprep.subr.mxu0 0.0
  %8782 = vmatpush2.msra.mxu0 0.0
  %8783 = vmatprep.subr.mxu0 0.0
  %8784 = vmatpush2.msra.mxu0 0.0
  %8785 = vmatprep.subr.mxu0 0.0
  %8786 = vmatpush2.msra.mxu0 0.0
  %8787 = vmatprep.subr.mxu0 0.0
  %8788 = vmatpush2.msra.mxu0 0.0
  %8789 = vmatprep.subr.mxu0 0.0
  %8790 = vmatpush2.msra.mxu0 0.0
  %8791 = vmatprep.subr.mxu0 0.0
  %8792 = vmatpush2.msra.mxu0 0.0
  %8793 = vmatprep.subr.mxu0 0.0
  %8794 = vmatpush2.msra.mxu0 0.0
  %8795 = vmatprep.subr.mxu0 0.0
  %8796 = vmatpush2.msra.mxu0 0.0
  %8797 = vmatprep.subr.mxu0 0.0
  %8798 = vmatpush2.msra.mxu0 0.0
  %8799 = vmatprep.subr.mxu0 0.0
  %8800 = vmatpush2.msra.mxu0 0.0
  %8801 = vmatprep.subr.mxu0 0.0
  %8802 = vmatpush2.msra.mxu0 0.0
  %8803 = vmatprep.subr.mxu0 0.0
  %8804 = vmatpush2.msra.mxu0 0.0
  %8805 = vmatprep.subr.mxu0 0.0
  %8806 = vmatpush2.msra.mxu0 0.0
  %8807 = vmatprep.subr.mxu0 0.0
  %8808 = vmatpush2.msra.mxu0 0.0
  %8809 = vmatprep.subr.mxu0 0.0
  %8810 = vmatpush2.msra.mxu0 0.0
  %8811 = vmatprep.subr.mxu0 0.0
  %8812 = vmatpush2.msra.mxu0 0.0
  %8813 = vmatprep.mubr.f32.mxu0 0.0
  %8814 = vmatmul.mubr.f32.gmra.mxu0 %v8747
  %v8815 = vpop.f32.mrf.mxu0
  %v8816 = vadd.f32 0.0, %v8815
  %v8817 = vpop.f32.mrf.mxu0
  %8818 = vdwg.mxu0
  %8819 = vrot.lane.b32.xlu0 %v7535, 72
  %v8820 = vpop.permute.xlu0 %8819
  %8821 = vrot.lane.b32.xlu0 %v7540, 72
  %v8822 = vpop.permute.xlu0 %8821
  %v8826 = vsel %vm281, %v8739, 0
  %8828 = vmatprep.subr.mxu0 0.0
  %8829 = vmatpush1.msra.mxu0 0.0
  %8830 = vmatprep.subr.mxu0 0.0
  %8831 = vmatpush1.msra.mxu0 0.0
  %8832 = vmatprep.subr.mxu0 0.0
  %8833 = vmatpush1.msra.mxu0 0.0
  %8834 = vmatprep.subr.mxu0 0.0
  %8835 = vmatpush1.msra.mxu0 0.0
  %8836 = vmatprep.subr.mxu0 0.0
  %8837 = vmatpush1.msra.mxu0 0.0
  %8838 = vmatprep.subr.mxu0 0.0
  %8839 = vmatpush1.msra.mxu0 0.0
  %8840 = vmatprep.subr.mxu0 0.0
  %8841 = vmatpush1.msra.mxu0 0.0
  %8842 = vmatprep.subr.mxu0 0.0
  %8843 = vmatpush1.msra.mxu0 0.0
  %8844 = vmatprep.subr.mxu0 0.0
  %8845 = vmatpush1.msra.mxu0 0.0
  %8846 = vmatprep.subr.mxu0 0.0
  %8847 = vmatpush1.msra.mxu0 0.0
  %8848 = vmatprep.subr.mxu0 0.0
  %8849 = vmatpush1.msra.mxu0 0.0
  %8850 = vmatprep.subr.mxu0 0.0
  %8851 = vmatpush1.msra.mxu0 0.0
  %8852 = vmatprep.subr.mxu0 0.0
  %8853 = vmatpush1.msra.mxu0 0.0
  %8854 = vmatprep.subr.mxu0 0.0
  %8855 = vmatpush1.msra.mxu0 0.0
  %8856 = vmatprep.subr.mxu0 0.0
  %8857 = vmatpush1.msra.mxu0 %v8822
  %8858 = vmatprep.subr.mxu0 0.0
  %8859 = vmatpush1.msra.mxu0 %v8820
  %8860 = vmatprep.subr.mxu0 0.0
  %8861 = vmatpush2.msra.mxu0 0.0
  %8862 = vmatprep.subr.mxu0 0.0
  %8863 = vmatpush2.msra.mxu0 0.0
  %8864 = vmatprep.subr.mxu0 0.0
  %8865 = vmatpush2.msra.mxu0 0.0
  %8866 = vmatprep.subr.mxu0 0.0
  %8867 = vmatpush2.msra.mxu0 0.0
  %8868 = vmatprep.subr.mxu0 0.0
  %8869 = vmatpush2.msra.mxu0 0.0
  %8870 = vmatprep.subr.mxu0 0.0
  %8871 = vmatpush2.msra.mxu0 0.0
  %8872 = vmatprep.subr.mxu0 0.0
  %8873 = vmatpush2.msra.mxu0 0.0
  %8874 = vmatprep.subr.mxu0 0.0
  %8875 = vmatpush2.msra.mxu0 0.0
  %8876 = vmatprep.subr.mxu0 0.0
  %8877 = vmatpush2.msra.mxu0 0.0
  %8878 = vmatprep.subr.mxu0 0.0
  %8879 = vmatpush2.msra.mxu0 0.0
  %8880 = vmatprep.subr.mxu0 0.0
  %8881 = vmatpush2.msra.mxu0 0.0
  %8882 = vmatprep.subr.mxu0 0.0
  %8883 = vmatpush2.msra.mxu0 0.0
  %8884 = vmatprep.subr.mxu0 0.0
  %8885 = vmatpush2.msra.mxu0 0.0
  %8886 = vmatprep.subr.mxu0 0.0
  %8887 = vmatpush2.msra.mxu0 0.0
  %8888 = vmatprep.subr.mxu0 0.0
  %8889 = vmatpush2.msra.mxu0 0.0
  %8890 = vmatprep.subr.mxu0 0.0
  %8891 = vmatpush2.msra.mxu0 0.0
  %8892 = vmatprep.mubr.f32.mxu0 0.0
  %8893 = vmatmul.mubr.f32.gmra.mxu0 %v8826
  %v8894 = vpop.f32.mrf.mxu0
  %v8895 = vadd.f32 0.0, %v8894
  %v8896 = vpop.f32.mrf.mxu0
  %8897 = vdwg.mxu0
  %8900 = vrot.lane.b32.xlu0 %v8136, 8
  %v8901 = vpop.permute.xlu0 %8900
  %8902 = vrot.lane.b32.xlu0 %v8215, 8
  %v8903 = vpop.permute.xlu0 %8902
  %8908 = vrot.lane.b32.xlu0 %v8476, 16
  %v8909 = vpop.permute.xlu0 %8908
  %8910 = vrot.lane.b32.xlu0 %v8555, 16
  %v8911 = vpop.permute.xlu0 %8910
  %8916 = vrot.lane.b32.xlu0 %v8816, 24
  %v8917 = vpop.permute.xlu0 %8916
  %8918 = vrot.lane.b32.xlu0 %v8895, 24
  %v8919 = vpop.permute.xlu0 %8918
  %v8922 = vsel %vm28, %v7796, %v8901
  %v8923 = vsel %vm28, %v7875, %v8903
  %v8924 = vsel %vm281, %v8922, %v8909
  %v8925 = vsel %vm281, %v8923, %v8911
  %v8926 = vsel %vm1510, %v8924, %v8917
  %v8927 = vsel %vm1510, %v8925, %v8919
  %v8928 = vadd.f32 %v7436, %v8926
  %v8929 = vadd.f32 %v7436, %v8927
  %v8930 = vld [vmem:[%s1 + $0x130] sm:$0xff]
  %v8931 = vld [vmem:[%s1 + $0x138] sm:$0xff]
  %v8932 = vld [vmem:[%s1 + $0x140] sm:$0xff]
  %v8933 = vld [vmem:[%s1 + $0x148] sm:$0xff]
  %v8934 = vld [vmem:[%s2 + $0x22] sm:$0x1]
  %v8935 = vlaneseq
  %v8936 = vshrl.u32 %v8935, 7
  %v8937 = vsub.s32 0, %v8936
  %v8938 = vrot.slane %v8934, %v8937
  %v8940 = vsel %vm1517, %v8928, 0
  %v8943 = vsel %vm1517, %v8929, 0
  %8945 = vmatprep.subr.mxu0 0.0
  %8946 = vmatpush1.msra.mxu0 0.0
  %8947 = vmatprep.subr.mxu0 0.0
  %8948 = vmatpush1.msra.mxu0 0.0
  %8949 = vmatprep.subr.mxu0 0.0
  %8950 = vmatpush1.msra.mxu0 0.0
  %8951 = vmatprep.subr.mxu0 0.0
  %8952 = vmatpush1.msra.mxu0 0.0
  %8953 = vmatprep.subr.mxu0 0.0
  %8954 = vmatpush1.msra.mxu0 0.0
  %8955 = vmatprep.subr.mxu0 0.0
  %8956 = vmatpush1.msra.mxu0 0.0
  %8957 = vmatprep.subr.mxu0 0.0
  %8958 = vmatpush1.msra.mxu0 0.0
  %8959 = vmatprep.subr.mxu0 0.0
  %8960 = vmatpush1.msra.mxu0 0.0
  %8961 = vmatprep.subr.mxu0 0.0
  %8962 = vmatpush1.msra.mxu0 0.0
  %8963 = vmatprep.subr.mxu0 0.0
  %8964 = vmatpush1.msra.mxu0 0.0
  %8965 = vmatprep.subr.mxu0 0.0
  %8966 = vmatpush1.msra.mxu0 0.0
  %8967 = vmatprep.subr.mxu0 0.0
  %8968 = vmatpush1.msra.mxu0 0.0
  %8969 = vmatprep.subr.mxu0 0.0
  %8970 = vmatpush1.msra.mxu0 %v8933
  %8971 = vmatprep.subr.mxu0 0.0
  %8972 = vmatpush1.msra.mxu0 %v8932
  %8973 = vmatprep.subr.mxu0 0.0
  %8974 = vmatpush1.msra.mxu0 %v8931
  %8975 = vmatprep.subr.mxu0 0.0
  %8976 = vmatpush1.msra.mxu0 %v8930
  %8977 = vmatprep.subr.mxu0 0.0
  %8978 = vmatpush2.msra.mxu0 0.0
  %8979 = vmatprep.subr.mxu0 0.0
  %8980 = vmatpush2.msra.mxu0 0.0
  %8981 = vmatprep.subr.mxu0 0.0
  %8982 = vmatpush2.msra.mxu0 0.0
  %8983 = vmatprep.subr.mxu0 0.0
  %8984 = vmatpush2.msra.mxu0 0.0
  %8985 = vmatprep.subr.mxu0 0.0
  %8986 = vmatpush2.msra.mxu0 0.0
  %8987 = vmatprep.subr.mxu0 0.0
  %8988 = vmatpush2.msra.mxu0 0.0
  %8989 = vmatprep.subr.mxu0 0.0
  %8990 = vmatpush2.msra.mxu0 0.0
  %8991 = vmatprep.subr.mxu0 0.0
  %8992 = vmatpush2.msra.mxu0 0.0
  %8993 = vmatprep.subr.mxu0 0.0
  %8994 = vmatpush2.msra.mxu0 0.0
  %8995 = vmatprep.subr.mxu0 0.0
  %8996 = vmatpush2.msra.mxu0 0.0
  %8997 = vmatprep.subr.mxu0 0.0
  %8998 = vmatpush2.msra.mxu0 0.0
  %8999 = vmatprep.subr.mxu0 0.0
  %9000 = vmatpush2.msra.mxu0 0.0
  %9001 = vmatprep.subr.mxu0 0.0
  %9002 = vmatpush2.msra.mxu0 0.0
  %9003 = vmatprep.subr.mxu0 0.0
  %9004 = vmatpush2.msra.mxu0 0.0
  %9005 = vmatprep.subr.mxu0 0.0
  %9006 = vmatpush2.msra.mxu0 0.0
  %9007 = vmatprep.subr.mxu0 0.0
  %9008 = vmatpush2.msra.mxu0 0.0
  %9009 = vmatprep.mubr.f32.mxu0 0.0
  %9010 = vmatmul.mubr.f32.gmra.mxu0 %v8940
  %v9011 = vpop.f32.mrf.mxu0
  %v9012 = vadd.f32 %v8938, %v9011
  %v9013 = vpop.f32.mrf.mxu0
  %9014 = vmatprep.mubr.f32.mxu0 0.0
  %9015 = vmatmul.mubr.f32.gmra.mxu0 %v8943
  %v9016 = vpop.f32.mrf.mxu0
  %v9017 = vadd.f32 %v8938, %v9016
  %v9018 = vpop.f32.mrf.mxu0
  %9019 = vdwg.mxu0
  %v9020 = vmax.f32 %v9012, 0.0
  %v9021 = vmax.f32 %v9017, 0.0
  %v9022 = vadd.f32 %v8928, %v9020
  %v9023 = vadd.f32 %v8929, %v9021
  %v9024 = vld [vmem:[%s1 + $0x150] sm:$0xff]
  %v9025 = vld [vmem:[%s1 + $0x158] sm:$0xff]
  %v9026 = vld [vmem:[%s1 + $0x160] sm:$0xff]
  %v9027 = vld [vmem:[%s1 + $0x168] sm:$0xff]
  %v9028 = vld [vmem:[%s2 + $0x28] sm:$0x1]
  %v9029 = vlaneseq
  %v9030 = vshrl.u32 %v9029, 7
  %v9031 = vsub.s32 0, %v9030
  %v9032 = vrot.slane %v9028, %v9031
  %v9034 = vsel %vm1517, %v9022, 0
  %v9037 = vsel %vm1517, %v9023, 0
  %9039 = vmatprep.subr.mxu0 0.0
  %9040 = vmatpush1.msra.mxu0 0.0
  %9041 = vmatprep.subr.mxu0 0.0
  %9042 = vmatpush1.msra.mxu0 0.0
  %9043 = vmatprep.subr.mxu0 0.0
  %9044 = vmatpush1.msra.mxu0 0.0
  %9045 = vmatprep.subr.mxu0 0.0
  %9046 = vmatpush1.msra.mxu0 0.0
  %9047 = vmatprep.subr.mxu0 0.0
  %9048 = vmatpush1.msra.mxu0 0.0
  %9049 = vmatprep.subr.mxu0 0.0
  %9050 = vmatpush1.msra.mxu0 0.0
  %9051 = vmatprep.subr.mxu0 0.0
  %9052 = vmatpush1.msra.mxu0 0.0
  %9053 = vmatprep.subr.mxu0 0.0
  %9054 = vmatpush1.msra.mxu0 0.0
  %9055 = vmatprep.subr.mxu0 0.0
  %9056 = vmatpush1.msra.mxu0 0.0
  %9057 = vmatprep.subr.mxu0 0.0
  %9058 = vmatpush1.msra.mxu0 0.0
  %9059 = vmatprep.subr.mxu0 0.0
  %9060 = vmatpush1.msra.mxu0 0.0
  %9061 = vmatprep.subr.mxu0 0.0
  %9062 = vmatpush1.msra.mxu0 0.0
  %9063 = vmatprep.subr.mxu0 0.0
  %9064 = vmatpush1.msra.mxu0 %v9027
  %9065 = vmatprep.subr.mxu0 0.0
  %9066 = vmatpush1.msra.mxu0 %v9026
  %9067 = vmatprep.subr.mxu0 0.0
  %9068 = vmatpush1.msra.mxu0 %v9025
  %9069 = vmatprep.subr.mxu0 0.0
  %9070 = vmatpush1.msra.mxu0 %v9024
  %9071 = vmatprep.subr.mxu0 0.0
  %9072 = vmatpush2.msra.mxu0 0.0
  %9073 = vmatprep.subr.mxu0 0.0
  %9074 = vmatpush2.msra.mxu0 0.0
  %9075 = vmatprep.subr.mxu0 0.0
  %9076 = vmatpush2.msra.mxu0 0.0
  %9077 = vmatprep.subr.mxu0 0.0
  %9078 = vmatpush2.msra.mxu0 0.0
  %9079 = vmatprep.subr.mxu0 0.0
  %9080 = vmatpush2.msra.mxu0 0.0
  %9081 = vmatprep.subr.mxu0 0.0
  %9082 = vmatpush2.msra.mxu0 0.0
  %9083 = vmatprep.subr.mxu0 0.0
  %9084 = vmatpush2.msra.mxu0 0.0
  %9085 = vmatprep.subr.mxu0 0.0
  %9086 = vmatpush2.msra.mxu0 0.0
  %9087 = vmatprep.subr.mxu0 0.0
  %9088 = vmatpush2.msra.mxu0 0.0
  %9089 = vmatprep.subr.mxu0 0.0
  %9090 = vmatpush2.msra.mxu0 0.0
  %9091 = vmatprep.subr.mxu0 0.0
  %9092 = vmatpush2.msra.mxu0 0.0
  %9093 = vmatprep.subr.mxu0 0.0
  %9094 = vmatpush2.msra.mxu0 0.0
  %9095 = vmatprep.subr.mxu0 0.0
  %9096 = vmatpush2.msra.mxu0 0.0
  %9097 = vmatprep.subr.mxu0 0.0
  %9098 = vmatpush2.msra.mxu0 0.0
  %9099 = vmatprep.subr.mxu0 0.0
  %9100 = vmatpush2.msra.mxu0 0.0
  %9101 = vmatprep.subr.mxu0 0.0
  %9102 = vmatpush2.msra.mxu0 0.0
  %9103 = vmatprep.mubr.f32.mxu0 0.0
  %9104 = vmatmul.mubr.f32.gmra.mxu0 %v9034
  %v9105 = vpop.f32.mrf.mxu0
  %v9106 = vadd.f32 %v9032, %v9105
  %v9107 = vpop.f32.mrf.mxu0
  %9108 = vmatprep.mubr.f32.mxu0 0.0
  %9109 = vmatmul.mubr.f32.gmra.mxu0 %v9037
  %v9110 = vpop.f32.mrf.mxu0
  %v9111 = vadd.f32 %v9032, %v9110
  %v9112 = vpop.f32.mrf.mxu0
  %9113 = vdwg.mxu0
  %v9114 = vmax.f32 %v9106, 0.0
  %v9115 = vmax.f32 %v9111, 0.0
  %v9116 = vld [vmem:[%s1 + $0x170] sm:$0xff]
  %v9117 = vld [vmem:[%s1 + $0x178] sm:$0xff]
  %v9118 = vld [vmem:[%s1 + $0x180] sm:$0xff]
  %v9119 = vld [vmem:[%s1 + $0x188] sm:$0xff]
  %v9120 = vld [vmem:[%s2 + $0x29] sm:$0x1]
  %v9121 = vlaneseq
  %v9122 = vshrl.u32 %v9121, 7
  %v9123 = vsub.s32 0, %v9122
  %v9124 = vrot.slane %v9120, %v9123
  %v9126 = vsel %vm1517, %v9114, 0
  %v9129 = vsel %vm1517, %v9115, 0
  %9131 = vmatprep.subr.mxu0 0.0
  %9132 = vmatpush1.msra.mxu0 0.0
  %9133 = vmatprep.subr.mxu0 0.0
  %9134 = vmatpush1.msra.mxu0 0.0
  %9135 = vmatprep.subr.mxu0 0.0
  %9136 = vmatpush1.msra.mxu0 0.0
  %9137 = vmatprep.subr.mxu0 0.0
  %9138 = vmatpush1.msra.mxu0 0.0
  %9139 = vmatprep.subr.mxu0 0.0
  %9140 = vmatpush1.msra.mxu0 0.0
  %9141 = vmatprep.subr.mxu0 0.0
  %9142 = vmatpush1.msra.mxu0 0.0
  %9143 = vmatprep.subr.mxu0 0.0
  %9144 = vmatpush1.msra.mxu0 0.0
  %9145 = vmatprep.subr.mxu0 0.0
  %9146 = vmatpush1.msra.mxu0 0.0
  %9147 = vmatprep.subr.mxu0 0.0
  %9148 = vmatpush1.msra.mxu0 0.0
  %9149 = vmatprep.subr.mxu0 0.0
  %9150 = vmatpush1.msra.mxu0 0.0
  %9151 = vmatprep.subr.mxu0 0.0
  %9152 = vmatpush1.msra.mxu0 0.0
  %9153 = vmatprep.subr.mxu0 0.0
  %9154 = vmatpush1.msra.mxu0 0.0
  %9155 = vmatprep.subr.mxu0 0.0
  %9156 = vmatpush1.msra.mxu0 %v9119
  %9157 = vmatprep.subr.mxu0 0.0
  %9158 = vmatpush1.msra.mxu0 %v9118
  %9159 = vmatprep.subr.mxu0 0.0
  %9160 = vmatpush1.msra.mxu0 %v9117
  %9161 = vmatprep.subr.mxu0 0.0
  %9162 = vmatpush1.msra.mxu0 %v9116
  %9163 = vmatprep.subr.mxu0 0.0
  %9164 = vmatpush2.msra.mxu0 0.0
  %9165 = vmatprep.subr.mxu0 0.0
  %9166 = vmatpush2.msra.mxu0 0.0
  %9167 = vmatprep.subr.mxu0 0.0
  %9168 = vmatpush2.msra.mxu0 0.0
  %9169 = vmatprep.subr.mxu0 0.0
  %9170 = vmatpush2.msra.mxu0 0.0
  %9171 = vmatprep.subr.mxu0 0.0
  %9172 = vmatpush2.msra.mxu0 0.0
  %9173 = vmatprep.subr.mxu0 0.0
  %9174 = vmatpush2.msra.mxu0 0.0
  %9175 = vmatprep.subr.mxu0 0.0
  %9176 = vmatpush2.msra.mxu0 0.0
  %9177 = vmatprep.subr.mxu0 0.0
  %9178 = vmatpush2.msra.mxu0 0.0
  %9179 = vmatprep.subr.mxu0 0.0
  %9180 = vmatpush2.msra.mxu0 0.0
  %9181 = vmatprep.subr.mxu0 0.0
  %9182 = vmatpush2.msra.mxu0 0.0
  %9183 = vmatprep.subr.mxu0 0.0
  %9184 = vmatpush2.msra.mxu0 0.0
  %9185 = vmatprep.subr.mxu0 0.0
  %9186 = vmatpush2.msra.mxu0 0.0
  %9187 = vmatprep.subr.mxu0 0.0
  %9188 = vmatpush2.msra.mxu0 0.0
  %9189 = vmatprep.subr.mxu0 0.0
  %9190 = vmatpush2.msra.mxu0 0.0
  %9191 = vmatprep.subr.mxu0 0.0
  %9192 = vmatpush2.msra.mxu0 0.0
  %9193 = vmatprep.subr.mxu0 0.0
  %9194 = vmatpush2.msra.mxu0 0.0
  %9195 = vmatprep.mubr.f32.mxu0 0.0
  %9196 = vmatmul.mubr.f32.gmra.mxu0 %v9126
  %v9197 = vpop.f32.mrf.mxu0
  %v9198 = vadd.f32 %v9124, %v9197
  %v9199 = vpop.f32.mrf.mxu0
  %9200 = vmatprep.mubr.f32.mxu0 0.0
  %9201 = vmatmul.mubr.f32.gmra.mxu0 %v9129
  %v9202 = vpop.f32.mrf.mxu0
  %v9203 = vadd.f32 %v9124, %v9202
  %v9204 = vpop.f32.mrf.mxu0
  %9205 = vdwg.mxu0
  %v9206 = vmax.f32 %v9198, 0.0
  %v9207 = vmax.f32 %v9203, 0.0
  %v9208 = vld [vmem:[%s1 + $0x190] sm:$0xff]
  %v9209 = vld [vmem:[%s1 + $0x198] sm:$0xff]
  %v9210 = vld [vmem:[%s2 + $0x2a] sm:$0x1]
  %v9211 = vlaneseq
  %v9212 = vshrl.u32 %v9211, 7
  %v9213 = vsub.s32 0, %v9212
  %v9214 = vrot.slane %v9210, %v9213
  %v9216 = vsel %vm281, %v9206, 0
  %v9219 = vsel %vm281, %v9207, 0
  %9221 = vmatprep.subr.mxu0 0.0
  %9222 = vmatpush1.msra.mxu0 0.0
  %9223 = vmatprep.subr.mxu0 0.0
  %9224 = vmatpush1.msra.mxu0 0.0
  %9225 = vmatprep.subr.mxu0 0.0
  %9226 = vmatpush1.msra.mxu0 0.0
  %9227 = vmatprep.subr.mxu0 0.0
  %9228 = vmatpush1.msra.mxu0 0.0
  %9229 = vmatprep.subr.mxu0 0.0
  %9230 = vmatpush1.msra.mxu0 0.0
  %9231 = vmatprep.subr.mxu0 0.0
  %9232 = vmatpush1.msra.mxu0 0.0
  %9233 = vmatprep.subr.mxu0 0.0
  %9234 = vmatpush1.msra.mxu0 0.0
  %9235 = vmatprep.subr.mxu0 0.0
  %9236 = vmatpush1.msra.mxu0 0.0
  %9237 = vmatprep.subr.mxu0 0.0
  %9238 = vmatpush1.msra.mxu0 0.0
  %9239 = vmatprep.subr.mxu0 0.0
  %9240 = vmatpush1.msra.mxu0 0.0
  %9241 = vmatprep.subr.mxu0 0.0
  %9242 = vmatpush1.msra.mxu0 0.0
  %9243 = vmatprep.subr.mxu0 0.0
  %9244 = vmatpush1.msra.mxu0 0.0
  %9245 = vmatprep.subr.mxu0 0.0
  %9246 = vmatpush1.msra.mxu0 0.0
  %9247 = vmatprep.subr.mxu0 0.0
  %9248 = vmatpush1.msra.mxu0 0.0
  %9249 = vmatprep.subr.mxu0 0.0
  %9250 = vmatpush1.msra.mxu0 %v9209
  %9251 = vmatprep.subr.mxu0 0.0
  %9252 = vmatpush1.msra.mxu0 %v9208
  %9253 = vmatprep.subr.mxu0 0.0
  %9254 = vmatpush2.msra.mxu0 0.0
  %9255 = vmatprep.subr.mxu0 0.0
  %9256 = vmatpush2.msra.mxu0 0.0
  %9257 = vmatprep.subr.mxu0 0.0
  %9258 = vmatpush2.msra.mxu0 0.0
  %9259 = vmatprep.subr.mxu0 0.0
  %9260 = vmatpush2.msra.mxu0 0.0
  %9261 = vmatprep.subr.mxu0 0.0
  %9262 = vmatpush2.msra.mxu0 0.0
  %9263 = vmatprep.subr.mxu0 0.0
  %9264 = vmatpush2.msra.mxu0 0.0
  %9265 = vmatprep.subr.mxu0 0.0
  %9266 = vmatpush2.msra.mxu0 0.0
  %9267 = vmatprep.subr.mxu0 0.0
  %9268 = vmatpush2.msra.mxu0 0.0
  %9269 = vmatprep.subr.mxu0 0.0
  %9270 = vmatpush2.msra.mxu0 0.0
  %9271 = vmatprep.subr.mxu0 0.0
  %9272 = vmatpush2.msra.mxu0 0.0
  %9273 = vmatprep.subr.mxu0 0.0
  %9274 = vmatpush2.msra.mxu0 0.0
  %9275 = vmatprep.subr.mxu0 0.0
  %9276 = vmatpush2.msra.mxu0 0.0
  %9277 = vmatprep.subr.mxu0 0.0
  %9278 = vmatpush2.msra.mxu0 0.0
  %9279 = vmatprep.subr.mxu0 0.0
  %9280 = vmatpush2.msra.mxu0 0.0
  %9281 = vmatprep.subr.mxu0 0.0
  %9282 = vmatpush2.msra.mxu0 0.0
  %9283 = vmatprep.subr.mxu0 0.0
  %9284 = vmatpush2.msra.mxu0 0.0
  %9285 = vmatprep.mubr.f32.mxu0 0.0
  %9286 = vmatmul.mubr.f32.gmra.mxu0 %v9216
  %v9287 = vpop.f32.mrf.mxu0
  %v9288 = vadd.f32 %v9214, %v9287
  %v9289 = vpop.f32.mrf.mxu0
  %9290 = vmatprep.mubr.f32.mxu0 0.0
  %9291 = vmatmul.mubr.f32.gmra.mxu0 %v9219
  %v9292 = vpop.f32.mrf.mxu0
  %v9293 = vadd.f32 %v9214, %v9292
  %v9294 = vpop.f32.mrf.mxu0
  %9295 = vdwg.mxu0
  %vm9296 = vcmask 23552
  %9297 = vst.msk [vmem:[%s4] sm:$0xff] %vm9296, %v9288
  %9298 = vst.msk [vmem:[%s4 + $0x8] sm:$0xff] %vm9296, %v9293
  // Predicated region
  $region18: #{hai_titer_predictor.1} parent=0 // pred_check
    _
  $region19: #{hai_titer_predictor.1} parent=0 // pred_check_branch
    %9300 = sbr.rel (0) target = $region21
  $region20: #{hai_titer_predictor.1} parent=0 // pred_region
    _
  $region21: #{hai_titer_predictor.1} parent=0 // pred_fallthru
    _
  // Predicated region
  $region22: #{hai_titer_predictor.1} parent=0 // pred_check
    _
  $region23: #{hai_titer_predictor.1} parent=0 // pred_check_branch
    %9302 = sbr.rel (0) target = $region25
  $region24: #{hai_titer_predictor.1} parent=0 // pred_region
    _
  $region25: #{hai_titer_predictor.1} parent=0 // pred_fallthru
    _

</llo_original>
